<compile_context>
chip_gen: v6e
topology: v6e:2x2x1
jax: 0.10.0
libtpu: 0.0.40
codegen_flags: <defaults>
</compile_context>

<pallas_src>
import jax
import jax.numpy as jnp
from jax.experimental import pallas as pl
from jax.experimental.pallas import tpu as pltpu

IN_FEATURES = 28 * 28        # 784
IN_PAD = 896                 # 7 * 128  (lane-dense K for the first matmul)
HIDDEN = 32 * 32             # 1024
OUT_FEATURES = 10
OUT_PAD = 128                # lane-dense output width
DEFAULT_BATCH_TILE = 512     # big tiles amortize per-grid-step overhead


def _round_up(x, m):
    return (x + m - 1) // m * m


def _mlp_kernel(x_ref, w1_ref, b1_ref, w2_ref, b2_ref, w3_ref, b3_ref, o_ref):
    # x_ref: (TB, 896) bf16, w1: (896, 1024) bf16, w2: (1024, 1024) bf16,
    # w3: (1024, 128) bf16, biases f32, o_ref: (TB, 128) f32.
    x = x_ref[...]

    h1 = jnp.dot(x, w1_ref[...], preferred_element_type=jnp.float32) + b1_ref[...]
    h1 = jnp.maximum(h1, 0.0).astype(jnp.bfloat16)          # F.relu, bf16 for next MXU pass

    h2 = jnp.dot(h1, w2_ref[...], preferred_element_type=jnp.float32) + b2_ref[...]
    h2 = jnp.maximum(h2, 0.0).astype(jnp.bfloat16)          # F.relu

    logits = jnp.dot(h2, w3_ref[...], preferred_element_type=jnp.float32) + b3_ref[...]
    o_ref[...] = logits.astype(o_ref.dtype)


def prepare_params(params):
    """Pad + cast torch-layout params once (do this outside the serving hot loop).

    Returns bf16 weights with K padded to 896 (w1) and N padded to 128 (w3),
    f32 biases (b3 padded to 128).
    """
    w1, b1, w2, b2, w3, b3 = params
    w1p = jnp.zeros((IN_PAD, HIDDEN), jnp.bfloat16).at[:IN_FEATURES, :].set(
        w1.astype(jnp.bfloat16))
    w3p = jnp.zeros((HIDDEN, OUT_PAD), jnp.bfloat16).at[:, :OUT_FEATURES].set(
        w3.astype(jnp.bfloat16))
    b3p = jnp.zeros((1, OUT_PAD), jnp.float32).at[:, :OUT_FEATURES].set(
        b3.astype(jnp.float32))
    return (w1p, b1.astype(jnp.float32), w2.astype(jnp.bfloat16),
            b2.astype(jnp.float32), w3p, b3p)


def digit_recognizer_forward(x, prepared_params, *, batch_tile=DEFAULT_BATCH_TILE):
    """x: (N, 1, 28, 28) or (N, 28, 28) image batch -> (N, 10) logits (f32)."""
    w1, b1, w2, b2, w3, b3 = prepared_params
    n = x.shape[0]
    x_flat = x.reshape(n, -1)                                # nn.Flatten
    assert x_flat.shape[1] == IN_FEATURES

    # Batch tile: large for throughput, but shrink (to a multiple of 8) for
    # tiny batches so we don't pad 8 rows up to 512.
    tb = batch_tile if n >= batch_tile else max(8, _round_up(n, 8))
    n_pad = _round_up(n, tb)

    # Zero-pad batch to a tile multiple and K to 896 in one fused pad; cast to bf16.
    x_padded = jnp.pad(x_flat.astype(jnp.bfloat16),
                       ((0, n_pad - n), (0, IN_PAD - IN_FEATURES)))

    grid = (n_pad // tb,)
    const = lambda i: (0, 0)     # weights/biases: same block every grid step -> VMEM-resident

    out = pl.pallas_call(
        _mlp_kernel,
        out_shape=jax.ShapeDtypeStruct((n_pad, OUT_PAD), jnp.float32),
        grid=grid,
        in_specs=[
            pl.BlockSpec((tb, IN_PAD), lambda i: (i, 0)),     # x: streamed per tile
            pl.BlockSpec((IN_PAD, HIDDEN), const),            # w1
            pl.BlockSpec((1, HIDDEN), const),                 # b1
            pl.BlockSpec((HIDDEN, HIDDEN), const),            # w2
            pl.BlockSpec((1, HIDDEN), const),                 # b2
            pl.BlockSpec((HIDDEN, OUT_PAD), const),           # w3
            pl.BlockSpec((1, OUT_PAD), const),                # b3
        ],
        out_specs=pl.BlockSpec((tb, OUT_PAD), lambda i: (i, 0)),
        compiler_params=pltpu.CompilerParams(
            dimension_semantics=("parallel",),                # 2 TCs on v7x
            vmem_limit_bytes=32 << 20,                        # ~10 MiB actually needed
        ),
    )(x_padded, w1, b1, w2, b2, w3, b3)

    # Strip batch padding and the lane padding of the 10-wide logits.
    return out[:n, :OUT_FEATURES]


def init_params(key):
    """Mimics torch.nn.Linear default init (U[-1/sqrt(fan_in), +1/sqrt(fan_in)]).

    Weights are stored (in_features, out_features) so the kernel does x @ W.
    """
    k1, k2, k3, k4, k5, k6 = jax.random.split(key, 6)

    def uniform(k, shape, fan_in):
        bound = 1.0 / jnp.sqrt(jnp.float32(fan_in))
        return jax.random.uniform(k, shape, jnp.float32, -bound, bound)

    w1 = uniform(k1, (IN_FEATURES, HIDDEN), IN_FEATURES)
    b1 = uniform(k2, (1, HIDDEN), IN_FEATURES)
    w2 = uniform(k3, (HIDDEN, HIDDEN), HIDDEN)
    b2 = uniform(k4, (1, HIDDEN), HIDDEN)
    w3 = uniform(k5, (HIDDEN, OUT_FEATURES), HIDDEN)
    b3 = uniform(k6, (1, OUT_FEATURES), HIDDEN)
    return (w1, b1, w2, b2, w3, b3)


def _reference_forward(x, prepared_params):
    """Plain-JAX reference replicating the kernel's bf16/padding numerics."""
    w1, b1, w2, b2, w3, b3 = prepared_params
    n = x.shape[0]
    xf = jnp.zeros((n, IN_PAD), jnp.bfloat16).at[:, :IN_FEATURES].set(
        x.reshape(n, -1).astype(jnp.bfloat16))
    h1 = jnp.maximum(jnp.dot(xf, w1, preferred_element_type=jnp.float32) + b1, 0.0)
    h1 = h1.astype(jnp.bfloat16)
    h2 = jnp.maximum(jnp.dot(h1, w2, preferred_element_type=jnp.float32) + b2, 0.0)
    h2 = h2.astype(jnp.bfloat16)
    logits = jnp.dot(h2, w3, preferred_element_type=jnp.float32) + b3
    return logits[:, :OUT_FEATURES]


if __name__ == "__main__":
    key = jax.random.PRNGKey(0)
    k_params, k_x = jax.random.split(key)

    params = init_params(k_params)
    prepared = prepare_params(params)          # pad + cast once (serving-friendly)

    # Small batch of NCHW "MNIST-like" inputs.
    x = jax.random.normal(k_x, (8, 1, 28, 28), dtype=jnp.float32)

    out = digit_recognizer_forward(x, prepared)
    out = jax.block_until_ready(out)

    ref = _reference_forward(x, prepared)
    assert out.shape == (8, 10)
    assert jnp.allclose(out, ref, atol=1e-2, rtol=1e-2), (
        float(jnp.max(jnp.abs(out - ref))))

    print("KERNEL_OK")
</pallas_src>

<mosaic_0001>
module attributes {stable_mosaic.version = 11 : i64} {
  func.func @_mlp_kernel(%arg0: i32, %arg1: memref<8x896xbf16, #tpu.memory_space<vmem>>, %arg2: memref<896x1024xbf16, #tpu.memory_space<vmem>>, %arg3: memref<1x1024xf32, #tpu.memory_space<vmem>>, %arg4: memref<1024x1024xbf16, #tpu.memory_space<vmem>>, %arg5: memref<1x1024xf32, #tpu.memory_space<vmem>>, %arg6: memref<1024x128xbf16, #tpu.memory_space<vmem>>, %arg7: memref<1x128xf32, #tpu.memory_space<vmem>>, %arg8: memref<8x128xf32, #tpu.memory_space<vmem>>) attributes {dimension_semantics = [#tpu.dimension_semantics<parallel>], iteration_bounds = array<i64: 1>, scalar_prefetch = 0 : i64, scratch_operands = 0 : i64, tpu.core_type = #tpu.core_type<tc>, window_params = [{transform_indices = @transform_0, window_bounds = array<i64: 8, 896>}, {pipeline_mode = #tpu.pipeline_mode<synchronous>, transform_indices = @transform_1, window_bounds = array<i64: 896, 1024>}, {pipeline_mode = #tpu.pipeline_mode<synchronous>, transform_indices = @transform_2, window_bounds = array<i64: 1, 1024>}, {pipeline_mode = #tpu.pipeline_mode<synchronous>, transform_indices = @transform_3, window_bounds = array<i64: 1024, 1024>}, {pipeline_mode = #tpu.pipeline_mode<synchronous>, transform_indices = @transform_4, window_bounds = array<i64: 1, 1024>}, {pipeline_mode = #tpu.pipeline_mode<synchronous>, transform_indices = @transform_5, window_bounds = array<i64: 1024, 128>}, {pipeline_mode = #tpu.pipeline_mode<synchronous>, transform_indices = @transform_6, window_bounds = array<i64: 1, 128>}, {transform_indices = @transform_7, window_bounds = array<i64: 8, 128>}]} {
    %c0 = arith.constant 0 : index
    %c0_0 = arith.constant 0 : index
    %0 = vector.load %arg1[%c0, %c0_0] : memref<8x896xbf16, #tpu.memory_space<vmem>>, vector<8x896xbf16>
    %c0_1 = arith.constant 0 : index
    %c0_2 = arith.constant 0 : index
    %1 = vector.load %arg2[%c0_1, %c0_2] : memref<896x1024xbf16, #tpu.memory_space<vmem>>, vector<896x1024xbf16>
    %cst = arith.constant dense<0.000000e+00> : vector<8x1024xf32>
    %2 = tpu.matmul %0, %1, %cst {dimension_numbers = #tpu.dot_dimension_numbers<[1], [0], [0], [1], [0, 0, 1, 1], [], []>} : vector<8x896xbf16>, vector<896x1024xbf16>, vector<8x1024xf32> -> vector<8x1024xf32>
    %c0_3 = arith.constant 0 : index
    %c0_4 = arith.constant 0 : index
    %3 = vector.load %arg3[%c0_3, %c0_4] : memref<1x1024xf32, #tpu.memory_space<vmem>>, vector<1x1024xf32>
    %4 = vector.broadcast %3 : vector<1x1024xf32> to vector<8x1024xf32>
    %5 = arith.addf %2, %4 : vector<8x1024xf32>
    %cst_5 = arith.constant 0.000000e+00 : f32
    %6 = vector.broadcast %cst_5 : f32 to vector<8x1024xf32>
    %7 = arith.maximumf %5, %6 : vector<8x1024xf32>
    %8 = arith.truncf %7 : vector<8x1024xf32> to vector<8x1024xbf16>
    %c0_6 = arith.constant 0 : index
    %c0_7 = arith.constant 0 : index
    %9 = vector.load %arg4[%c0_6, %c0_7] : memref<1024x1024xbf16, #tpu.memory_space<vmem>>, vector<1024x1024xbf16>
    %cst_8 = arith.constant dense<0.000000e+00> : vector<8x1024xf32>
    %10 = tpu.matmul %8, %9, %cst_8 {dimension_numbers = #tpu.dot_dimension_numbers<[1], [0], [0], [1], [0, 0, 1, 1], [], []>} : vector<8x1024xbf16>, vector<1024x1024xbf16>, vector<8x1024xf32> -> vector<8x1024xf32>
    %c0_9 = arith.constant 0 : index
    %c0_10 = arith.constant 0 : index
    %11 = vector.load %arg5[%c0_9, %c0_10] : memref<1x1024xf32, #tpu.memory_space<vmem>>, vector<1x1024xf32>
    %12 = vector.broadcast %11 : vector<1x1024xf32> to vector<8x1024xf32>
    %13 = arith.addf %10, %12 : vector<8x1024xf32>
    %cst_11 = arith.constant 0.000000e+00 : f32
    %14 = vector.broadcast %cst_11 : f32 to vector<8x1024xf32>
    %15 = arith.maximumf %13, %14 : vector<8x1024xf32>
    %16 = arith.truncf %15 : vector<8x1024xf32> to vector<8x1024xbf16>
    %c0_12 = arith.constant 0 : index
    %c0_13 = arith.constant 0 : index
    %17 = vector.load %arg6[%c0_12, %c0_13] : memref<1024x128xbf16, #tpu.memory_space<vmem>>, vector<1024x128xbf16>
    %cst_14 = arith.constant dense<0.000000e+00> : vector<8x128xf32>
    %18 = tpu.matmul %16, %17, %cst_14 {dimension_numbers = #tpu.dot_dimension_numbers<[1], [0], [0], [1], [0, 0, 1, 1], [], []>} : vector<8x1024xbf16>, vector<1024x128xbf16>, vector<8x128xf32> -> vector<8x128xf32>
    %c0_15 = arith.constant 0 : index
    %c0_16 = arith.constant 0 : index
    %19 = vector.load %arg7[%c0_15, %c0_16] : memref<1x128xf32, #tpu.memory_space<vmem>>, vector<1x128xf32>
    %20 = vector.broadcast %19 : vector<1x128xf32> to vector<8x128xf32>
    %21 = arith.addf %18, %20 : vector<8x128xf32>
    %c0_17 = arith.constant 0 : index
    %c0_18 = arith.constant 0 : index
    %22 = vector.load %arg8[%c0_17, %c0_18] : memref<8x128xf32, #tpu.memory_space<vmem>>, vector<8x128xf32>
    tpu.vector_store %arg8[%c0_17, %c0_18], %21 {strides = array<i32>} : memref<8x128xf32, #tpu.memory_space<vmem>>, vector<8x128xf32>,
    return
  }
  func.func @transform_0(%arg0: i32) -> (i32, i32) {
    %c0_i32 = arith.constant 0 : i32
    %c0_i32_0 = arith.constant 0 : i32
    return %arg0, %c0_i32 : i32, i32
  }
  func.func @transform_1(%arg0: i32) -> (i32, i32) {
    %c0_i32 = arith.constant 0 : i32
    %c0_i32_0 = arith.constant 0 : i32
    %c0_i32_1 = arith.constant 0 : i32
    return %c0_i32, %c0_i32_0 : i32, i32
  }
  func.func @transform_2(%arg0: i32) -> (i32, i32) {
    %c0_i32 = arith.constant 0 : i32
    %c0_i32_0 = arith.constant 0 : i32
    %c0_i32_1 = arith.constant 0 : i32
    return %c0_i32, %c0_i32_0 : i32, i32
  }
  func.func @transform_3(%arg0: i32) -> (i32, i32) {
    %c0_i32 = arith.constant 0 : i32
    %c0_i32_0 = arith.constant 0 : i32
    %c0_i32_1 = arith.constant 0 : i32
    return %c0_i32, %c0_i32_0 : i32, i32
  }
  func.func @transform_4(%arg0: i32) -> (i32, i32) {
    %c0_i32 = arith.constant 0 : i32
    %c0_i32_0 = arith.constant 0 : i32
    %c0_i32_1 = arith.constant 0 : i32
    return %c0_i32, %c0_i32_0 : i32, i32
  }
  func.func @transform_5(%arg0: i32) -> (i32, i32) {
    %c0_i32 = arith.constant 0 : i32
    %c0_i32_0 = arith.constant 0 : i32
    %c0_i32_1 = arith.constant 0 : i32
    return %c0_i32, %c0_i32_0 : i32, i32
  }
  func.func @transform_6(%arg0: i32) -> (i32, i32) {
    %c0_i32 = arith.constant 0 : i32
    %c0_i32_0 = arith.constant 0 : i32
    %c0_i32_1 = arith.constant 0 : i32
    return %c0_i32, %c0_i32_0 : i32, i32
  }
  func.func @transform_7(%arg0: i32) -> (i32, i32) {
    %c0_i32 = arith.constant 0 : i32
    %c0_i32_0 = arith.constant 0 : i32
    return %arg0, %c0_i32 : i32, i32
  }
}

</mosaic_0001>

<llo_original>
// kernel: tpu_custom_call.1
$region0: #{tpu_custom_call.1}
  #allocation0 [shape = 'u32[]', space=smem, size = 0x4, offset = 0x4, fixed_abs, tag = 'smem constant byte address 0x4 - core index']
  #allocation1 [shape = 'u32[144,128]{1,0:T(1,128)}', space=vmem, size = 0x12000, scoped, tag = 'internal scratch']
  %s0 = inlined_call_operand.hbm [shape: bf16[8,896], index: 0, kind: input, shape index: {}]
  %s1 = inlined_call_operand.hbm [shape: bf16[896,1024], index: 1, kind: input, shape index: {}]
  %s2 = inlined_call_operand.hbm [shape: f32[1,1024], index: 2, kind: input, shape index: {}]
  %s3 = inlined_call_operand.hbm [shape: bf16[1024,1024], index: 3, kind: input, shape index: {}]
  %s4 = inlined_call_operand.hbm [shape: f32[1,1024], index: 4, kind: input, shape index: {}]
  %s5 = inlined_call_operand.hbm [shape: bf16[1024,128], index: 5, kind: input, shape index: {}]
  %s6 = inlined_call_operand.hbm [shape: f32[1,128], index: 6, kind: input, shape index: {}]
  %s7 = inlined_call_operand.hbm [shape: f32[8,128], index: 7, kind: output, shape index: {}]
  %s8 = sld [smem:[#allocation0]]
  $region66: #{tpu_custom_call.1} parent=0
    _
  %s10 = ssub.s32 1, %s8
  %s11 = scalar_select 0, %s10, %s8
  $region1: #{tpu_custom_call.1} parent=0
    #allocation2 [shape = 'u8[14336]{0}', space=vmem, size = 0x3800, scoped, tag = 'input window, operand 0, single buffered']
    #allocation3 [shape = 's32[1]{0}', space=sflag, size = 0x4, scoped, tag = 'scoped memory for tpu_custom_call.1']
    #allocation4 [shape = 's32[1]{0}', space=sflag, size = 0x4, scoped, tag = 'scoped memory for tpu_custom_call.1']
    #allocation5 [shape = 'u8[1835008]{0}', space=vmem, size = 0x1c0000, scoped, tag = 'input window, operand 1, single buffered']
    #allocation6 [shape = 's32[1]{0}', space=sflag, size = 0x4, scoped, tag = 'scoped memory for tpu_custom_call.1']
    #allocation7 [shape = 'u8[4096]{0}', space=vmem, size = 0x1000, scoped, tag = 'input window, operand 2, single buffered']
    #allocation8 [shape = 'u8[2097152]{0}', space=vmem, size = 0x200000, scoped, tag = 'input window, operand 3, single buffered']
    #allocation9 [shape = 's32[1]{0}', space=sflag, size = 0x4, scoped, tag = 'scoped memory for tpu_custom_call.1']
    #allocation10 [shape = 'u8[4096]{0}', space=vmem, size = 0x1000, scoped, tag = 'input window, operand 4, single buffered']
    #allocation11 [shape = 'u8[262144]{0}', space=vmem, size = 0x40000, scoped, tag = 'input window, operand 5, single buffered']
    #allocation12 [shape = 's32[1]{0}', space=sflag, size = 0x4, scoped, tag = 'scoped memory for tpu_custom_call.1']
    #allocation13 [shape = 'u8[512]{0}', space=vmem, size = 0x400, scoped, tag = 'input window, operand 6, single buffered']
    #allocation14 [shape = 'u8[4096]{0}', space=vmem, size = 0x1000, scoped, tag = 'output window, operand 0, single buffered']
    %12 = vsyncpa [#allocation3], 0
    %13 = vsyncpa [#allocation6], 0
    %14 = vsyncpa [#allocation9], 0
    %15 = vsyncpa [#allocation12], 0
    %16 = vsyncpa [#allocation4], 0
    // Predicated region
    $region2: #{tpu_custom_call.1} parent=1 // pred_check
      _
    $region3: #{tpu_custom_call.1} parent=1 // pred_check_branch
      %18 = sbr.rel (0) target = $region5
    $region4: #{tpu_custom_call.1} parent=1 // pred_region
      %s20 = ssub.s32 448, 448
      %21 = vsyncadd [#allocation3], %s20
      %s23 = sshll.u32 [#allocation2], 4
      %s24 = int_to_ptr.vmem [resolvable:$true] %s23
      %26 = dma.hbm_to_vmem [thread:$0]  %s0, 448, %s24, [#allocation3]
    $region5: #{tpu_custom_call.1} parent=1 // pred_fallthru
      _
    // Predicated region
    $region6: #{tpu_custom_call.1} parent=1 // pred_check
      _
    $region7: #{tpu_custom_call.1} parent=1 // pred_check_branch
      %28 = sbr.rel (0) target = $region9
    $region8: #{tpu_custom_call.1} parent=1 // pred_region
      %s30 = ssub.s32 57344, 57344
      %31 = vsyncadd [#allocation6], %s30
      %s32 = sshll.u32 [#allocation5], 4
      %s33 = int_to_ptr.vmem [resolvable:$true] %s32
      %38 = dma.hbm_to_vmem [thread:$0]  %s1, 57344, %s33, [#allocation6], 512, 512, 32
    $region9: #{tpu_custom_call.1} parent=1 // pred_fallthru
      _
    // Predicated region
    $region10: #{tpu_custom_call.1} parent=1 // pred_check
      _
    $region11: #{tpu_custom_call.1} parent=1 // pred_check_branch
      %40 = sbr.rel (0) target = $region13
    $region12: #{tpu_custom_call.1} parent=1 // pred_region
      %s42 = ssub.s32 128, 128
      %43 = vsyncadd [#allocation6], %s42
      %s45 = sshll.u32 [#allocation7], 4
      %s46 = int_to_ptr.vmem [resolvable:$true] %s45
      %48 = dma.hbm_to_vmem [thread:$0]  %s2, 128, %s46, [#allocation6]
    $region13: #{tpu_custom_call.1} parent=1 // pred_fallthru
      _
    // Predicated region
    $region14: #{tpu_custom_call.1} parent=1 // pred_check
      _
    $region15: #{tpu_custom_call.1} parent=1 // pred_check_branch
      %50 = sbr.rel (0) target = $region17
    $region16: #{tpu_custom_call.1} parent=1 // pred_region
      %s52 = ssub.s32 65536, 65536
      %53 = vsyncadd [#allocation9], %s52
      %s54 = sshll.u32 [#allocation8], 4
      %s55 = int_to_ptr.vmem [resolvable:$true] %s54
      %60 = dma.hbm_to_vmem [thread:$0]  %s3, 65536, %s55, [#allocation9], 512, 512, 32
    $region17: #{tpu_custom_call.1} parent=1 // pred_fallthru
      _
    // Predicated region
    $region18: #{tpu_custom_call.1} parent=1 // pred_check
      _
    $region19: #{tpu_custom_call.1} parent=1 // pred_check_branch
      %62 = sbr.rel (0) target = $region21
    $region20: #{tpu_custom_call.1} parent=1 // pred_region
      %s64 = ssub.s32 128, 128
      %65 = vsyncadd [#allocation9], %s64
      %s67 = sshll.u32 [#allocation10], 4
      %s68 = int_to_ptr.vmem [resolvable:$true] %s67
      %70 = dma.hbm_to_vmem [thread:$0]  %s4, 128, %s68, [#allocation9]
    $region21: #{tpu_custom_call.1} parent=1 // pred_fallthru
      _
    // Predicated region
    $region22: #{tpu_custom_call.1} parent=1 // pred_check
      _
    $region23: #{tpu_custom_call.1} parent=1 // pred_check_branch
      %72 = sbr.rel (0) target = $region25
    $region24: #{tpu_custom_call.1} parent=1 // pred_region
      %s74 = ssub.s32 8192, 8192
      %75 = vsyncadd [#allocation12], %s74
      %s76 = sshll.u32 [#allocation11], 4
      %s77 = int_to_ptr.vmem [resolvable:$true] %s76
      %82 = dma.hbm_to_vmem [thread:$0]  %s5, 8192, %s77, [#allocation12], 64, 64, 4
    $region25: #{tpu_custom_call.1} parent=1 // pred_fallthru
      _
    // Predicated region
    $region26: #{tpu_custom_call.1} parent=1 // pred_check
      _
    $region27: #{tpu_custom_call.1} parent=1 // pred_check_branch
      %84 = sbr.rel (0) target = $region29
    $region28: #{tpu_custom_call.1} parent=1 // pred_region
      %s86 = ssub.s32 16, 16
      %87 = vsyncadd [#allocation12], %s86
      %s89 = sshll.u32 [#allocation13], 4
      %s90 = int_to_ptr.vmem [resolvable:$true] %s89
      %92 = dma.hbm_to_vmem [thread:$0]  %s6, 16, %s90, [#allocation12]
    $region29: #{tpu_custom_call.1} parent=1 // pred_fallthru
      _
    // Predicated region
    $region30: #{tpu_custom_call.1} parent=1 // pred_check
      _
    $region31: #{tpu_custom_call.1} parent=1 // pred_check_branch
      %94 = sbr.rel (0) target = $region33
    $region32: #{tpu_custom_call.1} parent=1 // pred_region
      %95 = dma.done [#allocation3], 448
    $region33: #{tpu_custom_call.1} parent=1 // pred_fallthru
      _
    // Predicated region
    $region34: #{tpu_custom_call.1} parent=1 // pred_check
      _
    $region35: #{tpu_custom_call.1} parent=1 // pred_check_branch
      %97 = sbr.rel (0) target = $region37
    $region36: #{tpu_custom_call.1} parent=1 // pred_region
      %98 = dma.done [#allocation6], 57344
    $region37: #{tpu_custom_call.1} parent=1 // pred_fallthru
      _
    // Predicated region
    $region38: #{tpu_custom_call.1} parent=1 // pred_check
      _
    $region39: #{tpu_custom_call.1} parent=1 // pred_check_branch
      %100 = sbr.rel (0) target = $region41
    $region40: #{tpu_custom_call.1} parent=1 // pred_region
      %101 = dma.done [#allocation6], 128
    $region41: #{tpu_custom_call.1} parent=1 // pred_fallthru
      _
    // Predicated region
    $region42: #{tpu_custom_call.1} parent=1 // pred_check
      _
    $region43: #{tpu_custom_call.1} parent=1 // pred_check_branch
      %103 = sbr.rel (0) target = $region45
    $region44: #{tpu_custom_call.1} parent=1 // pred_region
      %104 = dma.done [#allocation9], 65536
    $region45: #{tpu_custom_call.1} parent=1 // pred_fallthru
      _
    // Predicated region
    $region46: #{tpu_custom_call.1} parent=1 // pred_check
      _
    $region47: #{tpu_custom_call.1} parent=1 // pred_check_branch
      %106 = sbr.rel (0) target = $region49
    $region48: #{tpu_custom_call.1} parent=1 // pred_region
      %107 = dma.done [#allocation9], 128
    $region49: #{tpu_custom_call.1} parent=1 // pred_fallthru
      _
    // Predicated region
    $region50: #{tpu_custom_call.1} parent=1 // pred_check
      _
    $region51: #{tpu_custom_call.1} parent=1 // pred_check_branch
      %109 = sbr.rel (0) target = $region53
    $region52: #{tpu_custom_call.1} parent=1 // pred_region
      %110 = dma.done [#allocation12], 8192
    $region53: #{tpu_custom_call.1} parent=1 // pred_fallthru
      _
    // Predicated region
    $region54: #{tpu_custom_call.1} parent=1 // pred_check
      _
    $region55: #{tpu_custom_call.1} parent=1 // pred_check_branch
      %112 = sbr.rel (0) target = $region57
    $region56: #{tpu_custom_call.1} parent=1 // pred_region
      %113 = dma.done [#allocation12], 16
    $region57: #{tpu_custom_call.1} parent=1 // pred_fallthru
      _
    %v115 = vld [vmem:[#allocation2] sm:$0xff]
    %v116 = vld [vmem:[#allocation2 + $0x8] sm:$0xff]
    %v117 = vld [vmem:[#allocation2 + $0x10] sm:$0xff]
    %v118 = vld [vmem:[#allocation2 + $0x18] sm:$0xf]
    %v119 = vld [vmem:[#allocation5] sm:$0xff]
    %v120 = vld [vmem:[#allocation5 + $0x8] sm:$0xff]
    %v121 = vld [vmem:[#allocation5 + $0x10] sm:$0xff]
    %v122 = vld [vmem:[#allocation5 + $0x18] sm:$0xff]
    %v123 = vld [vmem:[#allocation5 + $0x20] sm:$0xff]
    %v124 = vld [vmem:[#allocation5 + $0x28] sm:$0xff]
    %v125 = vld [vmem:[#allocation5 + $0x30] sm:$0xff]
    %v126 = vld [vmem:[#allocation5 + $0x38] sm:$0xff]
    %v127 = vld [vmem:[#allocation5 + $0x40] sm:$0xff]
    %v128 = vld [vmem:[#allocation5 + $0x48] sm:$0xff]
    %v129 = vld [vmem:[#allocation5 + $0x50] sm:$0xff]
    %v130 = vld [vmem:[#allocation5 + $0x58] sm:$0xff]
    %v131 = vld [vmem:[#allocation5 + $0x60] sm:$0xff]
    %v132 = vld [vmem:[#allocation5 + $0x68] sm:$0xff]
    %v133 = vld [vmem:[#allocation5 + $0x70] sm:$0xff]
    %v134 = vld [vmem:[#allocation5 + $0x78] sm:$0xff]
    %v135 = vld [vmem:[#allocation5 + $0x80] sm:$0xff]
    %v136 = vld [vmem:[#allocation5 + $0x88] sm:$0xff]
    %v137 = vld [vmem:[#allocation5 + $0x90] sm:$0xff]
    %v138 = vld [vmem:[#allocation5 + $0x98] sm:$0xff]
    %v139 = vld [vmem:[#allocation5 + $0xa0] sm:$0xff]
    %v140 = vld [vmem:[#allocation5 + $0xa8] sm:$0xff]
    %v141 = vld [vmem:[#allocation5 + $0xb0] sm:$0xff]
    %v142 = vld [vmem:[#allocation5 + $0xb8] sm:$0xff]
    %v143 = vld [vmem:[#allocation5 + $0xc0] sm:$0xff]
    %v144 = vld [vmem:[#allocation5 + $0xc8] sm:$0xff]
    %v145 = vld [vmem:[#allocation5 + $0xd0] sm:$0xff]
    %v146 = vld [vmem:[#allocation5 + $0xd8] sm:$0xff]
    %v147 = vld [vmem:[#allocation5 + $0xe0] sm:$0xff]
    %v148 = vld [vmem:[#allocation5 + $0xe8] sm:$0xff]
    %v149 = vld [vmem:[#allocation5 + $0xf0] sm:$0xff]
    %v150 = vld [vmem:[#allocation5 + $0xf8] sm:$0xff]
    %v151 = vld [vmem:[#allocation5 + $0x100] sm:$0xff]
    %v152 = vld [vmem:[#allocation5 + $0x108] sm:$0xff]
    %v153 = vld [vmem:[#allocation5 + $0x110] sm:$0xff]
    %v154 = vld [vmem:[#allocation5 + $0x118] sm:$0xff]
    %v155 = vld [vmem:[#allocation5 + $0x120] sm:$0xff]
    %v156 = vld [vmem:[#allocation5 + $0x128] sm:$0xff]
    %v157 = vld [vmem:[#allocation5 + $0x130] sm:$0xff]
    %v158 = vld [vmem:[#allocation5 + $0x138] sm:$0xff]
    %v159 = vld [vmem:[#allocation5 + $0x140] sm:$0xff]
    %v160 = vld [vmem:[#allocation5 + $0x148] sm:$0xff]
    %v161 = vld [vmem:[#allocation5 + $0x150] sm:$0xff]
    %v162 = vld [vmem:[#allocation5 + $0x158] sm:$0xff]
    %v163 = vld [vmem:[#allocation5 + $0x160] sm:$0xff]
    %v164 = vld [vmem:[#allocation5 + $0x168] sm:$0xff]
    %v165 = vld [vmem:[#allocation5 + $0x170] sm:$0xff]
    %v166 = vld [vmem:[#allocation5 + $0x178] sm:$0xff]
    %v167 = vld [vmem:[#allocation5 + $0x180] sm:$0xff]
    %v168 = vld [vmem:[#allocation5 + $0x188] sm:$0xff]
    %v169 = vld [vmem:[#allocation5 + $0x190] sm:$0xff]
    %v170 = vld [vmem:[#allocation5 + $0x198] sm:$0xff]
    %v171 = vld [vmem:[#allocation5 + $0x1a0] sm:$0xff]
    %v172 = vld [vmem:[#allocation5 + $0x1a8] sm:$0xff]
    %v173 = vld [vmem:[#allocation5 + $0x1b0] sm:$0xff]
    %v174 = vld [vmem:[#allocation5 + $0x1b8] sm:$0xff]
    %v175 = vld [vmem:[#allocation5 + $0x1c0] sm:$0xff]
    %v176 = vld [vmem:[#allocation5 + $0x1c8] sm:$0xff]
    %v177 = vld [vmem:[#allocation5 + $0x1d0] sm:$0xff]
    %v178 = vld [vmem:[#allocation5 + $0x1d8] sm:$0xff]
    %v179 = vld [vmem:[#allocation5 + $0x1e0] sm:$0xff]
    %v180 = vld [vmem:[#allocation5 + $0x1e8] sm:$0xff]
    %v181 = vld [vmem:[#allocation5 + $0x1f0] sm:$0xff]
    %v182 = vld [vmem:[#allocation5 + $0x1f8] sm:$0xff]
    %v183 = vld [vmem:[#allocation5 + $0x200] sm:$0xff]
    %v184 = vld [vmem:[#allocation5 + $0x208] sm:$0xff]
    %v185 = vld [vmem:[#allocation5 + $0x210] sm:$0xff]
    %v186 = vld [vmem:[#allocation5 + $0x218] sm:$0xff]
    %v187 = vld [vmem:[#allocation5 + $0x220] sm:$0xff]
    %v188 = vld [vmem:[#allocation5 + $0x228] sm:$0xff]
    %v189 = vld [vmem:[#allocation5 + $0x230] sm:$0xff]
    %v190 = vld [vmem:[#allocation5 + $0x238] sm:$0xff]
    %v191 = vld [vmem:[#allocation5 + $0x240] sm:$0xff]
    %v192 = vld [vmem:[#allocation5 + $0x248] sm:$0xff]
    %v193 = vld [vmem:[#allocation5 + $0x250] sm:$0xff]
    %v194 = vld [vmem:[#allocation5 + $0x258] sm:$0xff]
    %v195 = vld [vmem:[#allocation5 + $0x260] sm:$0xff]
    %v196 = vld [vmem:[#allocation5 + $0x268] sm:$0xff]
    %v197 = vld [vmem:[#allocation5 + $0x270] sm:$0xff]
    %v198 = vld [vmem:[#allocation5 + $0x278] sm:$0xff]
    %v199 = vld [vmem:[#allocation5 + $0x280] sm:$0xff]
    %v200 = vld [vmem:[#allocation5 + $0x288] sm:$0xff]
    %v201 = vld [vmem:[#allocation5 + $0x290] sm:$0xff]
    %v202 = vld [vmem:[#allocation5 + $0x298] sm:$0xff]
    %v203 = vld [vmem:[#allocation5 + $0x2a0] sm:$0xff]
    %v204 = vld [vmem:[#allocation5 + $0x2a8] sm:$0xff]
    %v205 = vld [vmem:[#allocation5 + $0x2b0] sm:$0xff]
    %v206 = vld [vmem:[#allocation5 + $0x2b8] sm:$0xff]
    %v207 = vld [vmem:[#allocation5 + $0x2c0] sm:$0xff]
    %v208 = vld [vmem:[#allocation5 + $0x2c8] sm:$0xff]
    %v209 = vld [vmem:[#allocation5 + $0x2d0] sm:$0xff]
    %v210 = vld [vmem:[#allocation5 + $0x2d8] sm:$0xff]
    %v211 = vld [vmem:[#allocation5 + $0x2e0] sm:$0xff]
    %v212 = vld [vmem:[#allocation5 + $0x2e8] sm:$0xff]
    %v213 = vld [vmem:[#allocation5 + $0x2f0] sm:$0xff]
    %v214 = vld [vmem:[#allocation5 + $0x2f8] sm:$0xff]
    %v215 = vld [vmem:[#allocation5 + $0x300] sm:$0xff]
    %v216 = vld [vmem:[#allocation5 + $0x308] sm:$0xff]
    %v217 = vld [vmem:[#allocation5 + $0x310] sm:$0xff]
    %v218 = vld [vmem:[#allocation5 + $0x318] sm:$0xff]
    %v219 = vld [vmem:[#allocation5 + $0x320] sm:$0xff]
    %v220 = vld [vmem:[#allocation5 + $0x328] sm:$0xff]
    %v221 = vld [vmem:[#allocation5 + $0x330] sm:$0xff]
    %v222 = vld [vmem:[#allocation5 + $0x338] sm:$0xff]
    %v223 = vld [vmem:[#allocation5 + $0x340] sm:$0xff]
    %v224 = vld [vmem:[#allocation5 + $0x348] sm:$0xff]
    %v225 = vld [vmem:[#allocation5 + $0x350] sm:$0xff]
    %v226 = vld [vmem:[#allocation5 + $0x358] sm:$0xff]
    %v227 = vld [vmem:[#allocation5 + $0x360] sm:$0xff]
    %v228 = vld [vmem:[#allocation5 + $0x368] sm:$0xff]
    %v229 = vld [vmem:[#allocation5 + $0x370] sm:$0xff]
    %v230 = vld [vmem:[#allocation5 + $0x378] sm:$0xff]
    %v231 = vld [vmem:[#allocation5 + $0x380] sm:$0xff]
    %v232 = vld [vmem:[#allocation5 + $0x388] sm:$0xff]
    %v233 = vld [vmem:[#allocation5 + $0x390] sm:$0xff]
    %v234 = vld [vmem:[#allocation5 + $0x398] sm:$0xff]
    %v235 = vld [vmem:[#allocation5 + $0x3a0] sm:$0xff]
    %v236 = vld [vmem:[#allocation5 + $0x3a8] sm:$0xff]
    %v237 = vld [vmem:[#allocation5 + $0x3b0] sm:$0xff]
    %v238 = vld [vmem:[#allocation5 + $0x3b8] sm:$0xff]
    %v239 = vld [vmem:[#allocation5 + $0x3c0] sm:$0xff]
    %v240 = vld [vmem:[#allocation5 + $0x3c8] sm:$0xff]
    %v241 = vld [vmem:[#allocation5 + $0x3d0] sm:$0xff]
    %v242 = vld [vmem:[#allocation5 + $0x3d8] sm:$0xff]
    %v243 = vld [vmem:[#allocation5 + $0x3e0] sm:$0xff]
    %v244 = vld [vmem:[#allocation5 + $0x3e8] sm:$0xff]
    %v245 = vld [vmem:[#allocation5 + $0x3f0] sm:$0xff]
    %v246 = vld [vmem:[#allocation5 + $0x3f8] sm:$0xff]
    %v247 = vld [vmem:[#allocation5 + $0x400] sm:$0xff]
    %v248 = vld [vmem:[#allocation5 + $0x408] sm:$0xff]
    %v249 = vld [vmem:[#allocation5 + $0x410] sm:$0xff]
    %v250 = vld [vmem:[#allocation5 + $0x418] sm:$0xff]
    %v251 = vld [vmem:[#allocation5 + $0x420] sm:$0xff]
    %v252 = vld [vmem:[#allocation5 + $0x428] sm:$0xff]
    %v253 = vld [vmem:[#allocation5 + $0x430] sm:$0xff]
    %v254 = vld [vmem:[#allocation5 + $0x438] sm:$0xff]
    %v255 = vld [vmem:[#allocation5 + $0x440] sm:$0xff]
    %v256 = vld [vmem:[#allocation5 + $0x448] sm:$0xff]
    %v257 = vld [vmem:[#allocation5 + $0x450] sm:$0xff]
    %v258 = vld [vmem:[#allocation5 + $0x458] sm:$0xff]
    %v259 = vld [vmem:[#allocation5 + $0x460] sm:$0xff]
    %v260 = vld [vmem:[#allocation5 + $0x468] sm:$0xff]
    %v261 = vld [vmem:[#allocation5 + $0x470] sm:$0xff]
    %v262 = vld [vmem:[#allocation5 + $0x478] sm:$0xff]
    %v263 = vld [vmem:[#allocation5 + $0x480] sm:$0xff]
    %v264 = vld [vmem:[#allocation5 + $0x488] sm:$0xff]
    %v265 = vld [vmem:[#allocation5 + $0x490] sm:$0xff]
    %v266 = vld [vmem:[#allocation5 + $0x498] sm:$0xff]
    %v267 = vld [vmem:[#allocation5 + $0x4a0] sm:$0xff]
    %v268 = vld [vmem:[#allocation5 + $0x4a8] sm:$0xff]
    %v269 = vld [vmem:[#allocation5 + $0x4b0] sm:$0xff]
    %v270 = vld [vmem:[#allocation5 + $0x4b8] sm:$0xff]
    %v271 = vld [vmem:[#allocation5 + $0x4c0] sm:$0xff]
    %v272 = vld [vmem:[#allocation5 + $0x4c8] sm:$0xff]
    %v273 = vld [vmem:[#allocation5 + $0x4d0] sm:$0xff]
    %v274 = vld [vmem:[#allocation5 + $0x4d8] sm:$0xff]
    %v275 = vld [vmem:[#allocation5 + $0x4e0] sm:$0xff]
    %v276 = vld [vmem:[#allocation5 + $0x4e8] sm:$0xff]
    %v277 = vld [vmem:[#allocation5 + $0x4f0] sm:$0xff]
    %v278 = vld [vmem:[#allocation5 + $0x4f8] sm:$0xff]
    %v279 = vld [vmem:[#allocation5 + $0x500] sm:$0xff]
    %v280 = vld [vmem:[#allocation5 + $0x508] sm:$0xff]
    %v281 = vld [vmem:[#allocation5 + $0x510] sm:$0xff]
    %v282 = vld [vmem:[#allocation5 + $0x518] sm:$0xff]
    %v283 = vld [vmem:[#allocation5 + $0x520] sm:$0xff]
    %v284 = vld [vmem:[#allocation5 + $0x528] sm:$0xff]
    %v285 = vld [vmem:[#allocation5 + $0x530] sm:$0xff]
    %v286 = vld [vmem:[#allocation5 + $0x538] sm:$0xff]
    %v287 = vld [vmem:[#allocation5 + $0x540] sm:$0xff]
    %v288 = vld [vmem:[#allocation5 + $0x548] sm:$0xff]
    %v289 = vld [vmem:[#allocation5 + $0x550] sm:$0xff]
    %v290 = vld [vmem:[#allocation5 + $0x558] sm:$0xff]
    %v291 = vld [vmem:[#allocation5 + $0x560] sm:$0xff]
    %v292 = vld [vmem:[#allocation5 + $0x568] sm:$0xff]
    %v293 = vld [vmem:[#allocation5 + $0x570] sm:$0xff]
    %v294 = vld [vmem:[#allocation5 + $0x578] sm:$0xff]
    %v295 = vld [vmem:[#allocation5 + $0x580] sm:$0xff]
    %v296 = vld [vmem:[#allocation5 + $0x588] sm:$0xff]
    %v297 = vld [vmem:[#allocation5 + $0x590] sm:$0xff]
    %v298 = vld [vmem:[#allocation5 + $0x598] sm:$0xff]
    %v299 = vld [vmem:[#allocation5 + $0x5a0] sm:$0xff]
    %v300 = vld [vmem:[#allocation5 + $0x5a8] sm:$0xff]
    %v301 = vld [vmem:[#allocation5 + $0x5b0] sm:$0xff]
    %v302 = vld [vmem:[#allocation5 + $0x5b8] sm:$0xff]
    %v303 = vld [vmem:[#allocation5 + $0x5c0] sm:$0xff]
    %v304 = vld [vmem:[#allocation5 + $0x5c8] sm:$0xff]
    %v305 = vld [vmem:[#allocation5 + $0x5d0] sm:$0xff]
    %v306 = vld [vmem:[#allocation5 + $0x5d8] sm:$0xff]
    %v307 = vld [vmem:[#allocation5 + $0x5e0] sm:$0xff]
    %v308 = vld [vmem:[#allocation5 + $0x5e8] sm:$0xff]
    %v309 = vld [vmem:[#allocation5 + $0x5f0] sm:$0xff]
    %v310 = vld [vmem:[#allocation5 + $0x5f8] sm:$0xff]
    %v311 = vld [vmem:[#allocation5 + $0x600] sm:$0xff]
    %v312 = vld [vmem:[#allocation5 + $0x608] sm:$0xff]
    %v313 = vld [vmem:[#allocation5 + $0x610] sm:$0xff]
    %v314 = vld [vmem:[#allocation5 + $0x618] sm:$0xff]
    %v315 = vld [vmem:[#allocation5 + $0x620] sm:$0xff]
    %v316 = vld [vmem:[#allocation5 + $0x628] sm:$0xff]
    %v317 = vld [vmem:[#allocation5 + $0x630] sm:$0xff]
    %v318 = vld [vmem:[#allocation5 + $0x638] sm:$0xff]
    %v319 = vld [vmem:[#allocation5 + $0x640] sm:$0xff]
    %v320 = vld [vmem:[#allocation5 + $0x648] sm:$0xff]
    %v321 = vld [vmem:[#allocation5 + $0x650] sm:$0xff]
    %v322 = vld [vmem:[#allocation5 + $0x658] sm:$0xff]
    %v323 = vld [vmem:[#allocation5 + $0x660] sm:$0xff]
    %v324 = vld [vmem:[#allocation5 + $0x668] sm:$0xff]
    %v325 = vld [vmem:[#allocation5 + $0x670] sm:$0xff]
    %v326 = vld [vmem:[#allocation5 + $0x678] sm:$0xff]
    %v327 = vld [vmem:[#allocation5 + $0x680] sm:$0xff]
    %v328 = vld [vmem:[#allocation5 + $0x688] sm:$0xff]
    %v329 = vld [vmem:[#allocation5 + $0x690] sm:$0xff]
    %v330 = vld [vmem:[#allocation5 + $0x698] sm:$0xff]
    %v331 = vld [vmem:[#allocation5 + $0x6a0] sm:$0xff]
    %v332 = vld [vmem:[#allocation5 + $0x6a8] sm:$0xff]
    %v333 = vld [vmem:[#allocation5 + $0x6b0] sm:$0xff]
    %v334 = vld [vmem:[#allocation5 + $0x6b8] sm:$0xff]
    %v335 = vld [vmem:[#allocation5 + $0x6c0] sm:$0xff]
    %v336 = vld [vmem:[#allocation5 + $0x6c8] sm:$0xff]
    %v337 = vld [vmem:[#allocation5 + $0x6d0] sm:$0xff]
    %v338 = vld [vmem:[#allocation5 + $0x6d8] sm:$0xff]
    %v339 = vld [vmem:[#allocation5 + $0x6e0] sm:$0xff]
    %v340 = vld [vmem:[#allocation5 + $0x6e8] sm:$0xff]
    %v341 = vld [vmem:[#allocation5 + $0x6f0] sm:$0xff]
    %v342 = vld [vmem:[#allocation5 + $0x6f8] sm:$0xff]
    %v343 = vld [vmem:[#allocation5 + $0x700] sm:$0xff]
    %v344 = vld [vmem:[#allocation5 + $0x708] sm:$0xff]
    %v345 = vld [vmem:[#allocation5 + $0x710] sm:$0xff]
    %v346 = vld [vmem:[#allocation5 + $0x718] sm:$0xff]
    %v347 = vld [vmem:[#allocation5 + $0x720] sm:$0xff]
    %v348 = vld [vmem:[#allocation5 + $0x728] sm:$0xff]
    %v349 = vld [vmem:[#allocation5 + $0x730] sm:$0xff]
    %v350 = vld [vmem:[#allocation5 + $0x738] sm:$0xff]
    %v351 = vld [vmem:[#allocation5 + $0x740] sm:$0xff]
    %v352 = vld [vmem:[#allocation5 + $0x748] sm:$0xff]
    %v353 = vld [vmem:[#allocation5 + $0x750] sm:$0xff]
    %v354 = vld [vmem:[#allocation5 + $0x758] sm:$0xff]
    %v355 = vld [vmem:[#allocation5 + $0x760] sm:$0xff]
    %v356 = vld [vmem:[#allocation5 + $0x768] sm:$0xff]
    %v357 = vld [vmem:[#allocation5 + $0x770] sm:$0xff]
    %v358 = vld [vmem:[#allocation5 + $0x778] sm:$0xff]
    %v359 = vld [vmem:[#allocation5 + $0x780] sm:$0xff]
    %v360 = vld [vmem:[#allocation5 + $0x788] sm:$0xff]
    %v361 = vld [vmem:[#allocation5 + $0x790] sm:$0xff]
    %v362 = vld [vmem:[#allocation5 + $0x798] sm:$0xff]
    %v363 = vld [vmem:[#allocation5 + $0x7a0] sm:$0xff]
    %v364 = vld [vmem:[#allocation5 + $0x7a8] sm:$0xff]
    %v365 = vld [vmem:[#allocation5 + $0x7b0] sm:$0xff]
    %v366 = vld [vmem:[#allocation5 + $0x7b8] sm:$0xff]
    %v367 = vld [vmem:[#allocation5 + $0x7c0] sm:$0xff]
    %v368 = vld [vmem:[#allocation5 + $0x7c8] sm:$0xff]
    %v369 = vld [vmem:[#allocation5 + $0x7d0] sm:$0xff]
    %v370 = vld [vmem:[#allocation5 + $0x7d8] sm:$0xff]
    %v371 = vld [vmem:[#allocation5 + $0x7e0] sm:$0xff]
    %v372 = vld [vmem:[#allocation5 + $0x7e8] sm:$0xff]
    %v373 = vld [vmem:[#allocation5 + $0x7f0] sm:$0xff]
    %v374 = vld [vmem:[#allocation5 + $0x7f8] sm:$0xff]
    %v375 = vld [vmem:[#allocation5 + $0x800] sm:$0xff]
    %v376 = vld [vmem:[#allocation5 + $0x808] sm:$0xff]
    %v377 = vld [vmem:[#allocation5 + $0x810] sm:$0xff]
    %v378 = vld [vmem:[#allocation5 + $0x818] sm:$0xff]
    %v379 = vld [vmem:[#allocation5 + $0x820] sm:$0xff]
    %v380 = vld [vmem:[#allocation5 + $0x828] sm:$0xff]
    %v381 = vld [vmem:[#allocation5 + $0x830] sm:$0xff]
    %v382 = vld [vmem:[#allocation5 + $0x838] sm:$0xff]
    %v383 = vld [vmem:[#allocation5 + $0x840] sm:$0xff]
    %v384 = vld [vmem:[#allocation5 + $0x848] sm:$0xff]
    %v385 = vld [vmem:[#allocation5 + $0x850] sm:$0xff]
    %v386 = vld [vmem:[#allocation5 + $0x858] sm:$0xff]
    %v387 = vld [vmem:[#allocation5 + $0x860] sm:$0xff]
    %v388 = vld [vmem:[#allocation5 + $0x868] sm:$0xff]
    %v389 = vld [vmem:[#allocation5 + $0x870] sm:$0xff]
    %v390 = vld [vmem:[#allocation5 + $0x878] sm:$0xff]
    %v391 = vld [vmem:[#allocation5 + $0x880] sm:$0xff]
    %v392 = vld [vmem:[#allocation5 + $0x888] sm:$0xff]
    %v393 = vld [vmem:[#allocation5 + $0x890] sm:$0xff]
    %v394 = vld [vmem:[#allocation5 + $0x898] sm:$0xff]
    %v395 = vld [vmem:[#allocation5 + $0x8a0] sm:$0xff]
    %v396 = vld [vmem:[#allocation5 + $0x8a8] sm:$0xff]
    %v397 = vld [vmem:[#allocation5 + $0x8b0] sm:$0xff]
    %v398 = vld [vmem:[#allocation5 + $0x8b8] sm:$0xff]
    %v399 = vld [vmem:[#allocation5 + $0x8c0] sm:$0xff]
    %v400 = vld [vmem:[#allocation5 + $0x8c8] sm:$0xff]
    %v401 = vld [vmem:[#allocation5 + $0x8d0] sm:$0xff]
    %v402 = vld [vmem:[#allocation5 + $0x8d8] sm:$0xff]
    %v403 = vld [vmem:[#allocation5 + $0x8e0] sm:$0xff]
    %v404 = vld [vmem:[#allocation5 + $0x8e8] sm:$0xff]
    %v405 = vld [vmem:[#allocation5 + $0x8f0] sm:$0xff]
    %v406 = vld [vmem:[#allocation5 + $0x8f8] sm:$0xff]
    %v407 = vld [vmem:[#allocation5 + $0x900] sm:$0xff]
    %v408 = vld [vmem:[#allocation5 + $0x908] sm:$0xff]
    %v409 = vld [vmem:[#allocation5 + $0x910] sm:$0xff]
    %v410 = vld [vmem:[#allocation5 + $0x918] sm:$0xff]
    %v411 = vld [vmem:[#allocation5 + $0x920] sm:$0xff]
    %v412 = vld [vmem:[#allocation5 + $0x928] sm:$0xff]
    %v413 = vld [vmem:[#allocation5 + $0x930] sm:$0xff]
    %v414 = vld [vmem:[#allocation5 + $0x938] sm:$0xff]
    %v415 = vld [vmem:[#allocation5 + $0x940] sm:$0xff]
    %v416 = vld [vmem:[#allocation5 + $0x948] sm:$0xff]
    %v417 = vld [vmem:[#allocation5 + $0x950] sm:$0xff]
    %v418 = vld [vmem:[#allocation5 + $0x958] sm:$0xff]
    %v419 = vld [vmem:[#allocation5 + $0x960] sm:$0xff]
    %v420 = vld [vmem:[#allocation5 + $0x968] sm:$0xff]
    %v421 = vld [vmem:[#allocation5 + $0x970] sm:$0xff]
    %v422 = vld [vmem:[#allocation5 + $0x978] sm:$0xff]
    %v423 = vld [vmem:[#allocation5 + $0x980] sm:$0xff]
    %v424 = vld [vmem:[#allocation5 + $0x988] sm:$0xff]
    %v425 = vld [vmem:[#allocation5 + $0x990] sm:$0xff]
    %v426 = vld [vmem:[#allocation5 + $0x998] sm:$0xff]
    %v427 = vld [vmem:[#allocation5 + $0x9a0] sm:$0xff]
    %v428 = vld [vmem:[#allocation5 + $0x9a8] sm:$0xff]
    %v429 = vld [vmem:[#allocation5 + $0x9b0] sm:$0xff]
    %v430 = vld [vmem:[#allocation5 + $0x9b8] sm:$0xff]
    %v431 = vld [vmem:[#allocation5 + $0x9c0] sm:$0xff]
    %v432 = vld [vmem:[#allocation5 + $0x9c8] sm:$0xff]
    %v433 = vld [vmem:[#allocation5 + $0x9d0] sm:$0xff]
    %v434 = vld [vmem:[#allocation5 + $0x9d8] sm:$0xff]
    %v435 = vld [vmem:[#allocation5 + $0x9e0] sm:$0xff]
    %v436 = vld [vmem:[#allocation5 + $0x9e8] sm:$0xff]
    %v437 = vld [vmem:[#allocation5 + $0x9f0] sm:$0xff]
    %v438 = vld [vmem:[#allocation5 + $0x9f8] sm:$0xff]
    %v439 = vld [vmem:[#allocation5 + $0xa00] sm:$0xff]
    %v440 = vld [vmem:[#allocation5 + $0xa08] sm:$0xff]
    %v441 = vld [vmem:[#allocation5 + $0xa10] sm:$0xff]
    %v442 = vld [vmem:[#allocation5 + $0xa18] sm:$0xff]
    %v443 = vld [vmem:[#allocation5 + $0xa20] sm:$0xff]
    %v444 = vld [vmem:[#allocation5 + $0xa28] sm:$0xff]
    %v445 = vld [vmem:[#allocation5 + $0xa30] sm:$0xff]
    %v446 = vld [vmem:[#allocation5 + $0xa38] sm:$0xff]
    %v447 = vld [vmem:[#allocation5 + $0xa40] sm:$0xff]
    %v448 = vld [vmem:[#allocation5 + $0xa48] sm:$0xff]
    %v449 = vld [vmem:[#allocation5 + $0xa50] sm:$0xff]
    %v450 = vld [vmem:[#allocation5 + $0xa58] sm:$0xff]
    %v451 = vld [vmem:[#allocation5 + $0xa60] sm:$0xff]
    %v452 = vld [vmem:[#allocation5 + $0xa68] sm:$0xff]
    %v453 = vld [vmem:[#allocation5 + $0xa70] sm:$0xff]
    %v454 = vld [vmem:[#allocation5 + $0xa78] sm:$0xff]
    %v455 = vld [vmem:[#allocation5 + $0xa80] sm:$0xff]
    %v456 = vld [vmem:[#allocation5 + $0xa88] sm:$0xff]
    %v457 = vld [vmem:[#allocation5 + $0xa90] sm:$0xff]
    %v458 = vld [vmem:[#allocation5 + $0xa98] sm:$0xff]
    %v459 = vld [vmem:[#allocation5 + $0xaa0] sm:$0xff]
    %v460 = vld [vmem:[#allocation5 + $0xaa8] sm:$0xff]
    %v461 = vld [vmem:[#allocation5 + $0xab0] sm:$0xff]
    %v462 = vld [vmem:[#allocation5 + $0xab8] sm:$0xff]
    %v463 = vld [vmem:[#allocation5 + $0xac0] sm:$0xff]
    %v464 = vld [vmem:[#allocation5 + $0xac8] sm:$0xff]
    %v465 = vld [vmem:[#allocation5 + $0xad0] sm:$0xff]
    %v466 = vld [vmem:[#allocation5 + $0xad8] sm:$0xff]
    %v467 = vld [vmem:[#allocation5 + $0xae0] sm:$0xff]
    %v468 = vld [vmem:[#allocation5 + $0xae8] sm:$0xff]
    %v469 = vld [vmem:[#allocation5 + $0xaf0] sm:$0xff]
    %v470 = vld [vmem:[#allocation5 + $0xaf8] sm:$0xff]
    %v471 = vld [vmem:[#allocation5 + $0xb00] sm:$0xff]
    %v472 = vld [vmem:[#allocation5 + $0xb08] sm:$0xff]
    %v473 = vld [vmem:[#allocation5 + $0xb10] sm:$0xff]
    %v474 = vld [vmem:[#allocation5 + $0xb18] sm:$0xff]
    %v475 = vld [vmem:[#allocation5 + $0xb20] sm:$0xff]
    %v476 = vld [vmem:[#allocation5 + $0xb28] sm:$0xff]
    %v477 = vld [vmem:[#allocation5 + $0xb30] sm:$0xff]
    %v478 = vld [vmem:[#allocation5 + $0xb38] sm:$0xff]
    %v479 = vld [vmem:[#allocation5 + $0xb40] sm:$0xff]
    %v480 = vld [vmem:[#allocation5 + $0xb48] sm:$0xff]
    %v481 = vld [vmem:[#allocation5 + $0xb50] sm:$0xff]
    %v482 = vld [vmem:[#allocation5 + $0xb58] sm:$0xff]
    %v483 = vld [vmem:[#allocation5 + $0xb60] sm:$0xff]
    %v484 = vld [vmem:[#allocation5 + $0xb68] sm:$0xff]
    %v485 = vld [vmem:[#allocation5 + $0xb70] sm:$0xff]
    %v486 = vld [vmem:[#allocation5 + $0xb78] sm:$0xff]
    %v487 = vld [vmem:[#allocation5 + $0xb80] sm:$0xff]
    %v488 = vld [vmem:[#allocation5 + $0xb88] sm:$0xff]
    %v489 = vld [vmem:[#allocation5 + $0xb90] sm:$0xff]
    %v490 = vld [vmem:[#allocation5 + $0xb98] sm:$0xff]
    %v491 = vld [vmem:[#allocation5 + $0xba0] sm:$0xff]
    %v492 = vld [vmem:[#allocation5 + $0xba8] sm:$0xff]
    %v493 = vld [vmem:[#allocation5 + $0xbb0] sm:$0xff]
    %v494 = vld [vmem:[#allocation5 + $0xbb8] sm:$0xff]
    %v495 = vld [vmem:[#allocation5 + $0xbc0] sm:$0xff]
    %v496 = vld [vmem:[#allocation5 + $0xbc8] sm:$0xff]
    %v497 = vld [vmem:[#allocation5 + $0xbd0] sm:$0xff]
    %v498 = vld [vmem:[#allocation5 + $0xbd8] sm:$0xff]
    %v499 = vld [vmem:[#allocation5 + $0xbe0] sm:$0xff]
    %v500 = vld [vmem:[#allocation5 + $0xbe8] sm:$0xff]
    %v501 = vld [vmem:[#allocation5 + $0xbf0] sm:$0xff]
    %v502 = vld [vmem:[#allocation5 + $0xbf8] sm:$0xff]
    %v503 = vld [vmem:[#allocation5 + $0xc00] sm:$0xff]
    %v504 = vld [vmem:[#allocation5 + $0xc08] sm:$0xff]
    %v505 = vld [vmem:[#allocation5 + $0xc10] sm:$0xff]
    %v506 = vld [vmem:[#allocation5 + $0xc18] sm:$0xff]
    %v507 = vld [vmem:[#allocation5 + $0xc20] sm:$0xff]
    %v508 = vld [vmem:[#allocation5 + $0xc28] sm:$0xff]
    %v509 = vld [vmem:[#allocation5 + $0xc30] sm:$0xff]
    %v510 = vld [vmem:[#allocation5 + $0xc38] sm:$0xff]
    %v511 = vld [vmem:[#allocation5 + $0xc40] sm:$0xff]
    %v512 = vld [vmem:[#allocation5 + $0xc48] sm:$0xff]
    %v513 = vld [vmem:[#allocation5 + $0xc50] sm:$0xff]
    %v514 = vld [vmem:[#allocation5 + $0xc58] sm:$0xff]
    %v515 = vld [vmem:[#allocation5 + $0xc60] sm:$0xff]
    %v516 = vld [vmem:[#allocation5 + $0xc68] sm:$0xff]
    %v517 = vld [vmem:[#allocation5 + $0xc70] sm:$0xff]
    %v518 = vld [vmem:[#allocation5 + $0xc78] sm:$0xff]
    %v519 = vld [vmem:[#allocation5 + $0xc80] sm:$0xff]
    %v520 = vld [vmem:[#allocation5 + $0xc88] sm:$0xff]
    %v521 = vld [vmem:[#allocation5 + $0xc90] sm:$0xff]
    %v522 = vld [vmem:[#allocation5 + $0xc98] sm:$0xff]
    %v523 = vld [vmem:[#allocation5 + $0xca0] sm:$0xff]
    %v524 = vld [vmem:[#allocation5 + $0xca8] sm:$0xff]
    %v525 = vld [vmem:[#allocation5 + $0xcb0] sm:$0xff]
    %v526 = vld [vmem:[#allocation5 + $0xcb8] sm:$0xff]
    %v527 = vld [vmem:[#allocation5 + $0xcc0] sm:$0xff]
    %v528 = vld [vmem:[#allocation5 + $0xcc8] sm:$0xff]
    %v529 = vld [vmem:[#allocation5 + $0xcd0] sm:$0xff]
    %v530 = vld [vmem:[#allocation5 + $0xcd8] sm:$0xff]
    %v531 = vld [vmem:[#allocation5 + $0xce0] sm:$0xff]
    %v532 = vld [vmem:[#allocation5 + $0xce8] sm:$0xff]
    %v533 = vld [vmem:[#allocation5 + $0xcf0] sm:$0xff]
    %v534 = vld [vmem:[#allocation5 + $0xcf8] sm:$0xff]
    %v535 = vld [vmem:[#allocation5 + $0xd00] sm:$0xff]
    %v536 = vld [vmem:[#allocation5 + $0xd08] sm:$0xff]
    %v537 = vld [vmem:[#allocation5 + $0xd10] sm:$0xff]
    %v538 = vld [vmem:[#allocation5 + $0xd18] sm:$0xff]
    %v539 = vld [vmem:[#allocation5 + $0xd20] sm:$0xff]
    %v540 = vld [vmem:[#allocation5 + $0xd28] sm:$0xff]
    %v541 = vld [vmem:[#allocation5 + $0xd30] sm:$0xff]
    %v542 = vld [vmem:[#allocation5 + $0xd38] sm:$0xff]
    %v543 = vld [vmem:[#allocation5 + $0xd40] sm:$0xff]
    %v544 = vld [vmem:[#allocation5 + $0xd48] sm:$0xff]
    %v545 = vld [vmem:[#allocation5 + $0xd50] sm:$0xff]
    %v546 = vld [vmem:[#allocation5 + $0xd58] sm:$0xff]
    %v547 = vld [vmem:[#allocation5 + $0xd60] sm:$0xff]
    %v548 = vld [vmem:[#allocation5 + $0xd68] sm:$0xff]
    %v549 = vld [vmem:[#allocation5 + $0xd70] sm:$0xff]
    %v550 = vld [vmem:[#allocation5 + $0xd78] sm:$0xff]
    %v551 = vld [vmem:[#allocation5 + $0xd80] sm:$0xff]
    %v552 = vld [vmem:[#allocation5 + $0xd88] sm:$0xff]
    %v553 = vld [vmem:[#allocation5 + $0xd90] sm:$0xff]
    %v554 = vld [vmem:[#allocation5 + $0xd98] sm:$0xff]
    %v555 = vld [vmem:[#allocation5 + $0xda0] sm:$0xff]
    %v556 = vld [vmem:[#allocation5 + $0xda8] sm:$0xff]
    %v557 = vld [vmem:[#allocation5 + $0xdb0] sm:$0xff]
    %v558 = vld [vmem:[#allocation5 + $0xdb8] sm:$0xff]
    %v559 = vld [vmem:[#allocation5 + $0xdc0] sm:$0xff]
    %v560 = vld [vmem:[#allocation5 + $0xdc8] sm:$0xff]
    %v561 = vld [vmem:[#allocation5 + $0xdd0] sm:$0xff]
    %v562 = vld [vmem:[#allocation5 + $0xdd8] sm:$0xff]
    %v563 = vld [vmem:[#allocation5 + $0xde0] sm:$0xff]
    %v564 = vld [vmem:[#allocation5 + $0xde8] sm:$0xff]
    %v565 = vld [vmem:[#allocation5 + $0xdf0] sm:$0xff]
    %v566 = vld [vmem:[#allocation5 + $0xdf8] sm:$0xff]
    %v567 = vld [vmem:[#allocation7] sm:$0xff]
    %v569 = vlaneseq
    %v570 = vshrl.u32 %v569, 7
    %v571 = vsub.s32 0, %v570
    %v572 = vrot.slane %v567, %v571
    %v573 = vlaneseq
    %v574 = vshrl.u32 %v573, 7
    %v575 = vsub.s32 1, %v574
    %v576 = vrot.slane %v567, %v575
    %v577 = vlaneseq
    %v578 = vshrl.u32 %v577, 7
    %v579 = vsub.s32 2, %v578
    %v580 = vrot.slane %v567, %v579
    %v581 = vlaneseq
    %v582 = vshrl.u32 %v581, 7
    %v583 = vsub.s32 3, %v582
    %v584 = vrot.slane %v567, %v583
    %v585 = vlaneseq
    %v586 = vshrl.u32 %v585, 7
    %v587 = vsub.s32 4, %v586
    %v588 = vrot.slane %v567, %v587
    %v589 = vlaneseq
    %v590 = vshrl.u32 %v589, 7
    %v591 = vsub.s32 5, %v590
    %v592 = vrot.slane %v567, %v591
    %v593 = vlaneseq
    %v594 = vshrl.u32 %v593, 7
    %v595 = vsub.s32 6, %v594
    %v596 = vrot.slane %v567, %v595
    %v597 = vlaneseq
    %v598 = vshrl.u32 %v597, 7
    %v599 = vsub.s32 7, %v598
    %v600 = vrot.slane %v567, %v599
    %v613 = vunpack.c.l.b16 %v115
    %v614 = vunpack.c.h.b16 %v115
    %v615 = vunpack.c.l.b16 %v116
    %v616 = vunpack.c.h.b16 %v116
    %v617 = vunpack.c.l.b16 %v117
    %v618 = vunpack.c.h.b16 %v117
    %v619 = vunpack.c.l.b16 %v118
    %v620 = vpack.c.b16 %v613, %v613
    %v621 = vpack.c.b16 %v614, %v614
    %v622 = vpack.c.b16 %v615, %v615
    %v623 = vpack.c.b16 %v616, %v616
    %v624 = vpack.c.b16 %v617, %v617
    %v625 = vpack.c.b16 %v618, %v618
    %v626 = vpack.c.b16 %v619, %v619
    %v1082 = vunpack.c.l.b16 %v119
    %v1083 = vunpack.c.h.b16 %v119
    %v1084 = vunpack.c.l.b16 %v120
    %v1085 = vunpack.c.h.b16 %v120
    %v1086 = vunpack.c.l.b16 %v121
    %v1087 = vunpack.c.h.b16 %v121
    %v1088 = vunpack.c.l.b16 %v122
    %v1089 = vunpack.c.h.b16 %v122
    %v1090 = vunpack.c.l.b16 %v123
    %v1091 = vunpack.c.h.b16 %v123
    %v1092 = vunpack.c.l.b16 %v124
    %v1093 = vunpack.c.h.b16 %v124
    %v1094 = vunpack.c.l.b16 %v125
    %v1095 = vunpack.c.h.b16 %v125
    %v1096 = vunpack.c.l.b16 %v126
    %v1097 = vunpack.c.h.b16 %v126
    %v1098 = vunpack.c.l.b16 %v127
    %v1099 = vunpack.c.h.b16 %v127
    %v1100 = vunpack.c.l.b16 %v128
    %v1101 = vunpack.c.h.b16 %v128
    %v1102 = vunpack.c.l.b16 %v129
    %v1103 = vunpack.c.h.b16 %v129
    %v1104 = vunpack.c.l.b16 %v130
    %v1105 = vunpack.c.h.b16 %v130
    %v1106 = vunpack.c.l.b16 %v131
    %v1107 = vunpack.c.h.b16 %v131
    %v1108 = vunpack.c.l.b16 %v132
    %v1109 = vunpack.c.h.b16 %v132
    %v1110 = vunpack.c.l.b16 %v133
    %v1111 = vunpack.c.h.b16 %v133
    %v1112 = vunpack.c.l.b16 %v134
    %v1113 = vunpack.c.h.b16 %v134
    %v1114 = vunpack.c.l.b16 %v135
    %v1115 = vunpack.c.h.b16 %v135
    %v1116 = vunpack.c.l.b16 %v136
    %v1117 = vunpack.c.h.b16 %v136
    %v1118 = vunpack.c.l.b16 %v137
    %v1119 = vunpack.c.h.b16 %v137
    %v1120 = vunpack.c.l.b16 %v138
    %v1121 = vunpack.c.h.b16 %v138
    %v1122 = vunpack.c.l.b16 %v139
    %v1123 = vunpack.c.h.b16 %v139
    %v1124 = vunpack.c.l.b16 %v140
    %v1125 = vunpack.c.h.b16 %v140
    %v1126 = vunpack.c.l.b16 %v141
    %v1127 = vunpack.c.h.b16 %v141
    %v1128 = vunpack.c.l.b16 %v142
    %v1129 = vunpack.c.h.b16 %v142
    %v1130 = vunpack.c.l.b16 %v143
    %v1131 = vunpack.c.h.b16 %v143
    %v1132 = vunpack.c.l.b16 %v144
    %v1133 = vunpack.c.h.b16 %v144
    %v1134 = vunpack.c.l.b16 %v145
    %v1135 = vunpack.c.h.b16 %v145
    %v1136 = vunpack.c.l.b16 %v146
    %v1137 = vunpack.c.h.b16 %v146
    %v1138 = vunpack.c.l.b16 %v147
    %v1139 = vunpack.c.h.b16 %v147
    %v1140 = vunpack.c.l.b16 %v148
    %v1141 = vunpack.c.h.b16 %v148
    %v1142 = vunpack.c.l.b16 %v149
    %v1143 = vunpack.c.h.b16 %v149
    %v1144 = vunpack.c.l.b16 %v150
    %v1145 = vunpack.c.h.b16 %v150
    %v1146 = vunpack.c.l.b16 %v151
    %v1147 = vunpack.c.h.b16 %v151
    %v1148 = vunpack.c.l.b16 %v152
    %v1149 = vunpack.c.h.b16 %v152
    %v1150 = vunpack.c.l.b16 %v153
    %v1151 = vunpack.c.h.b16 %v153
    %v1152 = vunpack.c.l.b16 %v154
    %v1153 = vunpack.c.h.b16 %v154
    %v1154 = vunpack.c.l.b16 %v155
    %v1155 = vunpack.c.h.b16 %v155
    %v1156 = vunpack.c.l.b16 %v156
    %v1157 = vunpack.c.h.b16 %v156
    %v1158 = vunpack.c.l.b16 %v157
    %v1159 = vunpack.c.h.b16 %v157
    %v1160 = vunpack.c.l.b16 %v158
    %v1161 = vunpack.c.h.b16 %v158
    %v1162 = vunpack.c.l.b16 %v159
    %v1163 = vunpack.c.h.b16 %v159
    %v1164 = vunpack.c.l.b16 %v160
    %v1165 = vunpack.c.h.b16 %v160
    %v1166 = vunpack.c.l.b16 %v161
    %v1167 = vunpack.c.h.b16 %v161
    %v1168 = vunpack.c.l.b16 %v162
    %v1169 = vunpack.c.h.b16 %v162
    %v1170 = vunpack.c.l.b16 %v163
    %v1171 = vunpack.c.h.b16 %v163
    %v1172 = vunpack.c.l.b16 %v164
    %v1173 = vunpack.c.h.b16 %v164
    %v1174 = vunpack.c.l.b16 %v165
    %v1175 = vunpack.c.h.b16 %v165
    %v1176 = vunpack.c.l.b16 %v166
    %v1177 = vunpack.c.h.b16 %v166
    %v1178 = vunpack.c.l.b16 %v167
    %v1179 = vunpack.c.h.b16 %v167
    %v1180 = vunpack.c.l.b16 %v168
    %v1181 = vunpack.c.h.b16 %v168
    %v1182 = vunpack.c.l.b16 %v169
    %v1183 = vunpack.c.h.b16 %v169
    %v1184 = vunpack.c.l.b16 %v170
    %v1185 = vunpack.c.h.b16 %v170
    %v1186 = vunpack.c.l.b16 %v171
    %v1187 = vunpack.c.h.b16 %v171
    %v1188 = vunpack.c.l.b16 %v172
    %v1189 = vunpack.c.h.b16 %v172
    %v1190 = vunpack.c.l.b16 %v173
    %v1191 = vunpack.c.h.b16 %v173
    %v1192 = vunpack.c.l.b16 %v174
    %v1193 = vunpack.c.h.b16 %v174
    %v1194 = vunpack.c.l.b16 %v175
    %v1195 = vunpack.c.h.b16 %v175
    %v1196 = vunpack.c.l.b16 %v176
    %v1197 = vunpack.c.h.b16 %v176
    %v1198 = vunpack.c.l.b16 %v177
    %v1199 = vunpack.c.h.b16 %v177
    %v1200 = vunpack.c.l.b16 %v178
    %v1201 = vunpack.c.h.b16 %v178
    %v1202 = vunpack.c.l.b16 %v179
    %v1203 = vunpack.c.h.b16 %v179
    %v1204 = vunpack.c.l.b16 %v180
    %v1205 = vunpack.c.h.b16 %v180
    %v1206 = vunpack.c.l.b16 %v181
    %v1207 = vunpack.c.h.b16 %v181
    %v1208 = vunpack.c.l.b16 %v182
    %v1209 = vunpack.c.h.b16 %v182
    %v1210 = vunpack.c.l.b16 %v183
    %v1211 = vunpack.c.h.b16 %v183
    %v1212 = vunpack.c.l.b16 %v184
    %v1213 = vunpack.c.h.b16 %v184
    %v1214 = vunpack.c.l.b16 %v185
    %v1215 = vunpack.c.h.b16 %v185
    %v1216 = vunpack.c.l.b16 %v186
    %v1217 = vunpack.c.h.b16 %v186
    %v1218 = vunpack.c.l.b16 %v187
    %v1219 = vunpack.c.h.b16 %v187
    %v1220 = vunpack.c.l.b16 %v188
    %v1221 = vunpack.c.h.b16 %v188
    %v1222 = vunpack.c.l.b16 %v189
    %v1223 = vunpack.c.h.b16 %v189
    %v1224 = vunpack.c.l.b16 %v190
    %v1225 = vunpack.c.h.b16 %v190
    %v1226 = vunpack.c.l.b16 %v191
    %v1227 = vunpack.c.h.b16 %v191
    %v1228 = vunpack.c.l.b16 %v192
    %v1229 = vunpack.c.h.b16 %v192
    %v1230 = vunpack.c.l.b16 %v193
    %v1231 = vunpack.c.h.b16 %v193
    %v1232 = vunpack.c.l.b16 %v194
    %v1233 = vunpack.c.h.b16 %v194
    %v1234 = vunpack.c.l.b16 %v195
    %v1235 = vunpack.c.h.b16 %v195
    %v1236 = vunpack.c.l.b16 %v196
    %v1237 = vunpack.c.h.b16 %v196
    %v1238 = vunpack.c.l.b16 %v197
    %v1239 = vunpack.c.h.b16 %v197
    %v1240 = vunpack.c.l.b16 %v198
    %v1241 = vunpack.c.h.b16 %v198
    %v1242 = vunpack.c.l.b16 %v199
    %v1243 = vunpack.c.h.b16 %v199
    %v1244 = vunpack.c.l.b16 %v200
    %v1245 = vunpack.c.h.b16 %v200
    %v1246 = vunpack.c.l.b16 %v201
    %v1247 = vunpack.c.h.b16 %v201
    %v1248 = vunpack.c.l.b16 %v202
    %v1249 = vunpack.c.h.b16 %v202
    %v1250 = vunpack.c.l.b16 %v203
    %v1251 = vunpack.c.h.b16 %v203
    %v1252 = vunpack.c.l.b16 %v204
    %v1253 = vunpack.c.h.b16 %v204
    %v1254 = vunpack.c.l.b16 %v205
    %v1255 = vunpack.c.h.b16 %v205
    %v1256 = vunpack.c.l.b16 %v206
    %v1257 = vunpack.c.h.b16 %v206
    %v1258 = vunpack.c.l.b16 %v207
    %v1259 = vunpack.c.h.b16 %v207
    %v1260 = vunpack.c.l.b16 %v208
    %v1261 = vunpack.c.h.b16 %v208
    %v1262 = vunpack.c.l.b16 %v209
    %v1263 = vunpack.c.h.b16 %v209
    %v1264 = vunpack.c.l.b16 %v210
    %v1265 = vunpack.c.h.b16 %v210
    %v1266 = vunpack.c.l.b16 %v211
    %v1267 = vunpack.c.h.b16 %v211
    %v1268 = vunpack.c.l.b16 %v212
    %v1269 = vunpack.c.h.b16 %v212
    %v1270 = vunpack.c.l.b16 %v213
    %v1271 = vunpack.c.h.b16 %v213
    %v1272 = vunpack.c.l.b16 %v214
    %v1273 = vunpack.c.h.b16 %v214
    %v1274 = vunpack.c.l.b16 %v215
    %v1275 = vunpack.c.h.b16 %v215
    %v1276 = vunpack.c.l.b16 %v216
    %v1277 = vunpack.c.h.b16 %v216
    %v1278 = vunpack.c.l.b16 %v217
    %v1279 = vunpack.c.h.b16 %v217
    %v1280 = vunpack.c.l.b16 %v218
    %v1281 = vunpack.c.h.b16 %v218
    %v1282 = vunpack.c.l.b16 %v219
    %v1283 = vunpack.c.h.b16 %v219
    %v1284 = vunpack.c.l.b16 %v220
    %v1285 = vunpack.c.h.b16 %v220
    %v1286 = vunpack.c.l.b16 %v221
    %v1287 = vunpack.c.h.b16 %v221
    %v1288 = vunpack.c.l.b16 %v222
    %v1289 = vunpack.c.h.b16 %v222
    %v1290 = vunpack.c.l.b16 %v223
    %v1291 = vunpack.c.h.b16 %v223
    %v1292 = vunpack.c.l.b16 %v224
    %v1293 = vunpack.c.h.b16 %v224
    %v1294 = vunpack.c.l.b16 %v225
    %v1295 = vunpack.c.h.b16 %v225
    %v1296 = vunpack.c.l.b16 %v226
    %v1297 = vunpack.c.h.b16 %v226
    %v1298 = vunpack.c.l.b16 %v227
    %v1299 = vunpack.c.h.b16 %v227
    %v1300 = vunpack.c.l.b16 %v228
    %v1301 = vunpack.c.h.b16 %v228
    %v1302 = vunpack.c.l.b16 %v229
    %v1303 = vunpack.c.h.b16 %v229
    %v1304 = vunpack.c.l.b16 %v230
    %v1305 = vunpack.c.h.b16 %v230
    %v1306 = vunpack.c.l.b16 %v231
    %v1307 = vunpack.c.h.b16 %v231
    %v1308 = vunpack.c.l.b16 %v232
    %v1309 = vunpack.c.h.b16 %v232
    %v1310 = vunpack.c.l.b16 %v233
    %v1311 = vunpack.c.h.b16 %v233
    %v1312 = vunpack.c.l.b16 %v234
    %v1313 = vunpack.c.h.b16 %v234
    %v1314 = vunpack.c.l.b16 %v235
    %v1315 = vunpack.c.h.b16 %v235
    %v1316 = vunpack.c.l.b16 %v236
    %v1317 = vunpack.c.h.b16 %v236
    %v1318 = vunpack.c.l.b16 %v237
    %v1319 = vunpack.c.h.b16 %v237
    %v1320 = vunpack.c.l.b16 %v238
    %v1321 = vunpack.c.h.b16 %v238
    %v1322 = vunpack.c.l.b16 %v239
    %v1323 = vunpack.c.h.b16 %v239
    %v1324 = vunpack.c.l.b16 %v240
    %v1325 = vunpack.c.h.b16 %v240
    %v1326 = vunpack.c.l.b16 %v241
    %v1327 = vunpack.c.h.b16 %v241
    %v1328 = vunpack.c.l.b16 %v242
    %v1329 = vunpack.c.h.b16 %v242
    %v1330 = vunpack.c.l.b16 %v243
    %v1331 = vunpack.c.h.b16 %v243
    %v1332 = vunpack.c.l.b16 %v244
    %v1333 = vunpack.c.h.b16 %v244
    %v1334 = vunpack.c.l.b16 %v245
    %v1335 = vunpack.c.h.b16 %v245
    %v1336 = vunpack.c.l.b16 %v246
    %v1337 = vunpack.c.h.b16 %v246
    %v1338 = vunpack.c.l.b16 %v247
    %v1339 = vunpack.c.h.b16 %v247
    %v1340 = vunpack.c.l.b16 %v248
    %v1341 = vunpack.c.h.b16 %v248
    %v1342 = vunpack.c.l.b16 %v249
    %v1343 = vunpack.c.h.b16 %v249
    %v1344 = vunpack.c.l.b16 %v250
    %v1345 = vunpack.c.h.b16 %v250
    %v1346 = vunpack.c.l.b16 %v251
    %v1347 = vunpack.c.h.b16 %v251
    %v1348 = vunpack.c.l.b16 %v252
    %v1349 = vunpack.c.h.b16 %v252
    %v1350 = vunpack.c.l.b16 %v253
    %v1351 = vunpack.c.h.b16 %v253
    %v1352 = vunpack.c.l.b16 %v254
    %v1353 = vunpack.c.h.b16 %v254
    %v1354 = vunpack.c.l.b16 %v255
    %v1355 = vunpack.c.h.b16 %v255
    %v1356 = vunpack.c.l.b16 %v256
    %v1357 = vunpack.c.h.b16 %v256
    %v1358 = vunpack.c.l.b16 %v257
    %v1359 = vunpack.c.h.b16 %v257
    %v1360 = vunpack.c.l.b16 %v258
    %v1361 = vunpack.c.h.b16 %v258
    %v1362 = vunpack.c.l.b16 %v259
    %v1363 = vunpack.c.h.b16 %v259
    %v1364 = vunpack.c.l.b16 %v260
    %v1365 = vunpack.c.h.b16 %v260
    %v1366 = vunpack.c.l.b16 %v261
    %v1367 = vunpack.c.h.b16 %v261
    %v1368 = vunpack.c.l.b16 %v262
    %v1369 = vunpack.c.h.b16 %v262
    %v1370 = vunpack.c.l.b16 %v263
    %v1371 = vunpack.c.h.b16 %v263
    %v1372 = vunpack.c.l.b16 %v264
    %v1373 = vunpack.c.h.b16 %v264
    %v1374 = vunpack.c.l.b16 %v265
    %v1375 = vunpack.c.h.b16 %v265
    %v1376 = vunpack.c.l.b16 %v266
    %v1377 = vunpack.c.h.b16 %v266
    %v1378 = vunpack.c.l.b16 %v267
    %v1379 = vunpack.c.h.b16 %v267
    %v1380 = vunpack.c.l.b16 %v268
    %v1381 = vunpack.c.h.b16 %v268
    %v1382 = vunpack.c.l.b16 %v269
    %v1383 = vunpack.c.h.b16 %v269
    %v1384 = vunpack.c.l.b16 %v270
    %v1385 = vunpack.c.h.b16 %v270
    %v1386 = vunpack.c.l.b16 %v271
    %v1387 = vunpack.c.h.b16 %v271
    %v1388 = vunpack.c.l.b16 %v272
    %v1389 = vunpack.c.h.b16 %v272
    %v1390 = vunpack.c.l.b16 %v273
    %v1391 = vunpack.c.h.b16 %v273
    %v1392 = vunpack.c.l.b16 %v274
    %v1393 = vunpack.c.h.b16 %v274
    %v1394 = vunpack.c.l.b16 %v275
    %v1395 = vunpack.c.h.b16 %v275
    %v1396 = vunpack.c.l.b16 %v276
    %v1397 = vunpack.c.h.b16 %v276
    %v1398 = vunpack.c.l.b16 %v277
    %v1399 = vunpack.c.h.b16 %v277
    %v1400 = vunpack.c.l.b16 %v278
    %v1401 = vunpack.c.h.b16 %v278
    %v1402 = vunpack.c.l.b16 %v279
    %v1403 = vunpack.c.h.b16 %v279
    %v1404 = vunpack.c.l.b16 %v280
    %v1405 = vunpack.c.h.b16 %v280
    %v1406 = vunpack.c.l.b16 %v281
    %v1407 = vunpack.c.h.b16 %v281
    %v1408 = vunpack.c.l.b16 %v282
    %v1409 = vunpack.c.h.b16 %v282
    %v1410 = vunpack.c.l.b16 %v283
    %v1411 = vunpack.c.h.b16 %v283
    %v1412 = vunpack.c.l.b16 %v284
    %v1413 = vunpack.c.h.b16 %v284
    %v1414 = vunpack.c.l.b16 %v285
    %v1415 = vunpack.c.h.b16 %v285
    %v1416 = vunpack.c.l.b16 %v286
    %v1417 = vunpack.c.h.b16 %v286
    %v1418 = vunpack.c.l.b16 %v287
    %v1419 = vunpack.c.h.b16 %v287
    %v1420 = vunpack.c.l.b16 %v288
    %v1421 = vunpack.c.h.b16 %v288
    %v1422 = vunpack.c.l.b16 %v289
    %v1423 = vunpack.c.h.b16 %v289
    %v1424 = vunpack.c.l.b16 %v290
    %v1425 = vunpack.c.h.b16 %v290
    %v1426 = vunpack.c.l.b16 %v291
    %v1427 = vunpack.c.h.b16 %v291
    %v1428 = vunpack.c.l.b16 %v292
    %v1429 = vunpack.c.h.b16 %v292
    %v1430 = vunpack.c.l.b16 %v293
    %v1431 = vunpack.c.h.b16 %v293
    %v1432 = vunpack.c.l.b16 %v294
    %v1433 = vunpack.c.h.b16 %v294
    %v1434 = vunpack.c.l.b16 %v295
    %v1435 = vunpack.c.h.b16 %v295
    %v1436 = vunpack.c.l.b16 %v296
    %v1437 = vunpack.c.h.b16 %v296
    %v1438 = vunpack.c.l.b16 %v297
    %v1439 = vunpack.c.h.b16 %v297
    %v1440 = vunpack.c.l.b16 %v298
    %v1441 = vunpack.c.h.b16 %v298
    %v1442 = vunpack.c.l.b16 %v299
    %v1443 = vunpack.c.h.b16 %v299
    %v1444 = vunpack.c.l.b16 %v300
    %v1445 = vunpack.c.h.b16 %v300
    %v1446 = vunpack.c.l.b16 %v301
    %v1447 = vunpack.c.h.b16 %v301
    %v1448 = vunpack.c.l.b16 %v302
    %v1449 = vunpack.c.h.b16 %v302
    %v1450 = vunpack.c.l.b16 %v303
    %v1451 = vunpack.c.h.b16 %v303
    %v1452 = vunpack.c.l.b16 %v304
    %v1453 = vunpack.c.h.b16 %v304
    %v1454 = vunpack.c.l.b16 %v305
    %v1455 = vunpack.c.h.b16 %v305
    %v1456 = vunpack.c.l.b16 %v306
    %v1457 = vunpack.c.h.b16 %v306
    %v1458 = vunpack.c.l.b16 %v307
    %v1459 = vunpack.c.h.b16 %v307
    %v1460 = vunpack.c.l.b16 %v308
    %v1461 = vunpack.c.h.b16 %v308
    %v1462 = vunpack.c.l.b16 %v309
    %v1463 = vunpack.c.h.b16 %v309
    %v1464 = vunpack.c.l.b16 %v310
    %v1465 = vunpack.c.h.b16 %v310
    %v1466 = vunpack.c.l.b16 %v311
    %v1467 = vunpack.c.h.b16 %v311
    %v1468 = vunpack.c.l.b16 %v312
    %v1469 = vunpack.c.h.b16 %v312
    %v1470 = vunpack.c.l.b16 %v313
    %v1471 = vunpack.c.h.b16 %v313
    %v1472 = vunpack.c.l.b16 %v314
    %v1473 = vunpack.c.h.b16 %v314
    %v1474 = vunpack.c.l.b16 %v315
    %v1475 = vunpack.c.h.b16 %v315
    %v1476 = vunpack.c.l.b16 %v316
    %v1477 = vunpack.c.h.b16 %v316
    %v1478 = vunpack.c.l.b16 %v317
    %v1479 = vunpack.c.h.b16 %v317
    %v1480 = vunpack.c.l.b16 %v318
    %v1481 = vunpack.c.h.b16 %v318
    %v1482 = vunpack.c.l.b16 %v319
    %v1483 = vunpack.c.h.b16 %v319
    %v1484 = vunpack.c.l.b16 %v320
    %v1485 = vunpack.c.h.b16 %v320
    %v1486 = vunpack.c.l.b16 %v321
    %v1487 = vunpack.c.h.b16 %v321
    %v1488 = vunpack.c.l.b16 %v322
    %v1489 = vunpack.c.h.b16 %v322
    %v1490 = vunpack.c.l.b16 %v323
    %v1491 = vunpack.c.h.b16 %v323
    %v1492 = vunpack.c.l.b16 %v324
    %v1493 = vunpack.c.h.b16 %v324
    %v1494 = vunpack.c.l.b16 %v325
    %v1495 = vunpack.c.h.b16 %v325
    %v1496 = vunpack.c.l.b16 %v326
    %v1497 = vunpack.c.h.b16 %v326
    %v1498 = vunpack.c.l.b16 %v327
    %v1499 = vunpack.c.h.b16 %v327
    %v1500 = vunpack.c.l.b16 %v328
    %v1501 = vunpack.c.h.b16 %v328
    %v1502 = vunpack.c.l.b16 %v329
    %v1503 = vunpack.c.h.b16 %v329
    %v1504 = vunpack.c.l.b16 %v330
    %v1505 = vunpack.c.h.b16 %v330
    %v1506 = vunpack.c.l.b16 %v331
    %v1507 = vunpack.c.h.b16 %v331
    %v1508 = vunpack.c.l.b16 %v332
    %v1509 = vunpack.c.h.b16 %v332
    %v1510 = vunpack.c.l.b16 %v333
    %v1511 = vunpack.c.h.b16 %v333
    %v1512 = vunpack.c.l.b16 %v334
    %v1513 = vunpack.c.h.b16 %v334
    %v1514 = vunpack.c.l.b16 %v335
    %v1515 = vunpack.c.h.b16 %v335
    %v1516 = vunpack.c.l.b16 %v336
    %v1517 = vunpack.c.h.b16 %v336
    %v1518 = vunpack.c.l.b16 %v337
    %v1519 = vunpack.c.h.b16 %v337
    %v1520 = vunpack.c.l.b16 %v338
    %v1521 = vunpack.c.h.b16 %v338
    %v1522 = vunpack.c.l.b16 %v339
    %v1523 = vunpack.c.h.b16 %v339
    %v1524 = vunpack.c.l.b16 %v340
    %v1525 = vunpack.c.h.b16 %v340
    %v1526 = vunpack.c.l.b16 %v341
    %v1527 = vunpack.c.h.b16 %v341
    %v1528 = vunpack.c.l.b16 %v342
    %v1529 = vunpack.c.h.b16 %v342
    %v1530 = vunpack.c.l.b16 %v343
    %v1531 = vunpack.c.h.b16 %v343
    %v1532 = vunpack.c.l.b16 %v344
    %v1533 = vunpack.c.h.b16 %v344
    %v1534 = vunpack.c.l.b16 %v345
    %v1535 = vunpack.c.h.b16 %v345
    %v1536 = vunpack.c.l.b16 %v346
    %v1537 = vunpack.c.h.b16 %v346
    %v1538 = vunpack.c.l.b16 %v347
    %v1539 = vunpack.c.h.b16 %v347
    %v1540 = vunpack.c.l.b16 %v348
    %v1541 = vunpack.c.h.b16 %v348
    %v1542 = vunpack.c.l.b16 %v349
    %v1543 = vunpack.c.h.b16 %v349
    %v1544 = vunpack.c.l.b16 %v350
    %v1545 = vunpack.c.h.b16 %v350
    %v1546 = vunpack.c.l.b16 %v351
    %v1547 = vunpack.c.h.b16 %v351
    %v1548 = vunpack.c.l.b16 %v352
    %v1549 = vunpack.c.h.b16 %v352
    %v1550 = vunpack.c.l.b16 %v353
    %v1551 = vunpack.c.h.b16 %v353
    %v1552 = vunpack.c.l.b16 %v354
    %v1553 = vunpack.c.h.b16 %v354
    %v1554 = vunpack.c.l.b16 %v355
    %v1555 = vunpack.c.h.b16 %v355
    %v1556 = vunpack.c.l.b16 %v356
    %v1557 = vunpack.c.h.b16 %v356
    %v1558 = vunpack.c.l.b16 %v357
    %v1559 = vunpack.c.h.b16 %v357
    %v1560 = vunpack.c.l.b16 %v358
    %v1561 = vunpack.c.h.b16 %v358
    %v1562 = vunpack.c.l.b16 %v359
    %v1563 = vunpack.c.h.b16 %v359
    %v1564 = vunpack.c.l.b16 %v360
    %v1565 = vunpack.c.h.b16 %v360
    %v1566 = vunpack.c.l.b16 %v361
    %v1567 = vunpack.c.h.b16 %v361
    %v1568 = vunpack.c.l.b16 %v362
    %v1569 = vunpack.c.h.b16 %v362
    %v1570 = vunpack.c.l.b16 %v363
    %v1571 = vunpack.c.h.b16 %v363
    %v1572 = vunpack.c.l.b16 %v364
    %v1573 = vunpack.c.h.b16 %v364
    %v1574 = vunpack.c.l.b16 %v365
    %v1575 = vunpack.c.h.b16 %v365
    %v1576 = vunpack.c.l.b16 %v366
    %v1577 = vunpack.c.h.b16 %v366
    %v1578 = vunpack.c.l.b16 %v367
    %v1579 = vunpack.c.h.b16 %v367
    %v1580 = vunpack.c.l.b16 %v368
    %v1581 = vunpack.c.h.b16 %v368
    %v1582 = vunpack.c.l.b16 %v369
    %v1583 = vunpack.c.h.b16 %v369
    %v1584 = vunpack.c.l.b16 %v370
    %v1585 = vunpack.c.h.b16 %v370
    %v1586 = vunpack.c.l.b16 %v371
    %v1587 = vunpack.c.h.b16 %v371
    %v1588 = vunpack.c.l.b16 %v372
    %v1589 = vunpack.c.h.b16 %v372
    %v1590 = vunpack.c.l.b16 %v373
    %v1591 = vunpack.c.h.b16 %v373
    %v1592 = vunpack.c.l.b16 %v374
    %v1593 = vunpack.c.h.b16 %v374
    %v1594 = vunpack.c.l.b16 %v375
    %v1595 = vunpack.c.h.b16 %v375
    %v1596 = vunpack.c.l.b16 %v376
    %v1597 = vunpack.c.h.b16 %v376
    %v1598 = vunpack.c.l.b16 %v377
    %v1599 = vunpack.c.h.b16 %v377
    %v1600 = vunpack.c.l.b16 %v378
    %v1601 = vunpack.c.h.b16 %v378
    %v1602 = vunpack.c.l.b16 %v379
    %v1603 = vunpack.c.h.b16 %v379
    %v1604 = vunpack.c.l.b16 %v380
    %v1605 = vunpack.c.h.b16 %v380
    %v1606 = vunpack.c.l.b16 %v381
    %v1607 = vunpack.c.h.b16 %v381
    %v1608 = vunpack.c.l.b16 %v382
    %v1609 = vunpack.c.h.b16 %v382
    %v1610 = vunpack.c.l.b16 %v383
    %v1611 = vunpack.c.h.b16 %v383
    %v1612 = vunpack.c.l.b16 %v384
    %v1613 = vunpack.c.h.b16 %v384
    %v1614 = vunpack.c.l.b16 %v385
    %v1615 = vunpack.c.h.b16 %v385
    %v1616 = vunpack.c.l.b16 %v386
    %v1617 = vunpack.c.h.b16 %v386
    %v1618 = vunpack.c.l.b16 %v387
    %v1619 = vunpack.c.h.b16 %v387
    %v1620 = vunpack.c.l.b16 %v388
    %v1621 = vunpack.c.h.b16 %v388
    %v1622 = vunpack.c.l.b16 %v389
    %v1623 = vunpack.c.h.b16 %v389
    %v1624 = vunpack.c.l.b16 %v390
    %v1625 = vunpack.c.h.b16 %v390
    %v1626 = vunpack.c.l.b16 %v391
    %v1627 = vunpack.c.h.b16 %v391
    %v1628 = vunpack.c.l.b16 %v392
    %v1629 = vunpack.c.h.b16 %v392
    %v1630 = vunpack.c.l.b16 %v393
    %v1631 = vunpack.c.h.b16 %v393
    %v1632 = vunpack.c.l.b16 %v394
    %v1633 = vunpack.c.h.b16 %v394
    %v1634 = vunpack.c.l.b16 %v395
    %v1635 = vunpack.c.h.b16 %v395
    %v1636 = vunpack.c.l.b16 %v396
    %v1637 = vunpack.c.h.b16 %v396
    %v1638 = vunpack.c.l.b16 %v397
    %v1639 = vunpack.c.h.b16 %v397
    %v1640 = vunpack.c.l.b16 %v398
    %v1641 = vunpack.c.h.b16 %v398
    %v1642 = vunpack.c.l.b16 %v399
    %v1643 = vunpack.c.h.b16 %v399
    %v1644 = vunpack.c.l.b16 %v400
    %v1645 = vunpack.c.h.b16 %v400
    %v1646 = vunpack.c.l.b16 %v401
    %v1647 = vunpack.c.h.b16 %v401
    %v1648 = vunpack.c.l.b16 %v402
    %v1649 = vunpack.c.h.b16 %v402
    %v1650 = vunpack.c.l.b16 %v403
    %v1651 = vunpack.c.h.b16 %v403
    %v1652 = vunpack.c.l.b16 %v404
    %v1653 = vunpack.c.h.b16 %v404
    %v1654 = vunpack.c.l.b16 %v405
    %v1655 = vunpack.c.h.b16 %v405
    %v1656 = vunpack.c.l.b16 %v406
    %v1657 = vunpack.c.h.b16 %v406
    %v1658 = vunpack.c.l.b16 %v407
    %v1659 = vunpack.c.h.b16 %v407
    %v1660 = vunpack.c.l.b16 %v408
    %v1661 = vunpack.c.h.b16 %v408
    %v1662 = vunpack.c.l.b16 %v409
    %v1663 = vunpack.c.h.b16 %v409
    %v1664 = vunpack.c.l.b16 %v410
    %v1665 = vunpack.c.h.b16 %v410
    %v1666 = vunpack.c.l.b16 %v411
    %v1667 = vunpack.c.h.b16 %v411
    %v1668 = vunpack.c.l.b16 %v412
    %v1669 = vunpack.c.h.b16 %v412
    %v1670 = vunpack.c.l.b16 %v413
    %v1671 = vunpack.c.h.b16 %v413
    %v1672 = vunpack.c.l.b16 %v414
    %v1673 = vunpack.c.h.b16 %v414
    %v1674 = vunpack.c.l.b16 %v415
    %v1675 = vunpack.c.h.b16 %v415
    %v1676 = vunpack.c.l.b16 %v416
    %v1677 = vunpack.c.h.b16 %v416
    %v1678 = vunpack.c.l.b16 %v417
    %v1679 = vunpack.c.h.b16 %v417
    %v1680 = vunpack.c.l.b16 %v418
    %v1681 = vunpack.c.h.b16 %v418
    %v1682 = vunpack.c.l.b16 %v419
    %v1683 = vunpack.c.h.b16 %v419
    %v1684 = vunpack.c.l.b16 %v420
    %v1685 = vunpack.c.h.b16 %v420
    %v1686 = vunpack.c.l.b16 %v421
    %v1687 = vunpack.c.h.b16 %v421
    %v1688 = vunpack.c.l.b16 %v422
    %v1689 = vunpack.c.h.b16 %v422
    %v1690 = vunpack.c.l.b16 %v423
    %v1691 = vunpack.c.h.b16 %v423
    %v1692 = vunpack.c.l.b16 %v424
    %v1693 = vunpack.c.h.b16 %v424
    %v1694 = vunpack.c.l.b16 %v425
    %v1695 = vunpack.c.h.b16 %v425
    %v1696 = vunpack.c.l.b16 %v426
    %v1697 = vunpack.c.h.b16 %v426
    %v1698 = vunpack.c.l.b16 %v427
    %v1699 = vunpack.c.h.b16 %v427
    %v1700 = vunpack.c.l.b16 %v428
    %v1701 = vunpack.c.h.b16 %v428
    %v1702 = vunpack.c.l.b16 %v429
    %v1703 = vunpack.c.h.b16 %v429
    %v1704 = vunpack.c.l.b16 %v430
    %v1705 = vunpack.c.h.b16 %v430
    %v1706 = vunpack.c.l.b16 %v431
    %v1707 = vunpack.c.h.b16 %v431
    %v1708 = vunpack.c.l.b16 %v432
    %v1709 = vunpack.c.h.b16 %v432
    %v1710 = vunpack.c.l.b16 %v433
    %v1711 = vunpack.c.h.b16 %v433
    %v1712 = vunpack.c.l.b16 %v434
    %v1713 = vunpack.c.h.b16 %v434
    %v1714 = vunpack.c.l.b16 %v435
    %v1715 = vunpack.c.h.b16 %v435
    %v1716 = vunpack.c.l.b16 %v436
    %v1717 = vunpack.c.h.b16 %v436
    %v1718 = vunpack.c.l.b16 %v437
    %v1719 = vunpack.c.h.b16 %v437
    %v1720 = vunpack.c.l.b16 %v438
    %v1721 = vunpack.c.h.b16 %v438
    %v1722 = vunpack.c.l.b16 %v439
    %v1723 = vunpack.c.h.b16 %v439
    %v1724 = vunpack.c.l.b16 %v440
    %v1725 = vunpack.c.h.b16 %v440
    %v1726 = vunpack.c.l.b16 %v441
    %v1727 = vunpack.c.h.b16 %v441
    %v1728 = vunpack.c.l.b16 %v442
    %v1729 = vunpack.c.h.b16 %v442
    %v1730 = vunpack.c.l.b16 %v443
    %v1731 = vunpack.c.h.b16 %v443
    %v1732 = vunpack.c.l.b16 %v444
    %v1733 = vunpack.c.h.b16 %v444
    %v1734 = vunpack.c.l.b16 %v445
    %v1735 = vunpack.c.h.b16 %v445
    %v1736 = vunpack.c.l.b16 %v446
    %v1737 = vunpack.c.h.b16 %v446
    %v1738 = vunpack.c.l.b16 %v447
    %v1739 = vunpack.c.h.b16 %v447
    %v1740 = vunpack.c.l.b16 %v448
    %v1741 = vunpack.c.h.b16 %v448
    %v1742 = vunpack.c.l.b16 %v449
    %v1743 = vunpack.c.h.b16 %v449
    %v1744 = vunpack.c.l.b16 %v450
    %v1745 = vunpack.c.h.b16 %v450
    %v1746 = vunpack.c.l.b16 %v451
    %v1747 = vunpack.c.h.b16 %v451
    %v1748 = vunpack.c.l.b16 %v452
    %v1749 = vunpack.c.h.b16 %v452
    %v1750 = vunpack.c.l.b16 %v453
    %v1751 = vunpack.c.h.b16 %v453
    %v1752 = vunpack.c.l.b16 %v454
    %v1753 = vunpack.c.h.b16 %v454
    %v1754 = vunpack.c.l.b16 %v455
    %v1755 = vunpack.c.h.b16 %v455
    %v1756 = vunpack.c.l.b16 %v456
    %v1757 = vunpack.c.h.b16 %v456
    %v1758 = vunpack.c.l.b16 %v457
    %v1759 = vunpack.c.h.b16 %v457
    %v1760 = vunpack.c.l.b16 %v458
    %v1761 = vunpack.c.h.b16 %v458
    %v1762 = vunpack.c.l.b16 %v459
    %v1763 = vunpack.c.h.b16 %v459
    %v1764 = vunpack.c.l.b16 %v460
    %v1765 = vunpack.c.h.b16 %v460
    %v1766 = vunpack.c.l.b16 %v461
    %v1767 = vunpack.c.h.b16 %v461
    %v1768 = vunpack.c.l.b16 %v462
    %v1769 = vunpack.c.h.b16 %v462
    %v1770 = vunpack.c.l.b16 %v463
    %v1771 = vunpack.c.h.b16 %v463
    %v1772 = vunpack.c.l.b16 %v464
    %v1773 = vunpack.c.h.b16 %v464
    %v1774 = vunpack.c.l.b16 %v465
    %v1775 = vunpack.c.h.b16 %v465
    %v1776 = vunpack.c.l.b16 %v466
    %v1777 = vunpack.c.h.b16 %v466
    %v1778 = vunpack.c.l.b16 %v467
    %v1779 = vunpack.c.h.b16 %v467
    %v1780 = vunpack.c.l.b16 %v468
    %v1781 = vunpack.c.h.b16 %v468
    %v1782 = vunpack.c.l.b16 %v469
    %v1783 = vunpack.c.h.b16 %v469
    %v1784 = vunpack.c.l.b16 %v470
    %v1785 = vunpack.c.h.b16 %v470
    %v1786 = vunpack.c.l.b16 %v471
    %v1787 = vunpack.c.h.b16 %v471
    %v1788 = vunpack.c.l.b16 %v472
    %v1789 = vunpack.c.h.b16 %v472
    %v1790 = vunpack.c.l.b16 %v473
    %v1791 = vunpack.c.h.b16 %v473
    %v1792 = vunpack.c.l.b16 %v474
    %v1793 = vunpack.c.h.b16 %v474
    %v1794 = vunpack.c.l.b16 %v475
    %v1795 = vunpack.c.h.b16 %v475
    %v1796 = vunpack.c.l.b16 %v476
    %v1797 = vunpack.c.h.b16 %v476
    %v1798 = vunpack.c.l.b16 %v477
    %v1799 = vunpack.c.h.b16 %v477
    %v1800 = vunpack.c.l.b16 %v478
    %v1801 = vunpack.c.h.b16 %v478
    %v1802 = vunpack.c.l.b16 %v479
    %v1803 = vunpack.c.h.b16 %v479
    %v1804 = vunpack.c.l.b16 %v480
    %v1805 = vunpack.c.h.b16 %v480
    %v1806 = vunpack.c.l.b16 %v481
    %v1807 = vunpack.c.h.b16 %v481
    %v1808 = vunpack.c.l.b16 %v482
    %v1809 = vunpack.c.h.b16 %v482
    %v1810 = vunpack.c.l.b16 %v483
    %v1811 = vunpack.c.h.b16 %v483
    %v1812 = vunpack.c.l.b16 %v484
    %v1813 = vunpack.c.h.b16 %v484
    %v1814 = vunpack.c.l.b16 %v485
    %v1815 = vunpack.c.h.b16 %v485
    %v1816 = vunpack.c.l.b16 %v486
    %v1817 = vunpack.c.h.b16 %v486
    %v1818 = vunpack.c.l.b16 %v487
    %v1819 = vunpack.c.h.b16 %v487
    %v1820 = vunpack.c.l.b16 %v488
    %v1821 = vunpack.c.h.b16 %v488
    %v1822 = vunpack.c.l.b16 %v489
    %v1823 = vunpack.c.h.b16 %v489
    %v1824 = vunpack.c.l.b16 %v490
    %v1825 = vunpack.c.h.b16 %v490
    %v1826 = vunpack.c.l.b16 %v491
    %v1827 = vunpack.c.h.b16 %v491
    %v1828 = vunpack.c.l.b16 %v492
    %v1829 = vunpack.c.h.b16 %v492
    %v1830 = vunpack.c.l.b16 %v493
    %v1831 = vunpack.c.h.b16 %v493
    %v1832 = vunpack.c.l.b16 %v494
    %v1833 = vunpack.c.h.b16 %v494
    %v1834 = vunpack.c.l.b16 %v495
    %v1835 = vunpack.c.h.b16 %v495
    %v1836 = vunpack.c.l.b16 %v496
    %v1837 = vunpack.c.h.b16 %v496
    %v1838 = vunpack.c.l.b16 %v497
    %v1839 = vunpack.c.h.b16 %v497
    %v1840 = vunpack.c.l.b16 %v498
    %v1841 = vunpack.c.h.b16 %v498
    %v1842 = vunpack.c.l.b16 %v499
    %v1843 = vunpack.c.h.b16 %v499
    %v1844 = vunpack.c.l.b16 %v500
    %v1845 = vunpack.c.h.b16 %v500
    %v1846 = vunpack.c.l.b16 %v501
    %v1847 = vunpack.c.h.b16 %v501
    %v1848 = vunpack.c.l.b16 %v502
    %v1849 = vunpack.c.h.b16 %v502
    %v1850 = vunpack.c.l.b16 %v503
    %v1851 = vunpack.c.h.b16 %v503
    %v1852 = vunpack.c.l.b16 %v504
    %v1853 = vunpack.c.h.b16 %v504
    %v1854 = vunpack.c.l.b16 %v505
    %v1855 = vunpack.c.h.b16 %v505
    %v1856 = vunpack.c.l.b16 %v506
    %v1857 = vunpack.c.h.b16 %v506
    %v1858 = vunpack.c.l.b16 %v507
    %v1859 = vunpack.c.h.b16 %v507
    %v1860 = vunpack.c.l.b16 %v508
    %v1861 = vunpack.c.h.b16 %v508
    %v1862 = vunpack.c.l.b16 %v509
    %v1863 = vunpack.c.h.b16 %v509
    %v1864 = vunpack.c.l.b16 %v510
    %v1865 = vunpack.c.h.b16 %v510
    %v1866 = vunpack.c.l.b16 %v511
    %v1867 = vunpack.c.h.b16 %v511
    %v1868 = vunpack.c.l.b16 %v512
    %v1869 = vunpack.c.h.b16 %v512
    %v1870 = vunpack.c.l.b16 %v513
    %v1871 = vunpack.c.h.b16 %v513
    %v1872 = vunpack.c.l.b16 %v514
    %v1873 = vunpack.c.h.b16 %v514
    %v1874 = vunpack.c.l.b16 %v515
    %v1875 = vunpack.c.h.b16 %v515
    %v1876 = vunpack.c.l.b16 %v516
    %v1877 = vunpack.c.h.b16 %v516
    %v1878 = vunpack.c.l.b16 %v517
    %v1879 = vunpack.c.h.b16 %v517
    %v1880 = vunpack.c.l.b16 %v518
    %v1881 = vunpack.c.h.b16 %v518
    %v1882 = vunpack.c.l.b16 %v519
    %v1883 = vunpack.c.h.b16 %v519
    %v1884 = vunpack.c.l.b16 %v520
    %v1885 = vunpack.c.h.b16 %v520
    %v1886 = vunpack.c.l.b16 %v521
    %v1887 = vunpack.c.h.b16 %v521
    %v1888 = vunpack.c.l.b16 %v522
    %v1889 = vunpack.c.h.b16 %v522
    %v1890 = vunpack.c.l.b16 %v523
    %v1891 = vunpack.c.h.b16 %v523
    %v1892 = vunpack.c.l.b16 %v524
    %v1893 = vunpack.c.h.b16 %v524
    %v1894 = vunpack.c.l.b16 %v525
    %v1895 = vunpack.c.h.b16 %v525
    %v1896 = vunpack.c.l.b16 %v526
    %v1897 = vunpack.c.h.b16 %v526
    %v1898 = vunpack.c.l.b16 %v527
    %v1899 = vunpack.c.h.b16 %v527
    %v1900 = vunpack.c.l.b16 %v528
    %v1901 = vunpack.c.h.b16 %v528
    %v1902 = vunpack.c.l.b16 %v529
    %v1903 = vunpack.c.h.b16 %v529
    %v1904 = vunpack.c.l.b16 %v530
    %v1905 = vunpack.c.h.b16 %v530
    %v1906 = vunpack.c.l.b16 %v531
    %v1907 = vunpack.c.h.b16 %v531
    %v1908 = vunpack.c.l.b16 %v532
    %v1909 = vunpack.c.h.b16 %v532
    %v1910 = vunpack.c.l.b16 %v533
    %v1911 = vunpack.c.h.b16 %v533
    %v1912 = vunpack.c.l.b16 %v534
    %v1913 = vunpack.c.h.b16 %v534
    %v1914 = vunpack.c.l.b16 %v535
    %v1915 = vunpack.c.h.b16 %v535
    %v1916 = vunpack.c.l.b16 %v536
    %v1917 = vunpack.c.h.b16 %v536
    %v1918 = vunpack.c.l.b16 %v537
    %v1919 = vunpack.c.h.b16 %v537
    %v1920 = vunpack.c.l.b16 %v538
    %v1921 = vunpack.c.h.b16 %v538
    %v1922 = vunpack.c.l.b16 %v539
    %v1923 = vunpack.c.h.b16 %v539
    %v1924 = vunpack.c.l.b16 %v540
    %v1925 = vunpack.c.h.b16 %v540
    %v1926 = vunpack.c.l.b16 %v541
    %v1927 = vunpack.c.h.b16 %v541
    %v1928 = vunpack.c.l.b16 %v542
    %v1929 = vunpack.c.h.b16 %v542
    %v1930 = vunpack.c.l.b16 %v543
    %v1931 = vunpack.c.h.b16 %v543
    %v1932 = vunpack.c.l.b16 %v544
    %v1933 = vunpack.c.h.b16 %v544
    %v1934 = vunpack.c.l.b16 %v545
    %v1935 = vunpack.c.h.b16 %v545
    %v1936 = vunpack.c.l.b16 %v546
    %v1937 = vunpack.c.h.b16 %v546
    %v1938 = vunpack.c.l.b16 %v547
    %v1939 = vunpack.c.h.b16 %v547
    %v1940 = vunpack.c.l.b16 %v548
    %v1941 = vunpack.c.h.b16 %v548
    %v1942 = vunpack.c.l.b16 %v549
    %v1943 = vunpack.c.h.b16 %v549
    %v1944 = vunpack.c.l.b16 %v550
    %v1945 = vunpack.c.h.b16 %v550
    %v1946 = vunpack.c.l.b16 %v551
    %v1947 = vunpack.c.h.b16 %v551
    %v1948 = vunpack.c.l.b16 %v552
    %v1949 = vunpack.c.h.b16 %v552
    %v1950 = vunpack.c.l.b16 %v553
    %v1951 = vunpack.c.h.b16 %v553
    %v1952 = vunpack.c.l.b16 %v554
    %v1953 = vunpack.c.h.b16 %v554
    %v1954 = vunpack.c.l.b16 %v555
    %v1955 = vunpack.c.h.b16 %v555
    %v1956 = vunpack.c.l.b16 %v556
    %v1957 = vunpack.c.h.b16 %v556
    %v1958 = vunpack.c.l.b16 %v557
    %v1959 = vunpack.c.h.b16 %v557
    %v1960 = vunpack.c.l.b16 %v558
    %v1961 = vunpack.c.h.b16 %v558
    %v1962 = vunpack.c.l.b16 %v559
    %v1963 = vunpack.c.h.b16 %v559
    %v1964 = vunpack.c.l.b16 %v560
    %v1965 = vunpack.c.h.b16 %v560
    %v1966 = vunpack.c.l.b16 %v561
    %v1967 = vunpack.c.h.b16 %v561
    %v1968 = vunpack.c.l.b16 %v562
    %v1969 = vunpack.c.h.b16 %v562
    %v1970 = vunpack.c.l.b16 %v563
    %v1971 = vunpack.c.h.b16 %v563
    %v1972 = vunpack.c.l.b16 %v564
    %v1973 = vunpack.c.h.b16 %v564
    %v1974 = vunpack.c.l.b16 %v565
    %v1975 = vunpack.c.h.b16 %v565
    %v1976 = vunpack.c.l.b16 %v566
    %v1977 = vunpack.c.h.b16 %v566
    %v1978 = vpack.c.b16 %v1090, %v1082
    %v1979 = vpack.c.b16 %v1091, %v1083
    %v1980 = vpack.c.b16 %v1092, %v1084
    %v1981 = vpack.c.b16 %v1093, %v1085
    %v1982 = vpack.c.b16 %v1094, %v1086
    %v1983 = vpack.c.b16 %v1095, %v1087
    %v1984 = vpack.c.b16 %v1096, %v1088
    %v1985 = vpack.c.b16 %v1097, %v1089
    %v1986 = vpack.c.b16 %v1106, %v1098
    %v1987 = vpack.c.b16 %v1107, %v1099
    %v1988 = vpack.c.b16 %v1108, %v1100
    %v1989 = vpack.c.b16 %v1109, %v1101
    %v1990 = vpack.c.b16 %v1110, %v1102
    %v1991 = vpack.c.b16 %v1111, %v1103
    %v1992 = vpack.c.b16 %v1112, %v1104
    %v1993 = vpack.c.b16 %v1113, %v1105
    %v1994 = vpack.c.b16 %v1122, %v1114
    %v1995 = vpack.c.b16 %v1123, %v1115
    %v1996 = vpack.c.b16 %v1124, %v1116
    %v1997 = vpack.c.b16 %v1125, %v1117
    %v1998 = vpack.c.b16 %v1126, %v1118
    %v1999 = vpack.c.b16 %v1127, %v1119
    %v2000 = vpack.c.b16 %v1128, %v1120
    %v2001 = vpack.c.b16 %v1129, %v1121
    %v2002 = vpack.c.b16 %v1138, %v1130
    %v2003 = vpack.c.b16 %v1139, %v1131
    %v2004 = vpack.c.b16 %v1140, %v1132
    %v2005 = vpack.c.b16 %v1141, %v1133
    %v2006 = vpack.c.b16 %v1142, %v1134
    %v2007 = vpack.c.b16 %v1143, %v1135
    %v2008 = vpack.c.b16 %v1144, %v1136
    %v2009 = vpack.c.b16 %v1145, %v1137
    %v2010 = vpack.c.b16 %v1154, %v1146
    %v2011 = vpack.c.b16 %v1155, %v1147
    %v2012 = vpack.c.b16 %v1156, %v1148
    %v2013 = vpack.c.b16 %v1157, %v1149
    %v2014 = vpack.c.b16 %v1158, %v1150
    %v2015 = vpack.c.b16 %v1159, %v1151
    %v2016 = vpack.c.b16 %v1160, %v1152
    %v2017 = vpack.c.b16 %v1161, %v1153
    %v2018 = vpack.c.b16 %v1170, %v1162
    %v2019 = vpack.c.b16 %v1171, %v1163
    %v2020 = vpack.c.b16 %v1172, %v1164
    %v2021 = vpack.c.b16 %v1173, %v1165
    %v2022 = vpack.c.b16 %v1174, %v1166
    %v2023 = vpack.c.b16 %v1175, %v1167
    %v2024 = vpack.c.b16 %v1176, %v1168
    %v2025 = vpack.c.b16 %v1177, %v1169
    %v2026 = vpack.c.b16 %v1186, %v1178
    %v2027 = vpack.c.b16 %v1187, %v1179
    %v2028 = vpack.c.b16 %v1188, %v1180
    %v2029 = vpack.c.b16 %v1189, %v1181
    %v2030 = vpack.c.b16 %v1190, %v1182
    %v2031 = vpack.c.b16 %v1191, %v1183
    %v2032 = vpack.c.b16 %v1192, %v1184
    %v2033 = vpack.c.b16 %v1193, %v1185
    %v2034 = vpack.c.b16 %v1202, %v1194
    %v2035 = vpack.c.b16 %v1203, %v1195
    %v2036 = vpack.c.b16 %v1204, %v1196
    %v2037 = vpack.c.b16 %v1205, %v1197
    %v2038 = vpack.c.b16 %v1206, %v1198
    %v2039 = vpack.c.b16 %v1207, %v1199
    %v2040 = vpack.c.b16 %v1208, %v1200
    %v2041 = vpack.c.b16 %v1209, %v1201
    %v2042 = vpack.c.b16 %v1218, %v1210
    %v2043 = vpack.c.b16 %v1219, %v1211
    %v2044 = vpack.c.b16 %v1220, %v1212
    %v2045 = vpack.c.b16 %v1221, %v1213
    %v2046 = vpack.c.b16 %v1222, %v1214
    %v2047 = vpack.c.b16 %v1223, %v1215
    %v2048 = vpack.c.b16 %v1224, %v1216
    %v2049 = vpack.c.b16 %v1225, %v1217
    %v2050 = vpack.c.b16 %v1234, %v1226
    %v2051 = vpack.c.b16 %v1235, %v1227
    %v2052 = vpack.c.b16 %v1236, %v1228
    %v2053 = vpack.c.b16 %v1237, %v1229
    %v2054 = vpack.c.b16 %v1238, %v1230
    %v2055 = vpack.c.b16 %v1239, %v1231
    %v2056 = vpack.c.b16 %v1240, %v1232
    %v2057 = vpack.c.b16 %v1241, %v1233
    %v2058 = vpack.c.b16 %v1250, %v1242
    %v2059 = vpack.c.b16 %v1251, %v1243
    %v2060 = vpack.c.b16 %v1252, %v1244
    %v2061 = vpack.c.b16 %v1253, %v1245
    %v2062 = vpack.c.b16 %v1254, %v1246
    %v2063 = vpack.c.b16 %v1255, %v1247
    %v2064 = vpack.c.b16 %v1256, %v1248
    %v2065 = vpack.c.b16 %v1257, %v1249
    %v2066 = vpack.c.b16 %v1266, %v1258
    %v2067 = vpack.c.b16 %v1267, %v1259
    %v2068 = vpack.c.b16 %v1268, %v1260
    %v2069 = vpack.c.b16 %v1269, %v1261
    %v2070 = vpack.c.b16 %v1270, %v1262
    %v2071 = vpack.c.b16 %v1271, %v1263
    %v2072 = vpack.c.b16 %v1272, %v1264
    %v2073 = vpack.c.b16 %v1273, %v1265
    %v2074 = vpack.c.b16 %v1282, %v1274
    %v2075 = vpack.c.b16 %v1283, %v1275
    %v2076 = vpack.c.b16 %v1284, %v1276
    %v2077 = vpack.c.b16 %v1285, %v1277
    %v2078 = vpack.c.b16 %v1286, %v1278
    %v2079 = vpack.c.b16 %v1287, %v1279
    %v2080 = vpack.c.b16 %v1288, %v1280
    %v2081 = vpack.c.b16 %v1289, %v1281
    %v2082 = vpack.c.b16 %v1298, %v1290
    %v2083 = vpack.c.b16 %v1299, %v1291
    %v2084 = vpack.c.b16 %v1300, %v1292
    %v2085 = vpack.c.b16 %v1301, %v1293
    %v2086 = vpack.c.b16 %v1302, %v1294
    %v2087 = vpack.c.b16 %v1303, %v1295
    %v2088 = vpack.c.b16 %v1304, %v1296
    %v2089 = vpack.c.b16 %v1305, %v1297
    %v2090 = vpack.c.b16 %v1314, %v1306
    %v2091 = vpack.c.b16 %v1315, %v1307
    %v2092 = vpack.c.b16 %v1316, %v1308
    %v2093 = vpack.c.b16 %v1317, %v1309
    %v2094 = vpack.c.b16 %v1318, %v1310
    %v2095 = vpack.c.b16 %v1319, %v1311
    %v2096 = vpack.c.b16 %v1320, %v1312
    %v2097 = vpack.c.b16 %v1321, %v1313
    %v2098 = vpack.c.b16 %v1330, %v1322
    %v2099 = vpack.c.b16 %v1331, %v1323
    %v2100 = vpack.c.b16 %v1332, %v1324
    %v2101 = vpack.c.b16 %v1333, %v1325
    %v2102 = vpack.c.b16 %v1334, %v1326
    %v2103 = vpack.c.b16 %v1335, %v1327
    %v2104 = vpack.c.b16 %v1336, %v1328
    %v2105 = vpack.c.b16 %v1337, %v1329
    %v2106 = vpack.c.b16 %v1346, %v1338
    %v2107 = vpack.c.b16 %v1347, %v1339
    %v2108 = vpack.c.b16 %v1348, %v1340
    %v2109 = vpack.c.b16 %v1349, %v1341
    %v2110 = vpack.c.b16 %v1350, %v1342
    %v2111 = vpack.c.b16 %v1351, %v1343
    %v2112 = vpack.c.b16 %v1352, %v1344
    %v2113 = vpack.c.b16 %v1353, %v1345
    %v2114 = vpack.c.b16 %v1362, %v1354
    %v2115 = vpack.c.b16 %v1363, %v1355
    %v2116 = vpack.c.b16 %v1364, %v1356
    %v2117 = vpack.c.b16 %v1365, %v1357
    %v2118 = vpack.c.b16 %v1366, %v1358
    %v2119 = vpack.c.b16 %v1367, %v1359
    %v2120 = vpack.c.b16 %v1368, %v1360
    %v2121 = vpack.c.b16 %v1369, %v1361
    %v2122 = vpack.c.b16 %v1378, %v1370
    %v2123 = vpack.c.b16 %v1379, %v1371
    %v2124 = vpack.c.b16 %v1380, %v1372
    %v2125 = vpack.c.b16 %v1381, %v1373
    %v2126 = vpack.c.b16 %v1382, %v1374
    %v2127 = vpack.c.b16 %v1383, %v1375
    %v2128 = vpack.c.b16 %v1384, %v1376
    %v2129 = vpack.c.b16 %v1385, %v1377
    %v2130 = vpack.c.b16 %v1394, %v1386
    %v2131 = vpack.c.b16 %v1395, %v1387
    %v2132 = vpack.c.b16 %v1396, %v1388
    %v2133 = vpack.c.b16 %v1397, %v1389
    %v2134 = vpack.c.b16 %v1398, %v1390
    %v2135 = vpack.c.b16 %v1399, %v1391
    %v2136 = vpack.c.b16 %v1400, %v1392
    %v2137 = vpack.c.b16 %v1401, %v1393
    %v2138 = vpack.c.b16 %v1410, %v1402
    %v2139 = vpack.c.b16 %v1411, %v1403
    %v2140 = vpack.c.b16 %v1412, %v1404
    %v2141 = vpack.c.b16 %v1413, %v1405
    %v2142 = vpack.c.b16 %v1414, %v1406
    %v2143 = vpack.c.b16 %v1415, %v1407
    %v2144 = vpack.c.b16 %v1416, %v1408
    %v2145 = vpack.c.b16 %v1417, %v1409
    %v2146 = vpack.c.b16 %v1426, %v1418
    %v2147 = vpack.c.b16 %v1427, %v1419
    %v2148 = vpack.c.b16 %v1428, %v1420
    %v2149 = vpack.c.b16 %v1429, %v1421
    %v2150 = vpack.c.b16 %v1430, %v1422
    %v2151 = vpack.c.b16 %v1431, %v1423
    %v2152 = vpack.c.b16 %v1432, %v1424
    %v2153 = vpack.c.b16 %v1433, %v1425
    %v2154 = vpack.c.b16 %v1442, %v1434
    %v2155 = vpack.c.b16 %v1443, %v1435
    %v2156 = vpack.c.b16 %v1444, %v1436
    %v2157 = vpack.c.b16 %v1445, %v1437
    %v2158 = vpack.c.b16 %v1446, %v1438
    %v2159 = vpack.c.b16 %v1447, %v1439
    %v2160 = vpack.c.b16 %v1448, %v1440
    %v2161 = vpack.c.b16 %v1449, %v1441
    %v2162 = vpack.c.b16 %v1458, %v1450
    %v2163 = vpack.c.b16 %v1459, %v1451
    %v2164 = vpack.c.b16 %v1460, %v1452
    %v2165 = vpack.c.b16 %v1461, %v1453
    %v2166 = vpack.c.b16 %v1462, %v1454
    %v2167 = vpack.c.b16 %v1463, %v1455
    %v2168 = vpack.c.b16 %v1464, %v1456
    %v2169 = vpack.c.b16 %v1465, %v1457
    %v2170 = vpack.c.b16 %v1474, %v1466
    %v2171 = vpack.c.b16 %v1475, %v1467
    %v2172 = vpack.c.b16 %v1476, %v1468
    %v2173 = vpack.c.b16 %v1477, %v1469
    %v2174 = vpack.c.b16 %v1478, %v1470
    %v2175 = vpack.c.b16 %v1479, %v1471
    %v2176 = vpack.c.b16 %v1480, %v1472
    %v2177 = vpack.c.b16 %v1481, %v1473
    %v2178 = vpack.c.b16 %v1490, %v1482
    %v2179 = vpack.c.b16 %v1491, %v1483
    %v2180 = vpack.c.b16 %v1492, %v1484
    %v2181 = vpack.c.b16 %v1493, %v1485
    %v2182 = vpack.c.b16 %v1494, %v1486
    %v2183 = vpack.c.b16 %v1495, %v1487
    %v2184 = vpack.c.b16 %v1496, %v1488
    %v2185 = vpack.c.b16 %v1497, %v1489
    %v2186 = vpack.c.b16 %v1506, %v1498
    %v2187 = vpack.c.b16 %v1507, %v1499
    %v2188 = vpack.c.b16 %v1508, %v1500
    %v2189 = vpack.c.b16 %v1509, %v1501
    %v2190 = vpack.c.b16 %v1510, %v1502
    %v2191 = vpack.c.b16 %v1511, %v1503
    %v2192 = vpack.c.b16 %v1512, %v1504
    %v2193 = vpack.c.b16 %v1513, %v1505
    %v2194 = vpack.c.b16 %v1522, %v1514
    %v2195 = vpack.c.b16 %v1523, %v1515
    %v2196 = vpack.c.b16 %v1524, %v1516
    %v2197 = vpack.c.b16 %v1525, %v1517
    %v2198 = vpack.c.b16 %v1526, %v1518
    %v2199 = vpack.c.b16 %v1527, %v1519
    %v2200 = vpack.c.b16 %v1528, %v1520
    %v2201 = vpack.c.b16 %v1529, %v1521
    %v2202 = vpack.c.b16 %v1538, %v1530
    %v2203 = vpack.c.b16 %v1539, %v1531
    %v2204 = vpack.c.b16 %v1540, %v1532
    %v2205 = vpack.c.b16 %v1541, %v1533
    %v2206 = vpack.c.b16 %v1542, %v1534
    %v2207 = vpack.c.b16 %v1543, %v1535
    %v2208 = vpack.c.b16 %v1544, %v1536
    %v2209 = vpack.c.b16 %v1545, %v1537
    %v2210 = vpack.c.b16 %v1554, %v1546
    %v2211 = vpack.c.b16 %v1555, %v1547
    %v2212 = vpack.c.b16 %v1556, %v1548
    %v2213 = vpack.c.b16 %v1557, %v1549
    %v2214 = vpack.c.b16 %v1558, %v1550
    %v2215 = vpack.c.b16 %v1559, %v1551
    %v2216 = vpack.c.b16 %v1560, %v1552
    %v2217 = vpack.c.b16 %v1561, %v1553
    %v2218 = vpack.c.b16 %v1570, %v1562
    %v2219 = vpack.c.b16 %v1571, %v1563
    %v2220 = vpack.c.b16 %v1572, %v1564
    %v2221 = vpack.c.b16 %v1573, %v1565
    %v2222 = vpack.c.b16 %v1574, %v1566
    %v2223 = vpack.c.b16 %v1575, %v1567
    %v2224 = vpack.c.b16 %v1576, %v1568
    %v2225 = vpack.c.b16 %v1577, %v1569
    %v2226 = vpack.c.b16 %v1586, %v1578
    %v2227 = vpack.c.b16 %v1587, %v1579
    %v2228 = vpack.c.b16 %v1588, %v1580
    %v2229 = vpack.c.b16 %v1589, %v1581
    %v2230 = vpack.c.b16 %v1590, %v1582
    %v2231 = vpack.c.b16 %v1591, %v1583
    %v2232 = vpack.c.b16 %v1592, %v1584
    %v2233 = vpack.c.b16 %v1593, %v1585
    %v2234 = vpack.c.b16 %v1602, %v1594
    %v2235 = vpack.c.b16 %v1603, %v1595
    %v2236 = vpack.c.b16 %v1604, %v1596
    %v2237 = vpack.c.b16 %v1605, %v1597
    %v2238 = vpack.c.b16 %v1606, %v1598
    %v2239 = vpack.c.b16 %v1607, %v1599
    %v2240 = vpack.c.b16 %v1608, %v1600
    %v2241 = vpack.c.b16 %v1609, %v1601
    %v2242 = vpack.c.b16 %v1618, %v1610
    %v2243 = vpack.c.b16 %v1619, %v1611
    %v2244 = vpack.c.b16 %v1620, %v1612
    %v2245 = vpack.c.b16 %v1621, %v1613
    %v2246 = vpack.c.b16 %v1622, %v1614
    %v2247 = vpack.c.b16 %v1623, %v1615
    %v2248 = vpack.c.b16 %v1624, %v1616
    %v2249 = vpack.c.b16 %v1625, %v1617
    %v2250 = vpack.c.b16 %v1634, %v1626
    %v2251 = vpack.c.b16 %v1635, %v1627
    %v2252 = vpack.c.b16 %v1636, %v1628
    %v2253 = vpack.c.b16 %v1637, %v1629
    %v2254 = vpack.c.b16 %v1638, %v1630
    %v2255 = vpack.c.b16 %v1639, %v1631
    %v2256 = vpack.c.b16 %v1640, %v1632
    %v2257 = vpack.c.b16 %v1641, %v1633
    %v2258 = vpack.c.b16 %v1650, %v1642
    %v2259 = vpack.c.b16 %v1651, %v1643
    %v2260 = vpack.c.b16 %v1652, %v1644
    %v2261 = vpack.c.b16 %v1653, %v1645
    %v2262 = vpack.c.b16 %v1654, %v1646
    %v2263 = vpack.c.b16 %v1655, %v1647
    %v2264 = vpack.c.b16 %v1656, %v1648
    %v2265 = vpack.c.b16 %v1657, %v1649
    %v2266 = vpack.c.b16 %v1666, %v1658
    %v2267 = vpack.c.b16 %v1667, %v1659
    %v2268 = vpack.c.b16 %v1668, %v1660
    %v2269 = vpack.c.b16 %v1669, %v1661
    %v2270 = vpack.c.b16 %v1670, %v1662
    %v2271 = vpack.c.b16 %v1671, %v1663
    %v2272 = vpack.c.b16 %v1672, %v1664
    %v2273 = vpack.c.b16 %v1673, %v1665
    %v2274 = vpack.c.b16 %v1682, %v1674
    %v2275 = vpack.c.b16 %v1683, %v1675
    %v2276 = vpack.c.b16 %v1684, %v1676
    %v2277 = vpack.c.b16 %v1685, %v1677
    %v2278 = vpack.c.b16 %v1686, %v1678
    %v2279 = vpack.c.b16 %v1687, %v1679
    %v2280 = vpack.c.b16 %v1688, %v1680
    %v2281 = vpack.c.b16 %v1689, %v1681
    %v2282 = vpack.c.b16 %v1698, %v1690
    %v2283 = vpack.c.b16 %v1699, %v1691
    %v2284 = vpack.c.b16 %v1700, %v1692
    %v2285 = vpack.c.b16 %v1701, %v1693
    %v2286 = vpack.c.b16 %v1702, %v1694
    %v2287 = vpack.c.b16 %v1703, %v1695
    %v2288 = vpack.c.b16 %v1704, %v1696
    %v2289 = vpack.c.b16 %v1705, %v1697
    %v2290 = vpack.c.b16 %v1714, %v1706
    %v2291 = vpack.c.b16 %v1715, %v1707
    %v2292 = vpack.c.b16 %v1716, %v1708
    %v2293 = vpack.c.b16 %v1717, %v1709
    %v2294 = vpack.c.b16 %v1718, %v1710
    %v2295 = vpack.c.b16 %v1719, %v1711
    %v2296 = vpack.c.b16 %v1720, %v1712
    %v2297 = vpack.c.b16 %v1721, %v1713
    %v2298 = vpack.c.b16 %v1730, %v1722
    %v2299 = vpack.c.b16 %v1731, %v1723
    %v2300 = vpack.c.b16 %v1732, %v1724
    %v2301 = vpack.c.b16 %v1733, %v1725
    %v2302 = vpack.c.b16 %v1734, %v1726
    %v2303 = vpack.c.b16 %v1735, %v1727
    %v2304 = vpack.c.b16 %v1736, %v1728
    %v2305 = vpack.c.b16 %v1737, %v1729
    %v2306 = vpack.c.b16 %v1746, %v1738
    %v2307 = vpack.c.b16 %v1747, %v1739
    %v2308 = vpack.c.b16 %v1748, %v1740
    %v2309 = vpack.c.b16 %v1749, %v1741
    %v2310 = vpack.c.b16 %v1750, %v1742
    %v2311 = vpack.c.b16 %v1751, %v1743
    %v2312 = vpack.c.b16 %v1752, %v1744
    %v2313 = vpack.c.b16 %v1753, %v1745
    %v2314 = vpack.c.b16 %v1762, %v1754
    %v2315 = vpack.c.b16 %v1763, %v1755
    %v2316 = vpack.c.b16 %v1764, %v1756
    %v2317 = vpack.c.b16 %v1765, %v1757
    %v2318 = vpack.c.b16 %v1766, %v1758
    %v2319 = vpack.c.b16 %v1767, %v1759
    %v2320 = vpack.c.b16 %v1768, %v1760
    %v2321 = vpack.c.b16 %v1769, %v1761
    %v2322 = vpack.c.b16 %v1778, %v1770
    %v2323 = vpack.c.b16 %v1779, %v1771
    %v2324 = vpack.c.b16 %v1780, %v1772
    %v2325 = vpack.c.b16 %v1781, %v1773
    %v2326 = vpack.c.b16 %v1782, %v1774
    %v2327 = vpack.c.b16 %v1783, %v1775
    %v2328 = vpack.c.b16 %v1784, %v1776
    %v2329 = vpack.c.b16 %v1785, %v1777
    %v2330 = vpack.c.b16 %v1794, %v1786
    %v2331 = vpack.c.b16 %v1795, %v1787
    %v2332 = vpack.c.b16 %v1796, %v1788
    %v2333 = vpack.c.b16 %v1797, %v1789
    %v2334 = vpack.c.b16 %v1798, %v1790
    %v2335 = vpack.c.b16 %v1799, %v1791
    %v2336 = vpack.c.b16 %v1800, %v1792
    %v2337 = vpack.c.b16 %v1801, %v1793
    %v2338 = vpack.c.b16 %v1810, %v1802
    %v2339 = vpack.c.b16 %v1811, %v1803
    %v2340 = vpack.c.b16 %v1812, %v1804
    %v2341 = vpack.c.b16 %v1813, %v1805
    %v2342 = vpack.c.b16 %v1814, %v1806
    %v2343 = vpack.c.b16 %v1815, %v1807
    %v2344 = vpack.c.b16 %v1816, %v1808
    %v2345 = vpack.c.b16 %v1817, %v1809
    %v2346 = vpack.c.b16 %v1826, %v1818
    %v2347 = vpack.c.b16 %v1827, %v1819
    %v2348 = vpack.c.b16 %v1828, %v1820
    %v2349 = vpack.c.b16 %v1829, %v1821
    %v2350 = vpack.c.b16 %v1830, %v1822
    %v2351 = vpack.c.b16 %v1831, %v1823
    %v2352 = vpack.c.b16 %v1832, %v1824
    %v2353 = vpack.c.b16 %v1833, %v1825
    %v2354 = vpack.c.b16 %v1842, %v1834
    %v2355 = vpack.c.b16 %v1843, %v1835
    %v2356 = vpack.c.b16 %v1844, %v1836
    %v2357 = vpack.c.b16 %v1845, %v1837
    %v2358 = vpack.c.b16 %v1846, %v1838
    %v2359 = vpack.c.b16 %v1847, %v1839
    %v2360 = vpack.c.b16 %v1848, %v1840
    %v2361 = vpack.c.b16 %v1849, %v1841
    %v2362 = vpack.c.b16 %v1858, %v1850
    %v2363 = vpack.c.b16 %v1859, %v1851
    %v2364 = vpack.c.b16 %v1860, %v1852
    %v2365 = vpack.c.b16 %v1861, %v1853
    %v2366 = vpack.c.b16 %v1862, %v1854
    %v2367 = vpack.c.b16 %v1863, %v1855
    %v2368 = vpack.c.b16 %v1864, %v1856
    %v2369 = vpack.c.b16 %v1865, %v1857
    %v2370 = vpack.c.b16 %v1874, %v1866
    %v2371 = vpack.c.b16 %v1875, %v1867
    %v2372 = vpack.c.b16 %v1876, %v1868
    %v2373 = vpack.c.b16 %v1877, %v1869
    %v2374 = vpack.c.b16 %v1878, %v1870
    %v2375 = vpack.c.b16 %v1879, %v1871
    %v2376 = vpack.c.b16 %v1880, %v1872
    %v2377 = vpack.c.b16 %v1881, %v1873
    %v2378 = vpack.c.b16 %v1890, %v1882
    %v2379 = vpack.c.b16 %v1891, %v1883
    %v2380 = vpack.c.b16 %v1892, %v1884
    %v2381 = vpack.c.b16 %v1893, %v1885
    %v2382 = vpack.c.b16 %v1894, %v1886
    %v2383 = vpack.c.b16 %v1895, %v1887
    %v2384 = vpack.c.b16 %v1896, %v1888
    %v2385 = vpack.c.b16 %v1897, %v1889
    %v2386 = vpack.c.b16 %v1906, %v1898
    %v2387 = vpack.c.b16 %v1907, %v1899
    %v2388 = vpack.c.b16 %v1908, %v1900
    %v2389 = vpack.c.b16 %v1909, %v1901
    %v2390 = vpack.c.b16 %v1910, %v1902
    %v2391 = vpack.c.b16 %v1911, %v1903
    %v2392 = vpack.c.b16 %v1912, %v1904
    %v2393 = vpack.c.b16 %v1913, %v1905
    %v2394 = vpack.c.b16 %v1922, %v1914
    %v2395 = vpack.c.b16 %v1923, %v1915
    %v2396 = vpack.c.b16 %v1924, %v1916
    %v2397 = vpack.c.b16 %v1925, %v1917
    %v2398 = vpack.c.b16 %v1926, %v1918
    %v2399 = vpack.c.b16 %v1927, %v1919
    %v2400 = vpack.c.b16 %v1928, %v1920
    %v2401 = vpack.c.b16 %v1929, %v1921
    %v2402 = vpack.c.b16 %v1938, %v1930
    %v2403 = vpack.c.b16 %v1939, %v1931
    %v2404 = vpack.c.b16 %v1940, %v1932
    %v2405 = vpack.c.b16 %v1941, %v1933
    %v2406 = vpack.c.b16 %v1942, %v1934
    %v2407 = vpack.c.b16 %v1943, %v1935
    %v2408 = vpack.c.b16 %v1944, %v1936
    %v2409 = vpack.c.b16 %v1945, %v1937
    %v2410 = vpack.c.b16 %v1954, %v1946
    %v2411 = vpack.c.b16 %v1955, %v1947
    %v2412 = vpack.c.b16 %v1956, %v1948
    %v2413 = vpack.c.b16 %v1957, %v1949
    %v2414 = vpack.c.b16 %v1958, %v1950
    %v2415 = vpack.c.b16 %v1959, %v1951
    %v2416 = vpack.c.b16 %v1960, %v1952
    %v2417 = vpack.c.b16 %v1961, %v1953
    %v2418 = vpack.c.b16 %v1970, %v1962
    %v2419 = vpack.c.b16 %v1971, %v1963
    %v2420 = vpack.c.b16 %v1972, %v1964
    %v2421 = vpack.c.b16 %v1973, %v1965
    %v2422 = vpack.c.b16 %v1974, %v1966
    %v2423 = vpack.c.b16 %v1975, %v1967
    %v2424 = vpack.c.b16 %v1976, %v1968
    %v2425 = vpack.c.b16 %v1977, %v1969
    %2874 = vmatprep.subr.bf16.mxu0 %v2035
    %2875 = vmatpush1.bf16.msra.mxu0 %v2034
    %2876 = vmatprep.subr.bf16.mxu0 %v2027
    %2877 = vmatpush1.bf16.msra.mxu0 %v2026
    %2878 = vmatprep.subr.bf16.mxu0 %v2019
    %2879 = vmatpush1.bf16.msra.mxu0 %v2018
    %2880 = vmatprep.subr.bf16.mxu0 %v2011
    %2881 = vmatpush1.bf16.msra.mxu0 %v2010
    %2882 = vmatprep.subr.bf16.mxu0 %v2003
    %2883 = vmatpush1.bf16.msra.mxu0 %v2002
    %2884 = vmatprep.subr.bf16.mxu0 %v1995
    %2885 = vmatpush1.bf16.msra.mxu0 %v1994
    %2886 = vmatprep.subr.bf16.mxu0 %v1987
    %2887 = vmatpush1.bf16.msra.mxu0 %v1986
    %2888 = vmatprep.subr.bf16.mxu0 %v1979
    %2889 = vmatpush1.bf16.msra.mxu0 %v1978
    %2890 = vmatprep.subr.bf16.mxu0 %v2099
    %2891 = vmatpush2.bf16.msra.mxu0 %v2098
    %2892 = vmatprep.subr.bf16.mxu0 %v2091
    %2893 = vmatpush2.bf16.msra.mxu0 %v2090
    %2894 = vmatprep.subr.bf16.mxu0 %v2083
    %2895 = vmatpush2.bf16.msra.mxu0 %v2082
    %2896 = vmatprep.subr.bf16.mxu0 %v2075
    %2897 = vmatpush2.bf16.msra.mxu0 %v2074
    %2898 = vmatprep.subr.bf16.mxu0 %v2067
    %2899 = vmatpush2.bf16.msra.mxu0 %v2066
    %2900 = vmatprep.subr.bf16.mxu0 %v2059
    %2901 = vmatpush2.bf16.msra.mxu0 %v2058
    %2902 = vmatprep.subr.bf16.mxu0 %v2051
    %2903 = vmatpush2.bf16.msra.mxu0 %v2050
    %2904 = vmatprep.subr.bf16.mxu0 %v2043
    %2905 = vmatpush2.bf16.msra.mxu0 %v2042
    %2906 = vmatprep.mubr.bf16.mxu0 %v621
    %2907 = vmatmul.mubr.bf16.gmra.mxu0 %v620
    %v2908 = vpop.f32.mrf.mxu0
    %v2909 = vadd.f32 %v572, %v2908
    %v2910 = vpop.f32.mrf.mxu0
    %v2911 = vadd.f32 %v576, %v2910
    %v2912 = vpop.f32.mrf.mxu0
    %v2913 = vpop.f32.mrf.mxu0
    %2914 = vdwg.mxu0
    %2915 = vmatprep.subr.bf16.mxu0 %v2163
    %2916 = vmatpush1.bf16.msra.mxu0 %v2162
    %2917 = vmatprep.subr.bf16.mxu0 %v2155
    %2918 = vmatpush1.bf16.msra.mxu0 %v2154
    %2919 = vmatprep.subr.bf16.mxu0 %v2147
    %2920 = vmatpush1.bf16.msra.mxu0 %v2146
    %2921 = vmatprep.subr.bf16.mxu0 %v2139
    %2922 = vmatpush1.bf16.msra.mxu0 %v2138
    %2923 = vmatprep.subr.bf16.mxu0 %v2131
    %2924 = vmatpush1.bf16.msra.mxu0 %v2130
    %2925 = vmatprep.subr.bf16.mxu0 %v2123
    %2926 = vmatpush1.bf16.msra.mxu0 %v2122
    %2927 = vmatprep.subr.bf16.mxu0 %v2115
    %2928 = vmatpush1.bf16.msra.mxu0 %v2114
    %2929 = vmatprep.subr.bf16.mxu0 %v2107
    %2930 = vmatpush1.bf16.msra.mxu0 %v2106
    %2931 = vmatprep.subr.bf16.mxu0 %v2227
    %2932 = vmatpush2.bf16.msra.mxu0 %v2226
    %2933 = vmatprep.subr.bf16.mxu0 %v2219
    %2934 = vmatpush2.bf16.msra.mxu0 %v2218
    %2935 = vmatprep.subr.bf16.mxu0 %v2211
    %2936 = vmatpush2.bf16.msra.mxu0 %v2210
    %2937 = vmatprep.subr.bf16.mxu0 %v2203
    %2938 = vmatpush2.bf16.msra.mxu0 %v2202
    %2939 = vmatprep.subr.bf16.mxu0 %v2195
    %2940 = vmatpush2.bf16.msra.mxu0 %v2194
    %2941 = vmatprep.subr.bf16.mxu0 %v2187
    %2942 = vmatpush2.bf16.msra.mxu0 %v2186
    %2943 = vmatprep.subr.bf16.mxu0 %v2179
    %2944 = vmatpush2.bf16.msra.mxu0 %v2178
    %2945 = vmatprep.subr.bf16.mxu0 %v2171
    %2946 = vmatpush2.bf16.msra.mxu0 %v2170
    %2947 = vmatprep.mubr.bf16.mxu0 %v623
    %2948 = vmatmul.mubr.bf16.gmra.mxu0 %v622
    %v2949 = vpop.f32.mrf.mxu0
    %v2950 = vadd.f32 %v2909, %v2949
    %v2951 = vpop.f32.mrf.mxu0
    %v2952 = vadd.f32 %v2911, %v2951
    %v2953 = vpop.f32.mrf.mxu0
    %v2954 = vpop.f32.mrf.mxu0
    %2955 = vdwg.mxu0
    %2956 = vmatprep.subr.bf16.mxu0 %v2291
    %2957 = vmatpush1.bf16.msra.mxu0 %v2290
    %2958 = vmatprep.subr.bf16.mxu0 %v2283
    %2959 = vmatpush1.bf16.msra.mxu0 %v2282
    %2960 = vmatprep.subr.bf16.mxu0 %v2275
    %2961 = vmatpush1.bf16.msra.mxu0 %v2274
    %2962 = vmatprep.subr.bf16.mxu0 %v2267
    %2963 = vmatpush1.bf16.msra.mxu0 %v2266
    %2964 = vmatprep.subr.bf16.mxu0 %v2259
    %2965 = vmatpush1.bf16.msra.mxu0 %v2258
    %2966 = vmatprep.subr.bf16.mxu0 %v2251
    %2967 = vmatpush1.bf16.msra.mxu0 %v2250
    %2968 = vmatprep.subr.bf16.mxu0 %v2243
    %2969 = vmatpush1.bf16.msra.mxu0 %v2242
    %2970 = vmatprep.subr.bf16.mxu0 %v2235
    %2971 = vmatpush1.bf16.msra.mxu0 %v2234
    %2972 = vmatprep.subr.bf16.mxu0 %v2355
    %2973 = vmatpush2.bf16.msra.mxu0 %v2354
    %2974 = vmatprep.subr.bf16.mxu0 %v2347
    %2975 = vmatpush2.bf16.msra.mxu0 %v2346
    %2976 = vmatprep.subr.bf16.mxu0 %v2339
    %2977 = vmatpush2.bf16.msra.mxu0 %v2338
    %2978 = vmatprep.subr.bf16.mxu0 %v2331
    %2979 = vmatpush2.bf16.msra.mxu0 %v2330
    %2980 = vmatprep.subr.bf16.mxu0 %v2323
    %2981 = vmatpush2.bf16.msra.mxu0 %v2322
    %2982 = vmatprep.subr.bf16.mxu0 %v2315
    %2983 = vmatpush2.bf16.msra.mxu0 %v2314
    %2984 = vmatprep.subr.bf16.mxu0 %v2307
    %2985 = vmatpush2.bf16.msra.mxu0 %v2306
    %2986 = vmatprep.subr.bf16.mxu0 %v2299
    %2987 = vmatpush2.bf16.msra.mxu0 %v2298
    %2988 = vmatprep.mubr.bf16.mxu0 %v625
    %2989 = vmatmul.mubr.bf16.gmra.mxu0 %v624
    %v2990 = vpop.f32.mrf.mxu0
    %v2991 = vadd.f32 %v2950, %v2990
    %v2992 = vpop.f32.mrf.mxu0
    %v2993 = vadd.f32 %v2952, %v2992
    %v2994 = vpop.f32.mrf.mxu0
    %v2995 = vpop.f32.mrf.mxu0
    %2996 = vdwg.mxu0
    %2997 = vmatprep.subr.bf16.mxu0 %v2419
    %2998 = vmatpush1.bf16.msra.mxu0 %v2418
    %2999 = vmatprep.subr.bf16.mxu0 %v2411
    %3000 = vmatpush1.bf16.msra.mxu0 %v2410
    %3001 = vmatprep.subr.bf16.mxu0 %v2403
    %3002 = vmatpush1.bf16.msra.mxu0 %v2402
    %3003 = vmatprep.subr.bf16.mxu0 %v2395
    %3004 = vmatpush1.bf16.msra.mxu0 %v2394
    %3005 = vmatprep.subr.bf16.mxu0 %v2387
    %3006 = vmatpush1.bf16.msra.mxu0 %v2386
    %3007 = vmatprep.subr.bf16.mxu0 %v2379
    %3008 = vmatpush1.bf16.msra.mxu0 %v2378
    %3009 = vmatprep.subr.bf16.mxu0 %v2371
    %3010 = vmatpush1.bf16.msra.mxu0 %v2370
    %3011 = vmatprep.subr.bf16.mxu0 %v2363
    %3012 = vmatpush1.bf16.msra.mxu0 %v2362
    %3013 = vmatprep.subr.bf16.mxu0 0
    %3014 = vmatpush2.bf16.msra.mxu0 0
    %3015 = vmatprep.subr.bf16.mxu0 0
    %3016 = vmatpush2.bf16.msra.mxu0 0
    %3017 = vmatprep.subr.bf16.mxu0 0
    %3018 = vmatpush2.bf16.msra.mxu0 0
    %3019 = vmatprep.subr.bf16.mxu0 0
    %3020 = vmatpush2.bf16.msra.mxu0 0
    %3021 = vmatprep.subr.bf16.mxu0 0
    %3022 = vmatpush2.bf16.msra.mxu0 0
    %3023 = vmatprep.subr.bf16.mxu0 0
    %3024 = vmatpush2.bf16.msra.mxu0 0
    %3025 = vmatprep.subr.bf16.mxu0 0
    %3026 = vmatpush2.bf16.msra.mxu0 0
    %3027 = vmatprep.subr.bf16.mxu0 0
    %3028 = vmatpush2.bf16.msra.mxu0 0
    %3029 = vmatprep.mubr.bf16.mxu0 0
    %3030 = vmatmul.mubr.bf16.gmra.mxu0 %v626
    %v3031 = vpop.f32.mrf.mxu0
    %v3032 = vadd.f32 %v2991, %v3031
    %v3033 = vpop.f32.mrf.mxu0
    %v3034 = vadd.f32 %v2993, %v3033
    %v3035 = vpop.f32.mrf.mxu0
    %v3036 = vpop.f32.mrf.mxu0
    %3037 = vdwg.mxu0
    %3038 = vmatprep.subr.bf16.mxu0 %v2037
    %3039 = vmatpush1.bf16.msra.mxu0 %v2036
    %3040 = vmatprep.subr.bf16.mxu0 %v2029
    %3041 = vmatpush1.bf16.msra.mxu0 %v2028
    %3042 = vmatprep.subr.bf16.mxu0 %v2021
    %3043 = vmatpush1.bf16.msra.mxu0 %v2020
    %3044 = vmatprep.subr.bf16.mxu0 %v2013
    %3045 = vmatpush1.bf16.msra.mxu0 %v2012
    %3046 = vmatprep.subr.bf16.mxu0 %v2005
    %3047 = vmatpush1.bf16.msra.mxu0 %v2004
    %3048 = vmatprep.subr.bf16.mxu0 %v1997
    %3049 = vmatpush1.bf16.msra.mxu0 %v1996
    %3050 = vmatprep.subr.bf16.mxu0 %v1989
    %3051 = vmatpush1.bf16.msra.mxu0 %v1988
    %3052 = vmatprep.subr.bf16.mxu0 %v1981
    %3053 = vmatpush1.bf16.msra.mxu0 %v1980
    %3054 = vmatprep.subr.bf16.mxu0 %v2101
    %3055 = vmatpush2.bf16.msra.mxu0 %v2100
    %3056 = vmatprep.subr.bf16.mxu0 %v2093
    %3057 = vmatpush2.bf16.msra.mxu0 %v2092
    %3058 = vmatprep.subr.bf16.mxu0 %v2085
    %3059 = vmatpush2.bf16.msra.mxu0 %v2084
    %3060 = vmatprep.subr.bf16.mxu0 %v2077
    %3061 = vmatpush2.bf16.msra.mxu0 %v2076
    %3062 = vmatprep.subr.bf16.mxu0 %v2069
    %3063 = vmatpush2.bf16.msra.mxu0 %v2068
    %3064 = vmatprep.subr.bf16.mxu0 %v2061
    %3065 = vmatpush2.bf16.msra.mxu0 %v2060
    %3066 = vmatprep.subr.bf16.mxu0 %v2053
    %3067 = vmatpush2.bf16.msra.mxu0 %v2052
    %3068 = vmatprep.subr.bf16.mxu0 %v2045
    %3069 = vmatpush2.bf16.msra.mxu0 %v2044
    %3070 = vmatprep.mubr.bf16.mxu0 %v621
    %3071 = vmatmul.mubr.bf16.gmra.mxu0 %v620
    %v3072 = vpop.f32.mrf.mxu0
    %v3073 = vadd.f32 %v580, %v3072
    %v3074 = vpop.f32.mrf.mxu0
    %v3075 = vadd.f32 %v584, %v3074
    %v3076 = vpop.f32.mrf.mxu0
    %v3077 = vpop.f32.mrf.mxu0
    %3078 = vdwg.mxu0
    %3079 = vmatprep.subr.bf16.mxu0 %v2165
    %3080 = vmatpush1.bf16.msra.mxu0 %v2164
    %3081 = vmatprep.subr.bf16.mxu0 %v2157
    %3082 = vmatpush1.bf16.msra.mxu0 %v2156
    %3083 = vmatprep.subr.bf16.mxu0 %v2149
    %3084 = vmatpush1.bf16.msra.mxu0 %v2148
    %3085 = vmatprep.subr.bf16.mxu0 %v2141
    %3086 = vmatpush1.bf16.msra.mxu0 %v2140
    %3087 = vmatprep.subr.bf16.mxu0 %v2133
    %3088 = vmatpush1.bf16.msra.mxu0 %v2132
    %3089 = vmatprep.subr.bf16.mxu0 %v2125
    %3090 = vmatpush1.bf16.msra.mxu0 %v2124
    %3091 = vmatprep.subr.bf16.mxu0 %v2117
    %3092 = vmatpush1.bf16.msra.mxu0 %v2116
    %3093 = vmatprep.subr.bf16.mxu0 %v2109
    %3094 = vmatpush1.bf16.msra.mxu0 %v2108
    %3095 = vmatprep.subr.bf16.mxu0 %v2229
    %3096 = vmatpush2.bf16.msra.mxu0 %v2228
    %3097 = vmatprep.subr.bf16.mxu0 %v2221
    %3098 = vmatpush2.bf16.msra.mxu0 %v2220
    %3099 = vmatprep.subr.bf16.mxu0 %v2213
    %3100 = vmatpush2.bf16.msra.mxu0 %v2212
    %3101 = vmatprep.subr.bf16.mxu0 %v2205
    %3102 = vmatpush2.bf16.msra.mxu0 %v2204
    %3103 = vmatprep.subr.bf16.mxu0 %v2197
    %3104 = vmatpush2.bf16.msra.mxu0 %v2196
    %3105 = vmatprep.subr.bf16.mxu0 %v2189
    %3106 = vmatpush2.bf16.msra.mxu0 %v2188
    %3107 = vmatprep.subr.bf16.mxu0 %v2181
    %3108 = vmatpush2.bf16.msra.mxu0 %v2180
    %3109 = vmatprep.subr.bf16.mxu0 %v2173
    %3110 = vmatpush2.bf16.msra.mxu0 %v2172
    %3111 = vmatprep.mubr.bf16.mxu0 %v623
    %3112 = vmatmul.mubr.bf16.gmra.mxu0 %v622
    %v3113 = vpop.f32.mrf.mxu0
    %v3114 = vadd.f32 %v3073, %v3113
    %v3115 = vpop.f32.mrf.mxu0
    %v3116 = vadd.f32 %v3075, %v3115
    %v3117 = vpop.f32.mrf.mxu0
    %v3118 = vpop.f32.mrf.mxu0
    %3119 = vdwg.mxu0
    %3120 = vmatprep.subr.bf16.mxu0 %v2293
    %3121 = vmatpush1.bf16.msra.mxu0 %v2292
    %3122 = vmatprep.subr.bf16.mxu0 %v2285
    %3123 = vmatpush1.bf16.msra.mxu0 %v2284
    %3124 = vmatprep.subr.bf16.mxu0 %v2277
    %3125 = vmatpush1.bf16.msra.mxu0 %v2276
    %3126 = vmatprep.subr.bf16.mxu0 %v2269
    %3127 = vmatpush1.bf16.msra.mxu0 %v2268
    %3128 = vmatprep.subr.bf16.mxu0 %v2261
    %3129 = vmatpush1.bf16.msra.mxu0 %v2260
    %3130 = vmatprep.subr.bf16.mxu0 %v2253
    %3131 = vmatpush1.bf16.msra.mxu0 %v2252
    %3132 = vmatprep.subr.bf16.mxu0 %v2245
    %3133 = vmatpush1.bf16.msra.mxu0 %v2244
    %3134 = vmatprep.subr.bf16.mxu0 %v2237
    %3135 = vmatpush1.bf16.msra.mxu0 %v2236
    %3136 = vmatprep.subr.bf16.mxu0 %v2357
    %3137 = vmatpush2.bf16.msra.mxu0 %v2356
    %3138 = vmatprep.subr.bf16.mxu0 %v2349
    %3139 = vmatpush2.bf16.msra.mxu0 %v2348
    %3140 = vmatprep.subr.bf16.mxu0 %v2341
    %3141 = vmatpush2.bf16.msra.mxu0 %v2340
    %3142 = vmatprep.subr.bf16.mxu0 %v2333
    %3143 = vmatpush2.bf16.msra.mxu0 %v2332
    %3144 = vmatprep.subr.bf16.mxu0 %v2325
    %3145 = vmatpush2.bf16.msra.mxu0 %v2324
    %3146 = vmatprep.subr.bf16.mxu0 %v2317
    %3147 = vmatpush2.bf16.msra.mxu0 %v2316
    %3148 = vmatprep.subr.bf16.mxu0 %v2309
    %3149 = vmatpush2.bf16.msra.mxu0 %v2308
    %3150 = vmatprep.subr.bf16.mxu0 %v2301
    %3151 = vmatpush2.bf16.msra.mxu0 %v2300
    %3152 = vmatprep.mubr.bf16.mxu0 %v625
    %3153 = vmatmul.mubr.bf16.gmra.mxu0 %v624
    %v3154 = vpop.f32.mrf.mxu0
    %v3155 = vadd.f32 %v3114, %v3154
    %v3156 = vpop.f32.mrf.mxu0
    %v3157 = vadd.f32 %v3116, %v3156
    %v3158 = vpop.f32.mrf.mxu0
    %v3159 = vpop.f32.mrf.mxu0
    %3160 = vdwg.mxu0
    %3161 = vmatprep.subr.bf16.mxu0 %v2421
    %3162 = vmatpush1.bf16.msra.mxu0 %v2420
    %3163 = vmatprep.subr.bf16.mxu0 %v2413
    %3164 = vmatpush1.bf16.msra.mxu0 %v2412
    %3165 = vmatprep.subr.bf16.mxu0 %v2405
    %3166 = vmatpush1.bf16.msra.mxu0 %v2404
    %3167 = vmatprep.subr.bf16.mxu0 %v2397
    %3168 = vmatpush1.bf16.msra.mxu0 %v2396
    %3169 = vmatprep.subr.bf16.mxu0 %v2389
    %3170 = vmatpush1.bf16.msra.mxu0 %v2388
    %3171 = vmatprep.subr.bf16.mxu0 %v2381
    %3172 = vmatpush1.bf16.msra.mxu0 %v2380
    %3173 = vmatprep.subr.bf16.mxu0 %v2373
    %3174 = vmatpush1.bf16.msra.mxu0 %v2372
    %3175 = vmatprep.subr.bf16.mxu0 %v2365
    %3176 = vmatpush1.bf16.msra.mxu0 %v2364
    %3177 = vmatprep.subr.bf16.mxu0 0
    %3178 = vmatpush2.bf16.msra.mxu0 0
    %3179 = vmatprep.subr.bf16.mxu0 0
    %3180 = vmatpush2.bf16.msra.mxu0 0
    %3181 = vmatprep.subr.bf16.mxu0 0
    %3182 = vmatpush2.bf16.msra.mxu0 0
    %3183 = vmatprep.subr.bf16.mxu0 0
    %3184 = vmatpush2.bf16.msra.mxu0 0
    %3185 = vmatprep.subr.bf16.mxu0 0
    %3186 = vmatpush2.bf16.msra.mxu0 0
    %3187 = vmatprep.subr.bf16.mxu0 0
    %3188 = vmatpush2.bf16.msra.mxu0 0
    %3189 = vmatprep.subr.bf16.mxu0 0
    %3190 = vmatpush2.bf16.msra.mxu0 0
    %3191 = vmatprep.subr.bf16.mxu0 0
    %3192 = vmatpush2.bf16.msra.mxu0 0
    %3193 = vmatprep.mubr.bf16.mxu0 0
    %3194 = vmatmul.mubr.bf16.gmra.mxu0 %v626
    %v3195 = vpop.f32.mrf.mxu0
    %v3196 = vadd.f32 %v3155, %v3195
    %v3197 = vpop.f32.mrf.mxu0
    %v3198 = vadd.f32 %v3157, %v3197
    %v3199 = vpop.f32.mrf.mxu0
    %v3200 = vpop.f32.mrf.mxu0
    %3201 = vdwg.mxu0
    %3202 = vmatprep.subr.bf16.mxu0 %v2039
    %3203 = vmatpush1.bf16.msra.mxu0 %v2038
    %3204 = vmatprep.subr.bf16.mxu0 %v2031
    %3205 = vmatpush1.bf16.msra.mxu0 %v2030
    %3206 = vmatprep.subr.bf16.mxu0 %v2023
    %3207 = vmatpush1.bf16.msra.mxu0 %v2022
    %3208 = vmatprep.subr.bf16.mxu0 %v2015
    %3209 = vmatpush1.bf16.msra.mxu0 %v2014
    %3210 = vmatprep.subr.bf16.mxu0 %v2007
    %3211 = vmatpush1.bf16.msra.mxu0 %v2006
    %3212 = vmatprep.subr.bf16.mxu0 %v1999
    %3213 = vmatpush1.bf16.msra.mxu0 %v1998
    %3214 = vmatprep.subr.bf16.mxu0 %v1991
    %3215 = vmatpush1.bf16.msra.mxu0 %v1990
    %3216 = vmatprep.subr.bf16.mxu0 %v1983
    %3217 = vmatpush1.bf16.msra.mxu0 %v1982
    %3218 = vmatprep.subr.bf16.mxu0 %v2103
    %3219 = vmatpush2.bf16.msra.mxu0 %v2102
    %3220 = vmatprep.subr.bf16.mxu0 %v2095
    %3221 = vmatpush2.bf16.msra.mxu0 %v2094
    %3222 = vmatprep.subr.bf16.mxu0 %v2087
    %3223 = vmatpush2.bf16.msra.mxu0 %v2086
    %3224 = vmatprep.subr.bf16.mxu0 %v2079
    %3225 = vmatpush2.bf16.msra.mxu0 %v2078
    %3226 = vmatprep.subr.bf16.mxu0 %v2071
    %3227 = vmatpush2.bf16.msra.mxu0 %v2070
    %3228 = vmatprep.subr.bf16.mxu0 %v2063
    %3229 = vmatpush2.bf16.msra.mxu0 %v2062
    %3230 = vmatprep.subr.bf16.mxu0 %v2055
    %3231 = vmatpush2.bf16.msra.mxu0 %v2054
    %3232 = vmatprep.subr.bf16.mxu0 %v2047
    %3233 = vmatpush2.bf16.msra.mxu0 %v2046
    %3234 = vmatprep.mubr.bf16.mxu0 %v621
    %3235 = vmatmul.mubr.bf16.gmra.mxu0 %v620
    %v3236 = vpop.f32.mrf.mxu0
    %v3237 = vadd.f32 %v588, %v3236
    %v3238 = vpop.f32.mrf.mxu0
    %v3239 = vadd.f32 %v592, %v3238
    %v3240 = vpop.f32.mrf.mxu0
    %v3241 = vpop.f32.mrf.mxu0
    %3242 = vdwg.mxu0
    %3243 = vmatprep.subr.bf16.mxu0 %v2167
    %3244 = vmatpush1.bf16.msra.mxu0 %v2166
    %3245 = vmatprep.subr.bf16.mxu0 %v2159
    %3246 = vmatpush1.bf16.msra.mxu0 %v2158
    %3247 = vmatprep.subr.bf16.mxu0 %v2151
    %3248 = vmatpush1.bf16.msra.mxu0 %v2150
    %3249 = vmatprep.subr.bf16.mxu0 %v2143
    %3250 = vmatpush1.bf16.msra.mxu0 %v2142
    %3251 = vmatprep.subr.bf16.mxu0 %v2135
    %3252 = vmatpush1.bf16.msra.mxu0 %v2134
    %3253 = vmatprep.subr.bf16.mxu0 %v2127
    %3254 = vmatpush1.bf16.msra.mxu0 %v2126
    %3255 = vmatprep.subr.bf16.mxu0 %v2119
    %3256 = vmatpush1.bf16.msra.mxu0 %v2118
    %3257 = vmatprep.subr.bf16.mxu0 %v2111
    %3258 = vmatpush1.bf16.msra.mxu0 %v2110
    %3259 = vmatprep.subr.bf16.mxu0 %v2231
    %3260 = vmatpush2.bf16.msra.mxu0 %v2230
    %3261 = vmatprep.subr.bf16.mxu0 %v2223
    %3262 = vmatpush2.bf16.msra.mxu0 %v2222
    %3263 = vmatprep.subr.bf16.mxu0 %v2215
    %3264 = vmatpush2.bf16.msra.mxu0 %v2214
    %3265 = vmatprep.subr.bf16.mxu0 %v2207
    %3266 = vmatpush2.bf16.msra.mxu0 %v2206
    %3267 = vmatprep.subr.bf16.mxu0 %v2199
    %3268 = vmatpush2.bf16.msra.mxu0 %v2198
    %3269 = vmatprep.subr.bf16.mxu0 %v2191
    %3270 = vmatpush2.bf16.msra.mxu0 %v2190
    %3271 = vmatprep.subr.bf16.mxu0 %v2183
    %3272 = vmatpush2.bf16.msra.mxu0 %v2182
    %3273 = vmatprep.subr.bf16.mxu0 %v2175
    %3274 = vmatpush2.bf16.msra.mxu0 %v2174
    %3275 = vmatprep.mubr.bf16.mxu0 %v623
    %3276 = vmatmul.mubr.bf16.gmra.mxu0 %v622
    %v3277 = vpop.f32.mrf.mxu0
    %v3278 = vadd.f32 %v3237, %v3277
    %v3279 = vpop.f32.mrf.mxu0
    %v3280 = vadd.f32 %v3239, %v3279
    %v3281 = vpop.f32.mrf.mxu0
    %v3282 = vpop.f32.mrf.mxu0
    %3283 = vdwg.mxu0
    %3284 = vmatprep.subr.bf16.mxu0 %v2295
    %3285 = vmatpush1.bf16.msra.mxu0 %v2294
    %3286 = vmatprep.subr.bf16.mxu0 %v2287
    %3287 = vmatpush1.bf16.msra.mxu0 %v2286
    %3288 = vmatprep.subr.bf16.mxu0 %v2279
    %3289 = vmatpush1.bf16.msra.mxu0 %v2278
    %3290 = vmatprep.subr.bf16.mxu0 %v2271
    %3291 = vmatpush1.bf16.msra.mxu0 %v2270
    %3292 = vmatprep.subr.bf16.mxu0 %v2263
    %3293 = vmatpush1.bf16.msra.mxu0 %v2262
    %3294 = vmatprep.subr.bf16.mxu0 %v2255
    %3295 = vmatpush1.bf16.msra.mxu0 %v2254
    %3296 = vmatprep.subr.bf16.mxu0 %v2247
    %3297 = vmatpush1.bf16.msra.mxu0 %v2246
    %3298 = vmatprep.subr.bf16.mxu0 %v2239
    %3299 = vmatpush1.bf16.msra.mxu0 %v2238
    %3300 = vmatprep.subr.bf16.mxu0 %v2359
    %3301 = vmatpush2.bf16.msra.mxu0 %v2358
    %3302 = vmatprep.subr.bf16.mxu0 %v2351
    %3303 = vmatpush2.bf16.msra.mxu0 %v2350
    %3304 = vmatprep.subr.bf16.mxu0 %v2343
    %3305 = vmatpush2.bf16.msra.mxu0 %v2342
    %3306 = vmatprep.subr.bf16.mxu0 %v2335
    %3307 = vmatpush2.bf16.msra.mxu0 %v2334
    %3308 = vmatprep.subr.bf16.mxu0 %v2327
    %3309 = vmatpush2.bf16.msra.mxu0 %v2326
    %3310 = vmatprep.subr.bf16.mxu0 %v2319
    %3311 = vmatpush2.bf16.msra.mxu0 %v2318
    %3312 = vmatprep.subr.bf16.mxu0 %v2311
    %3313 = vmatpush2.bf16.msra.mxu0 %v2310
    %3314 = vmatprep.subr.bf16.mxu0 %v2303
    %3315 = vmatpush2.bf16.msra.mxu0 %v2302
    %3316 = vmatprep.mubr.bf16.mxu0 %v625
    %3317 = vmatmul.mubr.bf16.gmra.mxu0 %v624
    %v3318 = vpop.f32.mrf.mxu0
    %v3319 = vadd.f32 %v3278, %v3318
    %v3320 = vpop.f32.mrf.mxu0
    %v3321 = vadd.f32 %v3280, %v3320
    %v3322 = vpop.f32.mrf.mxu0
    %v3323 = vpop.f32.mrf.mxu0
    %3324 = vdwg.mxu0
    %3325 = vmatprep.subr.bf16.mxu0 %v2423
    %3326 = vmatpush1.bf16.msra.mxu0 %v2422
    %3327 = vmatprep.subr.bf16.mxu0 %v2415
    %3328 = vmatpush1.bf16.msra.mxu0 %v2414
    %3329 = vmatprep.subr.bf16.mxu0 %v2407
    %3330 = vmatpush1.bf16.msra.mxu0 %v2406
    %3331 = vmatprep.subr.bf16.mxu0 %v2399
    %3332 = vmatpush1.bf16.msra.mxu0 %v2398
    %3333 = vmatprep.subr.bf16.mxu0 %v2391
    %3334 = vmatpush1.bf16.msra.mxu0 %v2390
    %3335 = vmatprep.subr.bf16.mxu0 %v2383
    %3336 = vmatpush1.bf16.msra.mxu0 %v2382
    %3337 = vmatprep.subr.bf16.mxu0 %v2375
    %3338 = vmatpush1.bf16.msra.mxu0 %v2374
    %3339 = vmatprep.subr.bf16.mxu0 %v2367
    %3340 = vmatpush1.bf16.msra.mxu0 %v2366
    %3341 = vmatprep.subr.bf16.mxu0 0
    %3342 = vmatpush2.bf16.msra.mxu0 0
    %3343 = vmatprep.subr.bf16.mxu0 0
    %3344 = vmatpush2.bf16.msra.mxu0 0
    %3345 = vmatprep.subr.bf16.mxu0 0
    %3346 = vmatpush2.bf16.msra.mxu0 0
    %3347 = vmatprep.subr.bf16.mxu0 0
    %3348 = vmatpush2.bf16.msra.mxu0 0
    %3349 = vmatprep.subr.bf16.mxu0 0
    %3350 = vmatpush2.bf16.msra.mxu0 0
    %3351 = vmatprep.subr.bf16.mxu0 0
    %3352 = vmatpush2.bf16.msra.mxu0 0
    %3353 = vmatprep.subr.bf16.mxu0 0
    %3354 = vmatpush2.bf16.msra.mxu0 0
    %3355 = vmatprep.subr.bf16.mxu0 0
    %3356 = vmatpush2.bf16.msra.mxu0 0
    %3357 = vmatprep.mubr.bf16.mxu0 0
    %3358 = vmatmul.mubr.bf16.gmra.mxu0 %v626
    %v3359 = vpop.f32.mrf.mxu0
    %v3360 = vadd.f32 %v3319, %v3359
    %v3361 = vpop.f32.mrf.mxu0
    %v3362 = vadd.f32 %v3321, %v3361
    %v3363 = vpop.f32.mrf.mxu0
    %v3364 = vpop.f32.mrf.mxu0
    %3365 = vdwg.mxu0
    %3366 = vmatprep.subr.bf16.mxu0 %v2041
    %3367 = vmatpush1.bf16.msra.mxu0 %v2040
    %3368 = vmatprep.subr.bf16.mxu0 %v2033
    %3369 = vmatpush1.bf16.msra.mxu0 %v2032
    %3370 = vmatprep.subr.bf16.mxu0 %v2025
    %3371 = vmatpush1.bf16.msra.mxu0 %v2024
    %3372 = vmatprep.subr.bf16.mxu0 %v2017
    %3373 = vmatpush1.bf16.msra.mxu0 %v2016
    %3374 = vmatprep.subr.bf16.mxu0 %v2009
    %3375 = vmatpush1.bf16.msra.mxu0 %v2008
    %3376 = vmatprep.subr.bf16.mxu0 %v2001
    %3377 = vmatpush1.bf16.msra.mxu0 %v2000
    %3378 = vmatprep.subr.bf16.mxu0 %v1993
    %3379 = vmatpush1.bf16.msra.mxu0 %v1992
    %3380 = vmatprep.subr.bf16.mxu0 %v1985
    %3381 = vmatpush1.bf16.msra.mxu0 %v1984
    %3382 = vmatprep.subr.bf16.mxu0 %v2105
    %3383 = vmatpush2.bf16.msra.mxu0 %v2104
    %3384 = vmatprep.subr.bf16.mxu0 %v2097
    %3385 = vmatpush2.bf16.msra.mxu0 %v2096
    %3386 = vmatprep.subr.bf16.mxu0 %v2089
    %3387 = vmatpush2.bf16.msra.mxu0 %v2088
    %3388 = vmatprep.subr.bf16.mxu0 %v2081
    %3389 = vmatpush2.bf16.msra.mxu0 %v2080
    %3390 = vmatprep.subr.bf16.mxu0 %v2073
    %3391 = vmatpush2.bf16.msra.mxu0 %v2072
    %3392 = vmatprep.subr.bf16.mxu0 %v2065
    %3393 = vmatpush2.bf16.msra.mxu0 %v2064
    %3394 = vmatprep.subr.bf16.mxu0 %v2057
    %3395 = vmatpush2.bf16.msra.mxu0 %v2056
    %3396 = vmatprep.subr.bf16.mxu0 %v2049
    %3397 = vmatpush2.bf16.msra.mxu0 %v2048
    %3398 = vmatprep.mubr.bf16.mxu0 %v621
    %3399 = vmatmul.mubr.bf16.gmra.mxu0 %v620
    %v3400 = vpop.f32.mrf.mxu0
    %v3401 = vadd.f32 %v596, %v3400
    %v3402 = vpop.f32.mrf.mxu0
    %v3403 = vadd.f32 %v600, %v3402
    %v3404 = vpop.f32.mrf.mxu0
    %v3405 = vpop.f32.mrf.mxu0
    %3406 = vdwg.mxu0
    %3407 = vmatprep.subr.bf16.mxu0 %v2169
    %3408 = vmatpush1.bf16.msra.mxu0 %v2168
    %3409 = vmatprep.subr.bf16.mxu0 %v2161
    %3410 = vmatpush1.bf16.msra.mxu0 %v2160
    %3411 = vmatprep.subr.bf16.mxu0 %v2153
    %3412 = vmatpush1.bf16.msra.mxu0 %v2152
    %3413 = vmatprep.subr.bf16.mxu0 %v2145
    %3414 = vmatpush1.bf16.msra.mxu0 %v2144
    %3415 = vmatprep.subr.bf16.mxu0 %v2137
    %3416 = vmatpush1.bf16.msra.mxu0 %v2136
    %3417 = vmatprep.subr.bf16.mxu0 %v2129
    %3418 = vmatpush1.bf16.msra.mxu0 %v2128
    %3419 = vmatprep.subr.bf16.mxu0 %v2121
    %3420 = vmatpush1.bf16.msra.mxu0 %v2120
    %3421 = vmatprep.subr.bf16.mxu0 %v2113
    %3422 = vmatpush1.bf16.msra.mxu0 %v2112
    %3423 = vmatprep.subr.bf16.mxu0 %v2233
    %3424 = vmatpush2.bf16.msra.mxu0 %v2232
    %3425 = vmatprep.subr.bf16.mxu0 %v2225
    %3426 = vmatpush2.bf16.msra.mxu0 %v2224
    %3427 = vmatprep.subr.bf16.mxu0 %v2217
    %3428 = vmatpush2.bf16.msra.mxu0 %v2216
    %3429 = vmatprep.subr.bf16.mxu0 %v2209
    %3430 = vmatpush2.bf16.msra.mxu0 %v2208
    %3431 = vmatprep.subr.bf16.mxu0 %v2201
    %3432 = vmatpush2.bf16.msra.mxu0 %v2200
    %3433 = vmatprep.subr.bf16.mxu0 %v2193
    %3434 = vmatpush2.bf16.msra.mxu0 %v2192
    %3435 = vmatprep.subr.bf16.mxu0 %v2185
    %3436 = vmatpush2.bf16.msra.mxu0 %v2184
    %3437 = vmatprep.subr.bf16.mxu0 %v2177
    %3438 = vmatpush2.bf16.msra.mxu0 %v2176
    %3439 = vmatprep.mubr.bf16.mxu0 %v623
    %3440 = vmatmul.mubr.bf16.gmra.mxu0 %v622
    %v3441 = vpop.f32.mrf.mxu0
    %v3442 = vadd.f32 %v3401, %v3441
    %v3443 = vpop.f32.mrf.mxu0
    %v3444 = vadd.f32 %v3403, %v3443
    %v3445 = vpop.f32.mrf.mxu0
    %v3446 = vpop.f32.mrf.mxu0
    %3447 = vdwg.mxu0
    %3448 = vmatprep.subr.bf16.mxu0 %v2297
    %3449 = vmatpush1.bf16.msra.mxu0 %v2296
    %3450 = vmatprep.subr.bf16.mxu0 %v2289
    %3451 = vmatpush1.bf16.msra.mxu0 %v2288
    %3452 = vmatprep.subr.bf16.mxu0 %v2281
    %3453 = vmatpush1.bf16.msra.mxu0 %v2280
    %3454 = vmatprep.subr.bf16.mxu0 %v2273
    %3455 = vmatpush1.bf16.msra.mxu0 %v2272
    %3456 = vmatprep.subr.bf16.mxu0 %v2265
    %3457 = vmatpush1.bf16.msra.mxu0 %v2264
    %3458 = vmatprep.subr.bf16.mxu0 %v2257
    %3459 = vmatpush1.bf16.msra.mxu0 %v2256
    %3460 = vmatprep.subr.bf16.mxu0 %v2249
    %3461 = vmatpush1.bf16.msra.mxu0 %v2248
    %3462 = vmatprep.subr.bf16.mxu0 %v2241
    %3463 = vmatpush1.bf16.msra.mxu0 %v2240
    %3464 = vmatprep.subr.bf16.mxu0 %v2361
    %3465 = vmatpush2.bf16.msra.mxu0 %v2360
    %3466 = vmatprep.subr.bf16.mxu0 %v2353
    %3467 = vmatpush2.bf16.msra.mxu0 %v2352
    %3468 = vmatprep.subr.bf16.mxu0 %v2345
    %3469 = vmatpush2.bf16.msra.mxu0 %v2344
    %3470 = vmatprep.subr.bf16.mxu0 %v2337
    %3471 = vmatpush2.bf16.msra.mxu0 %v2336
    %3472 = vmatprep.subr.bf16.mxu0 %v2329
    %3473 = vmatpush2.bf16.msra.mxu0 %v2328
    %3474 = vmatprep.subr.bf16.mxu0 %v2321
    %3475 = vmatpush2.bf16.msra.mxu0 %v2320
    %3476 = vmatprep.subr.bf16.mxu0 %v2313
    %3477 = vmatpush2.bf16.msra.mxu0 %v2312
    %3478 = vmatprep.subr.bf16.mxu0 %v2305
    %3479 = vmatpush2.bf16.msra.mxu0 %v2304
    %3480 = vmatprep.mubr.bf16.mxu0 %v625
    %3481 = vmatmul.mubr.bf16.gmra.mxu0 %v624
    %v3482 = vpop.f32.mrf.mxu0
    %v3483 = vadd.f32 %v3442, %v3482
    %v3484 = vpop.f32.mrf.mxu0
    %v3485 = vadd.f32 %v3444, %v3484
    %v3486 = vpop.f32.mrf.mxu0
    %v3487 = vpop.f32.mrf.mxu0
    %3488 = vdwg.mxu0
    %3489 = vmatprep.subr.bf16.mxu0 %v2425
    %3490 = vmatpush1.bf16.msra.mxu0 %v2424
    %3491 = vmatprep.subr.bf16.mxu0 %v2417
    %3492 = vmatpush1.bf16.msra.mxu0 %v2416
    %3493 = vmatprep.subr.bf16.mxu0 %v2409
    %3494 = vmatpush1.bf16.msra.mxu0 %v2408
    %3495 = vmatprep.subr.bf16.mxu0 %v2401
    %3496 = vmatpush1.bf16.msra.mxu0 %v2400
    %3497 = vmatprep.subr.bf16.mxu0 %v2393
    %3498 = vmatpush1.bf16.msra.mxu0 %v2392
    %3499 = vmatprep.subr.bf16.mxu0 %v2385
    %3500 = vmatpush1.bf16.msra.mxu0 %v2384
    %3501 = vmatprep.subr.bf16.mxu0 %v2377
    %3502 = vmatpush1.bf16.msra.mxu0 %v2376
    %3503 = vmatprep.subr.bf16.mxu0 %v2369
    %3504 = vmatpush1.bf16.msra.mxu0 %v2368
    %3505 = vmatprep.subr.bf16.mxu0 0
    %3506 = vmatpush2.bf16.msra.mxu0 0
    %3507 = vmatprep.subr.bf16.mxu0 0
    %3508 = vmatpush2.bf16.msra.mxu0 0
    %3509 = vmatprep.subr.bf16.mxu0 0
    %3510 = vmatpush2.bf16.msra.mxu0 0
    %3511 = vmatprep.subr.bf16.mxu0 0
    %3512 = vmatpush2.bf16.msra.mxu0 0
    %3513 = vmatprep.subr.bf16.mxu0 0
    %3514 = vmatpush2.bf16.msra.mxu0 0
    %3515 = vmatprep.subr.bf16.mxu0 0
    %3516 = vmatpush2.bf16.msra.mxu0 0
    %3517 = vmatprep.subr.bf16.mxu0 0
    %3518 = vmatpush2.bf16.msra.mxu0 0
    %3519 = vmatprep.subr.bf16.mxu0 0
    %3520 = vmatpush2.bf16.msra.mxu0 0
    %3521 = vmatprep.mubr.bf16.mxu0 0
    %3522 = vmatmul.mubr.bf16.gmra.mxu0 %v626
    %v3523 = vpop.f32.mrf.mxu0
    %v3524 = vadd.f32 %v3483, %v3523
    %v3525 = vpop.f32.mrf.mxu0
    %v3526 = vadd.f32 %v3485, %v3525
    %v3527 = vpop.f32.mrf.mxu0
    %v3528 = vpop.f32.mrf.mxu0
    %3529 = vdwg.mxu0
    %v3530 = vmax.f32 %v3032, 0.0
    %v3531 = vmax.f32 %v3034, 0.0
    %v3532 = vmax.f32 %v3196, 0.0
    %v3533 = vmax.f32 %v3198, 0.0
    %v3534 = vmax.f32 %v3360, 0.0
    %v3535 = vmax.f32 %v3362, 0.0
    %v3536 = vmax.f32 %v3524, 0.0
    %v3537 = vmax.f32 %v3526, 0.0
    %v3538 = vpack.c.bf16 %v3530, %v3530
    %v3539 = vpack.c.bf16 %v3531, %v3531
    %v3540 = vpack.c.bf16 %v3532, %v3532
    %v3541 = vpack.c.bf16 %v3533, %v3533
    %v3542 = vpack.c.bf16 %v3534, %v3534
    %v3543 = vpack.c.bf16 %v3535, %v3535
    %v3544 = vpack.c.bf16 %v3536, %v3536
    %v3545 = vpack.c.bf16 %v3537, %v3537
    %v3546 = vld [vmem:[#allocation8] sm:$0xff]
    %v3547 = vld [vmem:[#allocation8 + $0x8] sm:$0xff]
    %v3548 = vld [vmem:[#allocation8 + $0x10] sm:$0xff]
    %v3549 = vld [vmem:[#allocation8 + $0x18] sm:$0xff]
    %v3550 = vld [vmem:[#allocation8 + $0x20] sm:$0xff]
    %v3551 = vld [vmem:[#allocation8 + $0x28] sm:$0xff]
    %v3552 = vld [vmem:[#allocation8 + $0x30] sm:$0xff]
    %v3553 = vld [vmem:[#allocation8 + $0x38] sm:$0xff]
    %v3554 = vld [vmem:[#allocation8 + $0x40] sm:$0xff]
    %v3555 = vld [vmem:[#allocation8 + $0x48] sm:$0xff]
    %v3556 = vld [vmem:[#allocation8 + $0x50] sm:$0xff]
    %v3557 = vld [vmem:[#allocation8 + $0x58] sm:$0xff]
    %v3558 = vld [vmem:[#allocation8 + $0x60] sm:$0xff]
    %v3559 = vld [vmem:[#allocation8 + $0x68] sm:$0xff]
    %v3560 = vld [vmem:[#allocation8 + $0x70] sm:$0xff]
    %v3561 = vld [vmem:[#allocation8 + $0x78] sm:$0xff]
    %v3562 = vld [vmem:[#allocation8 + $0x80] sm:$0xff]
    %v3563 = vld [vmem:[#allocation8 + $0x88] sm:$0xff]
    %v3564 = vld [vmem:[#allocation8 + $0x90] sm:$0xff]
    %v3565 = vld [vmem:[#allocation8 + $0x98] sm:$0xff]
    %v3566 = vld [vmem:[#allocation8 + $0xa0] sm:$0xff]
    %v3567 = vld [vmem:[#allocation8 + $0xa8] sm:$0xff]
    %v3568 = vld [vmem:[#allocation8 + $0xb0] sm:$0xff]
    %v3569 = vld [vmem:[#allocation8 + $0xb8] sm:$0xff]
    %v3570 = vld [vmem:[#allocation8 + $0xc0] sm:$0xff]
    %v3571 = vld [vmem:[#allocation8 + $0xc8] sm:$0xff]
    %v3572 = vld [vmem:[#allocation8 + $0xd0] sm:$0xff]
    %v3573 = vld [vmem:[#allocation8 + $0xd8] sm:$0xff]
    %v3574 = vld [vmem:[#allocation8 + $0xe0] sm:$0xff]
    %v3575 = vld [vmem:[#allocation8 + $0xe8] sm:$0xff]
    %v3576 = vld [vmem:[#allocation8 + $0xf0] sm:$0xff]
    %v3577 = vld [vmem:[#allocation8 + $0xf8] sm:$0xff]
    %v3578 = vld [vmem:[#allocation8 + $0x100] sm:$0xff]
    %v3579 = vld [vmem:[#allocation8 + $0x108] sm:$0xff]
    %v3580 = vld [vmem:[#allocation8 + $0x110] sm:$0xff]
    %v3581 = vld [vmem:[#allocation8 + $0x118] sm:$0xff]
    %v3582 = vld [vmem:[#allocation8 + $0x120] sm:$0xff]
    %v3583 = vld [vmem:[#allocation8 + $0x128] sm:$0xff]
    %v3584 = vld [vmem:[#allocation8 + $0x130] sm:$0xff]
    %v3585 = vld [vmem:[#allocation8 + $0x138] sm:$0xff]
    %v3586 = vld [vmem:[#allocation8 + $0x140] sm:$0xff]
    %v3587 = vld [vmem:[#allocation8 + $0x148] sm:$0xff]
    %v3588 = vld [vmem:[#allocation8 + $0x150] sm:$0xff]
    %v3589 = vld [vmem:[#allocation8 + $0x158] sm:$0xff]
    %v3590 = vld [vmem:[#allocation8 + $0x160] sm:$0xff]
    %v3591 = vld [vmem:[#allocation8 + $0x168] sm:$0xff]
    %v3592 = vld [vmem:[#allocation8 + $0x170] sm:$0xff]
    %v3593 = vld [vmem:[#allocation8 + $0x178] sm:$0xff]
    %v3594 = vld [vmem:[#allocation8 + $0x180] sm:$0xff]
    %v3595 = vld [vmem:[#allocation8 + $0x188] sm:$0xff]
    %v3596 = vld [vmem:[#allocation8 + $0x190] sm:$0xff]
    %v3597 = vld [vmem:[#allocation8 + $0x198] sm:$0xff]
    %v3598 = vld [vmem:[#allocation8 + $0x1a0] sm:$0xff]
    %v3599 = vld [vmem:[#allocation8 + $0x1a8] sm:$0xff]
    %v3600 = vld [vmem:[#allocation8 + $0x1b0] sm:$0xff]
    %v3601 = vld [vmem:[#allocation8 + $0x1b8] sm:$0xff]
    %v3602 = vld [vmem:[#allocation8 + $0x1c0] sm:$0xff]
    %v3603 = vld [vmem:[#allocation8 + $0x1c8] sm:$0xff]
    %v3604 = vld [vmem:[#allocation8 + $0x1d0] sm:$0xff]
    %v3605 = vld [vmem:[#allocation8 + $0x1d8] sm:$0xff]
    %v3606 = vld [vmem:[#allocation8 + $0x1e0] sm:$0xff]
    %v3607 = vld [vmem:[#allocation8 + $0x1e8] sm:$0xff]
    %v3608 = vld [vmem:[#allocation8 + $0x1f0] sm:$0xff]
    %v3609 = vld [vmem:[#allocation8 + $0x1f8] sm:$0xff]
    %v3610 = vld [vmem:[#allocation8 + $0x200] sm:$0xff]
    %v3611 = vld [vmem:[#allocation8 + $0x208] sm:$0xff]
    %v3612 = vld [vmem:[#allocation8 + $0x210] sm:$0xff]
    %v3613 = vld [vmem:[#allocation8 + $0x218] sm:$0xff]
    %v3614 = vld [vmem:[#allocation8 + $0x220] sm:$0xff]
    %v3615 = vld [vmem:[#allocation8 + $0x228] sm:$0xff]
    %v3616 = vld [vmem:[#allocation8 + $0x230] sm:$0xff]
    %v3617 = vld [vmem:[#allocation8 + $0x238] sm:$0xff]
    %v3618 = vld [vmem:[#allocation8 + $0x240] sm:$0xff]
    %v3619 = vld [vmem:[#allocation8 + $0x248] sm:$0xff]
    %v3620 = vld [vmem:[#allocation8 + $0x250] sm:$0xff]
    %v3621 = vld [vmem:[#allocation8 + $0x258] sm:$0xff]
    %v3622 = vld [vmem:[#allocation8 + $0x260] sm:$0xff]
    %v3623 = vld [vmem:[#allocation8 + $0x268] sm:$0xff]
    %v3624 = vld [vmem:[#allocation8 + $0x270] sm:$0xff]
    %v3625 = vld [vmem:[#allocation8 + $0x278] sm:$0xff]
    %v3626 = vld [vmem:[#allocation8 + $0x280] sm:$0xff]
    %v3627 = vld [vmem:[#allocation8 + $0x288] sm:$0xff]
    %v3628 = vld [vmem:[#allocation8 + $0x290] sm:$0xff]
    %v3629 = vld [vmem:[#allocation8 + $0x298] sm:$0xff]
    %v3630 = vld [vmem:[#allocation8 + $0x2a0] sm:$0xff]
    %v3631 = vld [vmem:[#allocation8 + $0x2a8] sm:$0xff]
    %v3632 = vld [vmem:[#allocation8 + $0x2b0] sm:$0xff]
    %v3633 = vld [vmem:[#allocation8 + $0x2b8] sm:$0xff]
    %v3634 = vld [vmem:[#allocation8 + $0x2c0] sm:$0xff]
    %v3635 = vld [vmem:[#allocation8 + $0x2c8] sm:$0xff]
    %v3636 = vld [vmem:[#allocation8 + $0x2d0] sm:$0xff]
    %v3637 = vld [vmem:[#allocation8 + $0x2d8] sm:$0xff]
    %v3638 = vld [vmem:[#allocation8 + $0x2e0] sm:$0xff]
    %v3639 = vld [vmem:[#allocation8 + $0x2e8] sm:$0xff]
    %v3640 = vld [vmem:[#allocation8 + $0x2f0] sm:$0xff]
    %v3641 = vld [vmem:[#allocation8 + $0x2f8] sm:$0xff]
    %v3642 = vld [vmem:[#allocation8 + $0x300] sm:$0xff]
    %v3643 = vld [vmem:[#allocation8 + $0x308] sm:$0xff]
    %v3644 = vld [vmem:[#allocation8 + $0x310] sm:$0xff]
    %v3645 = vld [vmem:[#allocation8 + $0x318] sm:$0xff]
    %v3646 = vld [vmem:[#allocation8 + $0x320] sm:$0xff]
    %v3647 = vld [vmem:[#allocation8 + $0x328] sm:$0xff]
    %v3648 = vld [vmem:[#allocation8 + $0x330] sm:$0xff]
    %v3649 = vld [vmem:[#allocation8 + $0x338] sm:$0xff]
    %v3650 = vld [vmem:[#allocation8 + $0x340] sm:$0xff]
    %v3651 = vld [vmem:[#allocation8 + $0x348] sm:$0xff]
    %v3652 = vld [vmem:[#allocation8 + $0x350] sm:$0xff]
    %v3653 = vld [vmem:[#allocation8 + $0x358] sm:$0xff]
    %v3654 = vld [vmem:[#allocation8 + $0x360] sm:$0xff]
    %v3655 = vld [vmem:[#allocation8 + $0x368] sm:$0xff]
    %v3656 = vld [vmem:[#allocation8 + $0x370] sm:$0xff]
    %v3657 = vld [vmem:[#allocation8 + $0x378] sm:$0xff]
    %v3658 = vld [vmem:[#allocation8 + $0x380] sm:$0xff]
    %v3659 = vld [vmem:[#allocation8 + $0x388] sm:$0xff]
    %v3660 = vld [vmem:[#allocation8 + $0x390] sm:$0xff]
    %v3661 = vld [vmem:[#allocation8 + $0x398] sm:$0xff]
    %v3662 = vld [vmem:[#allocation8 + $0x3a0] sm:$0xff]
    %v3663 = vld [vmem:[#allocation8 + $0x3a8] sm:$0xff]
    %v3664 = vld [vmem:[#allocation8 + $0x3b0] sm:$0xff]
    %v3665 = vld [vmem:[#allocation8 + $0x3b8] sm:$0xff]
    %v3666 = vld [vmem:[#allocation8 + $0x3c0] sm:$0xff]
    %v3667 = vld [vmem:[#allocation8 + $0x3c8] sm:$0xff]
    %v3668 = vld [vmem:[#allocation8 + $0x3d0] sm:$0xff]
    %v3669 = vld [vmem:[#allocation8 + $0x3d8] sm:$0xff]
    %v3670 = vld [vmem:[#allocation8 + $0x3e0] sm:$0xff]
    %v3671 = vld [vmem:[#allocation8 + $0x3e8] sm:$0xff]
    %v3672 = vld [vmem:[#allocation8 + $0x3f0] sm:$0xff]
    %v3673 = vld [vmem:[#allocation8 + $0x3f8] sm:$0xff]
    %v3674 = vld [vmem:[#allocation8 + $0x400] sm:$0xff]
    %v3675 = vld [vmem:[#allocation8 + $0x408] sm:$0xff]
    %v3676 = vld [vmem:[#allocation8 + $0x410] sm:$0xff]
    %v3677 = vld [vmem:[#allocation8 + $0x418] sm:$0xff]
    %v3678 = vld [vmem:[#allocation8 + $0x420] sm:$0xff]
    %v3679 = vld [vmem:[#allocation8 + $0x428] sm:$0xff]
    %v3680 = vld [vmem:[#allocation8 + $0x430] sm:$0xff]
    %v3681 = vld [vmem:[#allocation8 + $0x438] sm:$0xff]
    %v3682 = vld [vmem:[#allocation8 + $0x440] sm:$0xff]
    %v3683 = vld [vmem:[#allocation8 + $0x448] sm:$0xff]
    %v3684 = vld [vmem:[#allocation8 + $0x450] sm:$0xff]
    %v3685 = vld [vmem:[#allocation8 + $0x458] sm:$0xff]
    %v3686 = vld [vmem:[#allocation8 + $0x460] sm:$0xff]
    %v3687 = vld [vmem:[#allocation8 + $0x468] sm:$0xff]
    %v3688 = vld [vmem:[#allocation8 + $0x470] sm:$0xff]
    %v3689 = vld [vmem:[#allocation8 + $0x478] sm:$0xff]
    %v3690 = vld [vmem:[#allocation8 + $0x480] sm:$0xff]
    %v3691 = vld [vmem:[#allocation8 + $0x488] sm:$0xff]
    %v3692 = vld [vmem:[#allocation8 + $0x490] sm:$0xff]
    %v3693 = vld [vmem:[#allocation8 + $0x498] sm:$0xff]
    %v3694 = vld [vmem:[#allocation8 + $0x4a0] sm:$0xff]
    %v3695 = vld [vmem:[#allocation8 + $0x4a8] sm:$0xff]
    %v3696 = vld [vmem:[#allocation8 + $0x4b0] sm:$0xff]
    %v3697 = vld [vmem:[#allocation8 + $0x4b8] sm:$0xff]
    %v3698 = vld [vmem:[#allocation8 + $0x4c0] sm:$0xff]
    %v3699 = vld [vmem:[#allocation8 + $0x4c8] sm:$0xff]
    %v3700 = vld [vmem:[#allocation8 + $0x4d0] sm:$0xff]
    %v3701 = vld [vmem:[#allocation8 + $0x4d8] sm:$0xff]
    %v3702 = vld [vmem:[#allocation8 + $0x4e0] sm:$0xff]
    %v3703 = vld [vmem:[#allocation8 + $0x4e8] sm:$0xff]
    %v3704 = vld [vmem:[#allocation8 + $0x4f0] sm:$0xff]
    %v3705 = vld [vmem:[#allocation8 + $0x4f8] sm:$0xff]
    %v3706 = vld [vmem:[#allocation8 + $0x500] sm:$0xff]
    %v3707 = vld [vmem:[#allocation8 + $0x508] sm:$0xff]
    %v3708 = vld [vmem:[#allocation8 + $0x510] sm:$0xff]
    %v3709 = vld [vmem:[#allocation8 + $0x518] sm:$0xff]
    %v3710 = vld [vmem:[#allocation8 + $0x520] sm:$0xff]
    %v3711 = vld [vmem:[#allocation8 + $0x528] sm:$0xff]
    %v3712 = vld [vmem:[#allocation8 + $0x530] sm:$0xff]
    %v3713 = vld [vmem:[#allocation8 + $0x538] sm:$0xff]
    %v3714 = vld [vmem:[#allocation8 + $0x540] sm:$0xff]
    %v3715 = vld [vmem:[#allocation8 + $0x548] sm:$0xff]
    %v3716 = vld [vmem:[#allocation8 + $0x550] sm:$0xff]
    %v3717 = vld [vmem:[#allocation8 + $0x558] sm:$0xff]
    %v3718 = vld [vmem:[#allocation8 + $0x560] sm:$0xff]
    %v3719 = vld [vmem:[#allocation8 + $0x568] sm:$0xff]
    %v3720 = vld [vmem:[#allocation8 + $0x570] sm:$0xff]
    %v3721 = vld [vmem:[#allocation8 + $0x578] sm:$0xff]
    %v3722 = vld [vmem:[#allocation8 + $0x580] sm:$0xff]
    %v3723 = vld [vmem:[#allocation8 + $0x588] sm:$0xff]
    %v3724 = vld [vmem:[#allocation8 + $0x590] sm:$0xff]
    %v3725 = vld [vmem:[#allocation8 + $0x598] sm:$0xff]
    %v3726 = vld [vmem:[#allocation8 + $0x5a0] sm:$0xff]
    %v3727 = vld [vmem:[#allocation8 + $0x5a8] sm:$0xff]
    %v3728 = vld [vmem:[#allocation8 + $0x5b0] sm:$0xff]
    %v3729 = vld [vmem:[#allocation8 + $0x5b8] sm:$0xff]
    %v3730 = vld [vmem:[#allocation8 + $0x5c0] sm:$0xff]
    %v3731 = vld [vmem:[#allocation8 + $0x5c8] sm:$0xff]
    %v3732 = vld [vmem:[#allocation8 + $0x5d0] sm:$0xff]
    %v3733 = vld [vmem:[#allocation8 + $0x5d8] sm:$0xff]
    %v3734 = vld [vmem:[#allocation8 + $0x5e0] sm:$0xff]
    %v3735 = vld [vmem:[#allocation8 + $0x5e8] sm:$0xff]
    %v3736 = vld [vmem:[#allocation8 + $0x5f0] sm:$0xff]
    %v3737 = vld [vmem:[#allocation8 + $0x5f8] sm:$0xff]
    %v3738 = vld [vmem:[#allocation8 + $0x600] sm:$0xff]
    %v3739 = vld [vmem:[#allocation8 + $0x608] sm:$0xff]
    %v3740 = vld [vmem:[#allocation8 + $0x610] sm:$0xff]
    %v3741 = vld [vmem:[#allocation8 + $0x618] sm:$0xff]
    %v3742 = vld [vmem:[#allocation8 + $0x620] sm:$0xff]
    %v3743 = vld [vmem:[#allocation8 + $0x628] sm:$0xff]
    %v3744 = vld [vmem:[#allocation8 + $0x630] sm:$0xff]
    %v3745 = vld [vmem:[#allocation8 + $0x638] sm:$0xff]
    %v3746 = vld [vmem:[#allocation8 + $0x640] sm:$0xff]
    %v3747 = vld [vmem:[#allocation8 + $0x648] sm:$0xff]
    %v3748 = vld [vmem:[#allocation8 + $0x650] sm:$0xff]
    %v3749 = vld [vmem:[#allocation8 + $0x658] sm:$0xff]
    %v3750 = vld [vmem:[#allocation8 + $0x660] sm:$0xff]
    %v3751 = vld [vmem:[#allocation8 + $0x668] sm:$0xff]
    %v3752 = vld [vmem:[#allocation8 + $0x670] sm:$0xff]
    %v3753 = vld [vmem:[#allocation8 + $0x678] sm:$0xff]
    %v3754 = vld [vmem:[#allocation8 + $0x680] sm:$0xff]
    %v3755 = vld [vmem:[#allocation8 + $0x688] sm:$0xff]
    %v3756 = vld [vmem:[#allocation8 + $0x690] sm:$0xff]
    %v3757 = vld [vmem:[#allocation8 + $0x698] sm:$0xff]
    %v3758 = vld [vmem:[#allocation8 + $0x6a0] sm:$0xff]
    %v3759 = vld [vmem:[#allocation8 + $0x6a8] sm:$0xff]
    %v3760 = vld [vmem:[#allocation8 + $0x6b0] sm:$0xff]
    %v3761 = vld [vmem:[#allocation8 + $0x6b8] sm:$0xff]
    %v3762 = vld [vmem:[#allocation8 + $0x6c0] sm:$0xff]
    %v3763 = vld [vmem:[#allocation8 + $0x6c8] sm:$0xff]
    %v3764 = vld [vmem:[#allocation8 + $0x6d0] sm:$0xff]
    %v3765 = vld [vmem:[#allocation8 + $0x6d8] sm:$0xff]
    %v3766 = vld [vmem:[#allocation8 + $0x6e0] sm:$0xff]
    %v3767 = vld [vmem:[#allocation8 + $0x6e8] sm:$0xff]
    %v3768 = vld [vmem:[#allocation8 + $0x6f0] sm:$0xff]
    %v3769 = vld [vmem:[#allocation8 + $0x6f8] sm:$0xff]
    %v3770 = vld [vmem:[#allocation8 + $0x700] sm:$0xff]
    %v3771 = vld [vmem:[#allocation8 + $0x708] sm:$0xff]
    %v3772 = vld [vmem:[#allocation8 + $0x710] sm:$0xff]
    %v3773 = vld [vmem:[#allocation8 + $0x718] sm:$0xff]
    %v3774 = vld [vmem:[#allocation8 + $0x720] sm:$0xff]
    %v3775 = vld [vmem:[#allocation8 + $0x728] sm:$0xff]
    %v3776 = vld [vmem:[#allocation8 + $0x730] sm:$0xff]
    %v3777 = vld [vmem:[#allocation8 + $0x738] sm:$0xff]
    %v3778 = vld [vmem:[#allocation8 + $0x740] sm:$0xff]
    %v3779 = vld [vmem:[#allocation8 + $0x748] sm:$0xff]
    %v3780 = vld [vmem:[#allocation8 + $0x750] sm:$0xff]
    %v3781 = vld [vmem:[#allocation8 + $0x758] sm:$0xff]
    %v3782 = vld [vmem:[#allocation8 + $0x760] sm:$0xff]
    %v3783 = vld [vmem:[#allocation8 + $0x768] sm:$0xff]
    %v3784 = vld [vmem:[#allocation8 + $0x770] sm:$0xff]
    %v3785 = vld [vmem:[#allocation8 + $0x778] sm:$0xff]
    %v3786 = vld [vmem:[#allocation8 + $0x780] sm:$0xff]
    %v3787 = vld [vmem:[#allocation8 + $0x788] sm:$0xff]
    %v3788 = vld [vmem:[#allocation8 + $0x790] sm:$0xff]
    %v3789 = vld [vmem:[#allocation8 + $0x798] sm:$0xff]
    %v3790 = vld [vmem:[#allocation8 + $0x7a0] sm:$0xff]
    %v3791 = vld [vmem:[#allocation8 + $0x7a8] sm:$0xff]
    %v3792 = vld [vmem:[#allocation8 + $0x7b0] sm:$0xff]
    %v3793 = vld [vmem:[#allocation8 + $0x7b8] sm:$0xff]
    %v3794 = vld [vmem:[#allocation8 + $0x7c0] sm:$0xff]
    %v3795 = vld [vmem:[#allocation8 + $0x7c8] sm:$0xff]
    %v3796 = vld [vmem:[#allocation8 + $0x7d0] sm:$0xff]
    %v3797 = vld [vmem:[#allocation8 + $0x7d8] sm:$0xff]
    %v3798 = vld [vmem:[#allocation8 + $0x7e0] sm:$0xff]
    %v3799 = vld [vmem:[#allocation8 + $0x7e8] sm:$0xff]
    %v3800 = vld [vmem:[#allocation8 + $0x7f0] sm:$0xff]
    %v3801 = vld [vmem:[#allocation8 + $0x7f8] sm:$0xff]
    %v3802 = vld [vmem:[#allocation8 + $0x800] sm:$0xff]
    %v3803 = vld [vmem:[#allocation8 + $0x808] sm:$0xff]
    %v3804 = vld [vmem:[#allocation8 + $0x810] sm:$0xff]
    %v3805 = vld [vmem:[#allocation8 + $0x818] sm:$0xff]
    %v3806 = vld [vmem:[#allocation8 + $0x820] sm:$0xff]
    %v3807 = vld [vmem:[#allocation8 + $0x828] sm:$0xff]
    %v3808 = vld [vmem:[#allocation8 + $0x830] sm:$0xff]
    %v3809 = vld [vmem:[#allocation8 + $0x838] sm:$0xff]
    %v3810 = vld [vmem:[#allocation8 + $0x840] sm:$0xff]
    %v3811 = vld [vmem:[#allocation8 + $0x848] sm:$0xff]
    %v3812 = vld [vmem:[#allocation8 + $0x850] sm:$0xff]
    %v3813 = vld [vmem:[#allocation8 + $0x858] sm:$0xff]
    %v3814 = vld [vmem:[#allocation8 + $0x860] sm:$0xff]
    %v3815 = vld [vmem:[#allocation8 + $0x868] sm:$0xff]
    %v3816 = vld [vmem:[#allocation8 + $0x870] sm:$0xff]
    %v3817 = vld [vmem:[#allocation8 + $0x878] sm:$0xff]
    %v3818 = vld [vmem:[#allocation8 + $0x880] sm:$0xff]
    %v3819 = vld [vmem:[#allocation8 + $0x888] sm:$0xff]
    %v3820 = vld [vmem:[#allocation8 + $0x890] sm:$0xff]
    %v3821 = vld [vmem:[#allocation8 + $0x898] sm:$0xff]
    %v3822 = vld [vmem:[#allocation8 + $0x8a0] sm:$0xff]
    %v3823 = vld [vmem:[#allocation8 + $0x8a8] sm:$0xff]
    %v3824 = vld [vmem:[#allocation8 + $0x8b0] sm:$0xff]
    %v3825 = vld [vmem:[#allocation8 + $0x8b8] sm:$0xff]
    %v3826 = vld [vmem:[#allocation8 + $0x8c0] sm:$0xff]
    %v3827 = vld [vmem:[#allocation8 + $0x8c8] sm:$0xff]
    %v3828 = vld [vmem:[#allocation8 + $0x8d0] sm:$0xff]
    %v3829 = vld [vmem:[#allocation8 + $0x8d8] sm:$0xff]
    %v3830 = vld [vmem:[#allocation8 + $0x8e0] sm:$0xff]
    %v3831 = vld [vmem:[#allocation8 + $0x8e8] sm:$0xff]
    %v3832 = vld [vmem:[#allocation8 + $0x8f0] sm:$0xff]
    %v3833 = vld [vmem:[#allocation8 + $0x8f8] sm:$0xff]
    %v3834 = vld [vmem:[#allocation8 + $0x900] sm:$0xff]
    %v3835 = vld [vmem:[#allocation8 + $0x908] sm:$0xff]
    %v3836 = vld [vmem:[#allocation8 + $0x910] sm:$0xff]
    %v3837 = vld [vmem:[#allocation8 + $0x918] sm:$0xff]
    %v3838 = vld [vmem:[#allocation8 + $0x920] sm:$0xff]
    %v3839 = vld [vmem:[#allocation8 + $0x928] sm:$0xff]
    %v3840 = vld [vmem:[#allocation8 + $0x930] sm:$0xff]
    %v3841 = vld [vmem:[#allocation8 + $0x938] sm:$0xff]
    %v3842 = vld [vmem:[#allocation8 + $0x940] sm:$0xff]
    %v3843 = vld [vmem:[#allocation8 + $0x948] sm:$0xff]
    %v3844 = vld [vmem:[#allocation8 + $0x950] sm:$0xff]
    %v3845 = vld [vmem:[#allocation8 + $0x958] sm:$0xff]
    %v3846 = vld [vmem:[#allocation8 + $0x960] sm:$0xff]
    %v3847 = vld [vmem:[#allocation8 + $0x968] sm:$0xff]
    %v3848 = vld [vmem:[#allocation8 + $0x970] sm:$0xff]
    %v3849 = vld [vmem:[#allocation8 + $0x978] sm:$0xff]
    %v3850 = vld [vmem:[#allocation8 + $0x980] sm:$0xff]
    %v3851 = vld [vmem:[#allocation8 + $0x988] sm:$0xff]
    %v3852 = vld [vmem:[#allocation8 + $0x990] sm:$0xff]
    %v3853 = vld [vmem:[#allocation8 + $0x998] sm:$0xff]
    %v3854 = vld [vmem:[#allocation8 + $0x9a0] sm:$0xff]
    %v3855 = vld [vmem:[#allocation8 + $0x9a8] sm:$0xff]
    %v3856 = vld [vmem:[#allocation8 + $0x9b0] sm:$0xff]
    %v3857 = vld [vmem:[#allocation8 + $0x9b8] sm:$0xff]
    %v3858 = vld [vmem:[#allocation8 + $0x9c0] sm:$0xff]
    %v3859 = vld [vmem:[#allocation8 + $0x9c8] sm:$0xff]
    %v3860 = vld [vmem:[#allocation8 + $0x9d0] sm:$0xff]
    %v3861 = vld [vmem:[#allocation8 + $0x9d8] sm:$0xff]
    %v3862 = vld [vmem:[#allocation8 + $0x9e0] sm:$0xff]
    %v3863 = vld [vmem:[#allocation8 + $0x9e8] sm:$0xff]
    %v3864 = vld [vmem:[#allocation8 + $0x9f0] sm:$0xff]
    %v3865 = vld [vmem:[#allocation8 + $0x9f8] sm:$0xff]
    %v3866 = vld [vmem:[#allocation8 + $0xa00] sm:$0xff]
    %v3867 = vld [vmem:[#allocation8 + $0xa08] sm:$0xff]
    %v3868 = vld [vmem:[#allocation8 + $0xa10] sm:$0xff]
    %v3869 = vld [vmem:[#allocation8 + $0xa18] sm:$0xff]
    %v3870 = vld [vmem:[#allocation8 + $0xa20] sm:$0xff]
    %v3871 = vld [vmem:[#allocation8 + $0xa28] sm:$0xff]
    %v3872 = vld [vmem:[#allocation8 + $0xa30] sm:$0xff]
    %v3873 = vld [vmem:[#allocation8 + $0xa38] sm:$0xff]
    %v3874 = vld [vmem:[#allocation8 + $0xa40] sm:$0xff]
    %v3875 = vld [vmem:[#allocation8 + $0xa48] sm:$0xff]
    %v3876 = vld [vmem:[#allocation8 + $0xa50] sm:$0xff]
    %v3877 = vld [vmem:[#allocation8 + $0xa58] sm:$0xff]
    %v3878 = vld [vmem:[#allocation8 + $0xa60] sm:$0xff]
    %v3879 = vld [vmem:[#allocation8 + $0xa68] sm:$0xff]
    %v3880 = vld [vmem:[#allocation8 + $0xa70] sm:$0xff]
    %v3881 = vld [vmem:[#allocation8 + $0xa78] sm:$0xff]
    %v3882 = vld [vmem:[#allocation8 + $0xa80] sm:$0xff]
    %v3883 = vld [vmem:[#allocation8 + $0xa88] sm:$0xff]
    %v3884 = vld [vmem:[#allocation8 + $0xa90] sm:$0xff]
    %v3885 = vld [vmem:[#allocation8 + $0xa98] sm:$0xff]
    %v3886 = vld [vmem:[#allocation8 + $0xaa0] sm:$0xff]
    %v3887 = vld [vmem:[#allocation8 + $0xaa8] sm:$0xff]
    %v3888 = vld [vmem:[#allocation8 + $0xab0] sm:$0xff]
    %v3889 = vld [vmem:[#allocation8 + $0xab8] sm:$0xff]
    %v3890 = vld [vmem:[#allocation8 + $0xac0] sm:$0xff]
    %v3891 = vld [vmem:[#allocation8 + $0xac8] sm:$0xff]
    %v3892 = vld [vmem:[#allocation8 + $0xad0] sm:$0xff]
    %v3893 = vld [vmem:[#allocation8 + $0xad8] sm:$0xff]
    %v3894 = vld [vmem:[#allocation8 + $0xae0] sm:$0xff]
    %v3895 = vld [vmem:[#allocation8 + $0xae8] sm:$0xff]
    %v3896 = vld [vmem:[#allocation8 + $0xaf0] sm:$0xff]
    %v3897 = vld [vmem:[#allocation8 + $0xaf8] sm:$0xff]
    %v3898 = vld [vmem:[#allocation8 + $0xb00] sm:$0xff]
    %v3899 = vld [vmem:[#allocation8 + $0xb08] sm:$0xff]
    %v3900 = vld [vmem:[#allocation8 + $0xb10] sm:$0xff]
    %v3901 = vld [vmem:[#allocation8 + $0xb18] sm:$0xff]
    %v3902 = vld [vmem:[#allocation8 + $0xb20] sm:$0xff]
    %v3903 = vld [vmem:[#allocation8 + $0xb28] sm:$0xff]
    %v3904 = vld [vmem:[#allocation8 + $0xb30] sm:$0xff]
    %v3905 = vld [vmem:[#allocation8 + $0xb38] sm:$0xff]
    %v3906 = vld [vmem:[#allocation8 + $0xb40] sm:$0xff]
    %v3907 = vld [vmem:[#allocation8 + $0xb48] sm:$0xff]
    %v3908 = vld [vmem:[#allocation8 + $0xb50] sm:$0xff]
    %v3909 = vld [vmem:[#allocation8 + $0xb58] sm:$0xff]
    %v3910 = vld [vmem:[#allocation8 + $0xb60] sm:$0xff]
    %v3911 = vld [vmem:[#allocation8 + $0xb68] sm:$0xff]
    %v3912 = vld [vmem:[#allocation8 + $0xb70] sm:$0xff]
    %v3913 = vld [vmem:[#allocation8 + $0xb78] sm:$0xff]
    %v3914 = vld [vmem:[#allocation8 + $0xb80] sm:$0xff]
    %v3915 = vld [vmem:[#allocation8 + $0xb88] sm:$0xff]
    %v3916 = vld [vmem:[#allocation8 + $0xb90] sm:$0xff]
    %v3917 = vld [vmem:[#allocation8 + $0xb98] sm:$0xff]
    %v3918 = vld [vmem:[#allocation8 + $0xba0] sm:$0xff]
    %v3919 = vld [vmem:[#allocation8 + $0xba8] sm:$0xff]
    %v3920 = vld [vmem:[#allocation8 + $0xbb0] sm:$0xff]
    %v3921 = vld [vmem:[#allocation8 + $0xbb8] sm:$0xff]
    %v3922 = vld [vmem:[#allocation8 + $0xbc0] sm:$0xff]
    %v3923 = vld [vmem:[#allocation8 + $0xbc8] sm:$0xff]
    %v3924 = vld [vmem:[#allocation8 + $0xbd0] sm:$0xff]
    %v3925 = vld [vmem:[#allocation8 + $0xbd8] sm:$0xff]
    %v3926 = vld [vmem:[#allocation8 + $0xbe0] sm:$0xff]
    %v3927 = vld [vmem:[#allocation8 + $0xbe8] sm:$0xff]
    %v3928 = vld [vmem:[#allocation8 + $0xbf0] sm:$0xff]
    %v3929 = vld [vmem:[#allocation8 + $0xbf8] sm:$0xff]
    %v3930 = vld [vmem:[#allocation8 + $0xc00] sm:$0xff]
    %v3931 = vld [vmem:[#allocation8 + $0xc08] sm:$0xff]
    %v3932 = vld [vmem:[#allocation8 + $0xc10] sm:$0xff]
    %v3933 = vld [vmem:[#allocation8 + $0xc18] sm:$0xff]
    %v3934 = vld [vmem:[#allocation8 + $0xc20] sm:$0xff]
    %v3935 = vld [vmem:[#allocation8 + $0xc28] sm:$0xff]
    %v3936 = vld [vmem:[#allocation8 + $0xc30] sm:$0xff]
    %v3937 = vld [vmem:[#allocation8 + $0xc38] sm:$0xff]
    %v3938 = vld [vmem:[#allocation8 + $0xc40] sm:$0xff]
    %v3939 = vld [vmem:[#allocation8 + $0xc48] sm:$0xff]
    %v3940 = vld [vmem:[#allocation8 + $0xc50] sm:$0xff]
    %v3941 = vld [vmem:[#allocation8 + $0xc58] sm:$0xff]
    %v3942 = vld [vmem:[#allocation8 + $0xc60] sm:$0xff]
    %v3943 = vld [vmem:[#allocation8 + $0xc68] sm:$0xff]
    %v3944 = vld [vmem:[#allocation8 + $0xc70] sm:$0xff]
    %v3945 = vld [vmem:[#allocation8 + $0xc78] sm:$0xff]
    %v3946 = vld [vmem:[#allocation8 + $0xc80] sm:$0xff]
    %v3947 = vld [vmem:[#allocation8 + $0xc88] sm:$0xff]
    %v3948 = vld [vmem:[#allocation8 + $0xc90] sm:$0xff]
    %v3949 = vld [vmem:[#allocation8 + $0xc98] sm:$0xff]
    %v3950 = vld [vmem:[#allocation8 + $0xca0] sm:$0xff]
    %v3951 = vld [vmem:[#allocation8 + $0xca8] sm:$0xff]
    %v3952 = vld [vmem:[#allocation8 + $0xcb0] sm:$0xff]
    %v3953 = vld [vmem:[#allocation8 + $0xcb8] sm:$0xff]
    %v3954 = vld [vmem:[#allocation8 + $0xcc0] sm:$0xff]
    %v3955 = vld [vmem:[#allocation8 + $0xcc8] sm:$0xff]
    %v3956 = vld [vmem:[#allocation8 + $0xcd0] sm:$0xff]
    %v3957 = vld [vmem:[#allocation8 + $0xcd8] sm:$0xff]
    %v3958 = vld [vmem:[#allocation8 + $0xce0] sm:$0xff]
    %v3959 = vld [vmem:[#allocation8 + $0xce8] sm:$0xff]
    %v3960 = vld [vmem:[#allocation8 + $0xcf0] sm:$0xff]
    %v3961 = vld [vmem:[#allocation8 + $0xcf8] sm:$0xff]
    %v3962 = vld [vmem:[#allocation8 + $0xd00] sm:$0xff]
    %v3963 = vld [vmem:[#allocation8 + $0xd08] sm:$0xff]
    %v3964 = vld [vmem:[#allocation8 + $0xd10] sm:$0xff]
    %v3965 = vld [vmem:[#allocation8 + $0xd18] sm:$0xff]
    %v3966 = vld [vmem:[#allocation8 + $0xd20] sm:$0xff]
    %v3967 = vld [vmem:[#allocation8 + $0xd28] sm:$0xff]
    %v3968 = vld [vmem:[#allocation8 + $0xd30] sm:$0xff]
    %v3969 = vld [vmem:[#allocation8 + $0xd38] sm:$0xff]
    %v3970 = vld [vmem:[#allocation8 + $0xd40] sm:$0xff]
    %v3971 = vld [vmem:[#allocation8 + $0xd48] sm:$0xff]
    %v3972 = vld [vmem:[#allocation8 + $0xd50] sm:$0xff]
    %v3973 = vld [vmem:[#allocation8 + $0xd58] sm:$0xff]
    %v3974 = vld [vmem:[#allocation8 + $0xd60] sm:$0xff]
    %v3975 = vld [vmem:[#allocation8 + $0xd68] sm:$0xff]
    %v3976 = vld [vmem:[#allocation8 + $0xd70] sm:$0xff]
    %v3977 = vld [vmem:[#allocation8 + $0xd78] sm:$0xff]
    %v3978 = vld [vmem:[#allocation8 + $0xd80] sm:$0xff]
    %v3979 = vld [vmem:[#allocation8 + $0xd88] sm:$0xff]
    %v3980 = vld [vmem:[#allocation8 + $0xd90] sm:$0xff]
    %v3981 = vld [vmem:[#allocation8 + $0xd98] sm:$0xff]
    %v3982 = vld [vmem:[#allocation8 + $0xda0] sm:$0xff]
    %v3983 = vld [vmem:[#allocation8 + $0xda8] sm:$0xff]
    %v3984 = vld [vmem:[#allocation8 + $0xdb0] sm:$0xff]
    %v3985 = vld [vmem:[#allocation8 + $0xdb8] sm:$0xff]
    %v3986 = vld [vmem:[#allocation8 + $0xdc0] sm:$0xff]
    %v3987 = vld [vmem:[#allocation8 + $0xdc8] sm:$0xff]
    %v3988 = vld [vmem:[#allocation8 + $0xdd0] sm:$0xff]
    %v3989 = vld [vmem:[#allocation8 + $0xdd8] sm:$0xff]
    %v3990 = vld [vmem:[#allocation8 + $0xde0] sm:$0xff]
    %v3991 = vld [vmem:[#allocation8 + $0xde8] sm:$0xff]
    %v3992 = vld [vmem:[#allocation8 + $0xdf0] sm:$0xff]
    %v3993 = vld [vmem:[#allocation8 + $0xdf8] sm:$0xff]
    %v3994 = vld [vmem:[#allocation8 + $0xe00] sm:$0xff]
    %v3995 = vld [vmem:[#allocation8 + $0xe08] sm:$0xff]
    %v3996 = vld [vmem:[#allocation8 + $0xe10] sm:$0xff]
    %v3997 = vld [vmem:[#allocation8 + $0xe18] sm:$0xff]
    %v3998 = vld [vmem:[#allocation8 + $0xe20] sm:$0xff]
    %v3999 = vld [vmem:[#allocation8 + $0xe28] sm:$0xff]
    %v4000 = vld [vmem:[#allocation8 + $0xe30] sm:$0xff]
    %v4001 = vld [vmem:[#allocation8 + $0xe38] sm:$0xff]
    %v4002 = vld [vmem:[#allocation8 + $0xe40] sm:$0xff]
    %v4003 = vld [vmem:[#allocation8 + $0xe48] sm:$0xff]
    %v4004 = vld [vmem:[#allocation8 + $0xe50] sm:$0xff]
    %v4005 = vld [vmem:[#allocation8 + $0xe58] sm:$0xff]
    %v4006 = vld [vmem:[#allocation8 + $0xe60] sm:$0xff]
    %v4007 = vld [vmem:[#allocation8 + $0xe68] sm:$0xff]
    %v4008 = vld [vmem:[#allocation8 + $0xe70] sm:$0xff]
    %v4009 = vld [vmem:[#allocation8 + $0xe78] sm:$0xff]
    %v4010 = vld [vmem:[#allocation8 + $0xe80] sm:$0xff]
    %v4011 = vld [vmem:[#allocation8 + $0xe88] sm:$0xff]
    %v4012 = vld [vmem:[#allocation8 + $0xe90] sm:$0xff]
    %v4013 = vld [vmem:[#allocation8 + $0xe98] sm:$0xff]
    %v4014 = vld [vmem:[#allocation8 + $0xea0] sm:$0xff]
    %v4015 = vld [vmem:[#allocation8 + $0xea8] sm:$0xff]
    %v4016 = vld [vmem:[#allocation8 + $0xeb0] sm:$0xff]
    %v4017 = vld [vmem:[#allocation8 + $0xeb8] sm:$0xff]
    %v4018 = vld [vmem:[#allocation8 + $0xec0] sm:$0xff]
    %v4019 = vld [vmem:[#allocation8 + $0xec8] sm:$0xff]
    %v4020 = vld [vmem:[#allocation8 + $0xed0] sm:$0xff]
    %v4021 = vld [vmem:[#allocation8 + $0xed8] sm:$0xff]
    %v4022 = vld [vmem:[#allocation8 + $0xee0] sm:$0xff]
    %v4023 = vld [vmem:[#allocation8 + $0xee8] sm:$0xff]
    %v4024 = vld [vmem:[#allocation8 + $0xef0] sm:$0xff]
    %v4025 = vld [vmem:[#allocation8 + $0xef8] sm:$0xff]
    %v4026 = vld [vmem:[#allocation8 + $0xf00] sm:$0xff]
    %v4027 = vld [vmem:[#allocation8 + $0xf08] sm:$0xff]
    %v4028 = vld [vmem:[#allocation8 + $0xf10] sm:$0xff]
    %v4029 = vld [vmem:[#allocation8 + $0xf18] sm:$0xff]
    %v4030 = vld [vmem:[#allocation8 + $0xf20] sm:$0xff]
    %v4031 = vld [vmem:[#allocation8 + $0xf28] sm:$0xff]
    %v4032 = vld [vmem:[#allocation8 + $0xf30] sm:$0xff]
    %v4033 = vld [vmem:[#allocation8 + $0xf38] sm:$0xff]
    %v4034 = vld [vmem:[#allocation8 + $0xf40] sm:$0xff]
    %v4035 = vld [vmem:[#allocation8 + $0xf48] sm:$0xff]
    %v4036 = vld [vmem:[#allocation8 + $0xf50] sm:$0xff]
    %v4037 = vld [vmem:[#allocation8 + $0xf58] sm:$0xff]
    %v4038 = vld [vmem:[#allocation8 + $0xf60] sm:$0xff]
    %v4039 = vld [vmem:[#allocation8 + $0xf68] sm:$0xff]
    %v4040 = vld [vmem:[#allocation8 + $0xf70] sm:$0xff]
    %v4041 = vld [vmem:[#allocation8 + $0xf78] sm:$0xff]
    %v4042 = vld [vmem:[#allocation8 + $0xf80] sm:$0xff]
    %v4043 = vld [vmem:[#allocation8 + $0xf88] sm:$0xff]
    %v4044 = vld [vmem:[#allocation8 + $0xf90] sm:$0xff]
    %v4045 = vld [vmem:[#allocation8 + $0xf98] sm:$0xff]
    %v4046 = vld [vmem:[#allocation8 + $0xfa0] sm:$0xff]
    %v4047 = vld [vmem:[#allocation8 + $0xfa8] sm:$0xff]
    %v4048 = vld [vmem:[#allocation8 + $0xfb0] sm:$0xff]
    %v4049 = vld [vmem:[#allocation8 + $0xfb8] sm:$0xff]
    %v4050 = vld [vmem:[#allocation8 + $0xfc0] sm:$0xff]
    %v4051 = vld [vmem:[#allocation8 + $0xfc8] sm:$0xff]
    %v4052 = vld [vmem:[#allocation8 + $0xfd0] sm:$0xff]
    %v4053 = vld [vmem:[#allocation8 + $0xfd8] sm:$0xff]
    %v4054 = vld [vmem:[#allocation8 + $0xfe0] sm:$0xff]
    %v4055 = vld [vmem:[#allocation8 + $0xfe8] sm:$0xff]
    %v4056 = vld [vmem:[#allocation8 + $0xff0] sm:$0xff]
    %v4057 = vld [vmem:[#allocation8 + $0xff8] sm:$0xff]
    %v4058 = vld [vmem:[#allocation10] sm:$0xff]
    %v4060 = vlaneseq
    %v4061 = vshrl.u32 %v4060, 7
    %v4062 = vsub.s32 0, %v4061
    %v4063 = vrot.slane %v4058, %v4062
    %v4064 = vlaneseq
    %v4065 = vshrl.u32 %v4064, 7
    %v4066 = vsub.s32 1, %v4065
    %v4067 = vrot.slane %v4058, %v4066
    %v4068 = vlaneseq
    %v4069 = vshrl.u32 %v4068, 7
    %v4070 = vsub.s32 2, %v4069
    %v4071 = vrot.slane %v4058, %v4070
    %v4072 = vlaneseq
    %v4073 = vshrl.u32 %v4072, 7
    %v4074 = vsub.s32 3, %v4073
    %v4075 = vrot.slane %v4058, %v4074
    %v4076 = vlaneseq
    %v4077 = vshrl.u32 %v4076, 7
    %v4078 = vsub.s32 4, %v4077
    %v4079 = vrot.slane %v4058, %v4078
    %v4080 = vlaneseq
    %v4081 = vshrl.u32 %v4080, 7
    %v4082 = vsub.s32 5, %v4081
    %v4083 = vrot.slane %v4058, %v4082
    %v4084 = vlaneseq
    %v4085 = vshrl.u32 %v4084, 7
    %v4086 = vsub.s32 6, %v4085
    %v4087 = vrot.slane %v4058, %v4086
    %v4088 = vlaneseq
    %v4089 = vshrl.u32 %v4088, 7
    %v4090 = vsub.s32 7, %v4089
    %v4091 = vrot.slane %v4058, %v4090
    %v4612 = vunpack.c.l.b16 %v3546
    %v4613 = vunpack.c.h.b16 %v3546
    %v4614 = vunpack.c.l.b16 %v3547
    %v4615 = vunpack.c.h.b16 %v3547
    %v4616 = vunpack.c.l.b16 %v3548
    %v4617 = vunpack.c.h.b16 %v3548
    %v4618 = vunpack.c.l.b16 %v3549
    %v4619 = vunpack.c.h.b16 %v3549
    %v4620 = vunpack.c.l.b16 %v3550
    %v4621 = vunpack.c.h.b16 %v3550
    %v4622 = vunpack.c.l.b16 %v3551
    %v4623 = vunpack.c.h.b16 %v3551
    %v4624 = vunpack.c.l.b16 %v3552
    %v4625 = vunpack.c.h.b16 %v3552
    %v4626 = vunpack.c.l.b16 %v3553
    %v4627 = vunpack.c.h.b16 %v3553
    %v4628 = vunpack.c.l.b16 %v3554
    %v4629 = vunpack.c.h.b16 %v3554
    %v4630 = vunpack.c.l.b16 %v3555
    %v4631 = vunpack.c.h.b16 %v3555
    %v4632 = vunpack.c.l.b16 %v3556
    %v4633 = vunpack.c.h.b16 %v3556
    %v4634 = vunpack.c.l.b16 %v3557
    %v4635 = vunpack.c.h.b16 %v3557
    %v4636 = vunpack.c.l.b16 %v3558
    %v4637 = vunpack.c.h.b16 %v3558
    %v4638 = vunpack.c.l.b16 %v3559
    %v4639 = vunpack.c.h.b16 %v3559
    %v4640 = vunpack.c.l.b16 %v3560
    %v4641 = vunpack.c.h.b16 %v3560
    %v4642 = vunpack.c.l.b16 %v3561
    %v4643 = vunpack.c.h.b16 %v3561
    %v4644 = vunpack.c.l.b16 %v3562
    %v4645 = vunpack.c.h.b16 %v3562
    %v4646 = vunpack.c.l.b16 %v3563
    %v4647 = vunpack.c.h.b16 %v3563
    %v4648 = vunpack.c.l.b16 %v3564
    %v4649 = vunpack.c.h.b16 %v3564
    %v4650 = vunpack.c.l.b16 %v3565
    %v4651 = vunpack.c.h.b16 %v3565
    %v4652 = vunpack.c.l.b16 %v3566
    %v4653 = vunpack.c.h.b16 %v3566
    %v4654 = vunpack.c.l.b16 %v3567
    %v4655 = vunpack.c.h.b16 %v3567
    %v4656 = vunpack.c.l.b16 %v3568
    %v4657 = vunpack.c.h.b16 %v3568
    %v4658 = vunpack.c.l.b16 %v3569
    %v4659 = vunpack.c.h.b16 %v3569
    %v4660 = vunpack.c.l.b16 %v3570
    %v4661 = vunpack.c.h.b16 %v3570
    %v4662 = vunpack.c.l.b16 %v3571
    %v4663 = vunpack.c.h.b16 %v3571
    %v4664 = vunpack.c.l.b16 %v3572
    %v4665 = vunpack.c.h.b16 %v3572
    %v4666 = vunpack.c.l.b16 %v3573
    %v4667 = vunpack.c.h.b16 %v3573
    %v4668 = vunpack.c.l.b16 %v3574
    %v4669 = vunpack.c.h.b16 %v3574
    %v4670 = vunpack.c.l.b16 %v3575
    %v4671 = vunpack.c.h.b16 %v3575
    %v4672 = vunpack.c.l.b16 %v3576
    %v4673 = vunpack.c.h.b16 %v3576
    %v4674 = vunpack.c.l.b16 %v3577
    %v4675 = vunpack.c.h.b16 %v3577
    %v4676 = vunpack.c.l.b16 %v3578
    %v4677 = vunpack.c.h.b16 %v3578
    %v4678 = vunpack.c.l.b16 %v3579
    %v4679 = vunpack.c.h.b16 %v3579
    %v4680 = vunpack.c.l.b16 %v3580
    %v4681 = vunpack.c.h.b16 %v3580
    %v4682 = vunpack.c.l.b16 %v3581
    %v4683 = vunpack.c.h.b16 %v3581
    %v4684 = vunpack.c.l.b16 %v3582
    %v4685 = vunpack.c.h.b16 %v3582
    %v4686 = vunpack.c.l.b16 %v3583
    %v4687 = vunpack.c.h.b16 %v3583
    %v4688 = vunpack.c.l.b16 %v3584
    %v4689 = vunpack.c.h.b16 %v3584
    %v4690 = vunpack.c.l.b16 %v3585
    %v4691 = vunpack.c.h.b16 %v3585
    %v4692 = vunpack.c.l.b16 %v3586
    %v4693 = vunpack.c.h.b16 %v3586
    %v4694 = vunpack.c.l.b16 %v3587
    %v4695 = vunpack.c.h.b16 %v3587
    %v4696 = vunpack.c.l.b16 %v3588
    %v4697 = vunpack.c.h.b16 %v3588
    %v4698 = vunpack.c.l.b16 %v3589
    %v4699 = vunpack.c.h.b16 %v3589
    %v4700 = vunpack.c.l.b16 %v3590
    %v4701 = vunpack.c.h.b16 %v3590
    %v4702 = vunpack.c.l.b16 %v3591
    %v4703 = vunpack.c.h.b16 %v3591
    %v4704 = vunpack.c.l.b16 %v3592
    %v4705 = vunpack.c.h.b16 %v3592
    %v4706 = vunpack.c.l.b16 %v3593
    %v4707 = vunpack.c.h.b16 %v3593
    %v4708 = vunpack.c.l.b16 %v3594
    %v4709 = vunpack.c.h.b16 %v3594
    %v4710 = vunpack.c.l.b16 %v3595
    %v4711 = vunpack.c.h.b16 %v3595
    %v4712 = vunpack.c.l.b16 %v3596
    %v4713 = vunpack.c.h.b16 %v3596
    %v4714 = vunpack.c.l.b16 %v3597
    %v4715 = vunpack.c.h.b16 %v3597
    %v4716 = vunpack.c.l.b16 %v3598
    %v4717 = vunpack.c.h.b16 %v3598
    %v4718 = vunpack.c.l.b16 %v3599
    %v4719 = vunpack.c.h.b16 %v3599
    %v4720 = vunpack.c.l.b16 %v3600
    %v4721 = vunpack.c.h.b16 %v3600
    %v4722 = vunpack.c.l.b16 %v3601
    %v4723 = vunpack.c.h.b16 %v3601
    %v4724 = vunpack.c.l.b16 %v3602
    %v4725 = vunpack.c.h.b16 %v3602
    %v4726 = vunpack.c.l.b16 %v3603
    %v4727 = vunpack.c.h.b16 %v3603
    %v4728 = vunpack.c.l.b16 %v3604
    %v4729 = vunpack.c.h.b16 %v3604
    %v4730 = vunpack.c.l.b16 %v3605
    %v4731 = vunpack.c.h.b16 %v3605
    %v4732 = vunpack.c.l.b16 %v3606
    %v4733 = vunpack.c.h.b16 %v3606
    %v4734 = vunpack.c.l.b16 %v3607
    %v4735 = vunpack.c.h.b16 %v3607
    %v4736 = vunpack.c.l.b16 %v3608
    %v4737 = vunpack.c.h.b16 %v3608
    %v4738 = vunpack.c.l.b16 %v3609
    %v4739 = vunpack.c.h.b16 %v3609
    %v4740 = vunpack.c.l.b16 %v3610
    %v4741 = vunpack.c.h.b16 %v3610
    %v4742 = vunpack.c.l.b16 %v3611
    %v4743 = vunpack.c.h.b16 %v3611
    %v4744 = vunpack.c.l.b16 %v3612
    %v4745 = vunpack.c.h.b16 %v3612
    %v4746 = vunpack.c.l.b16 %v3613
    %v4747 = vunpack.c.h.b16 %v3613
    %v4748 = vunpack.c.l.b16 %v3614
    %v4749 = vunpack.c.h.b16 %v3614
    %v4750 = vunpack.c.l.b16 %v3615
    %v4751 = vunpack.c.h.b16 %v3615
    %v4752 = vunpack.c.l.b16 %v3616
    %v4753 = vunpack.c.h.b16 %v3616
    %v4754 = vunpack.c.l.b16 %v3617
    %v4755 = vunpack.c.h.b16 %v3617
    %v4756 = vunpack.c.l.b16 %v3618
    %v4757 = vunpack.c.h.b16 %v3618
    %v4758 = vunpack.c.l.b16 %v3619
    %v4759 = vunpack.c.h.b16 %v3619
    %v4760 = vunpack.c.l.b16 %v3620
    %v4761 = vunpack.c.h.b16 %v3620
    %v4762 = vunpack.c.l.b16 %v3621
    %v4763 = vunpack.c.h.b16 %v3621
    %v4764 = vunpack.c.l.b16 %v3622
    %v4765 = vunpack.c.h.b16 %v3622
    %v4766 = vunpack.c.l.b16 %v3623
    %v4767 = vunpack.c.h.b16 %v3623
    %v4768 = vunpack.c.l.b16 %v3624
    %v4769 = vunpack.c.h.b16 %v3624
    %v4770 = vunpack.c.l.b16 %v3625
    %v4771 = vunpack.c.h.b16 %v3625
    %v4772 = vunpack.c.l.b16 %v3626
    %v4773 = vunpack.c.h.b16 %v3626
    %v4774 = vunpack.c.l.b16 %v3627
    %v4775 = vunpack.c.h.b16 %v3627
    %v4776 = vunpack.c.l.b16 %v3628
    %v4777 = vunpack.c.h.b16 %v3628
    %v4778 = vunpack.c.l.b16 %v3629
    %v4779 = vunpack.c.h.b16 %v3629
    %v4780 = vunpack.c.l.b16 %v3630
    %v4781 = vunpack.c.h.b16 %v3630
    %v4782 = vunpack.c.l.b16 %v3631
    %v4783 = vunpack.c.h.b16 %v3631
    %v4784 = vunpack.c.l.b16 %v3632
    %v4785 = vunpack.c.h.b16 %v3632
    %v4786 = vunpack.c.l.b16 %v3633
    %v4787 = vunpack.c.h.b16 %v3633
    %v4788 = vunpack.c.l.b16 %v3634
    %v4789 = vunpack.c.h.b16 %v3634
    %v4790 = vunpack.c.l.b16 %v3635
    %v4791 = vunpack.c.h.b16 %v3635
    %v4792 = vunpack.c.l.b16 %v3636
    %v4793 = vunpack.c.h.b16 %v3636
    %v4794 = vunpack.c.l.b16 %v3637
    %v4795 = vunpack.c.h.b16 %v3637
    %v4796 = vunpack.c.l.b16 %v3638
    %v4797 = vunpack.c.h.b16 %v3638
    %v4798 = vunpack.c.l.b16 %v3639
    %v4799 = vunpack.c.h.b16 %v3639
    %v4800 = vunpack.c.l.b16 %v3640
    %v4801 = vunpack.c.h.b16 %v3640
    %v4802 = vunpack.c.l.b16 %v3641
    %v4803 = vunpack.c.h.b16 %v3641
    %v4804 = vunpack.c.l.b16 %v3642
    %v4805 = vunpack.c.h.b16 %v3642
    %v4806 = vunpack.c.l.b16 %v3643
    %v4807 = vunpack.c.h.b16 %v3643
    %v4808 = vunpack.c.l.b16 %v3644
    %v4809 = vunpack.c.h.b16 %v3644
    %v4810 = vunpack.c.l.b16 %v3645
    %v4811 = vunpack.c.h.b16 %v3645
    %v4812 = vunpack.c.l.b16 %v3646
    %v4813 = vunpack.c.h.b16 %v3646
    %v4814 = vunpack.c.l.b16 %v3647
    %v4815 = vunpack.c.h.b16 %v3647
    %v4816 = vunpack.c.l.b16 %v3648
    %v4817 = vunpack.c.h.b16 %v3648
    %v4818 = vunpack.c.l.b16 %v3649
    %v4819 = vunpack.c.h.b16 %v3649
    %v4820 = vunpack.c.l.b16 %v3650
    %v4821 = vunpack.c.h.b16 %v3650
    %v4822 = vunpack.c.l.b16 %v3651
    %v4823 = vunpack.c.h.b16 %v3651
    %v4824 = vunpack.c.l.b16 %v3652
    %v4825 = vunpack.c.h.b16 %v3652
    %v4826 = vunpack.c.l.b16 %v3653
    %v4827 = vunpack.c.h.b16 %v3653
    %v4828 = vunpack.c.l.b16 %v3654
    %v4829 = vunpack.c.h.b16 %v3654
    %v4830 = vunpack.c.l.b16 %v3655
    %v4831 = vunpack.c.h.b16 %v3655
    %v4832 = vunpack.c.l.b16 %v3656
    %v4833 = vunpack.c.h.b16 %v3656
    %v4834 = vunpack.c.l.b16 %v3657
    %v4835 = vunpack.c.h.b16 %v3657
    %v4836 = vunpack.c.l.b16 %v3658
    %v4837 = vunpack.c.h.b16 %v3658
    %v4838 = vunpack.c.l.b16 %v3659
    %v4839 = vunpack.c.h.b16 %v3659
    %v4840 = vunpack.c.l.b16 %v3660
    %v4841 = vunpack.c.h.b16 %v3660
    %v4842 = vunpack.c.l.b16 %v3661
    %v4843 = vunpack.c.h.b16 %v3661
    %v4844 = vunpack.c.l.b16 %v3662
    %v4845 = vunpack.c.h.b16 %v3662
    %v4846 = vunpack.c.l.b16 %v3663
    %v4847 = vunpack.c.h.b16 %v3663
    %v4848 = vunpack.c.l.b16 %v3664
    %v4849 = vunpack.c.h.b16 %v3664
    %v4850 = vunpack.c.l.b16 %v3665
    %v4851 = vunpack.c.h.b16 %v3665
    %v4852 = vunpack.c.l.b16 %v3666
    %v4853 = vunpack.c.h.b16 %v3666
    %v4854 = vunpack.c.l.b16 %v3667
    %v4855 = vunpack.c.h.b16 %v3667
    %v4856 = vunpack.c.l.b16 %v3668
    %v4857 = vunpack.c.h.b16 %v3668
    %v4858 = vunpack.c.l.b16 %v3669
    %v4859 = vunpack.c.h.b16 %v3669
    %v4860 = vunpack.c.l.b16 %v3670
    %v4861 = vunpack.c.h.b16 %v3670
    %v4862 = vunpack.c.l.b16 %v3671
    %v4863 = vunpack.c.h.b16 %v3671
    %v4864 = vunpack.c.l.b16 %v3672
    %v4865 = vunpack.c.h.b16 %v3672
    %v4866 = vunpack.c.l.b16 %v3673
    %v4867 = vunpack.c.h.b16 %v3673
    %v4868 = vunpack.c.l.b16 %v3674
    %v4869 = vunpack.c.h.b16 %v3674
    %v4870 = vunpack.c.l.b16 %v3675
    %v4871 = vunpack.c.h.b16 %v3675
    %v4872 = vunpack.c.l.b16 %v3676
    %v4873 = vunpack.c.h.b16 %v3676
    %v4874 = vunpack.c.l.b16 %v3677
    %v4875 = vunpack.c.h.b16 %v3677
    %v4876 = vunpack.c.l.b16 %v3678
    %v4877 = vunpack.c.h.b16 %v3678
    %v4878 = vunpack.c.l.b16 %v3679
    %v4879 = vunpack.c.h.b16 %v3679
    %v4880 = vunpack.c.l.b16 %v3680
    %v4881 = vunpack.c.h.b16 %v3680
    %v4882 = vunpack.c.l.b16 %v3681
    %v4883 = vunpack.c.h.b16 %v3681
    %v4884 = vunpack.c.l.b16 %v3682
    %v4885 = vunpack.c.h.b16 %v3682
    %v4886 = vunpack.c.l.b16 %v3683
    %v4887 = vunpack.c.h.b16 %v3683
    %v4888 = vunpack.c.l.b16 %v3684
    %v4889 = vunpack.c.h.b16 %v3684
    %v4890 = vunpack.c.l.b16 %v3685
    %v4891 = vunpack.c.h.b16 %v3685
    %v4892 = vunpack.c.l.b16 %v3686
    %v4893 = vunpack.c.h.b16 %v3686
    %v4894 = vunpack.c.l.b16 %v3687
    %v4895 = vunpack.c.h.b16 %v3687
    %v4896 = vunpack.c.l.b16 %v3688
    %v4897 = vunpack.c.h.b16 %v3688
    %v4898 = vunpack.c.l.b16 %v3689
    %v4899 = vunpack.c.h.b16 %v3689
    %v4900 = vunpack.c.l.b16 %v3690
    %v4901 = vunpack.c.h.b16 %v3690
    %v4902 = vunpack.c.l.b16 %v3691
    %v4903 = vunpack.c.h.b16 %v3691
    %v4904 = vunpack.c.l.b16 %v3692
    %v4905 = vunpack.c.h.b16 %v3692
    %v4906 = vunpack.c.l.b16 %v3693
    %v4907 = vunpack.c.h.b16 %v3693
    %v4908 = vunpack.c.l.b16 %v3694
    %v4909 = vunpack.c.h.b16 %v3694
    %v4910 = vunpack.c.l.b16 %v3695
    %v4911 = vunpack.c.h.b16 %v3695
    %v4912 = vunpack.c.l.b16 %v3696
    %v4913 = vunpack.c.h.b16 %v3696
    %v4914 = vunpack.c.l.b16 %v3697
    %v4915 = vunpack.c.h.b16 %v3697
    %v4916 = vunpack.c.l.b16 %v3698
    %v4917 = vunpack.c.h.b16 %v3698
    %v4918 = vunpack.c.l.b16 %v3699
    %v4919 = vunpack.c.h.b16 %v3699
    %v4920 = vunpack.c.l.b16 %v3700
    %v4921 = vunpack.c.h.b16 %v3700
    %v4922 = vunpack.c.l.b16 %v3701
    %v4923 = vunpack.c.h.b16 %v3701
    %v4924 = vunpack.c.l.b16 %v3702
    %v4925 = vunpack.c.h.b16 %v3702
    %v4926 = vunpack.c.l.b16 %v3703
    %v4927 = vunpack.c.h.b16 %v3703
    %v4928 = vunpack.c.l.b16 %v3704
    %v4929 = vunpack.c.h.b16 %v3704
    %v4930 = vunpack.c.l.b16 %v3705
    %v4931 = vunpack.c.h.b16 %v3705
    %v4932 = vunpack.c.l.b16 %v3706
    %v4933 = vunpack.c.h.b16 %v3706
    %v4934 = vunpack.c.l.b16 %v3707
    %v4935 = vunpack.c.h.b16 %v3707
    %v4936 = vunpack.c.l.b16 %v3708
    %v4937 = vunpack.c.h.b16 %v3708
    %v4938 = vunpack.c.l.b16 %v3709
    %v4939 = vunpack.c.h.b16 %v3709
    %v4940 = vunpack.c.l.b16 %v3710
    %v4941 = vunpack.c.h.b16 %v3710
    %v4942 = vunpack.c.l.b16 %v3711
    %v4943 = vunpack.c.h.b16 %v3711
    %v4944 = vunpack.c.l.b16 %v3712
    %v4945 = vunpack.c.h.b16 %v3712
    %v4946 = vunpack.c.l.b16 %v3713
    %v4947 = vunpack.c.h.b16 %v3713
    %v4948 = vunpack.c.l.b16 %v3714
    %v4949 = vunpack.c.h.b16 %v3714
    %v4950 = vunpack.c.l.b16 %v3715
    %v4951 = vunpack.c.h.b16 %v3715
    %v4952 = vunpack.c.l.b16 %v3716
    %v4953 = vunpack.c.h.b16 %v3716
    %v4954 = vunpack.c.l.b16 %v3717
    %v4955 = vunpack.c.h.b16 %v3717
    %v4956 = vunpack.c.l.b16 %v3718
    %v4957 = vunpack.c.h.b16 %v3718
    %v4958 = vunpack.c.l.b16 %v3719
    %v4959 = vunpack.c.h.b16 %v3719
    %v4960 = vunpack.c.l.b16 %v3720
    %v4961 = vunpack.c.h.b16 %v3720
    %v4962 = vunpack.c.l.b16 %v3721
    %v4963 = vunpack.c.h.b16 %v3721
    %v4964 = vunpack.c.l.b16 %v3722
    %v4965 = vunpack.c.h.b16 %v3722
    %v4966 = vunpack.c.l.b16 %v3723
    %v4967 = vunpack.c.h.b16 %v3723
    %v4968 = vunpack.c.l.b16 %v3724
    %v4969 = vunpack.c.h.b16 %v3724
    %v4970 = vunpack.c.l.b16 %v3725
    %v4971 = vunpack.c.h.b16 %v3725
    %v4972 = vunpack.c.l.b16 %v3726
    %v4973 = vunpack.c.h.b16 %v3726
    %v4974 = vunpack.c.l.b16 %v3727
    %v4975 = vunpack.c.h.b16 %v3727
    %v4976 = vunpack.c.l.b16 %v3728
    %v4977 = vunpack.c.h.b16 %v3728
    %v4978 = vunpack.c.l.b16 %v3729
    %v4979 = vunpack.c.h.b16 %v3729
    %v4980 = vunpack.c.l.b16 %v3730
    %v4981 = vunpack.c.h.b16 %v3730
    %v4982 = vunpack.c.l.b16 %v3731
    %v4983 = vunpack.c.h.b16 %v3731
    %v4984 = vunpack.c.l.b16 %v3732
    %v4985 = vunpack.c.h.b16 %v3732
    %v4986 = vunpack.c.l.b16 %v3733
    %v4987 = vunpack.c.h.b16 %v3733
    %v4988 = vunpack.c.l.b16 %v3734
    %v4989 = vunpack.c.h.b16 %v3734
    %v4990 = vunpack.c.l.b16 %v3735
    %v4991 = vunpack.c.h.b16 %v3735
    %v4992 = vunpack.c.l.b16 %v3736
    %v4993 = vunpack.c.h.b16 %v3736
    %v4994 = vunpack.c.l.b16 %v3737
    %v4995 = vunpack.c.h.b16 %v3737
    %v4996 = vunpack.c.l.b16 %v3738
    %v4997 = vunpack.c.h.b16 %v3738
    %v4998 = vunpack.c.l.b16 %v3739
    %v4999 = vunpack.c.h.b16 %v3739
    %v5000 = vunpack.c.l.b16 %v3740
    %v5001 = vunpack.c.h.b16 %v3740
    %v5002 = vunpack.c.l.b16 %v3741
    %v5003 = vunpack.c.h.b16 %v3741
    %v5004 = vunpack.c.l.b16 %v3742
    %v5005 = vunpack.c.h.b16 %v3742
    %v5006 = vunpack.c.l.b16 %v3743
    %v5007 = vunpack.c.h.b16 %v3743
    %v5008 = vunpack.c.l.b16 %v3744
    %v5009 = vunpack.c.h.b16 %v3744
    %v5010 = vunpack.c.l.b16 %v3745
    %v5011 = vunpack.c.h.b16 %v3745
    %v5012 = vunpack.c.l.b16 %v3746
    %v5013 = vunpack.c.h.b16 %v3746
    %v5014 = vunpack.c.l.b16 %v3747
    %v5015 = vunpack.c.h.b16 %v3747
    %v5016 = vunpack.c.l.b16 %v3748
    %v5017 = vunpack.c.h.b16 %v3748
    %v5018 = vunpack.c.l.b16 %v3749
    %v5019 = vunpack.c.h.b16 %v3749
    %v5020 = vunpack.c.l.b16 %v3750
    %v5021 = vunpack.c.h.b16 %v3750
    %v5022 = vunpack.c.l.b16 %v3751
    %v5023 = vunpack.c.h.b16 %v3751
    %v5024 = vunpack.c.l.b16 %v3752
    %v5025 = vunpack.c.h.b16 %v3752
    %v5026 = vunpack.c.l.b16 %v3753
    %v5027 = vunpack.c.h.b16 %v3753
    %v5028 = vunpack.c.l.b16 %v3754
    %v5029 = vunpack.c.h.b16 %v3754
    %v5030 = vunpack.c.l.b16 %v3755
    %v5031 = vunpack.c.h.b16 %v3755
    %v5032 = vunpack.c.l.b16 %v3756
    %v5033 = vunpack.c.h.b16 %v3756
    %v5034 = vunpack.c.l.b16 %v3757
    %v5035 = vunpack.c.h.b16 %v3757
    %v5036 = vunpack.c.l.b16 %v3758
    %v5037 = vunpack.c.h.b16 %v3758
    %v5038 = vunpack.c.l.b16 %v3759
    %v5039 = vunpack.c.h.b16 %v3759
    %v5040 = vunpack.c.l.b16 %v3760
    %v5041 = vunpack.c.h.b16 %v3760
    %v5042 = vunpack.c.l.b16 %v3761
    %v5043 = vunpack.c.h.b16 %v3761
    %v5044 = vunpack.c.l.b16 %v3762
    %v5045 = vunpack.c.h.b16 %v3762
    %v5046 = vunpack.c.l.b16 %v3763
    %v5047 = vunpack.c.h.b16 %v3763
    %v5048 = vunpack.c.l.b16 %v3764
    %v5049 = vunpack.c.h.b16 %v3764
    %v5050 = vunpack.c.l.b16 %v3765
    %v5051 = vunpack.c.h.b16 %v3765
    %v5052 = vunpack.c.l.b16 %v3766
    %v5053 = vunpack.c.h.b16 %v3766
    %v5054 = vunpack.c.l.b16 %v3767
    %v5055 = vunpack.c.h.b16 %v3767
    %v5056 = vunpack.c.l.b16 %v3768
    %v5057 = vunpack.c.h.b16 %v3768
    %v5058 = vunpack.c.l.b16 %v3769
    %v5059 = vunpack.c.h.b16 %v3769
    %v5060 = vunpack.c.l.b16 %v3770
    %v5061 = vunpack.c.h.b16 %v3770
    %v5062 = vunpack.c.l.b16 %v3771
    %v5063 = vunpack.c.h.b16 %v3771
    %v5064 = vunpack.c.l.b16 %v3772
    %v5065 = vunpack.c.h.b16 %v3772
    %v5066 = vunpack.c.l.b16 %v3773
    %v5067 = vunpack.c.h.b16 %v3773
    %v5068 = vunpack.c.l.b16 %v3774
    %v5069 = vunpack.c.h.b16 %v3774
    %v5070 = vunpack.c.l.b16 %v3775
    %v5071 = vunpack.c.h.b16 %v3775
    %v5072 = vunpack.c.l.b16 %v3776
    %v5073 = vunpack.c.h.b16 %v3776
    %v5074 = vunpack.c.l.b16 %v3777
    %v5075 = vunpack.c.h.b16 %v3777
    %v5076 = vunpack.c.l.b16 %v3778
    %v5077 = vunpack.c.h.b16 %v3778
    %v5078 = vunpack.c.l.b16 %v3779
    %v5079 = vunpack.c.h.b16 %v3779
    %v5080 = vunpack.c.l.b16 %v3780
    %v5081 = vunpack.c.h.b16 %v3780
    %v5082 = vunpack.c.l.b16 %v3781
    %v5083 = vunpack.c.h.b16 %v3781
    %v5084 = vunpack.c.l.b16 %v3782
    %v5085 = vunpack.c.h.b16 %v3782
    %v5086 = vunpack.c.l.b16 %v3783
    %v5087 = vunpack.c.h.b16 %v3783
    %v5088 = vunpack.c.l.b16 %v3784
    %v5089 = vunpack.c.h.b16 %v3784
    %v5090 = vunpack.c.l.b16 %v3785
    %v5091 = vunpack.c.h.b16 %v3785
    %v5092 = vunpack.c.l.b16 %v3786
    %v5093 = vunpack.c.h.b16 %v3786
    %v5094 = vunpack.c.l.b16 %v3787
    %v5095 = vunpack.c.h.b16 %v3787
    %v5096 = vunpack.c.l.b16 %v3788
    %v5097 = vunpack.c.h.b16 %v3788
    %v5098 = vunpack.c.l.b16 %v3789
    %v5099 = vunpack.c.h.b16 %v3789
    %v5100 = vunpack.c.l.b16 %v3790
    %v5101 = vunpack.c.h.b16 %v3790
    %v5102 = vunpack.c.l.b16 %v3791
    %v5103 = vunpack.c.h.b16 %v3791
    %v5104 = vunpack.c.l.b16 %v3792
    %v5105 = vunpack.c.h.b16 %v3792
    %v5106 = vunpack.c.l.b16 %v3793
    %v5107 = vunpack.c.h.b16 %v3793
    %v5108 = vunpack.c.l.b16 %v3794
    %v5109 = vunpack.c.h.b16 %v3794
    %v5110 = vunpack.c.l.b16 %v3795
    %v5111 = vunpack.c.h.b16 %v3795
    %v5112 = vunpack.c.l.b16 %v3796
    %v5113 = vunpack.c.h.b16 %v3796
    %v5114 = vunpack.c.l.b16 %v3797
    %v5115 = vunpack.c.h.b16 %v3797
    %v5116 = vunpack.c.l.b16 %v3798
    %v5117 = vunpack.c.h.b16 %v3798
    %v5118 = vunpack.c.l.b16 %v3799
    %v5119 = vunpack.c.h.b16 %v3799
    %v5120 = vunpack.c.l.b16 %v3800
    %v5121 = vunpack.c.h.b16 %v3800
    %v5122 = vunpack.c.l.b16 %v3801
    %v5123 = vunpack.c.h.b16 %v3801
    %v5124 = vunpack.c.l.b16 %v3802
    %v5125 = vunpack.c.h.b16 %v3802
    %v5126 = vunpack.c.l.b16 %v3803
    %v5127 = vunpack.c.h.b16 %v3803
    %v5128 = vunpack.c.l.b16 %v3804
    %v5129 = vunpack.c.h.b16 %v3804
    %v5130 = vunpack.c.l.b16 %v3805
    %v5131 = vunpack.c.h.b16 %v3805
    %v5132 = vunpack.c.l.b16 %v3806
    %v5133 = vunpack.c.h.b16 %v3806
    %v5134 = vunpack.c.l.b16 %v3807
    %v5135 = vunpack.c.h.b16 %v3807
    %v5136 = vunpack.c.l.b16 %v3808
    %v5137 = vunpack.c.h.b16 %v3808
    %v5138 = vunpack.c.l.b16 %v3809
    %v5139 = vunpack.c.h.b16 %v3809
    %v5140 = vunpack.c.l.b16 %v3810
    %v5141 = vunpack.c.h.b16 %v3810
    %v5142 = vunpack.c.l.b16 %v3811
    %v5143 = vunpack.c.h.b16 %v3811
    %v5144 = vunpack.c.l.b16 %v3812
    %v5145 = vunpack.c.h.b16 %v3812
    %v5146 = vunpack.c.l.b16 %v3813
    %v5147 = vunpack.c.h.b16 %v3813
    %v5148 = vunpack.c.l.b16 %v3814
    %v5149 = vunpack.c.h.b16 %v3814
    %v5150 = vunpack.c.l.b16 %v3815
    %v5151 = vunpack.c.h.b16 %v3815
    %v5152 = vunpack.c.l.b16 %v3816
    %v5153 = vunpack.c.h.b16 %v3816
    %v5154 = vunpack.c.l.b16 %v3817
    %v5155 = vunpack.c.h.b16 %v3817
    %v5156 = vunpack.c.l.b16 %v3818
    %v5157 = vunpack.c.h.b16 %v3818
    %v5158 = vunpack.c.l.b16 %v3819
    %v5159 = vunpack.c.h.b16 %v3819
    %v5160 = vunpack.c.l.b16 %v3820
    %v5161 = vunpack.c.h.b16 %v3820
    %v5162 = vunpack.c.l.b16 %v3821
    %v5163 = vunpack.c.h.b16 %v3821
    %v5164 = vunpack.c.l.b16 %v3822
    %v5165 = vunpack.c.h.b16 %v3822
    %v5166 = vunpack.c.l.b16 %v3823
    %v5167 = vunpack.c.h.b16 %v3823
    %v5168 = vunpack.c.l.b16 %v3824
    %v5169 = vunpack.c.h.b16 %v3824
    %v5170 = vunpack.c.l.b16 %v3825
    %v5171 = vunpack.c.h.b16 %v3825
    %v5172 = vunpack.c.l.b16 %v3826
    %v5173 = vunpack.c.h.b16 %v3826
    %v5174 = vunpack.c.l.b16 %v3827
    %v5175 = vunpack.c.h.b16 %v3827
    %v5176 = vunpack.c.l.b16 %v3828
    %v5177 = vunpack.c.h.b16 %v3828
    %v5178 = vunpack.c.l.b16 %v3829
    %v5179 = vunpack.c.h.b16 %v3829
    %v5180 = vunpack.c.l.b16 %v3830
    %v5181 = vunpack.c.h.b16 %v3830
    %v5182 = vunpack.c.l.b16 %v3831
    %v5183 = vunpack.c.h.b16 %v3831
    %v5184 = vunpack.c.l.b16 %v3832
    %v5185 = vunpack.c.h.b16 %v3832
    %v5186 = vunpack.c.l.b16 %v3833
    %v5187 = vunpack.c.h.b16 %v3833
    %v5188 = vunpack.c.l.b16 %v3834
    %v5189 = vunpack.c.h.b16 %v3834
    %v5190 = vunpack.c.l.b16 %v3835
    %v5191 = vunpack.c.h.b16 %v3835
    %v5192 = vunpack.c.l.b16 %v3836
    %v5193 = vunpack.c.h.b16 %v3836
    %v5194 = vunpack.c.l.b16 %v3837
    %v5195 = vunpack.c.h.b16 %v3837
    %v5196 = vunpack.c.l.b16 %v3838
    %v5197 = vunpack.c.h.b16 %v3838
    %v5198 = vunpack.c.l.b16 %v3839
    %v5199 = vunpack.c.h.b16 %v3839
    %v5200 = vunpack.c.l.b16 %v3840
    %v5201 = vunpack.c.h.b16 %v3840
    %v5202 = vunpack.c.l.b16 %v3841
    %v5203 = vunpack.c.h.b16 %v3841
    %v5204 = vunpack.c.l.b16 %v3842
    %v5205 = vunpack.c.h.b16 %v3842
    %v5206 = vunpack.c.l.b16 %v3843
    %v5207 = vunpack.c.h.b16 %v3843
    %v5208 = vunpack.c.l.b16 %v3844
    %v5209 = vunpack.c.h.b16 %v3844
    %v5210 = vunpack.c.l.b16 %v3845
    %v5211 = vunpack.c.h.b16 %v3845
    %v5212 = vunpack.c.l.b16 %v3846
    %v5213 = vunpack.c.h.b16 %v3846
    %v5214 = vunpack.c.l.b16 %v3847
    %v5215 = vunpack.c.h.b16 %v3847
    %v5216 = vunpack.c.l.b16 %v3848
    %v5217 = vunpack.c.h.b16 %v3848
    %v5218 = vunpack.c.l.b16 %v3849
    %v5219 = vunpack.c.h.b16 %v3849
    %v5220 = vunpack.c.l.b16 %v3850
    %v5221 = vunpack.c.h.b16 %v3850
    %v5222 = vunpack.c.l.b16 %v3851
    %v5223 = vunpack.c.h.b16 %v3851
    %v5224 = vunpack.c.l.b16 %v3852
    %v5225 = vunpack.c.h.b16 %v3852
    %v5226 = vunpack.c.l.b16 %v3853
    %v5227 = vunpack.c.h.b16 %v3853
    %v5228 = vunpack.c.l.b16 %v3854
    %v5229 = vunpack.c.h.b16 %v3854
    %v5230 = vunpack.c.l.b16 %v3855
    %v5231 = vunpack.c.h.b16 %v3855
    %v5232 = vunpack.c.l.b16 %v3856
    %v5233 = vunpack.c.h.b16 %v3856
    %v5234 = vunpack.c.l.b16 %v3857
    %v5235 = vunpack.c.h.b16 %v3857
    %v5236 = vunpack.c.l.b16 %v3858
    %v5237 = vunpack.c.h.b16 %v3858
    %v5238 = vunpack.c.l.b16 %v3859
    %v5239 = vunpack.c.h.b16 %v3859
    %v5240 = vunpack.c.l.b16 %v3860
    %v5241 = vunpack.c.h.b16 %v3860
    %v5242 = vunpack.c.l.b16 %v3861
    %v5243 = vunpack.c.h.b16 %v3861
    %v5244 = vunpack.c.l.b16 %v3862
    %v5245 = vunpack.c.h.b16 %v3862
    %v5246 = vunpack.c.l.b16 %v3863
    %v5247 = vunpack.c.h.b16 %v3863
    %v5248 = vunpack.c.l.b16 %v3864
    %v5249 = vunpack.c.h.b16 %v3864
    %v5250 = vunpack.c.l.b16 %v3865
    %v5251 = vunpack.c.h.b16 %v3865
    %v5252 = vunpack.c.l.b16 %v3866
    %v5253 = vunpack.c.h.b16 %v3866
    %v5254 = vunpack.c.l.b16 %v3867
    %v5255 = vunpack.c.h.b16 %v3867
    %v5256 = vunpack.c.l.b16 %v3868
    %v5257 = vunpack.c.h.b16 %v3868
    %v5258 = vunpack.c.l.b16 %v3869
    %v5259 = vunpack.c.h.b16 %v3869
    %v5260 = vunpack.c.l.b16 %v3870
    %v5261 = vunpack.c.h.b16 %v3870
    %v5262 = vunpack.c.l.b16 %v3871
    %v5263 = vunpack.c.h.b16 %v3871
    %v5264 = vunpack.c.l.b16 %v3872
    %v5265 = vunpack.c.h.b16 %v3872
    %v5266 = vunpack.c.l.b16 %v3873
    %v5267 = vunpack.c.h.b16 %v3873
    %v5268 = vunpack.c.l.b16 %v3874
    %v5269 = vunpack.c.h.b16 %v3874
    %v5270 = vunpack.c.l.b16 %v3875
    %v5271 = vunpack.c.h.b16 %v3875
    %v5272 = vunpack.c.l.b16 %v3876
    %v5273 = vunpack.c.h.b16 %v3876
    %v5274 = vunpack.c.l.b16 %v3877
    %v5275 = vunpack.c.h.b16 %v3877
    %v5276 = vunpack.c.l.b16 %v3878
    %v5277 = vunpack.c.h.b16 %v3878
    %v5278 = vunpack.c.l.b16 %v3879
    %v5279 = vunpack.c.h.b16 %v3879
    %v5280 = vunpack.c.l.b16 %v3880
    %v5281 = vunpack.c.h.b16 %v3880
    %v5282 = vunpack.c.l.b16 %v3881
    %v5283 = vunpack.c.h.b16 %v3881
    %v5284 = vunpack.c.l.b16 %v3882
    %v5285 = vunpack.c.h.b16 %v3882
    %v5286 = vunpack.c.l.b16 %v3883
    %v5287 = vunpack.c.h.b16 %v3883
    %v5288 = vunpack.c.l.b16 %v3884
    %v5289 = vunpack.c.h.b16 %v3884
    %v5290 = vunpack.c.l.b16 %v3885
    %v5291 = vunpack.c.h.b16 %v3885
    %v5292 = vunpack.c.l.b16 %v3886
    %v5293 = vunpack.c.h.b16 %v3886
    %v5294 = vunpack.c.l.b16 %v3887
    %v5295 = vunpack.c.h.b16 %v3887
    %v5296 = vunpack.c.l.b16 %v3888
    %v5297 = vunpack.c.h.b16 %v3888
    %v5298 = vunpack.c.l.b16 %v3889
    %v5299 = vunpack.c.h.b16 %v3889
    %v5300 = vunpack.c.l.b16 %v3890
    %v5301 = vunpack.c.h.b16 %v3890
    %v5302 = vunpack.c.l.b16 %v3891
    %v5303 = vunpack.c.h.b16 %v3891
    %v5304 = vunpack.c.l.b16 %v3892
    %v5305 = vunpack.c.h.b16 %v3892
    %v5306 = vunpack.c.l.b16 %v3893
    %v5307 = vunpack.c.h.b16 %v3893
    %v5308 = vunpack.c.l.b16 %v3894
    %v5309 = vunpack.c.h.b16 %v3894
    %v5310 = vunpack.c.l.b16 %v3895
    %v5311 = vunpack.c.h.b16 %v3895
    %v5312 = vunpack.c.l.b16 %v3896
    %v5313 = vunpack.c.h.b16 %v3896
    %v5314 = vunpack.c.l.b16 %v3897
    %v5315 = vunpack.c.h.b16 %v3897
    %v5316 = vunpack.c.l.b16 %v3898
    %v5317 = vunpack.c.h.b16 %v3898
    %v5318 = vunpack.c.l.b16 %v3899
    %v5319 = vunpack.c.h.b16 %v3899
    %v5320 = vunpack.c.l.b16 %v3900
    %v5321 = vunpack.c.h.b16 %v3900
    %v5322 = vunpack.c.l.b16 %v3901
    %v5323 = vunpack.c.h.b16 %v3901
    %v5324 = vunpack.c.l.b16 %v3902
    %v5325 = vunpack.c.h.b16 %v3902
    %v5326 = vunpack.c.l.b16 %v3903
    %v5327 = vunpack.c.h.b16 %v3903
    %v5328 = vunpack.c.l.b16 %v3904
    %v5329 = vunpack.c.h.b16 %v3904
    %v5330 = vunpack.c.l.b16 %v3905
    %v5331 = vunpack.c.h.b16 %v3905
    %v5332 = vunpack.c.l.b16 %v3906
    %v5333 = vunpack.c.h.b16 %v3906
    %v5334 = vunpack.c.l.b16 %v3907
    %v5335 = vunpack.c.h.b16 %v3907
    %v5336 = vunpack.c.l.b16 %v3908
    %v5337 = vunpack.c.h.b16 %v3908
    %v5338 = vunpack.c.l.b16 %v3909
    %v5339 = vunpack.c.h.b16 %v3909
    %v5340 = vunpack.c.l.b16 %v3910
    %v5341 = vunpack.c.h.b16 %v3910
    %v5342 = vunpack.c.l.b16 %v3911
    %v5343 = vunpack.c.h.b16 %v3911
    %v5344 = vunpack.c.l.b16 %v3912
    %v5345 = vunpack.c.h.b16 %v3912
    %v5346 = vunpack.c.l.b16 %v3913
    %v5347 = vunpack.c.h.b16 %v3913
    %v5348 = vunpack.c.l.b16 %v3914
    %v5349 = vunpack.c.h.b16 %v3914
    %v5350 = vunpack.c.l.b16 %v3915
    %v5351 = vunpack.c.h.b16 %v3915
    %v5352 = vunpack.c.l.b16 %v3916
    %v5353 = vunpack.c.h.b16 %v3916
    %v5354 = vunpack.c.l.b16 %v3917
    %v5355 = vunpack.c.h.b16 %v3917
    %v5356 = vunpack.c.l.b16 %v3918
    %v5357 = vunpack.c.h.b16 %v3918
    %v5358 = vunpack.c.l.b16 %v3919
    %v5359 = vunpack.c.h.b16 %v3919
    %v5360 = vunpack.c.l.b16 %v3920
    %v5361 = vunpack.c.h.b16 %v3920
    %v5362 = vunpack.c.l.b16 %v3921
    %v5363 = vunpack.c.h.b16 %v3921
    %v5364 = vunpack.c.l.b16 %v3922
    %v5365 = vunpack.c.h.b16 %v3922
    %v5366 = vunpack.c.l.b16 %v3923
    %v5367 = vunpack.c.h.b16 %v3923
    %v5368 = vunpack.c.l.b16 %v3924
    %v5369 = vunpack.c.h.b16 %v3924
    %v5370 = vunpack.c.l.b16 %v3925
    %v5371 = vunpack.c.h.b16 %v3925
    %v5372 = vunpack.c.l.b16 %v3926
    %v5373 = vunpack.c.h.b16 %v3926
    %v5374 = vunpack.c.l.b16 %v3927
    %v5375 = vunpack.c.h.b16 %v3927
    %v5376 = vunpack.c.l.b16 %v3928
    %v5377 = vunpack.c.h.b16 %v3928
    %v5378 = vunpack.c.l.b16 %v3929
    %v5379 = vunpack.c.h.b16 %v3929
    %v5380 = vunpack.c.l.b16 %v3930
    %v5381 = vunpack.c.h.b16 %v3930
    %v5382 = vunpack.c.l.b16 %v3931
    %v5383 = vunpack.c.h.b16 %v3931
    %v5384 = vunpack.c.l.b16 %v3932
    %v5385 = vunpack.c.h.b16 %v3932
    %v5386 = vunpack.c.l.b16 %v3933
    %v5387 = vunpack.c.h.b16 %v3933
    %v5388 = vunpack.c.l.b16 %v3934
    %v5389 = vunpack.c.h.b16 %v3934
    %v5390 = vunpack.c.l.b16 %v3935
    %v5391 = vunpack.c.h.b16 %v3935
    %v5392 = vunpack.c.l.b16 %v3936
    %v5393 = vunpack.c.h.b16 %v3936
    %v5394 = vunpack.c.l.b16 %v3937
    %v5395 = vunpack.c.h.b16 %v3937
    %v5396 = vunpack.c.l.b16 %v3938
    %v5397 = vunpack.c.h.b16 %v3938
    %v5398 = vunpack.c.l.b16 %v3939
    %v5399 = vunpack.c.h.b16 %v3939
    %v5400 = vunpack.c.l.b16 %v3940
    %v5401 = vunpack.c.h.b16 %v3940
    %v5402 = vunpack.c.l.b16 %v3941
    %v5403 = vunpack.c.h.b16 %v3941
    %v5404 = vunpack.c.l.b16 %v3942
    %v5405 = vunpack.c.h.b16 %v3942
    %v5406 = vunpack.c.l.b16 %v3943
    %v5407 = vunpack.c.h.b16 %v3943
    %v5408 = vunpack.c.l.b16 %v3944
    %v5409 = vunpack.c.h.b16 %v3944
    %v5410 = vunpack.c.l.b16 %v3945
    %v5411 = vunpack.c.h.b16 %v3945
    %v5412 = vunpack.c.l.b16 %v3946
    %v5413 = vunpack.c.h.b16 %v3946
    %v5414 = vunpack.c.l.b16 %v3947
    %v5415 = vunpack.c.h.b16 %v3947
    %v5416 = vunpack.c.l.b16 %v3948
    %v5417 = vunpack.c.h.b16 %v3948
    %v5418 = vunpack.c.l.b16 %v3949
    %v5419 = vunpack.c.h.b16 %v3949
    %v5420 = vunpack.c.l.b16 %v3950
    %v5421 = vunpack.c.h.b16 %v3950
    %v5422 = vunpack.c.l.b16 %v3951
    %v5423 = vunpack.c.h.b16 %v3951
    %v5424 = vunpack.c.l.b16 %v3952
    %v5425 = vunpack.c.h.b16 %v3952
    %v5426 = vunpack.c.l.b16 %v3953
    %v5427 = vunpack.c.h.b16 %v3953
    %v5428 = vunpack.c.l.b16 %v3954
    %v5429 = vunpack.c.h.b16 %v3954
    %v5430 = vunpack.c.l.b16 %v3955
    %v5431 = vunpack.c.h.b16 %v3955
    %v5432 = vunpack.c.l.b16 %v3956
    %v5433 = vunpack.c.h.b16 %v3956
    %v5434 = vunpack.c.l.b16 %v3957
    %v5435 = vunpack.c.h.b16 %v3957
    %v5436 = vunpack.c.l.b16 %v3958
    %v5437 = vunpack.c.h.b16 %v3958
    %v5438 = vunpack.c.l.b16 %v3959
    %v5439 = vunpack.c.h.b16 %v3959
    %v5440 = vunpack.c.l.b16 %v3960
    %v5441 = vunpack.c.h.b16 %v3960
    %v5442 = vunpack.c.l.b16 %v3961
    %v5443 = vunpack.c.h.b16 %v3961
    %v5444 = vunpack.c.l.b16 %v3962
    %v5445 = vunpack.c.h.b16 %v3962
    %v5446 = vunpack.c.l.b16 %v3963
    %v5447 = vunpack.c.h.b16 %v3963
    %v5448 = vunpack.c.l.b16 %v3964
    %v5449 = vunpack.c.h.b16 %v3964
    %v5450 = vunpack.c.l.b16 %v3965
    %v5451 = vunpack.c.h.b16 %v3965
    %v5452 = vunpack.c.l.b16 %v3966
    %v5453 = vunpack.c.h.b16 %v3966
    %v5454 = vunpack.c.l.b16 %v3967
    %v5455 = vunpack.c.h.b16 %v3967
    %v5456 = vunpack.c.l.b16 %v3968
    %v5457 = vunpack.c.h.b16 %v3968
    %v5458 = vunpack.c.l.b16 %v3969
    %v5459 = vunpack.c.h.b16 %v3969
    %v5460 = vunpack.c.l.b16 %v3970
    %v5461 = vunpack.c.h.b16 %v3970
    %v5462 = vunpack.c.l.b16 %v3971
    %v5463 = vunpack.c.h.b16 %v3971
    %v5464 = vunpack.c.l.b16 %v3972
    %v5465 = vunpack.c.h.b16 %v3972
    %v5466 = vunpack.c.l.b16 %v3973
    %v5467 = vunpack.c.h.b16 %v3973
    %v5468 = vunpack.c.l.b16 %v3974
    %v5469 = vunpack.c.h.b16 %v3974
    %v5470 = vunpack.c.l.b16 %v3975
    %v5471 = vunpack.c.h.b16 %v3975
    %v5472 = vunpack.c.l.b16 %v3976
    %v5473 = vunpack.c.h.b16 %v3976
    %v5474 = vunpack.c.l.b16 %v3977
    %v5475 = vunpack.c.h.b16 %v3977
    %v5476 = vunpack.c.l.b16 %v3978
    %v5477 = vunpack.c.h.b16 %v3978
    %v5478 = vunpack.c.l.b16 %v3979
    %v5479 = vunpack.c.h.b16 %v3979
    %v5480 = vunpack.c.l.b16 %v3980
    %v5481 = vunpack.c.h.b16 %v3980
    %v5482 = vunpack.c.l.b16 %v3981
    %v5483 = vunpack.c.h.b16 %v3981
    %v5484 = vunpack.c.l.b16 %v3982
    %v5485 = vunpack.c.h.b16 %v3982
    %v5486 = vunpack.c.l.b16 %v3983
    %v5487 = vunpack.c.h.b16 %v3983
    %v5488 = vunpack.c.l.b16 %v3984
    %v5489 = vunpack.c.h.b16 %v3984
    %v5490 = vunpack.c.l.b16 %v3985
    %v5491 = vunpack.c.h.b16 %v3985
    %v5492 = vunpack.c.l.b16 %v3986
    %v5493 = vunpack.c.h.b16 %v3986
    %v5494 = vunpack.c.l.b16 %v3987
    %v5495 = vunpack.c.h.b16 %v3987
    %v5496 = vunpack.c.l.b16 %v3988
    %v5497 = vunpack.c.h.b16 %v3988
    %v5498 = vunpack.c.l.b16 %v3989
    %v5499 = vunpack.c.h.b16 %v3989
    %v5500 = vunpack.c.l.b16 %v3990
    %v5501 = vunpack.c.h.b16 %v3990
    %v5502 = vunpack.c.l.b16 %v3991
    %v5503 = vunpack.c.h.b16 %v3991
    %v5504 = vunpack.c.l.b16 %v3992
    %v5505 = vunpack.c.h.b16 %v3992
    %v5506 = vunpack.c.l.b16 %v3993
    %v5507 = vunpack.c.h.b16 %v3993
    %v5508 = vunpack.c.l.b16 %v3994
    %v5509 = vunpack.c.h.b16 %v3994
    %v5510 = vunpack.c.l.b16 %v3995
    %v5511 = vunpack.c.h.b16 %v3995
    %v5512 = vunpack.c.l.b16 %v3996
    %v5513 = vunpack.c.h.b16 %v3996
    %v5514 = vunpack.c.l.b16 %v3997
    %v5515 = vunpack.c.h.b16 %v3997
    %v5516 = vunpack.c.l.b16 %v3998
    %v5517 = vunpack.c.h.b16 %v3998
    %v5518 = vunpack.c.l.b16 %v3999
    %v5519 = vunpack.c.h.b16 %v3999
    %v5520 = vunpack.c.l.b16 %v4000
    %v5521 = vunpack.c.h.b16 %v4000
    %v5522 = vunpack.c.l.b16 %v4001
    %v5523 = vunpack.c.h.b16 %v4001
    %v5524 = vunpack.c.l.b16 %v4002
    %v5525 = vunpack.c.h.b16 %v4002
    %v5526 = vunpack.c.l.b16 %v4003
    %v5527 = vunpack.c.h.b16 %v4003
    %v5528 = vunpack.c.l.b16 %v4004
    %v5529 = vunpack.c.h.b16 %v4004
    %v5530 = vunpack.c.l.b16 %v4005
    %v5531 = vunpack.c.h.b16 %v4005
    %v5532 = vunpack.c.l.b16 %v4006
    %v5533 = vunpack.c.h.b16 %v4006
    %v5534 = vunpack.c.l.b16 %v4007
    %v5535 = vunpack.c.h.b16 %v4007
    %v5536 = vunpack.c.l.b16 %v4008
    %v5537 = vunpack.c.h.b16 %v4008
    %v5538 = vunpack.c.l.b16 %v4009
    %v5539 = vunpack.c.h.b16 %v4009
    %v5540 = vunpack.c.l.b16 %v4010
    %v5541 = vunpack.c.h.b16 %v4010
    %v5542 = vunpack.c.l.b16 %v4011
    %v5543 = vunpack.c.h.b16 %v4011
    %v5544 = vunpack.c.l.b16 %v4012
    %v5545 = vunpack.c.h.b16 %v4012
    %v5546 = vunpack.c.l.b16 %v4013
    %v5547 = vunpack.c.h.b16 %v4013
    %v5548 = vunpack.c.l.b16 %v4014
    %v5549 = vunpack.c.h.b16 %v4014
    %v5550 = vunpack.c.l.b16 %v4015
    %v5551 = vunpack.c.h.b16 %v4015
    %v5552 = vunpack.c.l.b16 %v4016
    %v5553 = vunpack.c.h.b16 %v4016
    %v5554 = vunpack.c.l.b16 %v4017
    %v5555 = vunpack.c.h.b16 %v4017
    %v5556 = vunpack.c.l.b16 %v4018
    %v5557 = vunpack.c.h.b16 %v4018
    %v5558 = vunpack.c.l.b16 %v4019
    %v5559 = vunpack.c.h.b16 %v4019
    %v5560 = vunpack.c.l.b16 %v4020
    %v5561 = vunpack.c.h.b16 %v4020
    %v5562 = vunpack.c.l.b16 %v4021
    %v5563 = vunpack.c.h.b16 %v4021
    %v5564 = vunpack.c.l.b16 %v4022
    %v5565 = vunpack.c.h.b16 %v4022
    %v5566 = vunpack.c.l.b16 %v4023
    %v5567 = vunpack.c.h.b16 %v4023
    %v5568 = vunpack.c.l.b16 %v4024
    %v5569 = vunpack.c.h.b16 %v4024
    %v5570 = vunpack.c.l.b16 %v4025
    %v5571 = vunpack.c.h.b16 %v4025
    %v5572 = vunpack.c.l.b16 %v4026
    %v5573 = vunpack.c.h.b16 %v4026
    %v5574 = vunpack.c.l.b16 %v4027
    %v5575 = vunpack.c.h.b16 %v4027
    %v5576 = vunpack.c.l.b16 %v4028
    %v5577 = vunpack.c.h.b16 %v4028
    %v5578 = vunpack.c.l.b16 %v4029
    %v5579 = vunpack.c.h.b16 %v4029
    %v5580 = vunpack.c.l.b16 %v4030
    %v5581 = vunpack.c.h.b16 %v4030
    %v5582 = vunpack.c.l.b16 %v4031
    %v5583 = vunpack.c.h.b16 %v4031
    %v5584 = vunpack.c.l.b16 %v4032
    %v5585 = vunpack.c.h.b16 %v4032
    %v5586 = vunpack.c.l.b16 %v4033
    %v5587 = vunpack.c.h.b16 %v4033
    %v5588 = vunpack.c.l.b16 %v4034
    %v5589 = vunpack.c.h.b16 %v4034
    %v5590 = vunpack.c.l.b16 %v4035
    %v5591 = vunpack.c.h.b16 %v4035
    %v5592 = vunpack.c.l.b16 %v4036
    %v5593 = vunpack.c.h.b16 %v4036
    %v5594 = vunpack.c.l.b16 %v4037
    %v5595 = vunpack.c.h.b16 %v4037
    %v5596 = vunpack.c.l.b16 %v4038
    %v5597 = vunpack.c.h.b16 %v4038
    %v5598 = vunpack.c.l.b16 %v4039
    %v5599 = vunpack.c.h.b16 %v4039
    %v5600 = vunpack.c.l.b16 %v4040
    %v5601 = vunpack.c.h.b16 %v4040
    %v5602 = vunpack.c.l.b16 %v4041
    %v5603 = vunpack.c.h.b16 %v4041
    %v5604 = vunpack.c.l.b16 %v4042
    %v5605 = vunpack.c.h.b16 %v4042
    %v5606 = vunpack.c.l.b16 %v4043
    %v5607 = vunpack.c.h.b16 %v4043
    %v5608 = vunpack.c.l.b16 %v4044
    %v5609 = vunpack.c.h.b16 %v4044
    %v5610 = vunpack.c.l.b16 %v4045
    %v5611 = vunpack.c.h.b16 %v4045
    %v5612 = vunpack.c.l.b16 %v4046
    %v5613 = vunpack.c.h.b16 %v4046
    %v5614 = vunpack.c.l.b16 %v4047
    %v5615 = vunpack.c.h.b16 %v4047
    %v5616 = vunpack.c.l.b16 %v4048
    %v5617 = vunpack.c.h.b16 %v4048
    %v5618 = vunpack.c.l.b16 %v4049
    %v5619 = vunpack.c.h.b16 %v4049
    %v5620 = vunpack.c.l.b16 %v4050
    %v5621 = vunpack.c.h.b16 %v4050
    %v5622 = vunpack.c.l.b16 %v4051
    %v5623 = vunpack.c.h.b16 %v4051
    %v5624 = vunpack.c.l.b16 %v4052
    %v5625 = vunpack.c.h.b16 %v4052
    %v5626 = vunpack.c.l.b16 %v4053
    %v5627 = vunpack.c.h.b16 %v4053
    %v5628 = vunpack.c.l.b16 %v4054
    %v5629 = vunpack.c.h.b16 %v4054
    %v5630 = vunpack.c.l.b16 %v4055
    %v5631 = vunpack.c.h.b16 %v4055
    %v5632 = vunpack.c.l.b16 %v4056
    %v5633 = vunpack.c.h.b16 %v4056
    %v5634 = vunpack.c.l.b16 %v4057
    %v5635 = vunpack.c.h.b16 %v4057
    %v5636 = vpack.c.b16 %v4620, %v4612
    %v5637 = vpack.c.b16 %v4621, %v4613
    %v5638 = vpack.c.b16 %v4622, %v4614
    %v5639 = vpack.c.b16 %v4623, %v4615
    %v5640 = vpack.c.b16 %v4624, %v4616
    %v5641 = vpack.c.b16 %v4625, %v4617
    %v5642 = vpack.c.b16 %v4626, %v4618
    %v5643 = vpack.c.b16 %v4627, %v4619
    %v5644 = vpack.c.b16 %v4636, %v4628
    %v5645 = vpack.c.b16 %v4637, %v4629
    %v5646 = vpack.c.b16 %v4638, %v4630
    %v5647 = vpack.c.b16 %v4639, %v4631
    %v5648 = vpack.c.b16 %v4640, %v4632
    %v5649 = vpack.c.b16 %v4641, %v4633
    %v5650 = vpack.c.b16 %v4642, %v4634
    %v5651 = vpack.c.b16 %v4643, %v4635
    %v5652 = vpack.c.b16 %v4652, %v4644
    %v5653 = vpack.c.b16 %v4653, %v4645
    %v5654 = vpack.c.b16 %v4654, %v4646
    %v5655 = vpack.c.b16 %v4655, %v4647
    %v5656 = vpack.c.b16 %v4656, %v4648
    %v5657 = vpack.c.b16 %v4657, %v4649
    %v5658 = vpack.c.b16 %v4658, %v4650
    %v5659 = vpack.c.b16 %v4659, %v4651
    %v5660 = vpack.c.b16 %v4668, %v4660
    %v5661 = vpack.c.b16 %v4669, %v4661
    %v5662 = vpack.c.b16 %v4670, %v4662
    %v5663 = vpack.c.b16 %v4671, %v4663
    %v5664 = vpack.c.b16 %v4672, %v4664
    %v5665 = vpack.c.b16 %v4673, %v4665
    %v5666 = vpack.c.b16 %v4674, %v4666
    %v5667 = vpack.c.b16 %v4675, %v4667
    %v5668 = vpack.c.b16 %v4684, %v4676
    %v5669 = vpack.c.b16 %v4685, %v4677
    %v5670 = vpack.c.b16 %v4686, %v4678
    %v5671 = vpack.c.b16 %v4687, %v4679
    %v5672 = vpack.c.b16 %v4688, %v4680
    %v5673 = vpack.c.b16 %v4689, %v4681
    %v5674 = vpack.c.b16 %v4690, %v4682
    %v5675 = vpack.c.b16 %v4691, %v4683
    %v5676 = vpack.c.b16 %v4700, %v4692
    %v5677 = vpack.c.b16 %v4701, %v4693
    %v5678 = vpack.c.b16 %v4702, %v4694
    %v5679 = vpack.c.b16 %v4703, %v4695
    %v5680 = vpack.c.b16 %v4704, %v4696
    %v5681 = vpack.c.b16 %v4705, %v4697
    %v5682 = vpack.c.b16 %v4706, %v4698
    %v5683 = vpack.c.b16 %v4707, %v4699
    %v5684 = vpack.c.b16 %v4716, %v4708
    %v5685 = vpack.c.b16 %v4717, %v4709
    %v5686 = vpack.c.b16 %v4718, %v4710
    %v5687 = vpack.c.b16 %v4719, %v4711
    %v5688 = vpack.c.b16 %v4720, %v4712
    %v5689 = vpack.c.b16 %v4721, %v4713
    %v5690 = vpack.c.b16 %v4722, %v4714
    %v5691 = vpack.c.b16 %v4723, %v4715
    %v5692 = vpack.c.b16 %v4732, %v4724
    %v5693 = vpack.c.b16 %v4733, %v4725
    %v5694 = vpack.c.b16 %v4734, %v4726
    %v5695 = vpack.c.b16 %v4735, %v4727
    %v5696 = vpack.c.b16 %v4736, %v4728
    %v5697 = vpack.c.b16 %v4737, %v4729
    %v5698 = vpack.c.b16 %v4738, %v4730
    %v5699 = vpack.c.b16 %v4739, %v4731
    %v5700 = vpack.c.b16 %v4748, %v4740
    %v5701 = vpack.c.b16 %v4749, %v4741
    %v5702 = vpack.c.b16 %v4750, %v4742
    %v5703 = vpack.c.b16 %v4751, %v4743
    %v5704 = vpack.c.b16 %v4752, %v4744
    %v5705 = vpack.c.b16 %v4753, %v4745
    %v5706 = vpack.c.b16 %v4754, %v4746
    %v5707 = vpack.c.b16 %v4755, %v4747
    %v5708 = vpack.c.b16 %v4764, %v4756
    %v5709 = vpack.c.b16 %v4765, %v4757
    %v5710 = vpack.c.b16 %v4766, %v4758
    %v5711 = vpack.c.b16 %v4767, %v4759
    %v5712 = vpack.c.b16 %v4768, %v4760
    %v5713 = vpack.c.b16 %v4769, %v4761
    %v5714 = vpack.c.b16 %v4770, %v4762
    %v5715 = vpack.c.b16 %v4771, %v4763
    %v5716 = vpack.c.b16 %v4780, %v4772
    %v5717 = vpack.c.b16 %v4781, %v4773
    %v5718 = vpack.c.b16 %v4782, %v4774
    %v5719 = vpack.c.b16 %v4783, %v4775
    %v5720 = vpack.c.b16 %v4784, %v4776
    %v5721 = vpack.c.b16 %v4785, %v4777
    %v5722 = vpack.c.b16 %v4786, %v4778
    %v5723 = vpack.c.b16 %v4787, %v4779
    %v5724 = vpack.c.b16 %v4796, %v4788
    %v5725 = vpack.c.b16 %v4797, %v4789
    %v5726 = vpack.c.b16 %v4798, %v4790
    %v5727 = vpack.c.b16 %v4799, %v4791
    %v5728 = vpack.c.b16 %v4800, %v4792
    %v5729 = vpack.c.b16 %v4801, %v4793
    %v5730 = vpack.c.b16 %v4802, %v4794
    %v5731 = vpack.c.b16 %v4803, %v4795
    %v5732 = vpack.c.b16 %v4812, %v4804
    %v5733 = vpack.c.b16 %v4813, %v4805
    %v5734 = vpack.c.b16 %v4814, %v4806
    %v5735 = vpack.c.b16 %v4815, %v4807
    %v5736 = vpack.c.b16 %v4816, %v4808
    %v5737 = vpack.c.b16 %v4817, %v4809
    %v5738 = vpack.c.b16 %v4818, %v4810
    %v5739 = vpack.c.b16 %v4819, %v4811
    %v5740 = vpack.c.b16 %v4828, %v4820
    %v5741 = vpack.c.b16 %v4829, %v4821
    %v5742 = vpack.c.b16 %v4830, %v4822
    %v5743 = vpack.c.b16 %v4831, %v4823
    %v5744 = vpack.c.b16 %v4832, %v4824
    %v5745 = vpack.c.b16 %v4833, %v4825
    %v5746 = vpack.c.b16 %v4834, %v4826
    %v5747 = vpack.c.b16 %v4835, %v4827
    %v5748 = vpack.c.b16 %v4844, %v4836
    %v5749 = vpack.c.b16 %v4845, %v4837
    %v5750 = vpack.c.b16 %v4846, %v4838
    %v5751 = vpack.c.b16 %v4847, %v4839
    %v5752 = vpack.c.b16 %v4848, %v4840
    %v5753 = vpack.c.b16 %v4849, %v4841
    %v5754 = vpack.c.b16 %v4850, %v4842
    %v5755 = vpack.c.b16 %v4851, %v4843
    %v5756 = vpack.c.b16 %v4860, %v4852
    %v5757 = vpack.c.b16 %v4861, %v4853
    %v5758 = vpack.c.b16 %v4862, %v4854
    %v5759 = vpack.c.b16 %v4863, %v4855
    %v5760 = vpack.c.b16 %v4864, %v4856
    %v5761 = vpack.c.b16 %v4865, %v4857
    %v5762 = vpack.c.b16 %v4866, %v4858
    %v5763 = vpack.c.b16 %v4867, %v4859
    %v5764 = vpack.c.b16 %v4876, %v4868
    %v5765 = vpack.c.b16 %v4877, %v4869
    %v5766 = vpack.c.b16 %v4878, %v4870
    %v5767 = vpack.c.b16 %v4879, %v4871
    %v5768 = vpack.c.b16 %v4880, %v4872
    %v5769 = vpack.c.b16 %v4881, %v4873
    %v5770 = vpack.c.b16 %v4882, %v4874
    %v5771 = vpack.c.b16 %v4883, %v4875
    %v5772 = vpack.c.b16 %v4892, %v4884
    %v5773 = vpack.c.b16 %v4893, %v4885
    %v5774 = vpack.c.b16 %v4894, %v4886
    %v5775 = vpack.c.b16 %v4895, %v4887
    %v5776 = vpack.c.b16 %v4896, %v4888
    %v5777 = vpack.c.b16 %v4897, %v4889
    %v5778 = vpack.c.b16 %v4898, %v4890
    %v5779 = vpack.c.b16 %v4899, %v4891
    %v5780 = vpack.c.b16 %v4908, %v4900
    %v5781 = vpack.c.b16 %v4909, %v4901
    %v5782 = vpack.c.b16 %v4910, %v4902
    %v5783 = vpack.c.b16 %v4911, %v4903
    %v5784 = vpack.c.b16 %v4912, %v4904
    %v5785 = vpack.c.b16 %v4913, %v4905
    %v5786 = vpack.c.b16 %v4914, %v4906
    %v5787 = vpack.c.b16 %v4915, %v4907
    %v5788 = vpack.c.b16 %v4924, %v4916
    %v5789 = vpack.c.b16 %v4925, %v4917
    %v5790 = vpack.c.b16 %v4926, %v4918
    %v5791 = vpack.c.b16 %v4927, %v4919
    %v5792 = vpack.c.b16 %v4928, %v4920
    %v5793 = vpack.c.b16 %v4929, %v4921
    %v5794 = vpack.c.b16 %v4930, %v4922
    %v5795 = vpack.c.b16 %v4931, %v4923
    %v5796 = vpack.c.b16 %v4940, %v4932
    %v5797 = vpack.c.b16 %v4941, %v4933
    %v5798 = vpack.c.b16 %v4942, %v4934
    %v5799 = vpack.c.b16 %v4943, %v4935
    %v5800 = vpack.c.b16 %v4944, %v4936
    %v5801 = vpack.c.b16 %v4945, %v4937
    %v5802 = vpack.c.b16 %v4946, %v4938
    %v5803 = vpack.c.b16 %v4947, %v4939
    %v5804 = vpack.c.b16 %v4956, %v4948
    %v5805 = vpack.c.b16 %v4957, %v4949
    %v5806 = vpack.c.b16 %v4958, %v4950
    %v5807 = vpack.c.b16 %v4959, %v4951
    %v5808 = vpack.c.b16 %v4960, %v4952
    %v5809 = vpack.c.b16 %v4961, %v4953
    %v5810 = vpack.c.b16 %v4962, %v4954
    %v5811 = vpack.c.b16 %v4963, %v4955
    %v5812 = vpack.c.b16 %v4972, %v4964
    %v5813 = vpack.c.b16 %v4973, %v4965
    %v5814 = vpack.c.b16 %v4974, %v4966
    %v5815 = vpack.c.b16 %v4975, %v4967
    %v5816 = vpack.c.b16 %v4976, %v4968
    %v5817 = vpack.c.b16 %v4977, %v4969
    %v5818 = vpack.c.b16 %v4978, %v4970
    %v5819 = vpack.c.b16 %v4979, %v4971
    %v5820 = vpack.c.b16 %v4988, %v4980
    %v5821 = vpack.c.b16 %v4989, %v4981
    %v5822 = vpack.c.b16 %v4990, %v4982
    %v5823 = vpack.c.b16 %v4991, %v4983
    %v5824 = vpack.c.b16 %v4992, %v4984
    %v5825 = vpack.c.b16 %v4993, %v4985
    %v5826 = vpack.c.b16 %v4994, %v4986
    %v5827 = vpack.c.b16 %v4995, %v4987
    %v5828 = vpack.c.b16 %v5004, %v4996
    %v5829 = vpack.c.b16 %v5005, %v4997
    %v5830 = vpack.c.b16 %v5006, %v4998
    %v5831 = vpack.c.b16 %v5007, %v4999
    %v5832 = vpack.c.b16 %v5008, %v5000
    %v5833 = vpack.c.b16 %v5009, %v5001
    %v5834 = vpack.c.b16 %v5010, %v5002
    %v5835 = vpack.c.b16 %v5011, %v5003
    %v5836 = vpack.c.b16 %v5020, %v5012
    %v5837 = vpack.c.b16 %v5021, %v5013
    %v5838 = vpack.c.b16 %v5022, %v5014
    %v5839 = vpack.c.b16 %v5023, %v5015
    %v5840 = vpack.c.b16 %v5024, %v5016
    %v5841 = vpack.c.b16 %v5025, %v5017
    %v5842 = vpack.c.b16 %v5026, %v5018
    %v5843 = vpack.c.b16 %v5027, %v5019
    %v5844 = vpack.c.b16 %v5036, %v5028
    %v5845 = vpack.c.b16 %v5037, %v5029
    %v5846 = vpack.c.b16 %v5038, %v5030
    %v5847 = vpack.c.b16 %v5039, %v5031
    %v5848 = vpack.c.b16 %v5040, %v5032
    %v5849 = vpack.c.b16 %v5041, %v5033
    %v5850 = vpack.c.b16 %v5042, %v5034
    %v5851 = vpack.c.b16 %v5043, %v5035
    %v5852 = vpack.c.b16 %v5052, %v5044
    %v5853 = vpack.c.b16 %v5053, %v5045
    %v5854 = vpack.c.b16 %v5054, %v5046
    %v5855 = vpack.c.b16 %v5055, %v5047
    %v5856 = vpack.c.b16 %v5056, %v5048
    %v5857 = vpack.c.b16 %v5057, %v5049
    %v5858 = vpack.c.b16 %v5058, %v5050
    %v5859 = vpack.c.b16 %v5059, %v5051
    %v5860 = vpack.c.b16 %v5068, %v5060
    %v5861 = vpack.c.b16 %v5069, %v5061
    %v5862 = vpack.c.b16 %v5070, %v5062
    %v5863 = vpack.c.b16 %v5071, %v5063
    %v5864 = vpack.c.b16 %v5072, %v5064
    %v5865 = vpack.c.b16 %v5073, %v5065
    %v5866 = vpack.c.b16 %v5074, %v5066
    %v5867 = vpack.c.b16 %v5075, %v5067
    %v5868 = vpack.c.b16 %v5084, %v5076
    %v5869 = vpack.c.b16 %v5085, %v5077
    %v5870 = vpack.c.b16 %v5086, %v5078
    %v5871 = vpack.c.b16 %v5087, %v5079
    %v5872 = vpack.c.b16 %v5088, %v5080
    %v5873 = vpack.c.b16 %v5089, %v5081
    %v5874 = vpack.c.b16 %v5090, %v5082
    %v5875 = vpack.c.b16 %v5091, %v5083
    %v5876 = vpack.c.b16 %v5100, %v5092
    %v5877 = vpack.c.b16 %v5101, %v5093
    %v5878 = vpack.c.b16 %v5102, %v5094
    %v5879 = vpack.c.b16 %v5103, %v5095
    %v5880 = vpack.c.b16 %v5104, %v5096
    %v5881 = vpack.c.b16 %v5105, %v5097
    %v5882 = vpack.c.b16 %v5106, %v5098
    %v5883 = vpack.c.b16 %v5107, %v5099
    %v5884 = vpack.c.b16 %v5116, %v5108
    %v5885 = vpack.c.b16 %v5117, %v5109
    %v5886 = vpack.c.b16 %v5118, %v5110
    %v5887 = vpack.c.b16 %v5119, %v5111
    %v5888 = vpack.c.b16 %v5120, %v5112
    %v5889 = vpack.c.b16 %v5121, %v5113
    %v5890 = vpack.c.b16 %v5122, %v5114
    %v5891 = vpack.c.b16 %v5123, %v5115
    %v5892 = vpack.c.b16 %v5132, %v5124
    %v5893 = vpack.c.b16 %v5133, %v5125
    %v5894 = vpack.c.b16 %v5134, %v5126
    %v5895 = vpack.c.b16 %v5135, %v5127
    %v5896 = vpack.c.b16 %v5136, %v5128
    %v5897 = vpack.c.b16 %v5137, %v5129
    %v5898 = vpack.c.b16 %v5138, %v5130
    %v5899 = vpack.c.b16 %v5139, %v5131
    %v5900 = vpack.c.b16 %v5148, %v5140
    %v5901 = vpack.c.b16 %v5149, %v5141
    %v5902 = vpack.c.b16 %v5150, %v5142
    %v5903 = vpack.c.b16 %v5151, %v5143
    %v5904 = vpack.c.b16 %v5152, %v5144
    %v5905 = vpack.c.b16 %v5153, %v5145
    %v5906 = vpack.c.b16 %v5154, %v5146
    %v5907 = vpack.c.b16 %v5155, %v5147
    %v5908 = vpack.c.b16 %v5164, %v5156
    %v5909 = vpack.c.b16 %v5165, %v5157
    %v5910 = vpack.c.b16 %v5166, %v5158
    %v5911 = vpack.c.b16 %v5167, %v5159
    %v5912 = vpack.c.b16 %v5168, %v5160
    %v5913 = vpack.c.b16 %v5169, %v5161
    %v5914 = vpack.c.b16 %v5170, %v5162
    %v5915 = vpack.c.b16 %v5171, %v5163
    %v5916 = vpack.c.b16 %v5180, %v5172
    %v5917 = vpack.c.b16 %v5181, %v5173
    %v5918 = vpack.c.b16 %v5182, %v5174
    %v5919 = vpack.c.b16 %v5183, %v5175
    %v5920 = vpack.c.b16 %v5184, %v5176
    %v5921 = vpack.c.b16 %v5185, %v5177
    %v5922 = vpack.c.b16 %v5186, %v5178
    %v5923 = vpack.c.b16 %v5187, %v5179
    %v5924 = vpack.c.b16 %v5196, %v5188
    %v5925 = vpack.c.b16 %v5197, %v5189
    %v5926 = vpack.c.b16 %v5198, %v5190
    %v5927 = vpack.c.b16 %v5199, %v5191
    %v5928 = vpack.c.b16 %v5200, %v5192
    %v5929 = vpack.c.b16 %v5201, %v5193
    %v5930 = vpack.c.b16 %v5202, %v5194
    %v5931 = vpack.c.b16 %v5203, %v5195
    %v5932 = vpack.c.b16 %v5212, %v5204
    %v5933 = vpack.c.b16 %v5213, %v5205
    %v5934 = vpack.c.b16 %v5214, %v5206
    %v5935 = vpack.c.b16 %v5215, %v5207
    %v5936 = vpack.c.b16 %v5216, %v5208
    %v5937 = vpack.c.b16 %v5217, %v5209
    %v5938 = vpack.c.b16 %v5218, %v5210
    %v5939 = vpack.c.b16 %v5219, %v5211
    %v5940 = vpack.c.b16 %v5228, %v5220
    %v5941 = vpack.c.b16 %v5229, %v5221
    %v5942 = vpack.c.b16 %v5230, %v5222
    %v5943 = vpack.c.b16 %v5231, %v5223
    %v5944 = vpack.c.b16 %v5232, %v5224
    %v5945 = vpack.c.b16 %v5233, %v5225
    %v5946 = vpack.c.b16 %v5234, %v5226
    %v5947 = vpack.c.b16 %v5235, %v5227
    %v5948 = vpack.c.b16 %v5244, %v5236
    %v5949 = vpack.c.b16 %v5245, %v5237
    %v5950 = vpack.c.b16 %v5246, %v5238
    %v5951 = vpack.c.b16 %v5247, %v5239
    %v5952 = vpack.c.b16 %v5248, %v5240
    %v5953 = vpack.c.b16 %v5249, %v5241
    %v5954 = vpack.c.b16 %v5250, %v5242
    %v5955 = vpack.c.b16 %v5251, %v5243
    %v5956 = vpack.c.b16 %v5260, %v5252
    %v5957 = vpack.c.b16 %v5261, %v5253
    %v5958 = vpack.c.b16 %v5262, %v5254
    %v5959 = vpack.c.b16 %v5263, %v5255
    %v5960 = vpack.c.b16 %v5264, %v5256
    %v5961 = vpack.c.b16 %v5265, %v5257
    %v5962 = vpack.c.b16 %v5266, %v5258
    %v5963 = vpack.c.b16 %v5267, %v5259
    %v5964 = vpack.c.b16 %v5276, %v5268
    %v5965 = vpack.c.b16 %v5277, %v5269
    %v5966 = vpack.c.b16 %v5278, %v5270
    %v5967 = vpack.c.b16 %v5279, %v5271
    %v5968 = vpack.c.b16 %v5280, %v5272
    %v5969 = vpack.c.b16 %v5281, %v5273
    %v5970 = vpack.c.b16 %v5282, %v5274
    %v5971 = vpack.c.b16 %v5283, %v5275
    %v5972 = vpack.c.b16 %v5292, %v5284
    %v5973 = vpack.c.b16 %v5293, %v5285
    %v5974 = vpack.c.b16 %v5294, %v5286
    %v5975 = vpack.c.b16 %v5295, %v5287
    %v5976 = vpack.c.b16 %v5296, %v5288
    %v5977 = vpack.c.b16 %v5297, %v5289
    %v5978 = vpack.c.b16 %v5298, %v5290
    %v5979 = vpack.c.b16 %v5299, %v5291
    %v5980 = vpack.c.b16 %v5308, %v5300
    %v5981 = vpack.c.b16 %v5309, %v5301
    %v5982 = vpack.c.b16 %v5310, %v5302
    %v5983 = vpack.c.b16 %v5311, %v5303
    %v5984 = vpack.c.b16 %v5312, %v5304
    %v5985 = vpack.c.b16 %v5313, %v5305
    %v5986 = vpack.c.b16 %v5314, %v5306
    %v5987 = vpack.c.b16 %v5315, %v5307
    %v5988 = vpack.c.b16 %v5324, %v5316
    %v5989 = vpack.c.b16 %v5325, %v5317
    %v5990 = vpack.c.b16 %v5326, %v5318
    %v5991 = vpack.c.b16 %v5327, %v5319
    %v5992 = vpack.c.b16 %v5328, %v5320
    %v5993 = vpack.c.b16 %v5329, %v5321
    %v5994 = vpack.c.b16 %v5330, %v5322
    %v5995 = vpack.c.b16 %v5331, %v5323
    %v5996 = vpack.c.b16 %v5340, %v5332
    %v5997 = vpack.c.b16 %v5341, %v5333
    %v5998 = vpack.c.b16 %v5342, %v5334
    %v5999 = vpack.c.b16 %v5343, %v5335
    %v6000 = vpack.c.b16 %v5344, %v5336
    %v6001 = vpack.c.b16 %v5345, %v5337
    %v6002 = vpack.c.b16 %v5346, %v5338
    %v6003 = vpack.c.b16 %v5347, %v5339
    %v6004 = vpack.c.b16 %v5356, %v5348
    %v6005 = vpack.c.b16 %v5357, %v5349
    %v6006 = vpack.c.b16 %v5358, %v5350
    %v6007 = vpack.c.b16 %v5359, %v5351
    %v6008 = vpack.c.b16 %v5360, %v5352
    %v6009 = vpack.c.b16 %v5361, %v5353
    %v6010 = vpack.c.b16 %v5362, %v5354
    %v6011 = vpack.c.b16 %v5363, %v5355
    %v6012 = vpack.c.b16 %v5372, %v5364
    %v6013 = vpack.c.b16 %v5373, %v5365
    %v6014 = vpack.c.b16 %v5374, %v5366
    %v6015 = vpack.c.b16 %v5375, %v5367
    %v6016 = vpack.c.b16 %v5376, %v5368
    %v6017 = vpack.c.b16 %v5377, %v5369
    %v6018 = vpack.c.b16 %v5378, %v5370
    %v6019 = vpack.c.b16 %v5379, %v5371
    %v6020 = vpack.c.b16 %v5388, %v5380
    %v6021 = vpack.c.b16 %v5389, %v5381
    %v6022 = vpack.c.b16 %v5390, %v5382
    %v6023 = vpack.c.b16 %v5391, %v5383
    %v6024 = vpack.c.b16 %v5392, %v5384
    %v6025 = vpack.c.b16 %v5393, %v5385
    %v6026 = vpack.c.b16 %v5394, %v5386
    %v6027 = vpack.c.b16 %v5395, %v5387
    %v6028 = vpack.c.b16 %v5404, %v5396
    %v6029 = vpack.c.b16 %v5405, %v5397
    %v6030 = vpack.c.b16 %v5406, %v5398
    %v6031 = vpack.c.b16 %v5407, %v5399
    %v6032 = vpack.c.b16 %v5408, %v5400
    %v6033 = vpack.c.b16 %v5409, %v5401
    %v6034 = vpack.c.b16 %v5410, %v5402
    %v6035 = vpack.c.b16 %v5411, %v5403
    %v6036 = vpack.c.b16 %v5420, %v5412
    %v6037 = vpack.c.b16 %v5421, %v5413
    %v6038 = vpack.c.b16 %v5422, %v5414
    %v6039 = vpack.c.b16 %v5423, %v5415
    %v6040 = vpack.c.b16 %v5424, %v5416
    %v6041 = vpack.c.b16 %v5425, %v5417
    %v6042 = vpack.c.b16 %v5426, %v5418
    %v6043 = vpack.c.b16 %v5427, %v5419
    %v6044 = vpack.c.b16 %v5436, %v5428
    %v6045 = vpack.c.b16 %v5437, %v5429
    %v6046 = vpack.c.b16 %v5438, %v5430
    %v6047 = vpack.c.b16 %v5439, %v5431
    %v6048 = vpack.c.b16 %v5440, %v5432
    %v6049 = vpack.c.b16 %v5441, %v5433
    %v6050 = vpack.c.b16 %v5442, %v5434
    %v6051 = vpack.c.b16 %v5443, %v5435
    %v6052 = vpack.c.b16 %v5452, %v5444
    %v6053 = vpack.c.b16 %v5453, %v5445
    %v6054 = vpack.c.b16 %v5454, %v5446
    %v6055 = vpack.c.b16 %v5455, %v5447
    %v6056 = vpack.c.b16 %v5456, %v5448
    %v6057 = vpack.c.b16 %v5457, %v5449
    %v6058 = vpack.c.b16 %v5458, %v5450
    %v6059 = vpack.c.b16 %v5459, %v5451
    %v6060 = vpack.c.b16 %v5468, %v5460
    %v6061 = vpack.c.b16 %v5469, %v5461
    %v6062 = vpack.c.b16 %v5470, %v5462
    %v6063 = vpack.c.b16 %v5471, %v5463
    %v6064 = vpack.c.b16 %v5472, %v5464
    %v6065 = vpack.c.b16 %v5473, %v5465
    %v6066 = vpack.c.b16 %v5474, %v5466
    %v6067 = vpack.c.b16 %v5475, %v5467
    %v6068 = vpack.c.b16 %v5484, %v5476
    %v6069 = vpack.c.b16 %v5485, %v5477
    %v6070 = vpack.c.b16 %v5486, %v5478
    %v6071 = vpack.c.b16 %v5487, %v5479
    %v6072 = vpack.c.b16 %v5488, %v5480
    %v6073 = vpack.c.b16 %v5489, %v5481
    %v6074 = vpack.c.b16 %v5490, %v5482
    %v6075 = vpack.c.b16 %v5491, %v5483
    %v6076 = vpack.c.b16 %v5500, %v5492
    %v6077 = vpack.c.b16 %v5501, %v5493
    %v6078 = vpack.c.b16 %v5502, %v5494
    %v6079 = vpack.c.b16 %v5503, %v5495
    %v6080 = vpack.c.b16 %v5504, %v5496
    %v6081 = vpack.c.b16 %v5505, %v5497
    %v6082 = vpack.c.b16 %v5506, %v5498
    %v6083 = vpack.c.b16 %v5507, %v5499
    %v6084 = vpack.c.b16 %v5516, %v5508
    %v6085 = vpack.c.b16 %v5517, %v5509
    %v6086 = vpack.c.b16 %v5518, %v5510
    %v6087 = vpack.c.b16 %v5519, %v5511
    %v6088 = vpack.c.b16 %v5520, %v5512
    %v6089 = vpack.c.b16 %v5521, %v5513
    %v6090 = vpack.c.b16 %v5522, %v5514
    %v6091 = vpack.c.b16 %v5523, %v5515
    %v6092 = vpack.c.b16 %v5532, %v5524
    %v6093 = vpack.c.b16 %v5533, %v5525
    %v6094 = vpack.c.b16 %v5534, %v5526
    %v6095 = vpack.c.b16 %v5535, %v5527
    %v6096 = vpack.c.b16 %v5536, %v5528
    %v6097 = vpack.c.b16 %v5537, %v5529
    %v6098 = vpack.c.b16 %v5538, %v5530
    %v6099 = vpack.c.b16 %v5539, %v5531
    %v6100 = vpack.c.b16 %v5548, %v5540
    %v6101 = vpack.c.b16 %v5549, %v5541
    %v6102 = vpack.c.b16 %v5550, %v5542
    %v6103 = vpack.c.b16 %v5551, %v5543
    %v6104 = vpack.c.b16 %v5552, %v5544
    %v6105 = vpack.c.b16 %v5553, %v5545
    %v6106 = vpack.c.b16 %v5554, %v5546
    %v6107 = vpack.c.b16 %v5555, %v5547
    %v6108 = vpack.c.b16 %v5564, %v5556
    %v6109 = vpack.c.b16 %v5565, %v5557
    %v6110 = vpack.c.b16 %v5566, %v5558
    %v6111 = vpack.c.b16 %v5567, %v5559
    %v6112 = vpack.c.b16 %v5568, %v5560
    %v6113 = vpack.c.b16 %v5569, %v5561
    %v6114 = vpack.c.b16 %v5570, %v5562
    %v6115 = vpack.c.b16 %v5571, %v5563
    %v6116 = vpack.c.b16 %v5580, %v5572
    %v6117 = vpack.c.b16 %v5581, %v5573
    %v6118 = vpack.c.b16 %v5582, %v5574
    %v6119 = vpack.c.b16 %v5583, %v5575
    %v6120 = vpack.c.b16 %v5584, %v5576
    %v6121 = vpack.c.b16 %v5585, %v5577
    %v6122 = vpack.c.b16 %v5586, %v5578
    %v6123 = vpack.c.b16 %v5587, %v5579
    %v6124 = vpack.c.b16 %v5596, %v5588
    %v6125 = vpack.c.b16 %v5597, %v5589
    %v6126 = vpack.c.b16 %v5598, %v5590
    %v6127 = vpack.c.b16 %v5599, %v5591
    %v6128 = vpack.c.b16 %v5600, %v5592
    %v6129 = vpack.c.b16 %v5601, %v5593
    %v6130 = vpack.c.b16 %v5602, %v5594
    %v6131 = vpack.c.b16 %v5603, %v5595
    %v6132 = vpack.c.b16 %v5612, %v5604
    %v6133 = vpack.c.b16 %v5613, %v5605
    %v6134 = vpack.c.b16 %v5614, %v5606
    %v6135 = vpack.c.b16 %v5615, %v5607
    %v6136 = vpack.c.b16 %v5616, %v5608
    %v6137 = vpack.c.b16 %v5617, %v5609
    %v6138 = vpack.c.b16 %v5618, %v5610
    %v6139 = vpack.c.b16 %v5619, %v5611
    %v6140 = vpack.c.b16 %v5628, %v5620
    %v6141 = vpack.c.b16 %v5629, %v5621
    %v6142 = vpack.c.b16 %v5630, %v5622
    %v6143 = vpack.c.b16 %v5631, %v5623
    %v6144 = vpack.c.b16 %v5632, %v5624
    %v6145 = vpack.c.b16 %v5633, %v5625
    %v6146 = vpack.c.b16 %v5634, %v5626
    %v6147 = vpack.c.b16 %v5635, %v5627
    %6660 = vmatprep.subr.bf16.mxu0 %v5693
    %6661 = vmatpush1.bf16.msra.mxu0 %v5692
    %6662 = vmatprep.subr.bf16.mxu0 %v5685
    %6663 = vmatpush1.bf16.msra.mxu0 %v5684
    %6664 = vmatprep.subr.bf16.mxu0 %v5677
    %6665 = vmatpush1.bf16.msra.mxu0 %v5676
    %6666 = vmatprep.subr.bf16.mxu0 %v5669
    %6667 = vmatpush1.bf16.msra.mxu0 %v5668
    %6668 = vmatprep.subr.bf16.mxu0 %v5661
    %6669 = vmatpush1.bf16.msra.mxu0 %v5660
    %6670 = vmatprep.subr.bf16.mxu0 %v5653
    %6671 = vmatpush1.bf16.msra.mxu0 %v5652
    %6672 = vmatprep.subr.bf16.mxu0 %v5645
    %6673 = vmatpush1.bf16.msra.mxu0 %v5644
    %6674 = vmatprep.subr.bf16.mxu0 %v5637
    %6675 = vmatpush1.bf16.msra.mxu0 %v5636
    %6676 = vmatprep.subr.bf16.mxu0 %v5757
    %6677 = vmatpush2.bf16.msra.mxu0 %v5756
    %6678 = vmatprep.subr.bf16.mxu0 %v5749
    %6679 = vmatpush2.bf16.msra.mxu0 %v5748
    %6680 = vmatprep.subr.bf16.mxu0 %v5741
    %6681 = vmatpush2.bf16.msra.mxu0 %v5740
    %6682 = vmatprep.subr.bf16.mxu0 %v5733
    %6683 = vmatpush2.bf16.msra.mxu0 %v5732
    %6684 = vmatprep.subr.bf16.mxu0 %v5725
    %6685 = vmatpush2.bf16.msra.mxu0 %v5724
    %6686 = vmatprep.subr.bf16.mxu0 %v5717
    %6687 = vmatpush2.bf16.msra.mxu0 %v5716
    %6688 = vmatprep.subr.bf16.mxu0 %v5709
    %6689 = vmatpush2.bf16.msra.mxu0 %v5708
    %6690 = vmatprep.subr.bf16.mxu0 %v5701
    %6691 = vmatpush2.bf16.msra.mxu0 %v5700
    %6692 = vmatprep.mubr.bf16.mxu0 %v3539
    %6693 = vmatmul.mubr.bf16.gmra.mxu0 %v3538
    %v6694 = vpop.f32.mrf.mxu0
    %v6695 = vadd.f32 %v4063, %v6694
    %v6696 = vpop.f32.mrf.mxu0
    %v6697 = vadd.f32 %v4067, %v6696
    %v6698 = vpop.f32.mrf.mxu0
    %v6699 = vpop.f32.mrf.mxu0
    %6700 = vdwg.mxu0
    %6701 = vmatprep.subr.bf16.mxu0 %v5821
    %6702 = vmatpush1.bf16.msra.mxu0 %v5820
    %6703 = vmatprep.subr.bf16.mxu0 %v5813
    %6704 = vmatpush1.bf16.msra.mxu0 %v5812
    %6705 = vmatprep.subr.bf16.mxu0 %v5805
    %6706 = vmatpush1.bf16.msra.mxu0 %v5804
    %6707 = vmatprep.subr.bf16.mxu0 %v5797
    %6708 = vmatpush1.bf16.msra.mxu0 %v5796
    %6709 = vmatprep.subr.bf16.mxu0 %v5789
    %6710 = vmatpush1.bf16.msra.mxu0 %v5788
    %6711 = vmatprep.subr.bf16.mxu0 %v5781
    %6712 = vmatpush1.bf16.msra.mxu0 %v5780
    %6713 = vmatprep.subr.bf16.mxu0 %v5773
    %6714 = vmatpush1.bf16.msra.mxu0 %v5772
    %6715 = vmatprep.subr.bf16.mxu0 %v5765
    %6716 = vmatpush1.bf16.msra.mxu0 %v5764
    %6717 = vmatprep.subr.bf16.mxu0 %v5885
    %6718 = vmatpush2.bf16.msra.mxu0 %v5884
    %6719 = vmatprep.subr.bf16.mxu0 %v5877
    %6720 = vmatpush2.bf16.msra.mxu0 %v5876
    %6721 = vmatprep.subr.bf16.mxu0 %v5869
    %6722 = vmatpush2.bf16.msra.mxu0 %v5868
    %6723 = vmatprep.subr.bf16.mxu0 %v5861
    %6724 = vmatpush2.bf16.msra.mxu0 %v5860
    %6725 = vmatprep.subr.bf16.mxu0 %v5853
    %6726 = vmatpush2.bf16.msra.mxu0 %v5852
    %6727 = vmatprep.subr.bf16.mxu0 %v5845
    %6728 = vmatpush2.bf16.msra.mxu0 %v5844
    %6729 = vmatprep.subr.bf16.mxu0 %v5837
    %6730 = vmatpush2.bf16.msra.mxu0 %v5836
    %6731 = vmatprep.subr.bf16.mxu0 %v5829
    %6732 = vmatpush2.bf16.msra.mxu0 %v5828
    %6733 = vmatprep.mubr.bf16.mxu0 %v3541
    %6734 = vmatmul.mubr.bf16.gmra.mxu0 %v3540
    %v6735 = vpop.f32.mrf.mxu0
    %v6736 = vadd.f32 %v6695, %v6735
    %v6737 = vpop.f32.mrf.mxu0
    %v6738 = vadd.f32 %v6697, %v6737
    %v6739 = vpop.f32.mrf.mxu0
    %v6740 = vpop.f32.mrf.mxu0
    %6741 = vdwg.mxu0
    %6742 = vmatprep.subr.bf16.mxu0 %v5949
    %6743 = vmatpush1.bf16.msra.mxu0 %v5948
    %6744 = vmatprep.subr.bf16.mxu0 %v5941
    %6745 = vmatpush1.bf16.msra.mxu0 %v5940
    %6746 = vmatprep.subr.bf16.mxu0 %v5933
    %6747 = vmatpush1.bf16.msra.mxu0 %v5932
    %6748 = vmatprep.subr.bf16.mxu0 %v5925
    %6749 = vmatpush1.bf16.msra.mxu0 %v5924
    %6750 = vmatprep.subr.bf16.mxu0 %v5917
    %6751 = vmatpush1.bf16.msra.mxu0 %v5916
    %6752 = vmatprep.subr.bf16.mxu0 %v5909
    %6753 = vmatpush1.bf16.msra.mxu0 %v5908
    %6754 = vmatprep.subr.bf16.mxu0 %v5901
    %6755 = vmatpush1.bf16.msra.mxu0 %v5900
    %6756 = vmatprep.subr.bf16.mxu0 %v5893
    %6757 = vmatpush1.bf16.msra.mxu0 %v5892
    %6758 = vmatprep.subr.bf16.mxu0 %v6013
    %6759 = vmatpush2.bf16.msra.mxu0 %v6012
    %6760 = vmatprep.subr.bf16.mxu0 %v6005
    %6761 = vmatpush2.bf16.msra.mxu0 %v6004
    %6762 = vmatprep.subr.bf16.mxu0 %v5997
    %6763 = vmatpush2.bf16.msra.mxu0 %v5996
    %6764 = vmatprep.subr.bf16.mxu0 %v5989
    %6765 = vmatpush2.bf16.msra.mxu0 %v5988
    %6766 = vmatprep.subr.bf16.mxu0 %v5981
    %6767 = vmatpush2.bf16.msra.mxu0 %v5980
    %6768 = vmatprep.subr.bf16.mxu0 %v5973
    %6769 = vmatpush2.bf16.msra.mxu0 %v5972
    %6770 = vmatprep.subr.bf16.mxu0 %v5965
    %6771 = vmatpush2.bf16.msra.mxu0 %v5964
    %6772 = vmatprep.subr.bf16.mxu0 %v5957
    %6773 = vmatpush2.bf16.msra.mxu0 %v5956
    %6774 = vmatprep.mubr.bf16.mxu0 %v3543
    %6775 = vmatmul.mubr.bf16.gmra.mxu0 %v3542
    %v6776 = vpop.f32.mrf.mxu0
    %v6777 = vadd.f32 %v6736, %v6776
    %v6778 = vpop.f32.mrf.mxu0
    %v6779 = vadd.f32 %v6738, %v6778
    %v6780 = vpop.f32.mrf.mxu0
    %v6781 = vpop.f32.mrf.mxu0
    %6782 = vdwg.mxu0
    %6783 = vmatprep.subr.bf16.mxu0 %v6077
    %6784 = vmatpush1.bf16.msra.mxu0 %v6076
    %6785 = vmatprep.subr.bf16.mxu0 %v6069
    %6786 = vmatpush1.bf16.msra.mxu0 %v6068
    %6787 = vmatprep.subr.bf16.mxu0 %v6061
    %6788 = vmatpush1.bf16.msra.mxu0 %v6060
    %6789 = vmatprep.subr.bf16.mxu0 %v6053
    %6790 = vmatpush1.bf16.msra.mxu0 %v6052
    %6791 = vmatprep.subr.bf16.mxu0 %v6045
    %6792 = vmatpush1.bf16.msra.mxu0 %v6044
    %6793 = vmatprep.subr.bf16.mxu0 %v6037
    %6794 = vmatpush1.bf16.msra.mxu0 %v6036
    %6795 = vmatprep.subr.bf16.mxu0 %v6029
    %6796 = vmatpush1.bf16.msra.mxu0 %v6028
    %6797 = vmatprep.subr.bf16.mxu0 %v6021
    %6798 = vmatpush1.bf16.msra.mxu0 %v6020
    %6799 = vmatprep.subr.bf16.mxu0 %v6141
    %6800 = vmatpush2.bf16.msra.mxu0 %v6140
    %6801 = vmatprep.subr.bf16.mxu0 %v6133
    %6802 = vmatpush2.bf16.msra.mxu0 %v6132
    %6803 = vmatprep.subr.bf16.mxu0 %v6125
    %6804 = vmatpush2.bf16.msra.mxu0 %v6124
    %6805 = vmatprep.subr.bf16.mxu0 %v6117
    %6806 = vmatpush2.bf16.msra.mxu0 %v6116
    %6807 = vmatprep.subr.bf16.mxu0 %v6109
    %6808 = vmatpush2.bf16.msra.mxu0 %v6108
    %6809 = vmatprep.subr.bf16.mxu0 %v6101
    %6810 = vmatpush2.bf16.msra.mxu0 %v6100
    %6811 = vmatprep.subr.bf16.mxu0 %v6093
    %6812 = vmatpush2.bf16.msra.mxu0 %v6092
    %6813 = vmatprep.subr.bf16.mxu0 %v6085
    %6814 = vmatpush2.bf16.msra.mxu0 %v6084
    %6815 = vmatprep.mubr.bf16.mxu0 %v3545
    %6816 = vmatmul.mubr.bf16.gmra.mxu0 %v3544
    %v6817 = vpop.f32.mrf.mxu0
    %v6818 = vadd.f32 %v6777, %v6817
    %v6819 = vpop.f32.mrf.mxu0
    %v6820 = vadd.f32 %v6779, %v6819
    %v6821 = vpop.f32.mrf.mxu0
    %v6822 = vpop.f32.mrf.mxu0
    %6823 = vdwg.mxu0
    %6824 = vmatprep.subr.bf16.mxu0 %v5695
    %6825 = vmatpush1.bf16.msra.mxu0 %v5694
    %6826 = vmatprep.subr.bf16.mxu0 %v5687
    %6827 = vmatpush1.bf16.msra.mxu0 %v5686
    %6828 = vmatprep.subr.bf16.mxu0 %v5679
    %6829 = vmatpush1.bf16.msra.mxu0 %v5678
    %6830 = vmatprep.subr.bf16.mxu0 %v5671
    %6831 = vmatpush1.bf16.msra.mxu0 %v5670
    %6832 = vmatprep.subr.bf16.mxu0 %v5663
    %6833 = vmatpush1.bf16.msra.mxu0 %v5662
    %6834 = vmatprep.subr.bf16.mxu0 %v5655
    %6835 = vmatpush1.bf16.msra.mxu0 %v5654
    %6836 = vmatprep.subr.bf16.mxu0 %v5647
    %6837 = vmatpush1.bf16.msra.mxu0 %v5646
    %6838 = vmatprep.subr.bf16.mxu0 %v5639
    %6839 = vmatpush1.bf16.msra.mxu0 %v5638
    %6840 = vmatprep.subr.bf16.mxu0 %v5759
    %6841 = vmatpush2.bf16.msra.mxu0 %v5758
    %6842 = vmatprep.subr.bf16.mxu0 %v5751
    %6843 = vmatpush2.bf16.msra.mxu0 %v5750
    %6844 = vmatprep.subr.bf16.mxu0 %v5743
    %6845 = vmatpush2.bf16.msra.mxu0 %v5742
    %6846 = vmatprep.subr.bf16.mxu0 %v5735
    %6847 = vmatpush2.bf16.msra.mxu0 %v5734
    %6848 = vmatprep.subr.bf16.mxu0 %v5727
    %6849 = vmatpush2.bf16.msra.mxu0 %v5726
    %6850 = vmatprep.subr.bf16.mxu0 %v5719
    %6851 = vmatpush2.bf16.msra.mxu0 %v5718
    %6852 = vmatprep.subr.bf16.mxu0 %v5711
    %6853 = vmatpush2.bf16.msra.mxu0 %v5710
    %6854 = vmatprep.subr.bf16.mxu0 %v5703
    %6855 = vmatpush2.bf16.msra.mxu0 %v5702
    %6856 = vmatprep.mubr.bf16.mxu0 %v3539
    %6857 = vmatmul.mubr.bf16.gmra.mxu0 %v3538
    %v6858 = vpop.f32.mrf.mxu0
    %v6859 = vadd.f32 %v4071, %v6858
    %v6860 = vpop.f32.mrf.mxu0
    %v6861 = vadd.f32 %v4075, %v6860
    %v6862 = vpop.f32.mrf.mxu0
    %v6863 = vpop.f32.mrf.mxu0
    %6864 = vdwg.mxu0
    %6865 = vmatprep.subr.bf16.mxu0 %v5823
    %6866 = vmatpush1.bf16.msra.mxu0 %v5822
    %6867 = vmatprep.subr.bf16.mxu0 %v5815
    %6868 = vmatpush1.bf16.msra.mxu0 %v5814
    %6869 = vmatprep.subr.bf16.mxu0 %v5807
    %6870 = vmatpush1.bf16.msra.mxu0 %v5806
    %6871 = vmatprep.subr.bf16.mxu0 %v5799
    %6872 = vmatpush1.bf16.msra.mxu0 %v5798
    %6873 = vmatprep.subr.bf16.mxu0 %v5791
    %6874 = vmatpush1.bf16.msra.mxu0 %v5790
    %6875 = vmatprep.subr.bf16.mxu0 %v5783
    %6876 = vmatpush1.bf16.msra.mxu0 %v5782
    %6877 = vmatprep.subr.bf16.mxu0 %v5775
    %6878 = vmatpush1.bf16.msra.mxu0 %v5774
    %6879 = vmatprep.subr.bf16.mxu0 %v5767
    %6880 = vmatpush1.bf16.msra.mxu0 %v5766
    %6881 = vmatprep.subr.bf16.mxu0 %v5887
    %6882 = vmatpush2.bf16.msra.mxu0 %v5886
    %6883 = vmatprep.subr.bf16.mxu0 %v5879
    %6884 = vmatpush2.bf16.msra.mxu0 %v5878
    %6885 = vmatprep.subr.bf16.mxu0 %v5871
    %6886 = vmatpush2.bf16.msra.mxu0 %v5870
    %6887 = vmatprep.subr.bf16.mxu0 %v5863
    %6888 = vmatpush2.bf16.msra.mxu0 %v5862
    %6889 = vmatprep.subr.bf16.mxu0 %v5855
    %6890 = vmatpush2.bf16.msra.mxu0 %v5854
    %6891 = vmatprep.subr.bf16.mxu0 %v5847
    %6892 = vmatpush2.bf16.msra.mxu0 %v5846
    %6893 = vmatprep.subr.bf16.mxu0 %v5839
    %6894 = vmatpush2.bf16.msra.mxu0 %v5838
    %6895 = vmatprep.subr.bf16.mxu0 %v5831
    %6896 = vmatpush2.bf16.msra.mxu0 %v5830
    %6897 = vmatprep.mubr.bf16.mxu0 %v3541
    %6898 = vmatmul.mubr.bf16.gmra.mxu0 %v3540
    %v6899 = vpop.f32.mrf.mxu0
    %v6900 = vadd.f32 %v6859, %v6899
    %v6901 = vpop.f32.mrf.mxu0
    %v6902 = vadd.f32 %v6861, %v6901
    %v6903 = vpop.f32.mrf.mxu0
    %v6904 = vpop.f32.mrf.mxu0
    %6905 = vdwg.mxu0
    %6906 = vmatprep.subr.bf16.mxu0 %v5951
    %6907 = vmatpush1.bf16.msra.mxu0 %v5950
    %6908 = vmatprep.subr.bf16.mxu0 %v5943
    %6909 = vmatpush1.bf16.msra.mxu0 %v5942
    %6910 = vmatprep.subr.bf16.mxu0 %v5935
    %6911 = vmatpush1.bf16.msra.mxu0 %v5934
    %6912 = vmatprep.subr.bf16.mxu0 %v5927
    %6913 = vmatpush1.bf16.msra.mxu0 %v5926
    %6914 = vmatprep.subr.bf16.mxu0 %v5919
    %6915 = vmatpush1.bf16.msra.mxu0 %v5918
    %6916 = vmatprep.subr.bf16.mxu0 %v5911
    %6917 = vmatpush1.bf16.msra.mxu0 %v5910
    %6918 = vmatprep.subr.bf16.mxu0 %v5903
    %6919 = vmatpush1.bf16.msra.mxu0 %v5902
    %6920 = vmatprep.subr.bf16.mxu0 %v5895
    %6921 = vmatpush1.bf16.msra.mxu0 %v5894
    %6922 = vmatprep.subr.bf16.mxu0 %v6015
    %6923 = vmatpush2.bf16.msra.mxu0 %v6014
    %6924 = vmatprep.subr.bf16.mxu0 %v6007
    %6925 = vmatpush2.bf16.msra.mxu0 %v6006
    %6926 = vmatprep.subr.bf16.mxu0 %v5999
    %6927 = vmatpush2.bf16.msra.mxu0 %v5998
    %6928 = vmatprep.subr.bf16.mxu0 %v5991
    %6929 = vmatpush2.bf16.msra.mxu0 %v5990
    %6930 = vmatprep.subr.bf16.mxu0 %v5983
    %6931 = vmatpush2.bf16.msra.mxu0 %v5982
    %6932 = vmatprep.subr.bf16.mxu0 %v5975
    %6933 = vmatpush2.bf16.msra.mxu0 %v5974
    %6934 = vmatprep.subr.bf16.mxu0 %v5967
    %6935 = vmatpush2.bf16.msra.mxu0 %v5966
    %6936 = vmatprep.subr.bf16.mxu0 %v5959
    %6937 = vmatpush2.bf16.msra.mxu0 %v5958
    %6938 = vmatprep.mubr.bf16.mxu0 %v3543
    %6939 = vmatmul.mubr.bf16.gmra.mxu0 %v3542
    %v6940 = vpop.f32.mrf.mxu0
    %v6941 = vadd.f32 %v6900, %v6940
    %v6942 = vpop.f32.mrf.mxu0
    %v6943 = vadd.f32 %v6902, %v6942
    %v6944 = vpop.f32.mrf.mxu0
    %v6945 = vpop.f32.mrf.mxu0
    %6946 = vdwg.mxu0
    %6947 = vmatprep.subr.bf16.mxu0 %v6079
    %6948 = vmatpush1.bf16.msra.mxu0 %v6078
    %6949 = vmatprep.subr.bf16.mxu0 %v6071
    %6950 = vmatpush1.bf16.msra.mxu0 %v6070
    %6951 = vmatprep.subr.bf16.mxu0 %v6063
    %6952 = vmatpush1.bf16.msra.mxu0 %v6062
    %6953 = vmatprep.subr.bf16.mxu0 %v6055
    %6954 = vmatpush1.bf16.msra.mxu0 %v6054
    %6955 = vmatprep.subr.bf16.mxu0 %v6047
    %6956 = vmatpush1.bf16.msra.mxu0 %v6046
    %6957 = vmatprep.subr.bf16.mxu0 %v6039
    %6958 = vmatpush1.bf16.msra.mxu0 %v6038
    %6959 = vmatprep.subr.bf16.mxu0 %v6031
    %6960 = vmatpush1.bf16.msra.mxu0 %v6030
    %6961 = vmatprep.subr.bf16.mxu0 %v6023
    %6962 = vmatpush1.bf16.msra.mxu0 %v6022
    %6963 = vmatprep.subr.bf16.mxu0 %v6143
    %6964 = vmatpush2.bf16.msra.mxu0 %v6142
    %6965 = vmatprep.subr.bf16.mxu0 %v6135
    %6966 = vmatpush2.bf16.msra.mxu0 %v6134
    %6967 = vmatprep.subr.bf16.mxu0 %v6127
    %6968 = vmatpush2.bf16.msra.mxu0 %v6126
    %6969 = vmatprep.subr.bf16.mxu0 %v6119
    %6970 = vmatpush2.bf16.msra.mxu0 %v6118
    %6971 = vmatprep.subr.bf16.mxu0 %v6111
    %6972 = vmatpush2.bf16.msra.mxu0 %v6110
    %6973 = vmatprep.subr.bf16.mxu0 %v6103
    %6974 = vmatpush2.bf16.msra.mxu0 %v6102
    %6975 = vmatprep.subr.bf16.mxu0 %v6095
    %6976 = vmatpush2.bf16.msra.mxu0 %v6094
    %6977 = vmatprep.subr.bf16.mxu0 %v6087
    %6978 = vmatpush2.bf16.msra.mxu0 %v6086
    %6979 = vmatprep.mubr.bf16.mxu0 %v3545
    %6980 = vmatmul.mubr.bf16.gmra.mxu0 %v3544
    %v6981 = vpop.f32.mrf.mxu0
    %v6982 = vadd.f32 %v6941, %v6981
    %v6983 = vpop.f32.mrf.mxu0
    %v6984 = vadd.f32 %v6943, %v6983
    %v6985 = vpop.f32.mrf.mxu0
    %v6986 = vpop.f32.mrf.mxu0
    %6987 = vdwg.mxu0
    %6988 = vmatprep.subr.bf16.mxu0 %v5697
    %6989 = vmatpush1.bf16.msra.mxu0 %v5696
    %6990 = vmatprep.subr.bf16.mxu0 %v5689
    %6991 = vmatpush1.bf16.msra.mxu0 %v5688
    %6992 = vmatprep.subr.bf16.mxu0 %v5681
    %6993 = vmatpush1.bf16.msra.mxu0 %v5680
    %6994 = vmatprep.subr.bf16.mxu0 %v5673
    %6995 = vmatpush1.bf16.msra.mxu0 %v5672
    %6996 = vmatprep.subr.bf16.mxu0 %v5665
    %6997 = vmatpush1.bf16.msra.mxu0 %v5664
    %6998 = vmatprep.subr.bf16.mxu0 %v5657
    %6999 = vmatpush1.bf16.msra.mxu0 %v5656
    %7000 = vmatprep.subr.bf16.mxu0 %v5649
    %7001 = vmatpush1.bf16.msra.mxu0 %v5648
    %7002 = vmatprep.subr.bf16.mxu0 %v5641
    %7003 = vmatpush1.bf16.msra.mxu0 %v5640
    %7004 = vmatprep.subr.bf16.mxu0 %v5761
    %7005 = vmatpush2.bf16.msra.mxu0 %v5760
    %7006 = vmatprep.subr.bf16.mxu0 %v5753
    %7007 = vmatpush2.bf16.msra.mxu0 %v5752
    %7008 = vmatprep.subr.bf16.mxu0 %v5745
    %7009 = vmatpush2.bf16.msra.mxu0 %v5744
    %7010 = vmatprep.subr.bf16.mxu0 %v5737
    %7011 = vmatpush2.bf16.msra.mxu0 %v5736
    %7012 = vmatprep.subr.bf16.mxu0 %v5729
    %7013 = vmatpush2.bf16.msra.mxu0 %v5728
    %7014 = vmatprep.subr.bf16.mxu0 %v5721
    %7015 = vmatpush2.bf16.msra.mxu0 %v5720
    %7016 = vmatprep.subr.bf16.mxu0 %v5713
    %7017 = vmatpush2.bf16.msra.mxu0 %v5712
    %7018 = vmatprep.subr.bf16.mxu0 %v5705
    %7019 = vmatpush2.bf16.msra.mxu0 %v5704
    %7020 = vmatprep.mubr.bf16.mxu0 %v3539
    %7021 = vmatmul.mubr.bf16.gmra.mxu0 %v3538
    %v7022 = vpop.f32.mrf.mxu0
    %v7023 = vadd.f32 %v4079, %v7022
    %v7024 = vpop.f32.mrf.mxu0
    %v7025 = vadd.f32 %v4083, %v7024
    %v7026 = vpop.f32.mrf.mxu0
    %v7027 = vpop.f32.mrf.mxu0
    %7028 = vdwg.mxu0
    %7029 = vmatprep.subr.bf16.mxu0 %v5825
    %7030 = vmatpush1.bf16.msra.mxu0 %v5824
    %7031 = vmatprep.subr.bf16.mxu0 %v5817
    %7032 = vmatpush1.bf16.msra.mxu0 %v5816
    %7033 = vmatprep.subr.bf16.mxu0 %v5809
    %7034 = vmatpush1.bf16.msra.mxu0 %v5808
    %7035 = vmatprep.subr.bf16.mxu0 %v5801
    %7036 = vmatpush1.bf16.msra.mxu0 %v5800
    %7037 = vmatprep.subr.bf16.mxu0 %v5793
    %7038 = vmatpush1.bf16.msra.mxu0 %v5792
    %7039 = vmatprep.subr.bf16.mxu0 %v5785
    %7040 = vmatpush1.bf16.msra.mxu0 %v5784
    %7041 = vmatprep.subr.bf16.mxu0 %v5777
    %7042 = vmatpush1.bf16.msra.mxu0 %v5776
    %7043 = vmatprep.subr.bf16.mxu0 %v5769
    %7044 = vmatpush1.bf16.msra.mxu0 %v5768
    %7045 = vmatprep.subr.bf16.mxu0 %v5889
    %7046 = vmatpush2.bf16.msra.mxu0 %v5888
    %7047 = vmatprep.subr.bf16.mxu0 %v5881
    %7048 = vmatpush2.bf16.msra.mxu0 %v5880
    %7049 = vmatprep.subr.bf16.mxu0 %v5873
    %7050 = vmatpush2.bf16.msra.mxu0 %v5872
    %7051 = vmatprep.subr.bf16.mxu0 %v5865
    %7052 = vmatpush2.bf16.msra.mxu0 %v5864
    %7053 = vmatprep.subr.bf16.mxu0 %v5857
    %7054 = vmatpush2.bf16.msra.mxu0 %v5856
    %7055 = vmatprep.subr.bf16.mxu0 %v5849
    %7056 = vmatpush2.bf16.msra.mxu0 %v5848
    %7057 = vmatprep.subr.bf16.mxu0 %v5841
    %7058 = vmatpush2.bf16.msra.mxu0 %v5840
    %7059 = vmatprep.subr.bf16.mxu0 %v5833
    %7060 = vmatpush2.bf16.msra.mxu0 %v5832
    %7061 = vmatprep.mubr.bf16.mxu0 %v3541
    %7062 = vmatmul.mubr.bf16.gmra.mxu0 %v3540
    %v7063 = vpop.f32.mrf.mxu0
    %v7064 = vadd.f32 %v7023, %v7063
    %v7065 = vpop.f32.mrf.mxu0
    %v7066 = vadd.f32 %v7025, %v7065
    %v7067 = vpop.f32.mrf.mxu0
    %v7068 = vpop.f32.mrf.mxu0
    %7069 = vdwg.mxu0
    %7070 = vmatprep.subr.bf16.mxu0 %v5953
    %7071 = vmatpush1.bf16.msra.mxu0 %v5952
    %7072 = vmatprep.subr.bf16.mxu0 %v5945
    %7073 = vmatpush1.bf16.msra.mxu0 %v5944
    %7074 = vmatprep.subr.bf16.mxu0 %v5937
    %7075 = vmatpush1.bf16.msra.mxu0 %v5936
    %7076 = vmatprep.subr.bf16.mxu0 %v5929
    %7077 = vmatpush1.bf16.msra.mxu0 %v5928
    %7078 = vmatprep.subr.bf16.mxu0 %v5921
    %7079 = vmatpush1.bf16.msra.mxu0 %v5920
    %7080 = vmatprep.subr.bf16.mxu0 %v5913
    %7081 = vmatpush1.bf16.msra.mxu0 %v5912
    %7082 = vmatprep.subr.bf16.mxu0 %v5905
    %7083 = vmatpush1.bf16.msra.mxu0 %v5904
    %7084 = vmatprep.subr.bf16.mxu0 %v5897
    %7085 = vmatpush1.bf16.msra.mxu0 %v5896
    %7086 = vmatprep.subr.bf16.mxu0 %v6017
    %7087 = vmatpush2.bf16.msra.mxu0 %v6016
    %7088 = vmatprep.subr.bf16.mxu0 %v6009
    %7089 = vmatpush2.bf16.msra.mxu0 %v6008
    %7090 = vmatprep.subr.bf16.mxu0 %v6001
    %7091 = vmatpush2.bf16.msra.mxu0 %v6000
    %7092 = vmatprep.subr.bf16.mxu0 %v5993
    %7093 = vmatpush2.bf16.msra.mxu0 %v5992
    %7094 = vmatprep.subr.bf16.mxu0 %v5985
    %7095 = vmatpush2.bf16.msra.mxu0 %v5984
    %7096 = vmatprep.subr.bf16.mxu0 %v5977
    %7097 = vmatpush2.bf16.msra.mxu0 %v5976
    %7098 = vmatprep.subr.bf16.mxu0 %v5969
    %7099 = vmatpush2.bf16.msra.mxu0 %v5968
    %7100 = vmatprep.subr.bf16.mxu0 %v5961
    %7101 = vmatpush2.bf16.msra.mxu0 %v5960
    %7102 = vmatprep.mubr.bf16.mxu0 %v3543
    %7103 = vmatmul.mubr.bf16.gmra.mxu0 %v3542
    %v7104 = vpop.f32.mrf.mxu0
    %v7105 = vadd.f32 %v7064, %v7104
    %v7106 = vpop.f32.mrf.mxu0
    %v7107 = vadd.f32 %v7066, %v7106
    %v7108 = vpop.f32.mrf.mxu0
    %v7109 = vpop.f32.mrf.mxu0
    %7110 = vdwg.mxu0
    %7111 = vmatprep.subr.bf16.mxu0 %v6081
    %7112 = vmatpush1.bf16.msra.mxu0 %v6080
    %7113 = vmatprep.subr.bf16.mxu0 %v6073
    %7114 = vmatpush1.bf16.msra.mxu0 %v6072
    %7115 = vmatprep.subr.bf16.mxu0 %v6065
    %7116 = vmatpush1.bf16.msra.mxu0 %v6064
    %7117 = vmatprep.subr.bf16.mxu0 %v6057
    %7118 = vmatpush1.bf16.msra.mxu0 %v6056
    %7119 = vmatprep.subr.bf16.mxu0 %v6049
    %7120 = vmatpush1.bf16.msra.mxu0 %v6048
    %7121 = vmatprep.subr.bf16.mxu0 %v6041
    %7122 = vmatpush1.bf16.msra.mxu0 %v6040
    %7123 = vmatprep.subr.bf16.mxu0 %v6033
    %7124 = vmatpush1.bf16.msra.mxu0 %v6032
    %7125 = vmatprep.subr.bf16.mxu0 %v6025
    %7126 = vmatpush1.bf16.msra.mxu0 %v6024
    %7127 = vmatprep.subr.bf16.mxu0 %v6145
    %7128 = vmatpush2.bf16.msra.mxu0 %v6144
    %7129 = vmatprep.subr.bf16.mxu0 %v6137
    %7130 = vmatpush2.bf16.msra.mxu0 %v6136
    %7131 = vmatprep.subr.bf16.mxu0 %v6129
    %7132 = vmatpush2.bf16.msra.mxu0 %v6128
    %7133 = vmatprep.subr.bf16.mxu0 %v6121
    %7134 = vmatpush2.bf16.msra.mxu0 %v6120
    %7135 = vmatprep.subr.bf16.mxu0 %v6113
    %7136 = vmatpush2.bf16.msra.mxu0 %v6112
    %7137 = vmatprep.subr.bf16.mxu0 %v6105
    %7138 = vmatpush2.bf16.msra.mxu0 %v6104
    %7139 = vmatprep.subr.bf16.mxu0 %v6097
    %7140 = vmatpush2.bf16.msra.mxu0 %v6096
    %7141 = vmatprep.subr.bf16.mxu0 %v6089
    %7142 = vmatpush2.bf16.msra.mxu0 %v6088
    %7143 = vmatprep.mubr.bf16.mxu0 %v3545
    %7144 = vmatmul.mubr.bf16.gmra.mxu0 %v3544
    %v7145 = vpop.f32.mrf.mxu0
    %v7146 = vadd.f32 %v7105, %v7145
    %v7147 = vpop.f32.mrf.mxu0
    %v7148 = vadd.f32 %v7107, %v7147
    %v7149 = vpop.f32.mrf.mxu0
    %v7150 = vpop.f32.mrf.mxu0
    %7151 = vdwg.mxu0
    %7152 = vmatprep.subr.bf16.mxu0 %v5699
    %7153 = vmatpush1.bf16.msra.mxu0 %v5698
    %7154 = vmatprep.subr.bf16.mxu0 %v5691
    %7155 = vmatpush1.bf16.msra.mxu0 %v5690
    %7156 = vmatprep.subr.bf16.mxu0 %v5683
    %7157 = vmatpush1.bf16.msra.mxu0 %v5682
    %7158 = vmatprep.subr.bf16.mxu0 %v5675
    %7159 = vmatpush1.bf16.msra.mxu0 %v5674
    %7160 = vmatprep.subr.bf16.mxu0 %v5667
    %7161 = vmatpush1.bf16.msra.mxu0 %v5666
    %7162 = vmatprep.subr.bf16.mxu0 %v5659
    %7163 = vmatpush1.bf16.msra.mxu0 %v5658
    %7164 = vmatprep.subr.bf16.mxu0 %v5651
    %7165 = vmatpush1.bf16.msra.mxu0 %v5650
    %7166 = vmatprep.subr.bf16.mxu0 %v5643
    %7167 = vmatpush1.bf16.msra.mxu0 %v5642
    %7168 = vmatprep.subr.bf16.mxu0 %v5763
    %7169 = vmatpush2.bf16.msra.mxu0 %v5762
    %7170 = vmatprep.subr.bf16.mxu0 %v5755
    %7171 = vmatpush2.bf16.msra.mxu0 %v5754
    %7172 = vmatprep.subr.bf16.mxu0 %v5747
    %7173 = vmatpush2.bf16.msra.mxu0 %v5746
    %7174 = vmatprep.subr.bf16.mxu0 %v5739
    %7175 = vmatpush2.bf16.msra.mxu0 %v5738
    %7176 = vmatprep.subr.bf16.mxu0 %v5731
    %7177 = vmatpush2.bf16.msra.mxu0 %v5730
    %7178 = vmatprep.subr.bf16.mxu0 %v5723
    %7179 = vmatpush2.bf16.msra.mxu0 %v5722
    %7180 = vmatprep.subr.bf16.mxu0 %v5715
    %7181 = vmatpush2.bf16.msra.mxu0 %v5714
    %7182 = vmatprep.subr.bf16.mxu0 %v5707
    %7183 = vmatpush2.bf16.msra.mxu0 %v5706
    %7184 = vmatprep.mubr.bf16.mxu0 %v3539
    %7185 = vmatmul.mubr.bf16.gmra.mxu0 %v3538
    %v7186 = vpop.f32.mrf.mxu0
    %v7187 = vadd.f32 %v4087, %v7186
    %v7188 = vpop.f32.mrf.mxu0
    %v7189 = vadd.f32 %v4091, %v7188
    %v7190 = vpop.f32.mrf.mxu0
    %v7191 = vpop.f32.mrf.mxu0
    %7192 = vdwg.mxu0
    %7193 = vmatprep.subr.bf16.mxu0 %v5827
    %7194 = vmatpush1.bf16.msra.mxu0 %v5826
    %7195 = vmatprep.subr.bf16.mxu0 %v5819
    %7196 = vmatpush1.bf16.msra.mxu0 %v5818
    %7197 = vmatprep.subr.bf16.mxu0 %v5811
    %7198 = vmatpush1.bf16.msra.mxu0 %v5810
    %7199 = vmatprep.subr.bf16.mxu0 %v5803
    %7200 = vmatpush1.bf16.msra.mxu0 %v5802
    %7201 = vmatprep.subr.bf16.mxu0 %v5795
    %7202 = vmatpush1.bf16.msra.mxu0 %v5794
    %7203 = vmatprep.subr.bf16.mxu0 %v5787
    %7204 = vmatpush1.bf16.msra.mxu0 %v5786
    %7205 = vmatprep.subr.bf16.mxu0 %v5779
    %7206 = vmatpush1.bf16.msra.mxu0 %v5778
    %7207 = vmatprep.subr.bf16.mxu0 %v5771
    %7208 = vmatpush1.bf16.msra.mxu0 %v5770
    %7209 = vmatprep.subr.bf16.mxu0 %v5891
    %7210 = vmatpush2.bf16.msra.mxu0 %v5890
    %7211 = vmatprep.subr.bf16.mxu0 %v5883
    %7212 = vmatpush2.bf16.msra.mxu0 %v5882
    %7213 = vmatprep.subr.bf16.mxu0 %v5875
    %7214 = vmatpush2.bf16.msra.mxu0 %v5874
    %7215 = vmatprep.subr.bf16.mxu0 %v5867
    %7216 = vmatpush2.bf16.msra.mxu0 %v5866
    %7217 = vmatprep.subr.bf16.mxu0 %v5859
    %7218 = vmatpush2.bf16.msra.mxu0 %v5858
    %7219 = vmatprep.subr.bf16.mxu0 %v5851
    %7220 = vmatpush2.bf16.msra.mxu0 %v5850
    %7221 = vmatprep.subr.bf16.mxu0 %v5843
    %7222 = vmatpush2.bf16.msra.mxu0 %v5842
    %7223 = vmatprep.subr.bf16.mxu0 %v5835
    %7224 = vmatpush2.bf16.msra.mxu0 %v5834
    %7225 = vmatprep.mubr.bf16.mxu0 %v3541
    %7226 = vmatmul.mubr.bf16.gmra.mxu0 %v3540
    %v7227 = vpop.f32.mrf.mxu0
    %v7228 = vadd.f32 %v7187, %v7227
    %v7229 = vpop.f32.mrf.mxu0
    %v7230 = vadd.f32 %v7189, %v7229
    %v7231 = vpop.f32.mrf.mxu0
    %v7232 = vpop.f32.mrf.mxu0
    %7233 = vdwg.mxu0
    %7234 = vmatprep.subr.bf16.mxu0 %v5955
    %7235 = vmatpush1.bf16.msra.mxu0 %v5954
    %7236 = vmatprep.subr.bf16.mxu0 %v5947
    %7237 = vmatpush1.bf16.msra.mxu0 %v5946
    %7238 = vmatprep.subr.bf16.mxu0 %v5939
    %7239 = vmatpush1.bf16.msra.mxu0 %v5938
    %7240 = vmatprep.subr.bf16.mxu0 %v5931
    %7241 = vmatpush1.bf16.msra.mxu0 %v5930
    %7242 = vmatprep.subr.bf16.mxu0 %v5923
    %7243 = vmatpush1.bf16.msra.mxu0 %v5922
    %7244 = vmatprep.subr.bf16.mxu0 %v5915
    %7245 = vmatpush1.bf16.msra.mxu0 %v5914
    %7246 = vmatprep.subr.bf16.mxu0 %v5907
    %7247 = vmatpush1.bf16.msra.mxu0 %v5906
    %7248 = vmatprep.subr.bf16.mxu0 %v5899
    %7249 = vmatpush1.bf16.msra.mxu0 %v5898
    %7250 = vmatprep.subr.bf16.mxu0 %v6019
    %7251 = vmatpush2.bf16.msra.mxu0 %v6018
    %7252 = vmatprep.subr.bf16.mxu0 %v6011
    %7253 = vmatpush2.bf16.msra.mxu0 %v6010
    %7254 = vmatprep.subr.bf16.mxu0 %v6003
    %7255 = vmatpush2.bf16.msra.mxu0 %v6002
    %7256 = vmatprep.subr.bf16.mxu0 %v5995
    %7257 = vmatpush2.bf16.msra.mxu0 %v5994
    %7258 = vmatprep.subr.bf16.mxu0 %v5987
    %7259 = vmatpush2.bf16.msra.mxu0 %v5986
    %7260 = vmatprep.subr.bf16.mxu0 %v5979
    %7261 = vmatpush2.bf16.msra.mxu0 %v5978
    %7262 = vmatprep.subr.bf16.mxu0 %v5971
    %7263 = vmatpush2.bf16.msra.mxu0 %v5970
    %7264 = vmatprep.subr.bf16.mxu0 %v5963
    %7265 = vmatpush2.bf16.msra.mxu0 %v5962
    %7266 = vmatprep.mubr.bf16.mxu0 %v3543
    %7267 = vmatmul.mubr.bf16.gmra.mxu0 %v3542
    %v7268 = vpop.f32.mrf.mxu0
    %v7269 = vadd.f32 %v7228, %v7268
    %v7270 = vpop.f32.mrf.mxu0
    %v7271 = vadd.f32 %v7230, %v7270
    %v7272 = vpop.f32.mrf.mxu0
    %v7273 = vpop.f32.mrf.mxu0
    %7274 = vdwg.mxu0
    %7275 = vmatprep.subr.bf16.mxu0 %v6083
    %7276 = vmatpush1.bf16.msra.mxu0 %v6082
    %7277 = vmatprep.subr.bf16.mxu0 %v6075
    %7278 = vmatpush1.bf16.msra.mxu0 %v6074
    %7279 = vmatprep.subr.bf16.mxu0 %v6067
    %7280 = vmatpush1.bf16.msra.mxu0 %v6066
    %7281 = vmatprep.subr.bf16.mxu0 %v6059
    %7282 = vmatpush1.bf16.msra.mxu0 %v6058
    %7283 = vmatprep.subr.bf16.mxu0 %v6051
    %7284 = vmatpush1.bf16.msra.mxu0 %v6050
    %7285 = vmatprep.subr.bf16.mxu0 %v6043
    %7286 = vmatpush1.bf16.msra.mxu0 %v6042
    %7287 = vmatprep.subr.bf16.mxu0 %v6035
    %7288 = vmatpush1.bf16.msra.mxu0 %v6034
    %7289 = vmatprep.subr.bf16.mxu0 %v6027
    %7290 = vmatpush1.bf16.msra.mxu0 %v6026
    %7291 = vmatprep.subr.bf16.mxu0 %v6147
    %7292 = vmatpush2.bf16.msra.mxu0 %v6146
    %7293 = vmatprep.subr.bf16.mxu0 %v6139
    %7294 = vmatpush2.bf16.msra.mxu0 %v6138
    %7295 = vmatprep.subr.bf16.mxu0 %v6131
    %7296 = vmatpush2.bf16.msra.mxu0 %v6130
    %7297 = vmatprep.subr.bf16.mxu0 %v6123
    %7298 = vmatpush2.bf16.msra.mxu0 %v6122
    %7299 = vmatprep.subr.bf16.mxu0 %v6115
    %7300 = vmatpush2.bf16.msra.mxu0 %v6114
    %7301 = vmatprep.subr.bf16.mxu0 %v6107
    %7302 = vmatpush2.bf16.msra.mxu0 %v6106
    %7303 = vmatprep.subr.bf16.mxu0 %v6099
    %7304 = vmatpush2.bf16.msra.mxu0 %v6098
    %7305 = vmatprep.subr.bf16.mxu0 %v6091
    %7306 = vmatpush2.bf16.msra.mxu0 %v6090
    %7307 = vmatprep.mubr.bf16.mxu0 %v3545
    %7308 = vmatmul.mubr.bf16.gmra.mxu0 %v3544
    %v7309 = vpop.f32.mrf.mxu0
    %v7310 = vadd.f32 %v7269, %v7309
    %v7311 = vpop.f32.mrf.mxu0
    %v7312 = vadd.f32 %v7271, %v7311
    %v7313 = vpop.f32.mrf.mxu0
    %v7314 = vpop.f32.mrf.mxu0
    %7315 = vdwg.mxu0
    %v7316 = vmax.f32 %v6818, 0.0
    %v7317 = vmax.f32 %v6820, 0.0
    %v7318 = vmax.f32 %v6982, 0.0
    %v7319 = vmax.f32 %v6984, 0.0
    %v7320 = vmax.f32 %v7146, 0.0
    %v7321 = vmax.f32 %v7148, 0.0
    %v7322 = vmax.f32 %v7310, 0.0
    %v7323 = vmax.f32 %v7312, 0.0
    %v7324 = vpack.c.bf16 %v7316, %v7316
    %v7325 = vpack.c.bf16 %v7317, %v7317
    %v7326 = vpack.c.bf16 %v7318, %v7318
    %v7327 = vpack.c.bf16 %v7319, %v7319
    %v7328 = vpack.c.bf16 %v7320, %v7320
    %v7329 = vpack.c.bf16 %v7321, %v7321
    %v7330 = vpack.c.bf16 %v7322, %v7322
    %v7331 = vpack.c.bf16 %v7323, %v7323
    %v7332 = vld [vmem:[#allocation11] sm:$0xf]
    %v7333 = vld [vmem:[#allocation11 + $0x4] sm:$0xf]
    %v7334 = vld [vmem:[#allocation11 + $0x8] sm:$0xf]
    %v7335 = vld [vmem:[#allocation11 + $0xc] sm:$0xf]
    %v7336 = vld [vmem:[#allocation11 + $0x10] sm:$0xf]
    %v7337 = vld [vmem:[#allocation11 + $0x14] sm:$0xf]
    %v7338 = vld [vmem:[#allocation11 + $0x18] sm:$0xf]
    %v7339 = vld [vmem:[#allocation11 + $0x1c] sm:$0xf]
    %v7340 = vld [vmem:[#allocation11 + $0x20] sm:$0xf]
    %v7341 = vld [vmem:[#allocation11 + $0x24] sm:$0xf]
    %v7342 = vld [vmem:[#allocation11 + $0x28] sm:$0xf]
    %v7343 = vld [vmem:[#allocation11 + $0x2c] sm:$0xf]
    %v7344 = vld [vmem:[#allocation11 + $0x30] sm:$0xf]
    %v7345 = vld [vmem:[#allocation11 + $0x34] sm:$0xf]
    %v7346 = vld [vmem:[#allocation11 + $0x38] sm:$0xf]
    %v7347 = vld [vmem:[#allocation11 + $0x3c] sm:$0xf]
    %v7348 = vld [vmem:[#allocation11 + $0x40] sm:$0xf]
    %v7349 = vld [vmem:[#allocation11 + $0x44] sm:$0xf]
    %v7350 = vld [vmem:[#allocation11 + $0x48] sm:$0xf]
    %v7351 = vld [vmem:[#allocation11 + $0x4c] sm:$0xf]
    %v7352 = vld [vmem:[#allocation11 + $0x50] sm:$0xf]
    %v7353 = vld [vmem:[#allocation11 + $0x54] sm:$0xf]
    %v7354 = vld [vmem:[#allocation11 + $0x58] sm:$0xf]
    %v7355 = vld [vmem:[#allocation11 + $0x5c] sm:$0xf]
    %v7356 = vld [vmem:[#allocation11 + $0x60] sm:$0xf]
    %v7357 = vld [vmem:[#allocation11 + $0x64] sm:$0xf]
    %v7358 = vld [vmem:[#allocation11 + $0x68] sm:$0xf]
    %v7359 = vld [vmem:[#allocation11 + $0x6c] sm:$0xf]
    %v7360 = vld [vmem:[#allocation11 + $0x70] sm:$0xf]
    %v7361 = vld [vmem:[#allocation11 + $0x74] sm:$0xf]
    %v7362 = vld [vmem:[#allocation11 + $0x78] sm:$0xf]
    %v7363 = vld [vmem:[#allocation11 + $0x7c] sm:$0xf]
    %v7364 = vld [vmem:[#allocation11 + $0x80] sm:$0xf]
    %v7365 = vld [vmem:[#allocation11 + $0x84] sm:$0xf]
    %v7366 = vld [vmem:[#allocation11 + $0x88] sm:$0xf]
    %v7367 = vld [vmem:[#allocation11 + $0x8c] sm:$0xf]
    %v7368 = vld [vmem:[#allocation11 + $0x90] sm:$0xf]
    %v7369 = vld [vmem:[#allocation11 + $0x94] sm:$0xf]
    %v7370 = vld [vmem:[#allocation11 + $0x98] sm:$0xf]
    %v7371 = vld [vmem:[#allocation11 + $0x9c] sm:$0xf]
    %v7372 = vld [vmem:[#allocation11 + $0xa0] sm:$0xf]
    %v7373 = vld [vmem:[#allocation11 + $0xa4] sm:$0xf]
    %v7374 = vld [vmem:[#allocation11 + $0xa8] sm:$0xf]
    %v7375 = vld [vmem:[#allocation11 + $0xac] sm:$0xf]
    %v7376 = vld [vmem:[#allocation11 + $0xb0] sm:$0xf]
    %v7377 = vld [vmem:[#allocation11 + $0xb4] sm:$0xf]
    %v7378 = vld [vmem:[#allocation11 + $0xb8] sm:$0xf]
    %v7379 = vld [vmem:[#allocation11 + $0xbc] sm:$0xf]
    %v7380 = vld [vmem:[#allocation11 + $0xc0] sm:$0xf]
    %v7381 = vld [vmem:[#allocation11 + $0xc4] sm:$0xf]
    %v7382 = vld [vmem:[#allocation11 + $0xc8] sm:$0xf]
    %v7383 = vld [vmem:[#allocation11 + $0xcc] sm:$0xf]
    %v7384 = vld [vmem:[#allocation11 + $0xd0] sm:$0xf]
    %v7385 = vld [vmem:[#allocation11 + $0xd4] sm:$0xf]
    %v7386 = vld [vmem:[#allocation11 + $0xd8] sm:$0xf]
    %v7387 = vld [vmem:[#allocation11 + $0xdc] sm:$0xf]
    %v7388 = vld [vmem:[#allocation11 + $0xe0] sm:$0xf]
    %v7389 = vld [vmem:[#allocation11 + $0xe4] sm:$0xf]
    %v7390 = vld [vmem:[#allocation11 + $0xe8] sm:$0xf]
    %v7391 = vld [vmem:[#allocation11 + $0xec] sm:$0xf]
    %v7392 = vld [vmem:[#allocation11 + $0xf0] sm:$0xf]
    %v7393 = vld [vmem:[#allocation11 + $0xf4] sm:$0xf]
    %v7394 = vld [vmem:[#allocation11 + $0xf8] sm:$0xf]
    %v7395 = vld [vmem:[#allocation11 + $0xfc] sm:$0xf]
    %v7396 = vld [vmem:[#allocation11 + $0x100] sm:$0xf]
    %v7397 = vld [vmem:[#allocation11 + $0x104] sm:$0xf]
    %v7398 = vld [vmem:[#allocation11 + $0x108] sm:$0xf]
    %v7399 = vld [vmem:[#allocation11 + $0x10c] sm:$0xf]
    %v7400 = vld [vmem:[#allocation11 + $0x110] sm:$0xf]
    %v7401 = vld [vmem:[#allocation11 + $0x114] sm:$0xf]
    %v7402 = vld [vmem:[#allocation11 + $0x118] sm:$0xf]
    %v7403 = vld [vmem:[#allocation11 + $0x11c] sm:$0xf]
    %v7404 = vld [vmem:[#allocation11 + $0x120] sm:$0xf]
    %v7405 = vld [vmem:[#allocation11 + $0x124] sm:$0xf]
    %v7406 = vld [vmem:[#allocation11 + $0x128] sm:$0xf]
    %v7407 = vld [vmem:[#allocation11 + $0x12c] sm:$0xf]
    %v7408 = vld [vmem:[#allocation11 + $0x130] sm:$0xf]
    %v7409 = vld [vmem:[#allocation11 + $0x134] sm:$0xf]
    %v7410 = vld [vmem:[#allocation11 + $0x138] sm:$0xf]
    %v7411 = vld [vmem:[#allocation11 + $0x13c] sm:$0xf]
    %v7412 = vld [vmem:[#allocation11 + $0x140] sm:$0xf]
    %v7413 = vld [vmem:[#allocation11 + $0x144] sm:$0xf]
    %v7414 = vld [vmem:[#allocation11 + $0x148] sm:$0xf]
    %v7415 = vld [vmem:[#allocation11 + $0x14c] sm:$0xf]
    %v7416 = vld [vmem:[#allocation11 + $0x150] sm:$0xf]
    %v7417 = vld [vmem:[#allocation11 + $0x154] sm:$0xf]
    %v7418 = vld [vmem:[#allocation11 + $0x158] sm:$0xf]
    %v7419 = vld [vmem:[#allocation11 + $0x15c] sm:$0xf]
    %v7420 = vld [vmem:[#allocation11 + $0x160] sm:$0xf]
    %v7421 = vld [vmem:[#allocation11 + $0x164] sm:$0xf]
    %v7422 = vld [vmem:[#allocation11 + $0x168] sm:$0xf]
    %v7423 = vld [vmem:[#allocation11 + $0x16c] sm:$0xf]
    %v7424 = vld [vmem:[#allocation11 + $0x170] sm:$0xf]
    %v7425 = vld [vmem:[#allocation11 + $0x174] sm:$0xf]
    %v7426 = vld [vmem:[#allocation11 + $0x178] sm:$0xf]
    %v7427 = vld [vmem:[#allocation11 + $0x17c] sm:$0xf]
    %v7428 = vld [vmem:[#allocation11 + $0x180] sm:$0xf]
    %v7429 = vld [vmem:[#allocation11 + $0x184] sm:$0xf]
    %v7430 = vld [vmem:[#allocation11 + $0x188] sm:$0xf]
    %v7431 = vld [vmem:[#allocation11 + $0x18c] sm:$0xf]
    %v7432 = vld [vmem:[#allocation11 + $0x190] sm:$0xf]
    %v7433 = vld [vmem:[#allocation11 + $0x194] sm:$0xf]
    %v7434 = vld [vmem:[#allocation11 + $0x198] sm:$0xf]
    %v7435 = vld [vmem:[#allocation11 + $0x19c] sm:$0xf]
    %v7436 = vld [vmem:[#allocation11 + $0x1a0] sm:$0xf]
    %v7437 = vld [vmem:[#allocation11 + $0x1a4] sm:$0xf]
    %v7438 = vld [vmem:[#allocation11 + $0x1a8] sm:$0xf]
    %v7439 = vld [vmem:[#allocation11 + $0x1ac] sm:$0xf]
    %v7440 = vld [vmem:[#allocation11 + $0x1b0] sm:$0xf]
    %v7441 = vld [vmem:[#allocation11 + $0x1b4] sm:$0xf]
    %v7442 = vld [vmem:[#allocation11 + $0x1b8] sm:$0xf]
    %v7443 = vld [vmem:[#allocation11 + $0x1bc] sm:$0xf]
    %v7444 = vld [vmem:[#allocation11 + $0x1c0] sm:$0xf]
    %v7445 = vld [vmem:[#allocation11 + $0x1c4] sm:$0xf]
    %v7446 = vld [vmem:[#allocation11 + $0x1c8] sm:$0xf]
    %v7447 = vld [vmem:[#allocation11 + $0x1cc] sm:$0xf]
    %v7448 = vld [vmem:[#allocation11 + $0x1d0] sm:$0xf]
    %v7449 = vld [vmem:[#allocation11 + $0x1d4] sm:$0xf]
    %v7450 = vld [vmem:[#allocation11 + $0x1d8] sm:$0xf]
    %v7451 = vld [vmem:[#allocation11 + $0x1dc] sm:$0xf]
    %v7452 = vld [vmem:[#allocation11 + $0x1e0] sm:$0xf]
    %v7453 = vld [vmem:[#allocation11 + $0x1e4] sm:$0xf]
    %v7454 = vld [vmem:[#allocation11 + $0x1e8] sm:$0xf]
    %v7455 = vld [vmem:[#allocation11 + $0x1ec] sm:$0xf]
    %v7456 = vld [vmem:[#allocation11 + $0x1f0] sm:$0xf]
    %v7457 = vld [vmem:[#allocation11 + $0x1f4] sm:$0xf]
    %v7458 = vld [vmem:[#allocation11 + $0x1f8] sm:$0xf]
    %v7459 = vld [vmem:[#allocation11 + $0x1fc] sm:$0xf]
    %v7460 = vld [vmem:[#allocation13] sm:$0x1]
    %v7462 = vlaneseq
    %v7463 = vshrl.u32 %v7462, 7
    %v7464 = vsub.s32 0, %v7463
    %v7465 = vrot.slane %v7460, %v7464
    %v7595 = vunpack.c.l.b16 %v7332
    %v7596 = vunpack.c.l.b16 %v7333
    %v7597 = vunpack.c.l.b16 %v7334
    %v7598 = vunpack.c.l.b16 %v7335
    %v7599 = vunpack.c.l.b16 %v7336
    %v7600 = vunpack.c.l.b16 %v7337
    %v7601 = vunpack.c.l.b16 %v7338
    %v7602 = vunpack.c.l.b16 %v7339
    %v7603 = vunpack.c.l.b16 %v7340
    %v7604 = vunpack.c.l.b16 %v7341
    %v7605 = vunpack.c.l.b16 %v7342
    %v7606 = vunpack.c.l.b16 %v7343
    %v7607 = vunpack.c.l.b16 %v7344
    %v7608 = vunpack.c.l.b16 %v7345
    %v7609 = vunpack.c.l.b16 %v7346
    %v7610 = vunpack.c.l.b16 %v7347
    %v7611 = vunpack.c.l.b16 %v7348
    %v7612 = vunpack.c.l.b16 %v7349
    %v7613 = vunpack.c.l.b16 %v7350
    %v7614 = vunpack.c.l.b16 %v7351
    %v7615 = vunpack.c.l.b16 %v7352
    %v7616 = vunpack.c.l.b16 %v7353
    %v7617 = vunpack.c.l.b16 %v7354
    %v7618 = vunpack.c.l.b16 %v7355
    %v7619 = vunpack.c.l.b16 %v7356
    %v7620 = vunpack.c.l.b16 %v7357
    %v7621 = vunpack.c.l.b16 %v7358
    %v7622 = vunpack.c.l.b16 %v7359
    %v7623 = vunpack.c.l.b16 %v7360
    %v7624 = vunpack.c.l.b16 %v7361
    %v7625 = vunpack.c.l.b16 %v7362
    %v7626 = vunpack.c.l.b16 %v7363
    %v7627 = vunpack.c.l.b16 %v7364
    %v7628 = vunpack.c.l.b16 %v7365
    %v7629 = vunpack.c.l.b16 %v7366
    %v7630 = vunpack.c.l.b16 %v7367
    %v7631 = vunpack.c.l.b16 %v7368
    %v7632 = vunpack.c.l.b16 %v7369
    %v7633 = vunpack.c.l.b16 %v7370
    %v7634 = vunpack.c.l.b16 %v7371
    %v7635 = vunpack.c.l.b16 %v7372
    %v7636 = vunpack.c.l.b16 %v7373
    %v7637 = vunpack.c.l.b16 %v7374
    %v7638 = vunpack.c.l.b16 %v7375
    %v7639 = vunpack.c.l.b16 %v7376
    %v7640 = vunpack.c.l.b16 %v7377
    %v7641 = vunpack.c.l.b16 %v7378
    %v7642 = vunpack.c.l.b16 %v7379
    %v7643 = vunpack.c.l.b16 %v7380
    %v7644 = vunpack.c.l.b16 %v7381
    %v7645 = vunpack.c.l.b16 %v7382
    %v7646 = vunpack.c.l.b16 %v7383
    %v7647 = vunpack.c.l.b16 %v7384
    %v7648 = vunpack.c.l.b16 %v7385
    %v7649 = vunpack.c.l.b16 %v7386
    %v7650 = vunpack.c.l.b16 %v7387
    %v7651 = vunpack.c.l.b16 %v7388
    %v7652 = vunpack.c.l.b16 %v7389
    %v7653 = vunpack.c.l.b16 %v7390
    %v7654 = vunpack.c.l.b16 %v7391
    %v7655 = vunpack.c.l.b16 %v7392
    %v7656 = vunpack.c.l.b16 %v7393
    %v7657 = vunpack.c.l.b16 %v7394
    %v7658 = vunpack.c.l.b16 %v7395
    %v7659 = vunpack.c.l.b16 %v7396
    %v7660 = vunpack.c.l.b16 %v7397
    %v7661 = vunpack.c.l.b16 %v7398
    %v7662 = vunpack.c.l.b16 %v7399
    %v7663 = vunpack.c.l.b16 %v7400
    %v7664 = vunpack.c.l.b16 %v7401
    %v7665 = vunpack.c.l.b16 %v7402
    %v7666 = vunpack.c.l.b16 %v7403
    %v7667 = vunpack.c.l.b16 %v7404
    %v7668 = vunpack.c.l.b16 %v7405
    %v7669 = vunpack.c.l.b16 %v7406
    %v7670 = vunpack.c.l.b16 %v7407
    %v7671 = vunpack.c.l.b16 %v7408
    %v7672 = vunpack.c.l.b16 %v7409
    %v7673 = vunpack.c.l.b16 %v7410
    %v7674 = vunpack.c.l.b16 %v7411
    %v7675 = vunpack.c.l.b16 %v7412
    %v7676 = vunpack.c.l.b16 %v7413
    %v7677 = vunpack.c.l.b16 %v7414
    %v7678 = vunpack.c.l.b16 %v7415
    %v7679 = vunpack.c.l.b16 %v7416
    %v7680 = vunpack.c.l.b16 %v7417
    %v7681 = vunpack.c.l.b16 %v7418
    %v7682 = vunpack.c.l.b16 %v7419
    %v7683 = vunpack.c.l.b16 %v7420
    %v7684 = vunpack.c.l.b16 %v7421
    %v7685 = vunpack.c.l.b16 %v7422
    %v7686 = vunpack.c.l.b16 %v7423
    %v7687 = vunpack.c.l.b16 %v7424
    %v7688 = vunpack.c.l.b16 %v7425
    %v7689 = vunpack.c.l.b16 %v7426
    %v7690 = vunpack.c.l.b16 %v7427
    %v7691 = vunpack.c.l.b16 %v7428
    %v7692 = vunpack.c.l.b16 %v7429
    %v7693 = vunpack.c.l.b16 %v7430
    %v7694 = vunpack.c.l.b16 %v7431
    %v7695 = vunpack.c.l.b16 %v7432
    %v7696 = vunpack.c.l.b16 %v7433
    %v7697 = vunpack.c.l.b16 %v7434
    %v7698 = vunpack.c.l.b16 %v7435
    %v7699 = vunpack.c.l.b16 %v7436
    %v7700 = vunpack.c.l.b16 %v7437
    %v7701 = vunpack.c.l.b16 %v7438
    %v7702 = vunpack.c.l.b16 %v7439
    %v7703 = vunpack.c.l.b16 %v7440
    %v7704 = vunpack.c.l.b16 %v7441
    %v7705 = vunpack.c.l.b16 %v7442
    %v7706 = vunpack.c.l.b16 %v7443
    %v7707 = vunpack.c.l.b16 %v7444
    %v7708 = vunpack.c.l.b16 %v7445
    %v7709 = vunpack.c.l.b16 %v7446
    %v7710 = vunpack.c.l.b16 %v7447
    %v7711 = vunpack.c.l.b16 %v7448
    %v7712 = vunpack.c.l.b16 %v7449
    %v7713 = vunpack.c.l.b16 %v7450
    %v7714 = vunpack.c.l.b16 %v7451
    %v7715 = vunpack.c.l.b16 %v7452
    %v7716 = vunpack.c.l.b16 %v7453
    %v7717 = vunpack.c.l.b16 %v7454
    %v7718 = vunpack.c.l.b16 %v7455
    %v7719 = vunpack.c.l.b16 %v7456
    %v7720 = vunpack.c.l.b16 %v7457
    %v7721 = vunpack.c.l.b16 %v7458
    %v7722 = vunpack.c.l.b16 %v7459
    %v7723 = vpack.c.b16 %v7596, %v7595
    %v7724 = vpack.c.b16 %v7598, %v7597
    %v7725 = vpack.c.b16 %v7600, %v7599
    %v7726 = vpack.c.b16 %v7602, %v7601
    %v7727 = vpack.c.b16 %v7604, %v7603
    %v7728 = vpack.c.b16 %v7606, %v7605
    %v7729 = vpack.c.b16 %v7608, %v7607
    %v7730 = vpack.c.b16 %v7610, %v7609
    %v7731 = vpack.c.b16 %v7612, %v7611
    %v7732 = vpack.c.b16 %v7614, %v7613
    %v7733 = vpack.c.b16 %v7616, %v7615
    %v7734 = vpack.c.b16 %v7618, %v7617
    %v7735 = vpack.c.b16 %v7620, %v7619
    %v7736 = vpack.c.b16 %v7622, %v7621
    %v7737 = vpack.c.b16 %v7624, %v7623
    %v7738 = vpack.c.b16 %v7626, %v7625
    %v7739 = vpack.c.b16 %v7628, %v7627
    %v7740 = vpack.c.b16 %v7630, %v7629
    %v7741 = vpack.c.b16 %v7632, %v7631
    %v7742 = vpack.c.b16 %v7634, %v7633
    %v7743 = vpack.c.b16 %v7636, %v7635
    %v7744 = vpack.c.b16 %v7638, %v7637
    %v7745 = vpack.c.b16 %v7640, %v7639
    %v7746 = vpack.c.b16 %v7642, %v7641
    %v7747 = vpack.c.b16 %v7644, %v7643
    %v7748 = vpack.c.b16 %v7646, %v7645
    %v7749 = vpack.c.b16 %v7648, %v7647
    %v7750 = vpack.c.b16 %v7650, %v7649
    %v7751 = vpack.c.b16 %v7652, %v7651
    %v7752 = vpack.c.b16 %v7654, %v7653
    %v7753 = vpack.c.b16 %v7656, %v7655
    %v7754 = vpack.c.b16 %v7658, %v7657
    %v7755 = vpack.c.b16 %v7660, %v7659
    %v7756 = vpack.c.b16 %v7662, %v7661
    %v7757 = vpack.c.b16 %v7664, %v7663
    %v7758 = vpack.c.b16 %v7666, %v7665
    %v7759 = vpack.c.b16 %v7668, %v7667
    %v7760 = vpack.c.b16 %v7670, %v7669
    %v7761 = vpack.c.b16 %v7672, %v7671
    %v7762 = vpack.c.b16 %v7674, %v7673
    %v7763 = vpack.c.b16 %v7676, %v7675
    %v7764 = vpack.c.b16 %v7678, %v7677
    %v7765 = vpack.c.b16 %v7680, %v7679
    %v7766 = vpack.c.b16 %v7682, %v7681
    %v7767 = vpack.c.b16 %v7684, %v7683
    %v7768 = vpack.c.b16 %v7686, %v7685
    %v7769 = vpack.c.b16 %v7688, %v7687
    %v7770 = vpack.c.b16 %v7690, %v7689
    %v7771 = vpack.c.b16 %v7692, %v7691
    %v7772 = vpack.c.b16 %v7694, %v7693
    %v7773 = vpack.c.b16 %v7696, %v7695
    %v7774 = vpack.c.b16 %v7698, %v7697
    %v7775 = vpack.c.b16 %v7700, %v7699
    %v7776 = vpack.c.b16 %v7702, %v7701
    %v7777 = vpack.c.b16 %v7704, %v7703
    %v7778 = vpack.c.b16 %v7706, %v7705
    %v7779 = vpack.c.b16 %v7708, %v7707
    %v7780 = vpack.c.b16 %v7710, %v7709
    %v7781 = vpack.c.b16 %v7712, %v7711
    %v7782 = vpack.c.b16 %v7714, %v7713
    %v7783 = vpack.c.b16 %v7716, %v7715
    %v7784 = vpack.c.b16 %v7718, %v7717
    %v7785 = vpack.c.b16 %v7720, %v7719
    %v7786 = vpack.c.b16 %v7722, %v7721
    %7851 = vmatprep.subr.bf16.mxu0 0
    %7852 = vmatpush1.bf16.msra.mxu0 %v7730
    %7853 = vmatprep.subr.bf16.mxu0 0
    %7854 = vmatpush1.bf16.msra.mxu0 %v7729
    %7855 = vmatprep.subr.bf16.mxu0 0
    %7856 = vmatpush1.bf16.msra.mxu0 %v7728
    %7857 = vmatprep.subr.bf16.mxu0 0
    %7858 = vmatpush1.bf16.msra.mxu0 %v7727
    %7859 = vmatprep.subr.bf16.mxu0 0
    %7860 = vmatpush1.bf16.msra.mxu0 %v7726
    %7861 = vmatprep.subr.bf16.mxu0 0
    %7862 = vmatpush1.bf16.msra.mxu0 %v7725
    %7863 = vmatprep.subr.bf16.mxu0 0
    %7864 = vmatpush1.bf16.msra.mxu0 %v7724
    %7865 = vmatprep.subr.bf16.mxu0 0
    %7866 = vmatpush1.bf16.msra.mxu0 %v7723
    %7867 = vmatprep.subr.bf16.mxu0 0
    %7868 = vmatpush2.bf16.msra.mxu0 %v7738
    %7869 = vmatprep.subr.bf16.mxu0 0
    %7870 = vmatpush2.bf16.msra.mxu0 %v7737
    %7871 = vmatprep.subr.bf16.mxu0 0
    %7872 = vmatpush2.bf16.msra.mxu0 %v7736
    %7873 = vmatprep.subr.bf16.mxu0 0
    %7874 = vmatpush2.bf16.msra.mxu0 %v7735
    %7875 = vmatprep.subr.bf16.mxu0 0
    %7876 = vmatpush2.bf16.msra.mxu0 %v7734
    %7877 = vmatprep.subr.bf16.mxu0 0
    %7878 = vmatpush2.bf16.msra.mxu0 %v7733
    %7879 = vmatprep.subr.bf16.mxu0 0
    %7880 = vmatpush2.bf16.msra.mxu0 %v7732
    %7881 = vmatprep.subr.bf16.mxu0 0
    %7882 = vmatpush2.bf16.msra.mxu0 %v7731
    %7883 = vmatprep.mubr.bf16.mxu0 %v7325
    %7884 = vmatmul.mubr.bf16.gmra.mxu0 %v7324
    %v7885 = vpop.f32.mrf.mxu0
    %v7886 = vadd.f32 %v7465, %v7885
    %v7887 = vpop.f32.mrf.mxu0
    %v7888 = vpop.f32.mrf.mxu0
    %v7889 = vpop.f32.mrf.mxu0
    %7890 = vdwg.mxu0
    %7891 = vmatprep.subr.bf16.mxu0 0
    %7892 = vmatpush1.bf16.msra.mxu0 %v7746
    %7893 = vmatprep.subr.bf16.mxu0 0
    %7894 = vmatpush1.bf16.msra.mxu0 %v7745
    %7895 = vmatprep.subr.bf16.mxu0 0
    %7896 = vmatpush1.bf16.msra.mxu0 %v7744
    %7897 = vmatprep.subr.bf16.mxu0 0
    %7898 = vmatpush1.bf16.msra.mxu0 %v7743
    %7899 = vmatprep.subr.bf16.mxu0 0
    %7900 = vmatpush1.bf16.msra.mxu0 %v7742
    %7901 = vmatprep.subr.bf16.mxu0 0
    %7902 = vmatpush1.bf16.msra.mxu0 %v7741
    %7903 = vmatprep.subr.bf16.mxu0 0
    %7904 = vmatpush1.bf16.msra.mxu0 %v7740
    %7905 = vmatprep.subr.bf16.mxu0 0
    %7906 = vmatpush1.bf16.msra.mxu0 %v7739
    %7907 = vmatprep.subr.bf16.mxu0 0
    %7908 = vmatpush2.bf16.msra.mxu0 %v7754
    %7909 = vmatprep.subr.bf16.mxu0 0
    %7910 = vmatpush2.bf16.msra.mxu0 %v7753
    %7911 = vmatprep.subr.bf16.mxu0 0
    %7912 = vmatpush2.bf16.msra.mxu0 %v7752
    %7913 = vmatprep.subr.bf16.mxu0 0
    %7914 = vmatpush2.bf16.msra.mxu0 %v7751
    %7915 = vmatprep.subr.bf16.mxu0 0
    %7916 = vmatpush2.bf16.msra.mxu0 %v7750
    %7917 = vmatprep.subr.bf16.mxu0 0
    %7918 = vmatpush2.bf16.msra.mxu0 %v7749
    %7919 = vmatprep.subr.bf16.mxu0 0
    %7920 = vmatpush2.bf16.msra.mxu0 %v7748
    %7921 = vmatprep.subr.bf16.mxu0 0
    %7922 = vmatpush2.bf16.msra.mxu0 %v7747
    %7923 = vmatprep.mubr.bf16.mxu0 %v7327
    %7924 = vmatmul.mubr.bf16.gmra.mxu0 %v7326
    %v7925 = vpop.f32.mrf.mxu0
    %v7926 = vadd.f32 %v7886, %v7925
    %v7927 = vpop.f32.mrf.mxu0
    %v7928 = vpop.f32.mrf.mxu0
    %v7929 = vpop.f32.mrf.mxu0
    %7930 = vdwg.mxu0
    %7931 = vmatprep.subr.bf16.mxu0 0
    %7932 = vmatpush1.bf16.msra.mxu0 %v7762
    %7933 = vmatprep.subr.bf16.mxu0 0
    %7934 = vmatpush1.bf16.msra.mxu0 %v7761
    %7935 = vmatprep.subr.bf16.mxu0 0
    %7936 = vmatpush1.bf16.msra.mxu0 %v7760
    %7937 = vmatprep.subr.bf16.mxu0 0
    %7938 = vmatpush1.bf16.msra.mxu0 %v7759
    %7939 = vmatprep.subr.bf16.mxu0 0
    %7940 = vmatpush1.bf16.msra.mxu0 %v7758
    %7941 = vmatprep.subr.bf16.mxu0 0
    %7942 = vmatpush1.bf16.msra.mxu0 %v7757
    %7943 = vmatprep.subr.bf16.mxu0 0
    %7944 = vmatpush1.bf16.msra.mxu0 %v7756
    %7945 = vmatprep.subr.bf16.mxu0 0
    %7946 = vmatpush1.bf16.msra.mxu0 %v7755
    %7947 = vmatprep.subr.bf16.mxu0 0
    %7948 = vmatpush2.bf16.msra.mxu0 %v7770
    %7949 = vmatprep.subr.bf16.mxu0 0
    %7950 = vmatpush2.bf16.msra.mxu0 %v7769
    %7951 = vmatprep.subr.bf16.mxu0 0
    %7952 = vmatpush2.bf16.msra.mxu0 %v7768
    %7953 = vmatprep.subr.bf16.mxu0 0
    %7954 = vmatpush2.bf16.msra.mxu0 %v7767
    %7955 = vmatprep.subr.bf16.mxu0 0
    %7956 = vmatpush2.bf16.msra.mxu0 %v7766
    %7957 = vmatprep.subr.bf16.mxu0 0
    %7958 = vmatpush2.bf16.msra.mxu0 %v7765
    %7959 = vmatprep.subr.bf16.mxu0 0
    %7960 = vmatpush2.bf16.msra.mxu0 %v7764
    %7961 = vmatprep.subr.bf16.mxu0 0
    %7962 = vmatpush2.bf16.msra.mxu0 %v7763
    %7963 = vmatprep.mubr.bf16.mxu0 %v7329
    %7964 = vmatmul.mubr.bf16.gmra.mxu0 %v7328
    %v7965 = vpop.f32.mrf.mxu0
    %v7966 = vadd.f32 %v7926, %v7965
    %v7967 = vpop.f32.mrf.mxu0
    %v7968 = vpop.f32.mrf.mxu0
    %v7969 = vpop.f32.mrf.mxu0
    %7970 = vdwg.mxu0
    %7971 = vmatprep.subr.bf16.mxu0 0
    %7972 = vmatpush1.bf16.msra.mxu0 %v7778
    %7973 = vmatprep.subr.bf16.mxu0 0
    %7974 = vmatpush1.bf16.msra.mxu0 %v7777
    %7975 = vmatprep.subr.bf16.mxu0 0
    %7976 = vmatpush1.bf16.msra.mxu0 %v7776
    %7977 = vmatprep.subr.bf16.mxu0 0
    %7978 = vmatpush1.bf16.msra.mxu0 %v7775
    %7979 = vmatprep.subr.bf16.mxu0 0
    %7980 = vmatpush1.bf16.msra.mxu0 %v7774
    %7981 = vmatprep.subr.bf16.mxu0 0
    %7982 = vmatpush1.bf16.msra.mxu0 %v7773
    %7983 = vmatprep.subr.bf16.mxu0 0
    %7984 = vmatpush1.bf16.msra.mxu0 %v7772
    %7985 = vmatprep.subr.bf16.mxu0 0
    %7986 = vmatpush1.bf16.msra.mxu0 %v7771
    %7987 = vmatprep.subr.bf16.mxu0 0
    %7988 = vmatpush2.bf16.msra.mxu0 %v7786
    %7989 = vmatprep.subr.bf16.mxu0 0
    %7990 = vmatpush2.bf16.msra.mxu0 %v7785
    %7991 = vmatprep.subr.bf16.mxu0 0
    %7992 = vmatpush2.bf16.msra.mxu0 %v7784
    %7993 = vmatprep.subr.bf16.mxu0 0
    %7994 = vmatpush2.bf16.msra.mxu0 %v7783
    %7995 = vmatprep.subr.bf16.mxu0 0
    %7996 = vmatpush2.bf16.msra.mxu0 %v7782
    %7997 = vmatprep.subr.bf16.mxu0 0
    %7998 = vmatpush2.bf16.msra.mxu0 %v7781
    %7999 = vmatprep.subr.bf16.mxu0 0
    %8000 = vmatpush2.bf16.msra.mxu0 %v7780
    %8001 = vmatprep.subr.bf16.mxu0 0
    %8002 = vmatpush2.bf16.msra.mxu0 %v7779
    %8003 = vmatprep.mubr.bf16.mxu0 %v7331
    %8004 = vmatmul.mubr.bf16.gmra.mxu0 %v7330
    %v8005 = vpop.f32.mrf.mxu0
    %v8006 = vadd.f32 %v7966, %v8005
    %v8007 = vpop.f32.mrf.mxu0
    %v8008 = vpop.f32.mrf.mxu0
    %v8009 = vpop.f32.mrf.mxu0
    %8010 = vdwg.mxu0
    %8011 = vst [vmem:[#allocation14] sm:$0xff] %v8006
    // Predicated region
    $region58: #{tpu_custom_call.1} parent=1 // pred_check
      _
    $region59: #{tpu_custom_call.1} parent=1 // pred_check_branch
      %8013 = sbr.rel (0) target = $region61
    $region60: #{tpu_custom_call.1} parent=1 // pred_region
      %s8015 = ssub.s32 128, 128
      %8016 = vsyncadd [#allocation4], %s8015
      %s8018 = sshll.u32 [#allocation14], 4
      %s8019 = int_to_ptr.vmem [resolvable:$true] %s8018
      %8021 = dma.vmem_to_hbm [thread:$0]  %s8019, 128, %s7, [#allocation4]
    $region61: #{tpu_custom_call.1} parent=1 // pred_fallthru
      _
    // Predicated region
    $region62: #{tpu_custom_call.1} parent=1 // pred_check
      _
    $region63: #{tpu_custom_call.1} parent=1 // pred_check_branch
      %8023 = sbr.rel (0) target = $region65
    $region64: #{tpu_custom_call.1} parent=1 // pred_region
      %8024 = dma.done [#allocation4], 128
    $region65: #{tpu_custom_call.1} parent=1 // pred_fallthru
      _
    %8025 = vsyncpa [#allocation3], 1
    %8026 = vsyncpa [#allocation6], 1
    %8027 = vsyncpa [#allocation9], 1
    %8028 = vsyncpa [#allocation12], 1
    %8029 = vsyncpa [#allocation4], 1

</llo_original>
